<compile_context>
chip_gen: v7x
topology: tpu7x:2x2x1
jax: 0.10.0
libtpu: 0.0.40
codegen_flags: <defaults>
</compile_context>

<pallas_src>
import functools

import jax
import jax.numpy as jnp
from jax import lax
from jax.experimental import pallas as pl
from jax.experimental.pallas import tpu as pltpu


# ----------------------------------------------------------------------------
# Helpers
# ----------------------------------------------------------------------------
def _round_up(n, m):
    return ((n + m - 1) // m) * m


def _default_compute_dtype():
    """bf16 matmuls (f32 accumulation) on real TPUs; f32 elsewhere so that
    CPU / interpret executors (which reject BF16xBF16=F32 dots) still run."""
    try:
        if jax.devices()[0].platform == "tpu":
            return jnp.bfloat16
    except Exception:
        pass
    return jnp.float32


def _derive_time_chunk(t, bt, h, act_bytes, budget_bytes, cap=64):
    """Largest time chunk whose per-grid-step VMEM footprint fits the budget."""
    g = 4 * h
    fixed = h * g * act_bytes            # w_hh, single-buffered (pl.Buffered(1))
    fixed += g * 4                       # bias, f32
    fixed += bt * h * (act_bytes + 4)    # h scratch (compute dtype) + c scratch (f32)
    # gx input block + h_seq output block, both double-buffered by the pipeline.
    per_step = 2 * bt * g * act_bytes + 2 * bt * h * act_bytes
    avail = max(budget_bytes - fixed, per_step)
    return int(max(1, min(cap, avail // per_step, t)))


def _reorder_gate_rows(w, h):
    """PyTorch gate order [i, f, g, o] (rows of a (4H, X) tensor) -> [i, f, o, g]."""
    i, f, g, o = (w[k * h:(k + 1) * h] for k in range(4))
    return jnp.concatenate([i, f, o, g], axis=0)


def pack_lstm_layer(w_ih_pt, w_hh_pt, b_ih_pt, b_hh_pt):
    """Convert PyTorch nn.LSTM per-layer params to the internal packed layout.

    PyTorch: weight_ih (4H, Din), weight_hh (4H, H), bias_ih/hh (4H,), gates [i,f,g,o].
    Internal: w_ih (Din, 4H), w_hh (H, 4H), b (1, 4H), gates [i,f,o,g], b = b_ih + b_hh.
    """
    h = w_hh_pt.shape[1]
    w_ih = _reorder_gate_rows(w_ih_pt, h).T
    w_hh = _reorder_gate_rows(w_hh_pt, h).T
    b = _reorder_gate_rows((b_ih_pt + b_hh_pt).reshape(-1, 1), h).T
    return (w_ih, w_hh, b)


# ----------------------------------------------------------------------------
# Recurrent LSTM kernels.
# One grid step = one (batch_tile, time_chunk); a bounded-unroll fori_loop
# walks the chunk's time steps.  Gate column order: [i | f | o | g].
# h/c state lives in VMEM scratch and persists across time chunks.
# ----------------------------------------------------------------------------
def _lstm_cell_step(gx_t, w_hh, b, h_st, c_st):
    """One LSTM cell update.  gx_t: (bt,4H) precomputed x-projection (no bias)."""
    H = c_st.shape[-1]
    gates = jnp.dot(h_st[...], w_hh, preferred_element_type=jnp.float32)
    gates = gates + gx_t + b                            # (bt, 4H) f32
    ifo = jax.nn.sigmoid(gates[:, :3 * H])              # one EUP slab
    g = jnp.tanh(gates[:, 3 * H:])
    c = ifo[:, H:2 * H] * c_st[...] + ifo[:, :H] * g    # f32 cell state
    h = (ifo[:, 2 * H:3 * H] * jnp.tanh(c)).astype(h_st.dtype)  # single cast
    c_st[...] = c
    h_st[...] = h
    return h


def lstm_seq_kernel(gx_ref, w_hh_ref, b_ref, h_seq_ref, h_st, c_st,
                    *, t_steps, unroll):
    @pl.when(pl.program_id(1) == 0)
    def _():
        h_st[...] = jnp.zeros_like(h_st)
        c_st[...] = jnp.zeros_like(c_st)

    w_hh = w_hh_ref[...]      # (H, 4H), VMEM-resident across the whole chunk
    b = b_ref[...]            # (1, 4H) f32

    def step(t, carry):
        h = _lstm_cell_step(gx_ref[t], w_hh, b, h_st, c_st)
        h_seq_ref[t] = h
        return carry

    lax.fori_loop(0, t_steps, step, 0, unroll=unroll)


def lstm_last_kernel(gx_ref, w_hh_ref, b_ref, h_last_ref, h_st, c_st,
                     *, t_steps, last_step, unroll):
    """Last-layer variant: only the hidden state of the true final time step
    (index `last_step` before T padding) is written out."""
    @pl.when(pl.program_id(1) == 0)
    def _():
        h_st[...] = jnp.zeros_like(h_st)
        c_st[...] = jnp.zeros_like(c_st)

    w_hh = w_hh_ref[...]
    b = b_ref[...]
    chunk_base = pl.program_id(1) * t_steps

    def step(t, carry):
        h = _lstm_cell_step(gx_ref[t], w_hh, b, h_st, c_st)

        @pl.when(chunk_base + t == last_step)
        def _():
            h_last_ref[...] = h

        return carry

    lax.fori_loop(0, t_steps, step, 0, unroll=unroll)


def lstm_recurrence(gx, w_hh, b, *, t_chunk, h_dtype, last_only, real_t,
                    batch_tile=None, vmem_limit_bytes=32 * 1024 * 1024):
    """gx: (Tp, Bp, 4H) precomputed input projection (bias NOT folded in);
    w_hh: (H, 4H); b: (1, 4H) f32.  Returns (Tp, Bp, H) or, if last_only,
    the final-step hidden state (Bp, H)."""
    Tp, Bp, G = gx.shape
    H = w_hh.shape[0]
    assert G == 4 * H and Tp % t_chunk == 0
    bt = Bp if batch_tile is None else batch_tile
    assert Bp % bt == 0
    nb, nt = Bp // bt, Tp // t_chunk
    unroll = int(min(t_chunk, 8))   # serial deps: full unroll of long chunks buys nothing

    const_spec = dict(pipeline_mode=pl.Buffered(1))   # constant-index blocks: no double-buffer
    in_specs = [
        pl.BlockSpec((t_chunk, bt, G), lambda bi, ti: (ti, bi, 0)),
        pl.BlockSpec((H, G), lambda bi, ti: (0, 0), **const_spec),
        pl.BlockSpec((1, G), lambda bi, ti: (0, 0), **const_spec),
    ]

    if last_only:
        kernel = functools.partial(lstm_last_kernel, t_steps=t_chunk,
                                   last_step=real_t - 1, unroll=unroll)
        out_shape = jax.ShapeDtypeStruct((Bp, H), h_dtype)
        out_spec = pl.BlockSpec((bt, H), lambda bi, ti: (bi, 0))
    else:
        kernel = functools.partial(lstm_seq_kernel, t_steps=t_chunk, unroll=unroll)
        out_shape = jax.ShapeDtypeStruct((Tp, Bp, H), h_dtype)
        out_spec = pl.BlockSpec((t_chunk, bt, H), lambda bi, ti: (ti, bi, 0))

    return pl.pallas_call(
        kernel,
        out_shape=out_shape,
        grid_spec=pltpu.PrefetchScalarGridSpec(
            num_scalar_prefetch=0,
            # Batch tiles (parallel; on v7x pass batch_tile=Bp//2 so nb>=2 feeds
            # both TensorCores) x time chunks (sequential recurrence).
            grid=(nb, nt),
            in_specs=in_specs,
            out_specs=out_spec,
            scratch_shapes=[
                pltpu.VMEM((bt, H), h_dtype),        # h state (compute dtype)
                pltpu.VMEM((bt, H), jnp.float32),    # c state (f32)
            ],
        ),
        compiler_params=pltpu.CompilerParams(
            dimension_semantics=("parallel", "arbitrary"),
            vmem_limit_bytes=vmem_limit_bytes),
    )(gx, w_hh, b)


# ----------------------------------------------------------------------------
# Fused fc head: fc1 -> fc2 on the last-timestep hidden state.
# out_len is padded to a lane-dense 128 multiple; sliced by the caller.
# ----------------------------------------------------------------------------
def fc_head_kernel(h_ref, w1_ref, b1_ref, w2_ref, b2_ref, o_ref):
    y = jnp.dot(h_ref[...], w1_ref[...],
                preferred_element_type=jnp.float32) + b1_ref[...]
    z = jnp.dot(y.astype(w2_ref.dtype), w2_ref[...],
                preferred_element_type=jnp.float32) + b2_ref[...]
    o_ref[...] = z


def fc_head(h_last, w1, b1, w2, b2, *, compute_dtype):
    Bp, H = h_last.shape
    out_len = w2.shape[1]
    Np = _round_up(max(out_len, 128), 128)        # lane-dense output
    if Np != out_len:
        w2 = jnp.pad(w2, ((0, 0), (0, Np - out_len)))
        b2 = jnp.pad(b2, ((0, 0), (0, Np - out_len)))

    out = pl.pallas_call(
        fc_head_kernel,
        out_shape=jax.ShapeDtypeStruct((Bp, Np), jnp.float32),
        in_specs=[
            pl.BlockSpec((Bp, H), lambda: (0, 0)),
            pl.BlockSpec((H, H), lambda: (0, 0)),
            pl.BlockSpec((1, H), lambda: (0, 0)),
            pl.BlockSpec((H, Np), lambda: (0, 0)),
            pl.BlockSpec((1, Np), lambda: (0, 0)),
        ],
        out_specs=pl.BlockSpec((Bp, Np), lambda: (0, 0)),
    )(h_last, w1.astype(compute_dtype), b1, w2.astype(compute_dtype), b2)
    return out[:, :out_len]                        # (Bp, out_len)


# ----------------------------------------------------------------------------
# Full model wrapper (mirrors LSTM.forward, eval mode).
# ----------------------------------------------------------------------------
def lstm_forecast(x, params, *, compute_dtype=None, t_chunk=None, batch_tile=None):
    """x: (B, T, input_size) -> (B, out_len, 1)."""
    if compute_dtype is None:
        compute_dtype = _default_compute_dtype()
    act_bytes = jnp.dtype(compute_dtype).itemsize

    B, T, _ = x.shape
    H = params["w_fc1"].shape[0]
    out_len = params["w_fc2"].shape[1]

    # Pad batch so the sublane dim of (bt, H) / (tc, bt, H) tiles is native:
    # 16 rows for bf16 (unmasked (16,128) stores), 8 rows for f32.
    sub = 16 if act_bytes < 4 else 8
    Bp = _round_up(max(B, sub), sub)
    bt = Bp if batch_tile is None else batch_tile
    assert Bp % bt == 0 and bt % sub == 0

    # Time chunk derived from a VMEM budget (keeps the same code valid on
    # v7x's 64 MiB physical VMEM as on v5e/v6e's 128 MiB); T is padded up to a
    # multiple of it — the trailing garbage steps are never read.
    vmem_budget = 24 * 1024 * 1024
    tc = _derive_time_chunk(T, bt, H, act_bytes, vmem_budget) if t_chunk is None else t_chunk
    Tp = _round_up(T, tc)

    # Layer-0 input: transpose the small (B,T,Din) tensor once so the big
    # hoisted projection is produced directly time-major (no XLA transpose of
    # the (T,Bp,4H) intermediate).
    xT = jnp.transpose(x.astype(compute_dtype), (1, 0, 2))      # (T, B, Din)
    xT = jnp.pad(xT, ((0, Tp - T), (0, Bp - B), (0, 0)))        # (Tp, Bp, Din)

    n_layers = len(params["lstm_layers"])
    h_seq, h_last = xT, None
    for li, (w_ih, w_hh, b) in enumerate(params["lstm_layers"]):
        # Hoisted input projection: one big MXU matmul per layer, stored in the
        # compute dtype (halves the HBM stream for the recurrence on TPU).
        gx = jnp.einsum("tbd,dg->tbg", h_seq, w_ih.astype(compute_dtype),
                        preferred_element_type=jnp.float32).astype(compute_dtype)
        last = li == n_layers - 1
        out = lstm_recurrence(gx, w_hh.astype(compute_dtype), b,
                              t_chunk=tc, h_dtype=compute_dtype,
                              last_only=last, real_t=T, batch_tile=bt)
        if last:
            h_last = out                                         # (Bp, H) == out[:, -1, :]
        else:
            h_seq = out                                          # (Tp, Bp, H)

    # nn.Dropout(p=0.0) is an identity in eval mode -> no-op.
    out = fc_head(h_last, params["w_fc1"], params["b_fc1"],
                  params["w_fc2"], params["b_fc2"],
                  compute_dtype=compute_dtype)                   # (Bp, out_len)
    return out[:B][..., None]                                    # (B, out_len, 1)


# ----------------------------------------------------------------------------
# Parameter construction (PyTorch nn.LSTM / nn.Linear layouts, then repacked).
# ----------------------------------------------------------------------------
def init_params(key, input_size, out_len, d_model, layers):
    keys = jax.random.split(key, 4 * layers + 4)
    scale = 0.05
    ki = 0
    lstm_layers = []
    for layer in range(layers):
        d_in = input_size if layer == 0 else d_model
        # PyTorch layout: (4H, d_in)/(4H, H)/(4H,) with gate order [i, f, g, o].
        w_ih_pt = scale * jax.random.normal(keys[ki], (4 * d_model, d_in), jnp.float32); ki += 1
        w_hh_pt = scale * jax.random.normal(keys[ki], (4 * d_model, d_model), jnp.float32); ki += 1
        b_ih_pt = scale * jax.random.normal(keys[ki], (4 * d_model,), jnp.float32); ki += 1
        b_hh_pt = scale * jax.random.normal(keys[ki], (4 * d_model,), jnp.float32); ki += 1
        lstm_layers.append(pack_lstm_layer(w_ih_pt, w_hh_pt, b_ih_pt, b_hh_pt))
    w_fc1 = scale * jax.random.normal(keys[ki], (d_model, d_model), jnp.float32); ki += 1
    b_fc1 = scale * jax.random.normal(keys[ki], (1, d_model), jnp.float32); ki += 1
    w_fc2 = scale * jax.random.normal(keys[ki], (d_model, out_len), jnp.float32); ki += 1
    b_fc2 = scale * jax.random.normal(keys[ki], (1, out_len), jnp.float32); ki += 1
    return {
        "lstm_layers": lstm_layers,
        "w_fc1": w_fc1, "b_fc1": b_fc1,
        "w_fc2": w_fc2, "b_fc2": b_fc2,
    }


if __name__ == "__main__":
    # Small deterministic example: x is (batch, seq_len, input_size).
    batch, seq_len, input_size = 2, 8, 4
    d_model, layers, out_len = 128, 3, 8

    key = jax.random.PRNGKey(0)
    k_x, k_p = jax.random.split(key)
    x = jax.random.normal(k_x, (batch, seq_len, input_size), jnp.float32)
    params = init_params(k_p, input_size, out_len, d_model, layers)

    fwd = jax.jit(lstm_forecast)
    out = fwd(x, params)
    jax.block_until_ready(out)
    assert out.shape == (batch, out_len, 1), out.shape
    print("KERNEL_OK")
</pallas_src>

<mosaic_0001>
module attributes {stable_mosaic.version = 11 : i64} {
  func.func @lstm_seq_kernel(%arg0: i32, %arg1: i32, %arg2: memref<8x8x512xf32, #tpu.memory_space<vmem>>, %arg3: memref<128x512xf32, #tpu.memory_space<vmem>>, %arg4: memref<1x512xf32, #tpu.memory_space<vmem>>, %arg5: memref<8x8x128xf32, #tpu.memory_space<vmem>>, %arg6: memref<8x128xf32, #tpu.memory_space<vmem>>, %arg7: memref<8x128xf32, #tpu.memory_space<vmem>>) attributes {dimension_semantics = [#tpu.dimension_semantics<parallel>, #tpu.dimension_semantics<arbitrary>], iteration_bounds = array<i64: 1, 1>, scalar_prefetch = 0 : i64, scratch_operands = 2 : i64, tpu.core_type = #tpu.core_type<tc>, window_params = [{transform_indices = @transform_0, window_bounds = array<i64: 8, 8, 512>}, {pipeline_mode = #tpu.pipeline_mode<synchronous>, transform_indices = @transform_1, window_bounds = array<i64: 128, 512>}, {pipeline_mode = #tpu.pipeline_mode<synchronous>, transform_indices = @transform_2, window_bounds = array<i64: 1, 512>}, {transform_indices = @transform_3, window_bounds = array<i64: 8, 8, 128>}]} {
    %c0_i32 = arith.constant 0 : i32
    %0 = arith.cmpi eq, %arg1, %c0_i32 : i32
    %1 = arith.extui %0 : i1 to i32
    %c0_i32_0 = arith.constant 0 : i32
    %2 = arith.cmpi ne, %1, %c0_i32_0 : i32
    scf.if %2 {
      %cst_116 = arith.constant 0.000000e+00 : f32
      %253 = vector.broadcast %cst_116 : f32 to vector<8x128xf32>
      %c0_117 = arith.constant 0 : index
      %c0_118 = arith.constant 0 : index
      %254 = vector.load %arg6[%c0_117, %c0_118] : memref<8x128xf32, #tpu.memory_space<vmem>>, vector<8x128xf32>
      tpu.vector_store %arg6[%c0_117, %c0_118], %253 {strides = array<i32>} : memref<8x128xf32, #tpu.memory_space<vmem>>, vector<8x128xf32>,
      %cst_119 = arith.constant 0.000000e+00 : f32
      %255 = vector.broadcast %cst_119 : f32 to vector<8x128xf32>
      %c0_120 = arith.constant 0 : index
      %c0_121 = arith.constant 0 : index
      %256 = vector.load %arg7[%c0_120, %c0_121] : memref<8x128xf32, #tpu.memory_space<vmem>>, vector<8x128xf32>
      tpu.vector_store %arg7[%c0_120, %c0_121], %255 {strides = array<i32>} : memref<8x128xf32, #tpu.memory_space<vmem>>, vector<8x128xf32>,
    } else {
    }
    %c0 = arith.constant 0 : index
    %c0_1 = arith.constant 0 : index
    %3 = vector.load %arg3[%c0, %c0_1] : memref<128x512xf32, #tpu.memory_space<vmem>>, vector<128x512xf32>
    %c0_2 = arith.constant 0 : index
    %c0_3 = arith.constant 0 : index
    %4 = vector.load %arg4[%c0_2, %c0_3] : memref<1x512xf32, #tpu.memory_space<vmem>>, vector<1x512xf32>
    %c0_i32_4 = arith.constant 0 : i32
    %5 = arith.index_cast %c0_i32_4 : i32 to index
    %c0_5 = arith.constant 0 : index
    %c0_6 = arith.constant 0 : index
    %6 = vector.load %arg2[%5, %c0_5, %c0_6] : memref<8x8x512xf32, #tpu.memory_space<vmem>>, vector<1x8x512xf32>
    %7 = vector.shape_cast %6 : vector<1x8x512xf32> to vector<8x512xf32>
    %c0_7 = arith.constant 0 : index
    %c0_8 = arith.constant 0 : index
    %8 = vector.load %arg6[%c0_7, %c0_8] : memref<8x128xf32, #tpu.memory_space<vmem>>, vector<8x128xf32>
    %cst = arith.constant dense<0.000000e+00> : vector<8x512xf32>
    %9 = tpu.matmul %8, %3, %cst {dimension_numbers = #tpu.dot_dimension_numbers<[1], [0], [0], [1], [0, 0, 1, 1], [], []>} : vector<8x128xf32>, vector<128x512xf32>, vector<8x512xf32> -> vector<8x512xf32>
    %10 = arith.addf %9, %7 : vector<8x512xf32>
    %11 = vector.broadcast %4 : vector<1x512xf32> to vector<8x512xf32>
    %12 = arith.addf %10, %11 : vector<8x512xf32>
    %13 = vector.extract_strided_slice %12 {offsets = [0, 0], sizes = [8, 384], strides = [1, 1]} : vector<8x512xf32> to vector<8x384xf32>
    %14 = arith.negf %13 : vector<8x384xf32>
    %15 = math.exp %14 : vector<8x384xf32>
    %cst_9 = arith.constant 1.000000e+00 : f32
    %16 = vector.broadcast %cst_9 : f32 to vector<8x384xf32>
    %17 = arith.addf %16, %15 : vector<8x384xf32>
    %18 = arith.divf %16, %17 : vector<8x384xf32>
    %19 = vector.extract_strided_slice %12 {offsets = [0, 384], sizes = [8, 128], strides = [1, 1]} : vector<8x512xf32> to vector<8x128xf32>
    %20 = math.tanh %19 : vector<8x128xf32>
    %21 = vector.extract_strided_slice %18 {offsets = [0, 128], sizes = [8, 128], strides = [1, 1]} : vector<8x384xf32> to vector<8x128xf32>
    %c0_10 = arith.constant 0 : index
    %c0_11 = arith.constant 0 : index
    %22 = vector.load %arg7[%c0_10, %c0_11] : memref<8x128xf32, #tpu.memory_space<vmem>>, vector<8x128xf32>
    %23 = arith.mulf %21, %22 : vector<8x128xf32>
    %24 = vector.extract_strided_slice %18 {offsets = [0, 0], sizes = [8, 128], strides = [1, 1]} : vector<8x384xf32> to vector<8x128xf32>
    %25 = arith.mulf %24, %20 : vector<8x128xf32>
    %26 = arith.addf %23, %25 : vector<8x128xf32>
    %27 = vector.extract_strided_slice %18 {offsets = [0, 256], sizes = [8, 128], strides = [1, 1]} : vector<8x384xf32> to vector<8x128xf32>
    %28 = math.tanh %26 : vector<8x128xf32>
    %29 = arith.mulf %27, %28 : vector<8x128xf32>
    %c0_12 = arith.constant 0 : index
    %c0_13 = arith.constant 0 : index
    %30 = vector.load %arg7[%c0_12, %c0_13] : memref<8x128xf32, #tpu.memory_space<vmem>>, vector<8x128xf32>
    tpu.vector_store %arg7[%c0_12, %c0_13], %26 {strides = array<i32>} : memref<8x128xf32, #tpu.memory_space<vmem>>, vector<8x128xf32>,
    %c0_14 = arith.constant 0 : index
    %c0_15 = arith.constant 0 : index
    %31 = vector.load %arg6[%c0_14, %c0_15] : memref<8x128xf32, #tpu.memory_space<vmem>>, vector<8x128xf32>
    tpu.vector_store %arg6[%c0_14, %c0_15], %29 {strides = array<i32>} : memref<8x128xf32, #tpu.memory_space<vmem>>, vector<8x128xf32>,
    %32 = arith.index_cast %c0_i32_4 : i32 to index
    %c0_16 = arith.constant 0 : index
    %c0_17 = arith.constant 0 : index
    %33 = vector.load %arg5[%32, %c0_16, %c0_17] : memref<8x8x128xf32, #tpu.memory_space<vmem>>, vector<1x8x128xf32>
    %34 = vector.shape_cast %33 : vector<1x8x128xf32> to vector<8x128xf32>
    %35 = vector.shape_cast %29 : vector<8x128xf32> to vector<1x8x128xf32>
    tpu.vector_store %arg5[%32, %c0_16, %c0_17], %35 {strides = array<i32>} : memref<8x8x128xf32, #tpu.memory_space<vmem>>, vector<1x8x128xf32>,
    %c1_i32 = arith.constant 1 : i32
    %36 = arith.index_cast %c1_i32 : i32 to index
    %c0_18 = arith.constant 0 : index
    %c0_19 = arith.constant 0 : index
    %37 = vector.load %arg2[%36, %c0_18, %c0_19] : memref<8x8x512xf32, #tpu.memory_space<vmem>>, vector<1x8x512xf32>
    %38 = vector.shape_cast %37 : vector<1x8x512xf32> to vector<8x512xf32>
    %c0_20 = arith.constant 0 : index
    %c0_21 = arith.constant 0 : index
    %39 = vector.load %arg6[%c0_20, %c0_21] : memref<8x128xf32, #tpu.memory_space<vmem>>, vector<8x128xf32>
    %cst_22 = arith.constant dense<0.000000e+00> : vector<8x512xf32>
    %40 = tpu.matmul %39, %3, %cst_22 {dimension_numbers = #tpu.dot_dimension_numbers<[1], [0], [0], [1], [0, 0, 1, 1], [], []>} : vector<8x128xf32>, vector<128x512xf32>, vector<8x512xf32> -> vector<8x512xf32>
    %41 = arith.addf %40, %38 : vector<8x512xf32>
    %42 = vector.broadcast %4 : vector<1x512xf32> to vector<8x512xf32>
    %43 = arith.addf %41, %42 : vector<8x512xf32>
    %44 = vector.extract_strided_slice %43 {offsets = [0, 0], sizes = [8, 384], strides = [1, 1]} : vector<8x512xf32> to vector<8x384xf32>
    %45 = arith.negf %44 : vector<8x384xf32>
    %46 = math.exp %45 : vector<8x384xf32>
    %cst_23 = arith.constant 1.000000e+00 : f32
    %47 = vector.broadcast %cst_23 : f32 to vector<8x384xf32>
    %48 = arith.addf %47, %46 : vector<8x384xf32>
    %49 = arith.divf %47, %48 : vector<8x384xf32>
    %50 = vector.extract_strided_slice %43 {offsets = [0, 384], sizes = [8, 128], strides = [1, 1]} : vector<8x512xf32> to vector<8x128xf32>
    %51 = math.tanh %50 : vector<8x128xf32>
    %52 = vector.extract_strided_slice %49 {offsets = [0, 128], sizes = [8, 128], strides = [1, 1]} : vector<8x384xf32> to vector<8x128xf32>
    %c0_24 = arith.constant 0 : index
    %c0_25 = arith.constant 0 : index
    %53 = vector.load %arg7[%c0_24, %c0_25] : memref<8x128xf32, #tpu.memory_space<vmem>>, vector<8x128xf32>
    %54 = arith.mulf %52, %53 : vector<8x128xf32>
    %55 = vector.extract_strided_slice %49 {offsets = [0, 0], sizes = [8, 128], strides = [1, 1]} : vector<8x384xf32> to vector<8x128xf32>
    %56 = arith.mulf %55, %51 : vector<8x128xf32>
    %57 = arith.addf %54, %56 : vector<8x128xf32>
    %58 = vector.extract_strided_slice %49 {offsets = [0, 256], sizes = [8, 128], strides = [1, 1]} : vector<8x384xf32> to vector<8x128xf32>
    %59 = math.tanh %57 : vector<8x128xf32>
    %60 = arith.mulf %58, %59 : vector<8x128xf32>
    %c0_26 = arith.constant 0 : index
    %c0_27 = arith.constant 0 : index
    %61 = vector.load %arg7[%c0_26, %c0_27] : memref<8x128xf32, #tpu.memory_space<vmem>>, vector<8x128xf32>
    tpu.vector_store %arg7[%c0_26, %c0_27], %57 {strides = array<i32>} : memref<8x128xf32, #tpu.memory_space<vmem>>, vector<8x128xf32>,
    %c0_28 = arith.constant 0 : index
    %c0_29 = arith.constant 0 : index
    %62 = vector.load %arg6[%c0_28, %c0_29] : memref<8x128xf32, #tpu.memory_space<vmem>>, vector<8x128xf32>
    tpu.vector_store %arg6[%c0_28, %c0_29], %60 {strides = array<i32>} : memref<8x128xf32, #tpu.memory_space<vmem>>, vector<8x128xf32>,
    %63 = arith.index_cast %c1_i32 : i32 to index
    %c0_30 = arith.constant 0 : index
    %c0_31 = arith.constant 0 : index
    %64 = vector.load %arg5[%63, %c0_30, %c0_31] : memref<8x8x128xf32, #tpu.memory_space<vmem>>, vector<1x8x128xf32>
    %65 = vector.shape_cast %64 : vector<1x8x128xf32> to vector<8x128xf32>
    %66 = vector.shape_cast %60 : vector<8x128xf32> to vector<1x8x128xf32>
    tpu.vector_store %arg5[%63, %c0_30, %c0_31], %66 {strides = array<i32>} : memref<8x8x128xf32, #tpu.memory_space<vmem>>, vector<1x8x128xf32>,
    %c2_i32 = arith.constant 2 : i32
    %67 = arith.index_cast %c2_i32 : i32 to index
    %c0_32 = arith.constant 0 : index
    %c0_33 = arith.constant 0 : index
    %68 = vector.load %arg2[%67, %c0_32, %c0_33] : memref<8x8x512xf32, #tpu.memory_space<vmem>>, vector<1x8x512xf32>
    %69 = vector.shape_cast %68 : vector<1x8x512xf32> to vector<8x512xf32>
    %c0_34 = arith.constant 0 : index
    %c0_35 = arith.constant 0 : index
    %70 = vector.load %arg6[%c0_34, %c0_35] : memref<8x128xf32, #tpu.memory_space<vmem>>, vector<8x128xf32>
    %cst_36 = arith.constant dense<0.000000e+00> : vector<8x512xf32>
    %71 = tpu.matmul %70, %3, %cst_36 {dimension_numbers = #tpu.dot_dimension_numbers<[1], [0], [0], [1], [0, 0, 1, 1], [], []>} : vector<8x128xf32>, vector<128x512xf32>, vector<8x512xf32> -> vector<8x512xf32>
    %72 = arith.addf %71, %69 : vector<8x512xf32>
    %73 = vector.broadcast %4 : vector<1x512xf32> to vector<8x512xf32>
    %74 = arith.addf %72, %73 : vector<8x512xf32>
    %75 = vector.extract_strided_slice %74 {offsets = [0, 0], sizes = [8, 384], strides = [1, 1]} : vector<8x512xf32> to vector<8x384xf32>
    %76 = arith.negf %75 : vector<8x384xf32>
    %77 = math.exp %76 : vector<8x384xf32>
    %cst_37 = arith.constant 1.000000e+00 : f32
    %78 = vector.broadcast %cst_37 : f32 to vector<8x384xf32>
    %79 = arith.addf %78, %77 : vector<8x384xf32>
    %80 = arith.divf %78, %79 : vector<8x384xf32>
    %81 = vector.extract_strided_slice %74 {offsets = [0, 384], sizes = [8, 128], strides = [1, 1]} : vector<8x512xf32> to vector<8x128xf32>
    %82 = math.tanh %81 : vector<8x128xf32>
    %83 = vector.extract_strided_slice %80 {offsets = [0, 128], sizes = [8, 128], strides = [1, 1]} : vector<8x384xf32> to vector<8x128xf32>
    %c0_38 = arith.constant 0 : index
    %c0_39 = arith.constant 0 : index
    %84 = vector.load %arg7[%c0_38, %c0_39] : memref<8x128xf32, #tpu.memory_space<vmem>>, vector<8x128xf32>
    %85 = arith.mulf %83, %84 : vector<8x128xf32>
    %86 = vector.extract_strided_slice %80 {offsets = [0, 0], sizes = [8, 128], strides = [1, 1]} : vector<8x384xf32> to vector<8x128xf32>
    %87 = arith.mulf %86, %82 : vector<8x128xf32>
    %88 = arith.addf %85, %87 : vector<8x128xf32>
    %89 = vector.extract_strided_slice %80 {offsets = [0, 256], sizes = [8, 128], strides = [1, 1]} : vector<8x384xf32> to vector<8x128xf32>
    %90 = math.tanh %88 : vector<8x128xf32>
    %91 = arith.mulf %89, %90 : vector<8x128xf32>
    %c0_40 = arith.constant 0 : index
    %c0_41 = arith.constant 0 : index
    %92 = vector.load %arg7[%c0_40, %c0_41] : memref<8x128xf32, #tpu.memory_space<vmem>>, vector<8x128xf32>
    tpu.vector_store %arg7[%c0_40, %c0_41], %88 {strides = array<i32>} : memref<8x128xf32, #tpu.memory_space<vmem>>, vector<8x128xf32>,
    %c0_42 = arith.constant 0 : index
    %c0_43 = arith.constant 0 : index
    %93 = vector.load %arg6[%c0_42, %c0_43] : memref<8x128xf32, #tpu.memory_space<vmem>>, vector<8x128xf32>
    tpu.vector_store %arg6[%c0_42, %c0_43], %91 {strides = array<i32>} : memref<8x128xf32, #tpu.memory_space<vmem>>, vector<8x128xf32>,
    %94 = arith.index_cast %c2_i32 : i32 to index
    %c0_44 = arith.constant 0 : index
    %c0_45 = arith.constant 0 : index
    %95 = vector.load %arg5[%94, %c0_44, %c0_45] : memref<8x8x128xf32, #tpu.memory_space<vmem>>, vector<1x8x128xf32>
    %96 = vector.shape_cast %95 : vector<1x8x128xf32> to vector<8x128xf32>
    %97 = vector.shape_cast %91 : vector<8x128xf32> to vector<1x8x128xf32>
    tpu.vector_store %arg5[%94, %c0_44, %c0_45], %97 {strides = array<i32>} : memref<8x8x128xf32, #tpu.memory_space<vmem>>, vector<1x8x128xf32>,
    %c3_i32 = arith.constant 3 : i32
    %98 = arith.index_cast %c3_i32 : i32 to index
    %c0_46 = arith.constant 0 : index
    %c0_47 = arith.constant 0 : index
    %99 = vector.load %arg2[%98, %c0_46, %c0_47] : memref<8x8x512xf32, #tpu.memory_space<vmem>>, vector<1x8x512xf32>
    %100 = vector.shape_cast %99 : vector<1x8x512xf32> to vector<8x512xf32>
    %c0_48 = arith.constant 0 : index
    %c0_49 = arith.constant 0 : index
    %101 = vector.load %arg6[%c0_48, %c0_49] : memref<8x128xf32, #tpu.memory_space<vmem>>, vector<8x128xf32>
    %cst_50 = arith.constant dense<0.000000e+00> : vector<8x512xf32>
    %102 = tpu.matmul %101, %3, %cst_50 {dimension_numbers = #tpu.dot_dimension_numbers<[1], [0], [0], [1], [0, 0, 1, 1], [], []>} : vector<8x128xf32>, vector<128x512xf32>, vector<8x512xf32> -> vector<8x512xf32>
    %103 = arith.addf %102, %100 : vector<8x512xf32>
    %104 = vector.broadcast %4 : vector<1x512xf32> to vector<8x512xf32>
    %105 = arith.addf %103, %104 : vector<8x512xf32>
    %106 = vector.extract_strided_slice %105 {offsets = [0, 0], sizes = [8, 384], strides = [1, 1]} : vector<8x512xf32> to vector<8x384xf32>
    %107 = arith.negf %106 : vector<8x384xf32>
    %108 = math.exp %107 : vector<8x384xf32>
    %cst_51 = arith.constant 1.000000e+00 : f32
    %109 = vector.broadcast %cst_51 : f32 to vector<8x384xf32>
    %110 = arith.addf %109, %108 : vector<8x384xf32>
    %111 = arith.divf %109, %110 : vector<8x384xf32>
    %112 = vector.extract_strided_slice %105 {offsets = [0, 384], sizes = [8, 128], strides = [1, 1]} : vector<8x512xf32> to vector<8x128xf32>
    %113 = math.tanh %112 : vector<8x128xf32>
    %114 = vector.extract_strided_slice %111 {offsets = [0, 128], sizes = [8, 128], strides = [1, 1]} : vector<8x384xf32> to vector<8x128xf32>
    %c0_52 = arith.constant 0 : index
    %c0_53 = arith.constant 0 : index
    %115 = vector.load %arg7[%c0_52, %c0_53] : memref<8x128xf32, #tpu.memory_space<vmem>>, vector<8x128xf32>
    %116 = arith.mulf %114, %115 : vector<8x128xf32>
    %117 = vector.extract_strided_slice %111 {offsets = [0, 0], sizes = [8, 128], strides = [1, 1]} : vector<8x384xf32> to vector<8x128xf32>
    %118 = arith.mulf %117, %113 : vector<8x128xf32>
    %119 = arith.addf %116, %118 : vector<8x128xf32>
    %120 = vector.extract_strided_slice %111 {offsets = [0, 256], sizes = [8, 128], strides = [1, 1]} : vector<8x384xf32> to vector<8x128xf32>
    %121 = math.tanh %119 : vector<8x128xf32>
    %122 = arith.mulf %120, %121 : vector<8x128xf32>
    %c0_54 = arith.constant 0 : index
    %c0_55 = arith.constant 0 : index
    %123 = vector.load %arg7[%c0_54, %c0_55] : memref<8x128xf32, #tpu.memory_space<vmem>>, vector<8x128xf32>
    tpu.vector_store %arg7[%c0_54, %c0_55], %119 {strides = array<i32>} : memref<8x128xf32, #tpu.memory_space<vmem>>, vector<8x128xf32>,
    %c0_56 = arith.constant 0 : index
    %c0_57 = arith.constant 0 : index
    %124 = vector.load %arg6[%c0_56, %c0_57] : memref<8x128xf32, #tpu.memory_space<vmem>>, vector<8x128xf32>
    tpu.vector_store %arg6[%c0_56, %c0_57], %122 {strides = array<i32>} : memref<8x128xf32, #tpu.memory_space<vmem>>, vector<8x128xf32>,
    %125 = arith.index_cast %c3_i32 : i32 to index
    %c0_58 = arith.constant 0 : index
    %c0_59 = arith.constant 0 : index
    %126 = vector.load %arg5[%125, %c0_58, %c0_59] : memref<8x8x128xf32, #tpu.memory_space<vmem>>, vector<1x8x128xf32>
    %127 = vector.shape_cast %126 : vector<1x8x128xf32> to vector<8x128xf32>
    %128 = vector.shape_cast %122 : vector<8x128xf32> to vector<1x8x128xf32>
    tpu.vector_store %arg5[%125, %c0_58, %c0_59], %128 {strides = array<i32>} : memref<8x8x128xf32, #tpu.memory_space<vmem>>, vector<1x8x128xf32>,
    %c4_i32 = arith.constant 4 : i32
    %129 = arith.index_cast %c4_i32 : i32 to index
    %c0_60 = arith.constant 0 : index
    %c0_61 = arith.constant 0 : index
    %130 = vector.load %arg2[%129, %c0_60, %c0_61] : memref<8x8x512xf32, #tpu.memory_space<vmem>>, vector<1x8x512xf32>
    %131 = vector.shape_cast %130 : vector<1x8x512xf32> to vector<8x512xf32>
    %c0_62 = arith.constant 0 : index
    %c0_63 = arith.constant 0 : index
    %132 = vector.load %arg6[%c0_62, %c0_63] : memref<8x128xf32, #tpu.memory_space<vmem>>, vector<8x128xf32>
    %cst_64 = arith.constant dense<0.000000e+00> : vector<8x512xf32>
    %133 = tpu.matmul %132, %3, %cst_64 {dimension_numbers = #tpu.dot_dimension_numbers<[1], [0], [0], [1], [0, 0, 1, 1], [], []>} : vector<8x128xf32>, vector<128x512xf32>, vector<8x512xf32> -> vector<8x512xf32>
    %134 = arith.addf %133, %131 : vector<8x512xf32>
    %135 = vector.broadcast %4 : vector<1x512xf32> to vector<8x512xf32>
    %136 = arith.addf %134, %135 : vector<8x512xf32>
    %137 = vector.extract_strided_slice %136 {offsets = [0, 0], sizes = [8, 384], strides = [1, 1]} : vector<8x512xf32> to vector<8x384xf32>
    %138 = arith.negf %137 : vector<8x384xf32>
    %139 = math.exp %138 : vector<8x384xf32>
    %cst_65 = arith.constant 1.000000e+00 : f32
    %140 = vector.broadcast %cst_65 : f32 to vector<8x384xf32>
    %141 = arith.addf %140, %139 : vector<8x384xf32>
    %142 = arith.divf %140, %141 : vector<8x384xf32>
    %143 = vector.extract_strided_slice %136 {offsets = [0, 384], sizes = [8, 128], strides = [1, 1]} : vector<8x512xf32> to vector<8x128xf32>
    %144 = math.tanh %143 : vector<8x128xf32>
    %145 = vector.extract_strided_slice %142 {offsets = [0, 128], sizes = [8, 128], strides = [1, 1]} : vector<8x384xf32> to vector<8x128xf32>
    %c0_66 = arith.constant 0 : index
    %c0_67 = arith.constant 0 : index
    %146 = vector.load %arg7[%c0_66, %c0_67] : memref<8x128xf32, #tpu.memory_space<vmem>>, vector<8x128xf32>
    %147 = arith.mulf %145, %146 : vector<8x128xf32>
    %148 = vector.extract_strided_slice %142 {offsets = [0, 0], sizes = [8, 128], strides = [1, 1]} : vector<8x384xf32> to vector<8x128xf32>
    %149 = arith.mulf %148, %144 : vector<8x128xf32>
    %150 = arith.addf %147, %149 : vector<8x128xf32>
    %151 = vector.extract_strided_slice %142 {offsets = [0, 256], sizes = [8, 128], strides = [1, 1]} : vector<8x384xf32> to vector<8x128xf32>
    %152 = math.tanh %150 : vector<8x128xf32>
    %153 = arith.mulf %151, %152 : vector<8x128xf32>
    %c0_68 = arith.constant 0 : index
    %c0_69 = arith.constant 0 : index
    %154 = vector.load %arg7[%c0_68, %c0_69] : memref<8x128xf32, #tpu.memory_space<vmem>>, vector<8x128xf32>
    tpu.vector_store %arg7[%c0_68, %c0_69], %150 {strides = array<i32>} : memref<8x128xf32, #tpu.memory_space<vmem>>, vector<8x128xf32>,
    %c0_70 = arith.constant 0 : index
    %c0_71 = arith.constant 0 : index
    %155 = vector.load %arg6[%c0_70, %c0_71] : memref<8x128xf32, #tpu.memory_space<vmem>>, vector<8x128xf32>
    tpu.vector_store %arg6[%c0_70, %c0_71], %153 {strides = array<i32>} : memref<8x128xf32, #tpu.memory_space<vmem>>, vector<8x128xf32>,
    %156 = arith.index_cast %c4_i32 : i32 to index
    %c0_72 = arith.constant 0 : index
    %c0_73 = arith.constant 0 : index
    %157 = vector.load %arg5[%156, %c0_72, %c0_73] : memref<8x8x128xf32, #tpu.memory_space<vmem>>, vector<1x8x128xf32>
    %158 = vector.shape_cast %157 : vector<1x8x128xf32> to vector<8x128xf32>
    %159 = vector.shape_cast %153 : vector<8x128xf32> to vector<1x8x128xf32>
    tpu.vector_store %arg5[%156, %c0_72, %c0_73], %159 {strides = array<i32>} : memref<8x8x128xf32, #tpu.memory_space<vmem>>, vector<1x8x128xf32>,
    %c5_i32 = arith.constant 5 : i32
    %160 = arith.index_cast %c5_i32 : i32 to index
    %c0_74 = arith.constant 0 : index
    %c0_75 = arith.constant 0 : index
    %161 = vector.load %arg2[%160, %c0_74, %c0_75] : memref<8x8x512xf32, #tpu.memory_space<vmem>>, vector<1x8x512xf32>
    %162 = vector.shape_cast %161 : vector<1x8x512xf32> to vector<8x512xf32>
    %c0_76 = arith.constant 0 : index
    %c0_77 = arith.constant 0 : index
    %163 = vector.load %arg6[%c0_76, %c0_77] : memref<8x128xf32, #tpu.memory_space<vmem>>, vector<8x128xf32>
    %cst_78 = arith.constant dense<0.000000e+00> : vector<8x512xf32>
    %164 = tpu.matmul %163, %3, %cst_78 {dimension_numbers = #tpu.dot_dimension_numbers<[1], [0], [0], [1], [0, 0, 1, 1], [], []>} : vector<8x128xf32>, vector<128x512xf32>, vector<8x512xf32> -> vector<8x512xf32>
    %165 = arith.addf %164, %162 : vector<8x512xf32>
    %166 = vector.broadcast %4 : vector<1x512xf32> to vector<8x512xf32>
    %167 = arith.addf %165, %166 : vector<8x512xf32>
    %168 = vector.extract_strided_slice %167 {offsets = [0, 0], sizes = [8, 384], strides = [1, 1]} : vector<8x512xf32> to vector<8x384xf32>
    %169 = arith.negf %168 : vector<8x384xf32>
    %170 = math.exp %169 : vector<8x384xf32>
    %cst_79 = arith.constant 1.000000e+00 : f32
    %171 = vector.broadcast %cst_79 : f32 to vector<8x384xf32>
    %172 = arith.addf %171, %170 : vector<8x384xf32>
    %173 = arith.divf %171, %172 : vector<8x384xf32>
    %174 = vector.extract_strided_slice %167 {offsets = [0, 384], sizes = [8, 128], strides = [1, 1]} : vector<8x512xf32> to vector<8x128xf32>
    %175 = math.tanh %174 : vector<8x128xf32>
    %176 = vector.extract_strided_slice %173 {offsets = [0, 128], sizes = [8, 128], strides = [1, 1]} : vector<8x384xf32> to vector<8x128xf32>
    %c0_80 = arith.constant 0 : index
    %c0_81 = arith.constant 0 : index
    %177 = vector.load %arg7[%c0_80, %c0_81] : memref<8x128xf32, #tpu.memory_space<vmem>>, vector<8x128xf32>
    %178 = arith.mulf %176, %177 : vector<8x128xf32>
    %179 = vector.extract_strided_slice %173 {offsets = [0, 0], sizes = [8, 128], strides = [1, 1]} : vector<8x384xf32> to vector<8x128xf32>
    %180 = arith.mulf %179, %175 : vector<8x128xf32>
    %181 = arith.addf %178, %180 : vector<8x128xf32>
    %182 = vector.extract_strided_slice %173 {offsets = [0, 256], sizes = [8, 128], strides = [1, 1]} : vector<8x384xf32> to vector<8x128xf32>
    %183 = math.tanh %181 : vector<8x128xf32>
    %184 = arith.mulf %182, %183 : vector<8x128xf32>
    %c0_82 = arith.constant 0 : index
    %c0_83 = arith.constant 0 : index
    %185 = vector.load %arg7[%c0_82, %c0_83] : memref<8x128xf32, #tpu.memory_space<vmem>>, vector<8x128xf32>
    tpu.vector_store %arg7[%c0_82, %c0_83], %181 {strides = array<i32>} : memref<8x128xf32, #tpu.memory_space<vmem>>, vector<8x128xf32>,
    %c0_84 = arith.constant 0 : index
    %c0_85 = arith.constant 0 : index
    %186 = vector.load %arg6[%c0_84, %c0_85] : memref<8x128xf32, #tpu.memory_space<vmem>>, vector<8x128xf32>
    tpu.vector_store %arg6[%c0_84, %c0_85], %184 {strides = array<i32>} : memref<8x128xf32, #tpu.memory_space<vmem>>, vector<8x128xf32>,
    %187 = arith.index_cast %c5_i32 : i32 to index
    %c0_86 = arith.constant 0 : index
    %c0_87 = arith.constant 0 : index
    %188 = vector.load %arg5[%187, %c0_86, %c0_87] : memref<8x8x128xf32, #tpu.memory_space<vmem>>, vector<1x8x128xf32>
    %189 = vector.shape_cast %188 : vector<1x8x128xf32> to vector<8x128xf32>
    %190 = vector.shape_cast %184 : vector<8x128xf32> to vector<1x8x128xf32>
    tpu.vector_store %arg5[%187, %c0_86, %c0_87], %190 {strides = array<i32>} : memref<8x8x128xf32, #tpu.memory_space<vmem>>, vector<1x8x128xf32>,
    %c6_i32 = arith.constant 6 : i32
    %191 = arith.index_cast %c6_i32 : i32 to index
    %c0_88 = arith.constant 0 : index
    %c0_89 = arith.constant 0 : index
    %192 = vector.load %arg2[%191, %c0_88, %c0_89] : memref<8x8x512xf32, #tpu.memory_space<vmem>>, vector<1x8x512xf32>
    %193 = vector.shape_cast %192 : vector<1x8x512xf32> to vector<8x512xf32>
    %c0_90 = arith.constant 0 : index
    %c0_91 = arith.constant 0 : index
    %194 = vector.load %arg6[%c0_90, %c0_91] : memref<8x128xf32, #tpu.memory_space<vmem>>, vector<8x128xf32>
    %cst_92 = arith.constant dense<0.000000e+00> : vector<8x512xf32>
    %195 = tpu.matmul %194, %3, %cst_92 {dimension_numbers = #tpu.dot_dimension_numbers<[1], [0], [0], [1], [0, 0, 1, 1], [], []>} : vector<8x128xf32>, vector<128x512xf32>, vector<8x512xf32> -> vector<8x512xf32>
    %196 = arith.addf %195, %193 : vector<8x512xf32>
    %197 = vector.broadcast %4 : vector<1x512xf32> to vector<8x512xf32>
    %198 = arith.addf %196, %197 : vector<8x512xf32>
    %199 = vector.extract_strided_slice %198 {offsets = [0, 0], sizes = [8, 384], strides = [1, 1]} : vector<8x512xf32> to vector<8x384xf32>
    %200 = arith.negf %199 : vector<8x384xf32>
    %201 = math.exp %200 : vector<8x384xf32>
    %cst_93 = arith.constant 1.000000e+00 : f32
    %202 = vector.broadcast %cst_93 : f32 to vector<8x384xf32>
    %203 = arith.addf %202, %201 : vector<8x384xf32>
    %204 = arith.divf %202, %203 : vector<8x384xf32>
    %205 = vector.extract_strided_slice %198 {offsets = [0, 384], sizes = [8, 128], strides = [1, 1]} : vector<8x512xf32> to vector<8x128xf32>
    %206 = math.tanh %205 : vector<8x128xf32>
    %207 = vector.extract_strided_slice %204 {offsets = [0, 128], sizes = [8, 128], strides = [1, 1]} : vector<8x384xf32> to vector<8x128xf32>
    %c0_94 = arith.constant 0 : index
    %c0_95 = arith.constant 0 : index
    %208 = vector.load %arg7[%c0_94, %c0_95] : memref<8x128xf32, #tpu.memory_space<vmem>>, vector<8x128xf32>
    %209 = arith.mulf %207, %208 : vector<8x128xf32>
    %210 = vector.extract_strided_slice %204 {offsets = [0, 0], sizes = [8, 128], strides = [1, 1]} : vector<8x384xf32> to vector<8x128xf32>
    %211 = arith.mulf %210, %206 : vector<8x128xf32>
    %212 = arith.addf %209, %211 : vector<8x128xf32>
    %213 = vector.extract_strided_slice %204 {offsets = [0, 256], sizes = [8, 128], strides = [1, 1]} : vector<8x384xf32> to vector<8x128xf32>
    %214 = math.tanh %212 : vector<8x128xf32>
    %215 = arith.mulf %213, %214 : vector<8x128xf32>
    %c0_96 = arith.constant 0 : index
    %c0_97 = arith.constant 0 : index
    %216 = vector.load %arg7[%c0_96, %c0_97] : memref<8x128xf32, #tpu.memory_space<vmem>>, vector<8x128xf32>
    tpu.vector_store %arg7[%c0_96, %c0_97], %212 {strides = array<i32>} : memref<8x128xf32, #tpu.memory_space<vmem>>, vector<8x128xf32>,
    %c0_98 = arith.constant 0 : index
    %c0_99 = arith.constant 0 : index
    %217 = vector.load %arg6[%c0_98, %c0_99] : memref<8x128xf32, #tpu.memory_space<vmem>>, vector<8x128xf32>
    tpu.vector_store %arg6[%c0_98, %c0_99], %215 {strides = array<i32>} : memref<8x128xf32, #tpu.memory_space<vmem>>, vector<8x128xf32>,
    %218 = arith.index_cast %c6_i32 : i32 to index
    %c0_100 = arith.constant 0 : index
    %c0_101 = arith.constant 0 : index
    %219 = vector.load %arg5[%218, %c0_100, %c0_101] : memref<8x8x128xf32, #tpu.memory_space<vmem>>, vector<1x8x128xf32>
    %220 = vector.shape_cast %219 : vector<1x8x128xf32> to vector<8x128xf32>
    %221 = vector.shape_cast %215 : vector<8x128xf32> to vector<1x8x128xf32>
    tpu.vector_store %arg5[%218, %c0_100, %c0_101], %221 {strides = array<i32>} : memref<8x8x128xf32, #tpu.memory_space<vmem>>, vector<1x8x128xf32>,
    %c7_i32 = arith.constant 7 : i32
    %222 = arith.index_cast %c7_i32 : i32 to index
    %c0_102 = arith.constant 0 : index
    %c0_103 = arith.constant 0 : index
    %223 = vector.load %arg2[%222, %c0_102, %c0_103] : memref<8x8x512xf32, #tpu.memory_space<vmem>>, vector<1x8x512xf32>
    %224 = vector.shape_cast %223 : vector<1x8x512xf32> to vector<8x512xf32>
    %c0_104 = arith.constant 0 : index
    %c0_105 = arith.constant 0 : index
    %225 = vector.load %arg6[%c0_104, %c0_105] : memref<8x128xf32, #tpu.memory_space<vmem>>, vector<8x128xf32>
    %cst_106 = arith.constant dense<0.000000e+00> : vector<8x512xf32>
    %226 = tpu.matmul %225, %3, %cst_106 {dimension_numbers = #tpu.dot_dimension_numbers<[1], [0], [0], [1], [0, 0, 1, 1], [], []>} : vector<8x128xf32>, vector<128x512xf32>, vector<8x512xf32> -> vector<8x512xf32>
    %227 = arith.addf %226, %224 : vector<8x512xf32>
    %228 = vector.broadcast %4 : vector<1x512xf32> to vector<8x512xf32>
    %229 = arith.addf %227, %228 : vector<8x512xf32>
    %230 = vector.extract_strided_slice %229 {offsets = [0, 0], sizes = [8, 384], strides = [1, 1]} : vector<8x512xf32> to vector<8x384xf32>
    %231 = arith.negf %230 : vector<8x384xf32>
    %232 = math.exp %231 : vector<8x384xf32>
    %cst_107 = arith.constant 1.000000e+00 : f32
    %233 = vector.broadcast %cst_107 : f32 to vector<8x384xf32>
    %234 = arith.addf %233, %232 : vector<8x384xf32>
    %235 = arith.divf %233, %234 : vector<8x384xf32>
    %236 = vector.extract_strided_slice %229 {offsets = [0, 384], sizes = [8, 128], strides = [1, 1]} : vector<8x512xf32> to vector<8x128xf32>
    %237 = math.tanh %236 : vector<8x128xf32>
    %238 = vector.extract_strided_slice %235 {offsets = [0, 128], sizes = [8, 128], strides = [1, 1]} : vector<8x384xf32> to vector<8x128xf32>
    %c0_108 = arith.constant 0 : index
    %c0_109 = arith.constant 0 : index
    %239 = vector.load %arg7[%c0_108, %c0_109] : memref<8x128xf32, #tpu.memory_space<vmem>>, vector<8x128xf32>
    %240 = arith.mulf %238, %239 : vector<8x128xf32>
    %241 = vector.extract_strided_slice %235 {offsets = [0, 0], sizes = [8, 128], strides = [1, 1]} : vector<8x384xf32> to vector<8x128xf32>
    %242 = arith.mulf %241, %237 : vector<8x128xf32>
    %243 = arith.addf %240, %242 : vector<8x128xf32>
    %244 = vector.extract_strided_slice %235 {offsets = [0, 256], sizes = [8, 128], strides = [1, 1]} : vector<8x384xf32> to vector<8x128xf32>
    %245 = math.tanh %243 : vector<8x128xf32>
    %246 = arith.mulf %244, %245 : vector<8x128xf32>
    %c0_110 = arith.constant 0 : index
    %c0_111 = arith.constant 0 : index
    %247 = vector.load %arg7[%c0_110, %c0_111] : memref<8x128xf32, #tpu.memory_space<vmem>>, vector<8x128xf32>
    tpu.vector_store %arg7[%c0_110, %c0_111], %243 {strides = array<i32>} : memref<8x128xf32, #tpu.memory_space<vmem>>, vector<8x128xf32>,
    %c0_112 = arith.constant 0 : index
    %c0_113 = arith.constant 0 : index
    %248 = vector.load %arg6[%c0_112, %c0_113] : memref<8x128xf32, #tpu.memory_space<vmem>>, vector<8x128xf32>
    tpu.vector_store %arg6[%c0_112, %c0_113], %246 {strides = array<i32>} : memref<8x128xf32, #tpu.memory_space<vmem>>, vector<8x128xf32>,
    %249 = arith.index_cast %c7_i32 : i32 to index
    %c0_114 = arith.constant 0 : index
    %c0_115 = arith.constant 0 : index
    %250 = vector.load %arg5[%249, %c0_114, %c0_115] : memref<8x8x128xf32, #tpu.memory_space<vmem>>, vector<1x8x128xf32>
    %251 = vector.shape_cast %250 : vector<1x8x128xf32> to vector<8x128xf32>
    %252 = vector.shape_cast %246 : vector<8x128xf32> to vector<1x8x128xf32>
    tpu.vector_store %arg5[%249, %c0_114, %c0_115], %252 {strides = array<i32>} : memref<8x8x128xf32, #tpu.memory_space<vmem>>, vector<1x8x128xf32>,
    %c8_i32 = arith.constant 8 : i32
    return
  }
  func.func @transform_0(%arg0: i32, %arg1: i32) -> (i32, i32, i32) {
    %c0_i32 = arith.constant 0 : i32
    %c0_i32_0 = arith.constant 0 : i32
    return %arg1, %arg0, %c0_i32 : i32, i32, i32
  }
  func.func @transform_1(%arg0: i32, %arg1: i32) -> (i32, i32) {
    %c0_i32 = arith.constant 0 : i32
    %c0_i32_0 = arith.constant 0 : i32
    %c0_i32_1 = arith.constant 0 : i32
    return %c0_i32, %c0_i32_0 : i32, i32
  }
  func.func @transform_2(%arg0: i32, %arg1: i32) -> (i32, i32) {
    %c0_i32 = arith.constant 0 : i32
    %c0_i32_0 = arith.constant 0 : i32
    %c0_i32_1 = arith.constant 0 : i32
    return %c0_i32, %c0_i32_0 : i32, i32
  }
  func.func @transform_3(%arg0: i32, %arg1: i32) -> (i32, i32, i32) {
    %c0_i32 = arith.constant 0 : i32
    %c0_i32_0 = arith.constant 0 : i32
    return %arg1, %arg0, %c0_i32 : i32, i32, i32
  }
}

module attributes {stable_mosaic.version = 11 : i64} {
  func.func @lstm_seq_kernel(%arg0: i32, %arg1: i32, %arg2: memref<8x8x512xf32, #tpu.memory_space<vmem>>, %arg3: memref<128x512xf32, #tpu.memory_space<vmem>>, %arg4: memref<1x512xf32, #tpu.memory_space<vmem>>, %arg5: memref<8x8x128xf32, #tpu.memory_space<vmem>>, %arg6: memref<8x128xf32, #tpu.memory_space<vmem>>, %arg7: memref<8x128xf32, #tpu.memory_space<vmem>>) attributes {dimension_semantics = [#tpu.dimension_semantics<parallel>, #tpu.dimension_semantics<arbitrary>], iteration_bounds = array<i64: 1, 1>, scalar_prefetch = 0 : i64, scratch_operands = 2 : i64, tpu.core_type = #tpu.core_type<tc>, window_params = [{transform_indices = @transform_0, window_bounds = array<i64: 8, 8, 512>}, {pipeline_mode = #tpu.pipeline_mode<synchronous>, transform_indices = @transform_1, window_bounds = array<i64: 128, 512>}, {pipeline_mode = #tpu.pipeline_mode<synchronous>, transform_indices = @transform_2, window_bounds = array<i64: 1, 512>}, {transform_indices = @transform_3, window_bounds = array<i64: 8, 8, 128>}]} {
    %c0_i32 = arith.constant 0 : i32
    %0 = arith.cmpi eq, %arg1, %c0_i32 : i32
    %1 = arith.extui %0 : i1 to i32
    %c0_i32_0 = arith.constant 0 : i32
    %2 = arith.cmpi ne, %1, %c0_i32_0 : i32
    scf.if %2 {
      %cst_116 = arith.constant 0.000000e+00 : f32
      %253 = vector.broadcast %cst_116 : f32 to vector<8x128xf32>
      %c0_117 = arith.constant 0 : index
      %c0_118 = arith.constant 0 : index
      %254 = vector.load %arg6[%c0_117, %c0_118] : memref<8x128xf32, #tpu.memory_space<vmem>>, vector<8x128xf32>
      tpu.vector_store %arg6[%c0_117, %c0_118], %253 {strides = array<i32>} : memref<8x128xf32, #tpu.memory_space<vmem>>, vector<8x128xf32>,
      %cst_119 = arith.constant 0.000000e+00 : f32
      %255 = vector.broadcast %cst_119 : f32 to vector<8x128xf32>
      %c0_120 = arith.constant 0 : index
      %c0_121 = arith.constant 0 : index
      %256 = vector.load %arg7[%c0_120, %c0_121] : memref<8x128xf32, #tpu.memory_space<vmem>>, vector<8x128xf32>
      tpu.vector_store %arg7[%c0_120, %c0_121], %255 {strides = array<i32>} : memref<8x128xf32, #tpu.memory_space<vmem>>, vector<8x128xf32>,
    } else {
    }
    %c0 = arith.constant 0 : index
    %c0_1 = arith.constant 0 : index
    %3 = vector.load %arg3[%c0, %c0_1] : memref<128x512xf32, #tpu.memory_space<vmem>>, vector<128x512xf32>
    %c0_2 = arith.constant 0 : index
    %c0_3 = arith.constant 0 : index
    %4 = vector.load %arg4[%c0_2, %c0_3] : memref<1x512xf32, #tpu.memory_space<vmem>>, vector<1x512xf32>
    %c0_i32_4 = arith.constant 0 : i32
    %5 = arith.index_cast %c0_i32_4 : i32 to index
    %c0_5 = arith.constant 0 : index
    %c0_6 = arith.constant 0 : index
    %6 = vector.load %arg2[%5, %c0_5, %c0_6] : memref<8x8x512xf32, #tpu.memory_space<vmem>>, vector<1x8x512xf32>
    %7 = vector.shape_cast %6 : vector<1x8x512xf32> to vector<8x512xf32>
    %c0_7 = arith.constant 0 : index
    %c0_8 = arith.constant 0 : index
    %8 = vector.load %arg6[%c0_7, %c0_8] : memref<8x128xf32, #tpu.memory_space<vmem>>, vector<8x128xf32>
    %cst = arith.constant dense<0.000000e+00> : vector<8x512xf32>
    %9 = tpu.matmul %8, %3, %cst {dimension_numbers = #tpu.dot_dimension_numbers<[1], [0], [0], [1], [0, 0, 1, 1], [], []>} : vector<8x128xf32>, vector<128x512xf32>, vector<8x512xf32> -> vector<8x512xf32>
    %10 = arith.addf %9, %7 : vector<8x512xf32>
    %11 = vector.broadcast %4 : vector<1x512xf32> to vector<8x512xf32>
    %12 = arith.addf %10, %11 : vector<8x512xf32>
    %13 = vector.extract_strided_slice %12 {offsets = [0, 0], sizes = [8, 384], strides = [1, 1]} : vector<8x512xf32> to vector<8x384xf32>
    %14 = arith.negf %13 : vector<8x384xf32>
    %15 = math.exp %14 : vector<8x384xf32>
    %cst_9 = arith.constant 1.000000e+00 : f32
    %16 = vector.broadcast %cst_9 : f32 to vector<8x384xf32>
    %17 = arith.addf %16, %15 : vector<8x384xf32>
    %18 = arith.divf %16, %17 : vector<8x384xf32>
    %19 = vector.extract_strided_slice %12 {offsets = [0, 384], sizes = [8, 128], strides = [1, 1]} : vector<8x512xf32> to vector<8x128xf32>
    %20 = math.tanh %19 : vector<8x128xf32>
    %21 = vector.extract_strided_slice %18 {offsets = [0, 128], sizes = [8, 128], strides = [1, 1]} : vector<8x384xf32> to vector<8x128xf32>
    %c0_10 = arith.constant 0 : index
    %c0_11 = arith.constant 0 : index
    %22 = vector.load %arg7[%c0_10, %c0_11] : memref<8x128xf32, #tpu.memory_space<vmem>>, vector<8x128xf32>
    %23 = arith.mulf %21, %22 : vector<8x128xf32>
    %24 = vector.extract_strided_slice %18 {offsets = [0, 0], sizes = [8, 128], strides = [1, 1]} : vector<8x384xf32> to vector<8x128xf32>
    %25 = arith.mulf %24, %20 : vector<8x128xf32>
    %26 = arith.addf %23, %25 : vector<8x128xf32>
    %27 = vector.extract_strided_slice %18 {offsets = [0, 256], sizes = [8, 128], strides = [1, 1]} : vector<8x384xf32> to vector<8x128xf32>
    %28 = math.tanh %26 : vector<8x128xf32>
    %29 = arith.mulf %27, %28 : vector<8x128xf32>
    %c0_12 = arith.constant 0 : index
    %c0_13 = arith.constant 0 : index
    %30 = vector.load %arg7[%c0_12, %c0_13] : memref<8x128xf32, #tpu.memory_space<vmem>>, vector<8x128xf32>
    tpu.vector_store %arg7[%c0_12, %c0_13], %26 {strides = array<i32>} : memref<8x128xf32, #tpu.memory_space<vmem>>, vector<8x128xf32>,
    %c0_14 = arith.constant 0 : index
    %c0_15 = arith.constant 0 : index
    %31 = vector.load %arg6[%c0_14, %c0_15] : memref<8x128xf32, #tpu.memory_space<vmem>>, vector<8x128xf32>
    tpu.vector_store %arg6[%c0_14, %c0_15], %29 {strides = array<i32>} : memref<8x128xf32, #tpu.memory_space<vmem>>, vector<8x128xf32>,
    %32 = arith.index_cast %c0_i32_4 : i32 to index
    %c0_16 = arith.constant 0 : index
    %c0_17 = arith.constant 0 : index
    %33 = vector.load %arg5[%32, %c0_16, %c0_17] : memref<8x8x128xf32, #tpu.memory_space<vmem>>, vector<1x8x128xf32>
    %34 = vector.shape_cast %33 : vector<1x8x128xf32> to vector<8x128xf32>
    %35 = vector.shape_cast %29 : vector<8x128xf32> to vector<1x8x128xf32>
    tpu.vector_store %arg5[%32, %c0_16, %c0_17], %35 {strides = array<i32>} : memref<8x8x128xf32, #tpu.memory_space<vmem>>, vector<1x8x128xf32>,
    %c1_i32 = arith.constant 1 : i32
    %36 = arith.index_cast %c1_i32 : i32 to index
    %c0_18 = arith.constant 0 : index
    %c0_19 = arith.constant 0 : index
    %37 = vector.load %arg2[%36, %c0_18, %c0_19] : memref<8x8x512xf32, #tpu.memory_space<vmem>>, vector<1x8x512xf32>
    %38 = vector.shape_cast %37 : vector<1x8x512xf32> to vector<8x512xf32>
    %c0_20 = arith.constant 0 : index
    %c0_21 = arith.constant 0 : index
    %39 = vector.load %arg6[%c0_20, %c0_21] : memref<8x128xf32, #tpu.memory_space<vmem>>, vector<8x128xf32>
    %cst_22 = arith.constant dense<0.000000e+00> : vector<8x512xf32>
    %40 = tpu.matmul %39, %3, %cst_22 {dimension_numbers = #tpu.dot_dimension_numbers<[1], [0], [0], [1], [0, 0, 1, 1], [], []>} : vector<8x128xf32>, vector<128x512xf32>, vector<8x512xf32> -> vector<8x512xf32>
    %41 = arith.addf %40, %38 : vector<8x512xf32>
    %42 = vector.broadcast %4 : vector<1x512xf32> to vector<8x512xf32>
    %43 = arith.addf %41, %42 : vector<8x512xf32>
    %44 = vector.extract_strided_slice %43 {offsets = [0, 0], sizes = [8, 384], strides = [1, 1]} : vector<8x512xf32> to vector<8x384xf32>
    %45 = arith.negf %44 : vector<8x384xf32>
    %46 = math.exp %45 : vector<8x384xf32>
    %cst_23 = arith.constant 1.000000e+00 : f32
    %47 = vector.broadcast %cst_23 : f32 to vector<8x384xf32>
    %48 = arith.addf %47, %46 : vector<8x384xf32>
    %49 = arith.divf %47, %48 : vector<8x384xf32>
    %50 = vector.extract_strided_slice %43 {offsets = [0, 384], sizes = [8, 128], strides = [1, 1]} : vector<8x512xf32> to vector<8x128xf32>
    %51 = math.tanh %50 : vector<8x128xf32>
    %52 = vector.extract_strided_slice %49 {offsets = [0, 128], sizes = [8, 128], strides = [1, 1]} : vector<8x384xf32> to vector<8x128xf32>
    %c0_24 = arith.constant 0 : index
    %c0_25 = arith.constant 0 : index
    %53 = vector.load %arg7[%c0_24, %c0_25] : memref<8x128xf32, #tpu.memory_space<vmem>>, vector<8x128xf32>
    %54 = arith.mulf %52, %53 : vector<8x128xf32>
    %55 = vector.extract_strided_slice %49 {offsets = [0, 0], sizes = [8, 128], strides = [1, 1]} : vector<8x384xf32> to vector<8x128xf32>
    %56 = arith.mulf %55, %51 : vector<8x128xf32>
    %57 = arith.addf %54, %56 : vector<8x128xf32>
    %58 = vector.extract_strided_slice %49 {offsets = [0, 256], sizes = [8, 128], strides = [1, 1]} : vector<8x384xf32> to vector<8x128xf32>
    %59 = math.tanh %57 : vector<8x128xf32>
    %60 = arith.mulf %58, %59 : vector<8x128xf32>
    %c0_26 = arith.constant 0 : index
    %c0_27 = arith.constant 0 : index
    %61 = vector.load %arg7[%c0_26, %c0_27] : memref<8x128xf32, #tpu.memory_space<vmem>>, vector<8x128xf32>
    tpu.vector_store %arg7[%c0_26, %c0_27], %57 {strides = array<i32>} : memref<8x128xf32, #tpu.memory_space<vmem>>, vector<8x128xf32>,
    %c0_28 = arith.constant 0 : index
    %c0_29 = arith.constant 0 : index
    %62 = vector.load %arg6[%c0_28, %c0_29] : memref<8x128xf32, #tpu.memory_space<vmem>>, vector<8x128xf32>
    tpu.vector_store %arg6[%c0_28, %c0_29], %60 {strides = array<i32>} : memref<8x128xf32, #tpu.memory_space<vmem>>, vector<8x128xf32>,
    %63 = arith.index_cast %c1_i32 : i32 to index
    %c0_30 = arith.constant 0 : index
    %c0_31 = arith.constant 0 : index
    %64 = vector.load %arg5[%63, %c0_30, %c0_31] : memref<8x8x128xf32, #tpu.memory_space<vmem>>, vector<1x8x128xf32>
    %65 = vector.shape_cast %64 : vector<1x8x128xf32> to vector<8x128xf32>
    %66 = vector.shape_cast %60 : vector<8x128xf32> to vector<1x8x128xf32>
    tpu.vector_store %arg5[%63, %c0_30, %c0_31], %66 {strides = array<i32>} : memref<8x8x128xf32, #tpu.memory_space<vmem>>, vector<1x8x128xf32>,
    %c2_i32 = arith.constant 2 : i32
    %67 = arith.index_cast %c2_i32 : i32 to index
    %c0_32 = arith.constant 0 : index
    %c0_33 = arith.constant 0 : index
    %68 = vector.load %arg2[%67, %c0_32, %c0_33] : memref<8x8x512xf32, #tpu.memory_space<vmem>>, vector<1x8x512xf32>
    %69 = vector.shape_cast %68 : vector<1x8x512xf32> to vector<8x512xf32>
    %c0_34 = arith.constant 0 : index
    %c0_35 = arith.constant 0 : index
    %70 = vector.load %arg6[%c0_34, %c0_35] : memref<8x128xf32, #tpu.memory_space<vmem>>, vector<8x128xf32>
    %cst_36 = arith.constant dense<0.000000e+00> : vector<8x512xf32>
    %71 = tpu.matmul %70, %3, %cst_36 {dimension_numbers = #tpu.dot_dimension_numbers<[1], [0], [0], [1], [0, 0, 1, 1], [], []>} : vector<8x128xf32>, vector<128x512xf32>, vector<8x512xf32> -> vector<8x512xf32>
    %72 = arith.addf %71, %69 : vector<8x512xf32>
    %73 = vector.broadcast %4 : vector<1x512xf32> to vector<8x512xf32>
    %74 = arith.addf %72, %73 : vector<8x512xf32>
    %75 = vector.extract_strided_slice %74 {offsets = [0, 0], sizes = [8, 384], strides = [1, 1]} : vector<8x512xf32> to vector<8x384xf32>
    %76 = arith.negf %75 : vector<8x384xf32>
    %77 = math.exp %76 : vector<8x384xf32>
    %cst_37 = arith.constant 1.000000e+00 : f32
    %78 = vector.broadcast %cst_37 : f32 to vector<8x384xf32>
    %79 = arith.addf %78, %77 : vector<8x384xf32>
    %80 = arith.divf %78, %79 : vector<8x384xf32>
    %81 = vector.extract_strided_slice %74 {offsets = [0, 384], sizes = [8, 128], strides = [1, 1]} : vector<8x512xf32> to vector<8x128xf32>
    %82 = math.tanh %81 : vector<8x128xf32>
    %83 = vector.extract_strided_slice %80 {offsets = [0, 128], sizes = [8, 128], strides = [1, 1]} : vector<8x384xf32> to vector<8x128xf32>
    %c0_38 = arith.constant 0 : index
    %c0_39 = arith.constant 0 : index
    %84 = vector.load %arg7[%c0_38, %c0_39] : memref<8x128xf32, #tpu.memory_space<vmem>>, vector<8x128xf32>
    %85 = arith.mulf %83, %84 : vector<8x128xf32>
    %86 = vector.extract_strided_slice %80 {offsets = [0, 0], sizes = [8, 128], strides = [1, 1]} : vector<8x384xf32> to vector<8x128xf32>
    %87 = arith.mulf %86, %82 : vector<8x128xf32>
    %88 = arith.addf %85, %87 : vector<8x128xf32>
    %89 = vector.extract_strided_slice %80 {offsets = [0, 256], sizes = [8, 128], strides = [1, 1]} : vector<8x384xf32> to vector<8x128xf32>
    %90 = math.tanh %88 : vector<8x128xf32>
    %91 = arith.mulf %89, %90 : vector<8x128xf32>
    %c0_40 = arith.constant 0 : index
    %c0_41 = arith.constant 0 : index
    %92 = vector.load %arg7[%c0_40, %c0_41] : memref<8x128xf32, #tpu.memory_space<vmem>>, vector<8x128xf32>
    tpu.vector_store %arg7[%c0_40, %c0_41], %88 {strides = array<i32>} : memref<8x128xf32, #tpu.memory_space<vmem>>, vector<8x128xf32>,
    %c0_42 = arith.constant 0 : index
    %c0_43 = arith.constant 0 : index
    %93 = vector.load %arg6[%c0_42, %c0_43] : memref<8x128xf32, #tpu.memory_space<vmem>>, vector<8x128xf32>
    tpu.vector_store %arg6[%c0_42, %c0_43], %91 {strides = array<i32>} : memref<8x128xf32, #tpu.memory_space<vmem>>, vector<8x128xf32>,
    %94 = arith.index_cast %c2_i32 : i32 to index
    %c0_44 = arith.constant 0 : index
    %c0_45 = arith.constant 0 : index
    %95 = vector.load %arg5[%94, %c0_44, %c0_45] : memref<8x8x128xf32, #tpu.memory_space<vmem>>, vector<1x8x128xf32>
    %96 = vector.shape_cast %95 : vector<1x8x128xf32> to vector<8x128xf32>
    %97 = vector.shape_cast %91 : vector<8x128xf32> to vector<1x8x128xf32>
    tpu.vector_store %arg5[%94, %c0_44, %c0_45], %97 {strides = array<i32>} : memref<8x8x128xf32, #tpu.memory_space<vmem>>, vector<1x8x128xf32>,
    %c3_i32 = arith.constant 3 : i32
    %98 = arith.index_cast %c3_i32 : i32 to index
    %c0_46 = arith.constant 0 : index
    %c0_47 = arith.constant 0 : index
    %99 = vector.load %arg2[%98, %c0_46, %c0_47] : memref<8x8x512xf32, #tpu.memory_space<vmem>>, vector<1x8x512xf32>
    %100 = vector.shape_cast %99 : vector<1x8x512xf32> to vector<8x512xf32>
    %c0_48 = arith.constant 0 : index
    %c0_49 = arith.constant 0 : index
    %101 = vector.load %arg6[%c0_48, %c0_49] : memref<8x128xf32, #tpu.memory_space<vmem>>, vector<8x128xf32>
    %cst_50 = arith.constant dense<0.000000e+00> : vector<8x512xf32>
    %102 = tpu.matmul %101, %3, %cst_50 {dimension_numbers = #tpu.dot_dimension_numbers<[1], [0], [0], [1], [0, 0, 1, 1], [], []>} : vector<8x128xf32>, vector<128x512xf32>, vector<8x512xf32> -> vector<8x512xf32>
    %103 = arith.addf %102, %100 : vector<8x512xf32>
    %104 = vector.broadcast %4 : vector<1x512xf32> to vector<8x512xf32>
    %105 = arith.addf %103, %104 : vector<8x512xf32>
    %106 = vector.extract_strided_slice %105 {offsets = [0, 0], sizes = [8, 384], strides = [1, 1]} : vector<8x512xf32> to vector<8x384xf32>
    %107 = arith.negf %106 : vector<8x384xf32>
    %108 = math.exp %107 : vector<8x384xf32>
    %cst_51 = arith.constant 1.000000e+00 : f32
    %109 = vector.broadcast %cst_51 : f32 to vector<8x384xf32>
    %110 = arith.addf %109, %108 : vector<8x384xf32>
    %111 = arith.divf %109, %110 : vector<8x384xf32>
    %112 = vector.extract_strided_slice %105 {offsets = [0, 384], sizes = [8, 128], strides = [1, 1]} : vector<8x512xf32> to vector<8x128xf32>
    %113 = math.tanh %112 : vector<8x128xf32>
    %114 = vector.extract_strided_slice %111 {offsets = [0, 128], sizes = [8, 128], strides = [1, 1]} : vector<8x384xf32> to vector<8x128xf32>
    %c0_52 = arith.constant 0 : index
    %c0_53 = arith.constant 0 : index
    %115 = vector.load %arg7[%c0_52, %c0_53] : memref<8x128xf32, #tpu.memory_space<vmem>>, vector<8x128xf32>
    %116 = arith.mulf %114, %115 : vector<8x128xf32>
    %117 = vector.extract_strided_slice %111 {offsets = [0, 0], sizes = [8, 128], strides = [1, 1]} : vector<8x384xf32> to vector<8x128xf32>
    %118 = arith.mulf %117, %113 : vector<8x128xf32>
    %119 = arith.addf %116, %118 : vector<8x128xf32>
    %120 = vector.extract_strided_slice %111 {offsets = [0, 256], sizes = [8, 128], strides = [1, 1]} : vector<8x384xf32> to vector<8x128xf32>
    %121 = math.tanh %119 : vector<8x128xf32>
    %122 = arith.mulf %120, %121 : vector<8x128xf32>
    %c0_54 = arith.constant 0 : index
    %c0_55 = arith.constant 0 : index
    %123 = vector.load %arg7[%c0_54, %c0_55] : memref<8x128xf32, #tpu.memory_space<vmem>>, vector<8x128xf32>
    tpu.vector_store %arg7[%c0_54, %c0_55], %119 {strides = array<i32>} : memref<8x128xf32, #tpu.memory_space<vmem>>, vector<8x128xf32>,
    %c0_56 = arith.constant 0 : index
    %c0_57 = arith.constant 0 : index
    %124 = vector.load %arg6[%c0_56, %c0_57] : memref<8x128xf32, #tpu.memory_space<vmem>>, vector<8x128xf32>
    tpu.vector_store %arg6[%c0_56, %c0_57], %122 {strides = array<i32>} : memref<8x128xf32, #tpu.memory_space<vmem>>, vector<8x128xf32>,
    %125 = arith.index_cast %c3_i32 : i32 to index
    %c0_58 = arith.constant 0 : index
    %c0_59 = arith.constant 0 : index
    %126 = vector.load %arg5[%125, %c0_58, %c0_59] : memref<8x8x128xf32, #tpu.memory_space<vmem>>, vector<1x8x128xf32>
    %127 = vector.shape_cast %126 : vector<1x8x128xf32> to vector<8x128xf32>
    %128 = vector.shape_cast %122 : vector<8x128xf32> to vector<1x8x128xf32>
    tpu.vector_store %arg5[%125, %c0_58, %c0_59], %128 {strides = array<i32>} : memref<8x8x128xf32, #tpu.memory_space<vmem>>, vector<1x8x128xf32>,
    %c4_i32 = arith.constant 4 : i32
    %129 = arith.index_cast %c4_i32 : i32 to index
    %c0_60 = arith.constant 0 : index
    %c0_61 = arith.constant 0 : index
    %130 = vector.load %arg2[%129, %c0_60, %c0_61] : memref<8x8x512xf32, #tpu.memory_space<vmem>>, vector<1x8x512xf32>
    %131 = vector.shape_cast %130 : vector<1x8x512xf32> to vector<8x512xf32>
    %c0_62 = arith.constant 0 : index
    %c0_63 = arith.constant 0 : index
    %132 = vector.load %arg6[%c0_62, %c0_63] : memref<8x128xf32, #tpu.memory_space<vmem>>, vector<8x128xf32>
    %cst_64 = arith.constant dense<0.000000e+00> : vector<8x512xf32>
    %133 = tpu.matmul %132, %3, %cst_64 {dimension_numbers = #tpu.dot_dimension_numbers<[1], [0], [0], [1], [0, 0, 1, 1], [], []>} : vector<8x128xf32>, vector<128x512xf32>, vector<8x512xf32> -> vector<8x512xf32>
    %134 = arith.addf %133, %131 : vector<8x512xf32>
    %135 = vector.broadcast %4 : vector<1x512xf32> to vector<8x512xf32>
    %136 = arith.addf %134, %135 : vector<8x512xf32>
    %137 = vector.extract_strided_slice %136 {offsets = [0, 0], sizes = [8, 384], strides = [1, 1]} : vector<8x512xf32> to vector<8x384xf32>
    %138 = arith.negf %137 : vector<8x384xf32>
    %139 = math.exp %138 : vector<8x384xf32>
    %cst_65 = arith.constant 1.000000e+00 : f32
    %140 = vector.broadcast %cst_65 : f32 to vector<8x384xf32>
    %141 = arith.addf %140, %139 : vector<8x384xf32>
    %142 = arith.divf %140, %141 : vector<8x384xf32>
    %143 = vector.extract_strided_slice %136 {offsets = [0, 384], sizes = [8, 128], strides = [1, 1]} : vector<8x512xf32> to vector<8x128xf32>
    %144 = math.tanh %143 : vector<8x128xf32>
    %145 = vector.extract_strided_slice %142 {offsets = [0, 128], sizes = [8, 128], strides = [1, 1]} : vector<8x384xf32> to vector<8x128xf32>
    %c0_66 = arith.constant 0 : index
    %c0_67 = arith.constant 0 : index
    %146 = vector.load %arg7[%c0_66, %c0_67] : memref<8x128xf32, #tpu.memory_space<vmem>>, vector<8x128xf32>
    %147 = arith.mulf %145, %146 : vector<8x128xf32>
    %148 = vector.extract_strided_slice %142 {offsets = [0, 0], sizes = [8, 128], strides = [1, 1]} : vector<8x384xf32> to vector<8x128xf32>
    %149 = arith.mulf %148, %144 : vector<8x128xf32>
    %150 = arith.addf %147, %149 : vector<8x128xf32>
    %151 = vector.extract_strided_slice %142 {offsets = [0, 256], sizes = [8, 128], strides = [1, 1]} : vector<8x384xf32> to vector<8x128xf32>
    %152 = math.tanh %150 : vector<8x128xf32>
    %153 = arith.mulf %151, %152 : vector<8x128xf32>
    %c0_68 = arith.constant 0 : index
    %c0_69 = arith.constant 0 : index
    %154 = vector.load %arg7[%c0_68, %c0_69] : memref<8x128xf32, #tpu.memory_space<vmem>>, vector<8x128xf32>
    tpu.vector_store %arg7[%c0_68, %c0_69], %150 {strides = array<i32>} : memref<8x128xf32, #tpu.memory_space<vmem>>, vector<8x128xf32>,
    %c0_70 = arith.constant 0 : index
    %c0_71 = arith.constant 0 : index
    %155 = vector.load %arg6[%c0_70, %c0_71] : memref<8x128xf32, #tpu.memory_space<vmem>>, vector<8x128xf32>
    tpu.vector_store %arg6[%c0_70, %c0_71], %153 {strides = array<i32>} : memref<8x128xf32, #tpu.memory_space<vmem>>, vector<8x128xf32>,
    %156 = arith.index_cast %c4_i32 : i32 to index
    %c0_72 = arith.constant 0 : index
    %c0_73 = arith.constant 0 : index
    %157 = vector.load %arg5[%156, %c0_72, %c0_73] : memref<8x8x128xf32, #tpu.memory_space<vmem>>, vector<1x8x128xf32>
    %158 = vector.shape_cast %157 : vector<1x8x128xf32> to vector<8x128xf32>
    %159 = vector.shape_cast %153 : vector<8x128xf32> to vector<1x8x128xf32>
    tpu.vector_store %arg5[%156, %c0_72, %c0_73], %159 {strides = array<i32>} : memref<8x8x128xf32, #tpu.memory_space<vmem>>, vector<1x8x128xf32>,
    %c5_i32 = arith.constant 5 : i32
    %160 = arith.index_cast %c5_i32 : i32 to index
    %c0_74 = arith.constant 0 : index
    %c0_75 = arith.constant 0 : index
    %161 = vector.load %arg2[%160, %c0_74, %c0_75] : memref<8x8x512xf32, #tpu.memory_space<vmem>>, vector<1x8x512xf32>
    %162 = vector.shape_cast %161 : vector<1x8x512xf32> to vector<8x512xf32>
    %c0_76 = arith.constant 0 : index
    %c0_77 = arith.constant 0 : index
    %163 = vector.load %arg6[%c0_76, %c0_77] : memref<8x128xf32, #tpu.memory_space<vmem>>, vector<8x128xf32>
    %cst_78 = arith.constant dense<0.000000e+00> : vector<8x512xf32>
    %164 = tpu.matmul %163, %3, %cst_78 {dimension_numbers = #tpu.dot_dimension_numbers<[1], [0], [0], [1], [0, 0, 1, 1], [], []>} : vector<8x128xf32>, vector<128x512xf32>, vector<8x512xf32> -> vector<8x512xf32>
    %165 = arith.addf %164, %162 : vector<8x512xf32>
    %166 = vector.broadcast %4 : vector<1x512xf32> to vector<8x512xf32>
    %167 = arith.addf %165, %166 : vector<8x512xf32>
    %168 = vector.extract_strided_slice %167 {offsets = [0, 0], sizes = [8, 384], strides = [1, 1]} : vector<8x512xf32> to vector<8x384xf32>
    %169 = arith.negf %168 : vector<8x384xf32>
    %170 = math.exp %169 : vector<8x384xf32>
    %cst_79 = arith.constant 1.000000e+00 : f32
    %171 = vector.broadcast %cst_79 : f32 to vector<8x384xf32>
    %172 = arith.addf %171, %170 : vector<8x384xf32>
    %173 = arith.divf %171, %172 : vector<8x384xf32>
    %174 = vector.extract_strided_slice %167 {offsets = [0, 384], sizes = [8, 128], strides = [1, 1]} : vector<8x512xf32> to vector<8x128xf32>
    %175 = math.tanh %174 : vector<8x128xf32>
    %176 = vector.extract_strided_slice %173 {offsets = [0, 128], sizes = [8, 128], strides = [1, 1]} : vector<8x384xf32> to vector<8x128xf32>
    %c0_80 = arith.constant 0 : index
    %c0_81 = arith.constant 0 : index
    %177 = vector.load %arg7[%c0_80, %c0_81] : memref<8x128xf32, #tpu.memory_space<vmem>>, vector<8x128xf32>
    %178 = arith.mulf %176, %177 : vector<8x128xf32>
    %179 = vector.extract_strided_slice %173 {offsets = [0, 0], sizes = [8, 128], strides = [1, 1]} : vector<8x384xf32> to vector<8x128xf32>
    %180 = arith.mulf %179, %175 : vector<8x128xf32>
    %181 = arith.addf %178, %180 : vector<8x128xf32>
    %182 = vector.extract_strided_slice %173 {offsets = [0, 256], sizes = [8, 128], strides = [1, 1]} : vector<8x384xf32> to vector<8x128xf32>
    %183 = math.tanh %181 : vector<8x128xf32>
    %184 = arith.mulf %182, %183 : vector<8x128xf32>
    %c0_82 = arith.constant 0 : index
    %c0_83 = arith.constant 0 : index
    %185 = vector.load %arg7[%c0_82, %c0_83] : memref<8x128xf32, #tpu.memory_space<vmem>>, vector<8x128xf32>
    tpu.vector_store %arg7[%c0_82, %c0_83], %181 {strides = array<i32>} : memref<8x128xf32, #tpu.memory_space<vmem>>, vector<8x128xf32>,
    %c0_84 = arith.constant 0 : index
    %c0_85 = arith.constant 0 : index
    %186 = vector.load %arg6[%c0_84, %c0_85] : memref<8x128xf32, #tpu.memory_space<vmem>>, vector<8x128xf32>
    tpu.vector_store %arg6[%c0_84, %c0_85], %184 {strides = array<i32>} : memref<8x128xf32, #tpu.memory_space<vmem>>, vector<8x128xf32>,
    %187 = arith.index_cast %c5_i32 : i32 to index
    %c0_86 = arith.constant 0 : index
    %c0_87 = arith.constant 0 : index
    %188 = vector.load %arg5[%187, %c0_86, %c0_87] : memref<8x8x128xf32, #tpu.memory_space<vmem>>, vector<1x8x128xf32>
    %189 = vector.shape_cast %188 : vector<1x8x128xf32> to vector<8x128xf32>
    %190 = vector.shape_cast %184 : vector<8x128xf32> to vector<1x8x128xf32>
    tpu.vector_store %arg5[%187, %c0_86, %c0_87], %190 {strides = array<i32>} : memref<8x8x128xf32, #tpu.memory_space<vmem>>, vector<1x8x128xf32>,
    %c6_i32 = arith.constant 6 : i32
    %191 = arith.index_cast %c6_i32 : i32 to index
    %c0_88 = arith.constant 0 : index
    %c0_89 = arith.constant 0 : index
    %192 = vector.load %arg2[%191, %c0_88, %c0_89] : memref<8x8x512xf32, #tpu.memory_space<vmem>>, vector<1x8x512xf32>
    %193 = vector.shape_cast %192 : vector<1x8x512xf32> to vector<8x512xf32>
    %c0_90 = arith.constant 0 : index
    %c0_91 = arith.constant 0 : index
    %194 = vector.load %arg6[%c0_90, %c0_91] : memref<8x128xf32, #tpu.memory_space<vmem>>, vector<8x128xf32>
    %cst_92 = arith.constant dense<0.000000e+00> : vector<8x512xf32>
    %195 = tpu.matmul %194, %3, %cst_92 {dimension_numbers = #tpu.dot_dimension_numbers<[1], [0], [0], [1], [0, 0, 1, 1], [], []>} : vector<8x128xf32>, vector<128x512xf32>, vector<8x512xf32> -> vector<8x512xf32>
    %196 = arith.addf %195, %193 : vector<8x512xf32>
    %197 = vector.broadcast %4 : vector<1x512xf32> to vector<8x512xf32>
    %198 = arith.addf %196, %197 : vector<8x512xf32>
    %199 = vector.extract_strided_slice %198 {offsets = [0, 0], sizes = [8, 384], strides = [1, 1]} : vector<8x512xf32> to vector<8x384xf32>
    %200 = arith.negf %199 : vector<8x384xf32>
    %201 = math.exp %200 : vector<8x384xf32>
    %cst_93 = arith.constant 1.000000e+00 : f32
    %202 = vector.broadcast %cst_93 : f32 to vector<8x384xf32>
    %203 = arith.addf %202, %201 : vector<8x384xf32>
    %204 = arith.divf %202, %203 : vector<8x384xf32>
    %205 = vector.extract_strided_slice %198 {offsets = [0, 384], sizes = [8, 128], strides = [1, 1]} : vector<8x512xf32> to vector<8x128xf32>
    %206 = math.tanh %205 : vector<8x128xf32>
    %207 = vector.extract_strided_slice %204 {offsets = [0, 128], sizes = [8, 128], strides = [1, 1]} : vector<8x384xf32> to vector<8x128xf32>
    %c0_94 = arith.constant 0 : index
    %c0_95 = arith.constant 0 : index
    %208 = vector.load %arg7[%c0_94, %c0_95] : memref<8x128xf32, #tpu.memory_space<vmem>>, vector<8x128xf32>
    %209 = arith.mulf %207, %208 : vector<8x128xf32>
    %210 = vector.extract_strided_slice %204 {offsets = [0, 0], sizes = [8, 128], strides = [1, 1]} : vector<8x384xf32> to vector<8x128xf32>
    %211 = arith.mulf %210, %206 : vector<8x128xf32>
    %212 = arith.addf %209, %211 : vector<8x128xf32>
    %213 = vector.extract_strided_slice %204 {offsets = [0, 256], sizes = [8, 128], strides = [1, 1]} : vector<8x384xf32> to vector<8x128xf32>
    %214 = math.tanh %212 : vector<8x128xf32>
    %215 = arith.mulf %213, %214 : vector<8x128xf32>
    %c0_96 = arith.constant 0 : index
    %c0_97 = arith.constant 0 : index
    %216 = vector.load %arg7[%c0_96, %c0_97] : memref<8x128xf32, #tpu.memory_space<vmem>>, vector<8x128xf32>
    tpu.vector_store %arg7[%c0_96, %c0_97], %212 {strides = array<i32>} : memref<8x128xf32, #tpu.memory_space<vmem>>, vector<8x128xf32>,
    %c0_98 = arith.constant 0 : index
    %c0_99 = arith.constant 0 : index
    %217 = vector.load %arg6[%c0_98, %c0_99] : memref<8x128xf32, #tpu.memory_space<vmem>>, vector<8x128xf32>
    tpu.vector_store %arg6[%c0_98, %c0_99], %215 {strides = array<i32>} : memref<8x128xf32, #tpu.memory_space<vmem>>, vector<8x128xf32>,
    %218 = arith.index_cast %c6_i32 : i32 to index
    %c0_100 = arith.constant 0 : index
    %c0_101 = arith.constant 0 : index
    %219 = vector.load %arg5[%218, %c0_100, %c0_101] : memref<8x8x128xf32, #tpu.memory_space<vmem>>, vector<1x8x128xf32>
    %220 = vector.shape_cast %219 : vector<1x8x128xf32> to vector<8x128xf32>
    %221 = vector.shape_cast %215 : vector<8x128xf32> to vector<1x8x128xf32>
    tpu.vector_store %arg5[%218, %c0_100, %c0_101], %221 {strides = array<i32>} : memref<8x8x128xf32, #tpu.memory_space<vmem>>, vector<1x8x128xf32>,
    %c7_i32 = arith.constant 7 : i32
    %222 = arith.index_cast %c7_i32 : i32 to index
    %c0_102 = arith.constant 0 : index
    %c0_103 = arith.constant 0 : index
    %223 = vector.load %arg2[%222, %c0_102, %c0_103] : memref<8x8x512xf32, #tpu.memory_space<vmem>>, vector<1x8x512xf32>
    %224 = vector.shape_cast %223 : vector<1x8x512xf32> to vector<8x512xf32>
    %c0_104 = arith.constant 0 : index
    %c0_105 = arith.constant 0 : index
    %225 = vector.load %arg6[%c0_104, %c0_105] : memref<8x128xf32, #tpu.memory_space<vmem>>, vector<8x128xf32>
    %cst_106 = arith.constant dense<0.000000e+00> : vector<8x512xf32>
    %226 = tpu.matmul %225, %3, %cst_106 {dimension_numbers = #tpu.dot_dimension_numbers<[1], [0], [0], [1], [0, 0, 1, 1], [], []>} : vector<8x128xf32>, vector<128x512xf32>, vector<8x512xf32> -> vector<8x512xf32>
    %227 = arith.addf %226, %224 : vector<8x512xf32>
    %228 = vector.broadcast %4 : vector<1x512xf32> to vector<8x512xf32>
    %229 = arith.addf %227, %228 : vector<8x512xf32>
    %230 = vector.extract_strided_slice %229 {offsets = [0, 0], sizes = [8, 384], strides = [1, 1]} : vector<8x512xf32> to vector<8x384xf32>
    %231 = arith.negf %230 : vector<8x384xf32>
    %232 = math.exp %231 : vector<8x384xf32>
    %cst_107 = arith.constant 1.000000e+00 : f32
    %233 = vector.broadcast %cst_107 : f32 to vector<8x384xf32>
    %234 = arith.addf %233, %232 : vector<8x384xf32>
    %235 = arith.divf %233, %234 : vector<8x384xf32>
    %236 = vector.extract_strided_slice %229 {offsets = [0, 384], sizes = [8, 128], strides = [1, 1]} : vector<8x512xf32> to vector<8x128xf32>
    %237 = math.tanh %236 : vector<8x128xf32>
    %238 = vector.extract_strided_slice %235 {offsets = [0, 128], sizes = [8, 128], strides = [1, 1]} : vector<8x384xf32> to vector<8x128xf32>
    %c0_108 = arith.constant 0 : index
    %c0_109 = arith.constant 0 : index
    %239 = vector.load %arg7[%c0_108, %c0_109] : memref<8x128xf32, #tpu.memory_space<vmem>>, vector<8x128xf32>
    %240 = arith.mulf %238, %239 : vector<8x128xf32>
    %241 = vector.extract_strided_slice %235 {offsets = [0, 0], sizes = [8, 128], strides = [1, 1]} : vector<8x384xf32> to vector<8x128xf32>
    %242 = arith.mulf %241, %237 : vector<8x128xf32>
    %243 = arith.addf %240, %242 : vector<8x128xf32>
    %244 = vector.extract_strided_slice %235 {offsets = [0, 256], sizes = [8, 128], strides = [1, 1]} : vector<8x384xf32> to vector<8x128xf32>
    %245 = math.tanh %243 : vector<8x128xf32>
    %246 = arith.mulf %244, %245 : vector<8x128xf32>
    %c0_110 = arith.constant 0 : index
    %c0_111 = arith.constant 0 : index
    %247 = vector.load %arg7[%c0_110, %c0_111] : memref<8x128xf32, #tpu.memory_space<vmem>>, vector<8x128xf32>
    tpu.vector_store %arg7[%c0_110, %c0_111], %243 {strides = array<i32>} : memref<8x128xf32, #tpu.memory_space<vmem>>, vector<8x128xf32>,
    %c0_112 = arith.constant 0 : index
    %c0_113 = arith.constant 0 : index
    %248 = vector.load %arg6[%c0_112, %c0_113] : memref<8x128xf32, #tpu.memory_space<vmem>>, vector<8x128xf32>
    tpu.vector_store %arg6[%c0_112, %c0_113], %246 {strides = array<i32>} : memref<8x128xf32, #tpu.memory_space<vmem>>, vector<8x128xf32>,
    %249 = arith.index_cast %c7_i32 : i32 to index
    %c0_114 = arith.constant 0 : index
    %c0_115 = arith.constant 0 : index
    %250 = vector.load %arg5[%249, %c0_114, %c0_115] : memref<8x8x128xf32, #tpu.memory_space<vmem>>, vector<1x8x128xf32>
    %251 = vector.shape_cast %250 : vector<1x8x128xf32> to vector<8x128xf32>
    %252 = vector.shape_cast %246 : vector<8x128xf32> to vector<1x8x128xf32>
    tpu.vector_store %arg5[%249, %c0_114, %c0_115], %252 {strides = array<i32>} : memref<8x8x128xf32, #tpu.memory_space<vmem>>, vector<1x8x128xf32>,
    %c8_i32 = arith.constant 8 : i32
    return
  }
  func.func @transform_0(%arg0: i32, %arg1: i32) -> (i32, i32, i32) {
    %c0_i32 = arith.constant 0 : i32
    %c0_i32_0 = arith.constant 0 : i32
    return %arg1, %arg0, %c0_i32 : i32, i32, i32
  }
  func.func @transform_1(%arg0: i32, %arg1: i32) -> (i32, i32) {
    %c0_i32 = arith.constant 0 : i32
    %c0_i32_0 = arith.constant 0 : i32
    %c0_i32_1 = arith.constant 0 : i32
    return %c0_i32, %c0_i32_0 : i32, i32
  }
  func.func @transform_2(%arg0: i32, %arg1: i32) -> (i32, i32) {
    %c0_i32 = arith.constant 0 : i32
    %c0_i32_0 = arith.constant 0 : i32
    %c0_i32_1 = arith.constant 0 : i32
    return %c0_i32, %c0_i32_0 : i32, i32
  }
  func.func @transform_3(%arg0: i32, %arg1: i32) -> (i32, i32, i32) {
    %c0_i32 = arith.constant 0 : i32
    %c0_i32_0 = arith.constant 0 : i32
    return %arg1, %arg0, %c0_i32 : i32, i32, i32
  }
}

module attributes {stable_mosaic.version = 11 : i64} {
  func.func @lstm_last_kernel(%arg0: i32, %arg1: i32, %arg2: memref<8x8x512xf32, #tpu.memory_space<vmem>>, %arg3: memref<128x512xf32, #tpu.memory_space<vmem>>, %arg4: memref<1x512xf32, #tpu.memory_space<vmem>>, %arg5: memref<8x128xf32, #tpu.memory_space<vmem>>, %arg6: memref<8x128xf32, #tpu.memory_space<vmem>>, %arg7: memref<8x128xf32, #tpu.memory_space<vmem>>) attributes {dimension_semantics = [#tpu.dimension_semantics<parallel>, #tpu.dimension_semantics<arbitrary>], iteration_bounds = array<i64: 1, 1>, scalar_prefetch = 0 : i64, scratch_operands = 2 : i64, tpu.core_type = #tpu.core_type<tc>, window_params = [{transform_indices = @transform_0, window_bounds = array<i64: 8, 8, 512>}, {pipeline_mode = #tpu.pipeline_mode<synchronous>, transform_indices = @transform_1, window_bounds = array<i64: 128, 512>}, {pipeline_mode = #tpu.pipeline_mode<synchronous>, transform_indices = @transform_2, window_bounds = array<i64: 1, 512>}, {transform_indices = @transform_3, window_bounds = array<i64: 8, 128>}]} {
    %c0_i32 = arith.constant 0 : i32
    %0 = arith.cmpi eq, %arg1, %c0_i32 : i32
    %1 = arith.extui %0 : i1 to i32
    %c0_i32_0 = arith.constant 0 : i32
    %2 = arith.cmpi ne, %1, %c0_i32_0 : i32
    scf.if %2 {
      %cst_117 = arith.constant 0.000000e+00 : f32
      %254 = vector.broadcast %cst_117 : f32 to vector<8x128xf32>
      %c0_118 = arith.constant 0 : index
      %c0_119 = arith.constant 0 : index
      %255 = vector.load %arg6[%c0_118, %c0_119] : memref<8x128xf32, #tpu.memory_space<vmem>>, vector<8x128xf32>
      tpu.vector_store %arg6[%c0_118, %c0_119], %254 {strides = array<i32>} : memref<8x128xf32, #tpu.memory_space<vmem>>, vector<8x128xf32>,
      %cst_120 = arith.constant 0.000000e+00 : f32
      %256 = vector.broadcast %cst_120 : f32 to vector<8x128xf32>
      %c0_121 = arith.constant 0 : index
      %c0_122 = arith.constant 0 : index
      %257 = vector.load %arg7[%c0_121, %c0_122] : memref<8x128xf32, #tpu.memory_space<vmem>>, vector<8x128xf32>
      tpu.vector_store %arg7[%c0_121, %c0_122], %256 {strides = array<i32>} : memref<8x128xf32, #tpu.memory_space<vmem>>, vector<8x128xf32>,
    } else {
    }
    %c0 = arith.constant 0 : index
    %c0_1 = arith.constant 0 : index
    %3 = vector.load %arg3[%c0, %c0_1] : memref<128x512xf32, #tpu.memory_space<vmem>>, vector<128x512xf32>
    %c0_2 = arith.constant 0 : index
    %c0_3 = arith.constant 0 : index
    %4 = vector.load %arg4[%c0_2, %c0_3] : memref<1x512xf32, #tpu.memory_space<vmem>>, vector<1x512xf32>
    %c8_i32 = arith.constant 8 : i32
    %5 = arith.muli %arg1, %c8_i32 : i32
    %c0_i32_4 = arith.constant 0 : i32
    %6 = arith.index_cast %c0_i32_4 : i32 to index
    %c0_5 = arith.constant 0 : index
    %c0_6 = arith.constant 0 : index
    %7 = vector.load %arg2[%6, %c0_5, %c0_6] : memref<8x8x512xf32, #tpu.memory_space<vmem>>, vector<1x8x512xf32>
    %8 = vector.shape_cast %7 : vector<1x8x512xf32> to vector<8x512xf32>
    %c0_7 = arith.constant 0 : index
    %c0_8 = arith.constant 0 : index
    %9 = vector.load %arg6[%c0_7, %c0_8] : memref<8x128xf32, #tpu.memory_space<vmem>>, vector<8x128xf32>
    %cst = arith.constant dense<0.000000e+00> : vector<8x512xf32>
    %10 = tpu.matmul %9, %3, %cst {dimension_numbers = #tpu.dot_dimension_numbers<[1], [0], [0], [1], [0, 0, 1, 1], [], []>} : vector<8x128xf32>, vector<128x512xf32>, vector<8x512xf32> -> vector<8x512xf32>
    %11 = arith.addf %10, %8 : vector<8x512xf32>
    %12 = vector.broadcast %4 : vector<1x512xf32> to vector<8x512xf32>
    %13 = arith.addf %11, %12 : vector<8x512xf32>
    %14 = vector.extract_strided_slice %13 {offsets = [0, 0], sizes = [8, 384], strides = [1, 1]} : vector<8x512xf32> to vector<8x384xf32>
    %15 = arith.negf %14 : vector<8x384xf32>
    %16 = math.exp %15 : vector<8x384xf32>
    %cst_9 = arith.constant 1.000000e+00 : f32
    %17 = vector.broadcast %cst_9 : f32 to vector<8x384xf32>
    %18 = arith.addf %17, %16 : vector<8x384xf32>
    %19 = arith.divf %17, %18 : vector<8x384xf32>
    %20 = vector.extract_strided_slice %13 {offsets = [0, 384], sizes = [8, 128], strides = [1, 1]} : vector<8x512xf32> to vector<8x128xf32>
    %21 = math.tanh %20 : vector<8x128xf32>
    %22 = vector.extract_strided_slice %19 {offsets = [0, 128], sizes = [8, 128], strides = [1, 1]} : vector<8x384xf32> to vector<8x128xf32>
    %c0_10 = arith.constant 0 : index
    %c0_11 = arith.constant 0 : index
    %23 = vector.load %arg7[%c0_10, %c0_11] : memref<8x128xf32, #tpu.memory_space<vmem>>, vector<8x128xf32>
    %24 = arith.mulf %22, %23 : vector<8x128xf32>
    %25 = vector.extract_strided_slice %19 {offsets = [0, 0], sizes = [8, 128], strides = [1, 1]} : vector<8x384xf32> to vector<8x128xf32>
    %26 = arith.mulf %25, %21 : vector<8x128xf32>
    %27 = arith.addf %24, %26 : vector<8x128xf32>
    %28 = vector.extract_strided_slice %19 {offsets = [0, 256], sizes = [8, 128], strides = [1, 1]} : vector<8x384xf32> to vector<8x128xf32>
    %29 = math.tanh %27 : vector<8x128xf32>
    %30 = arith.mulf %28, %29 : vector<8x128xf32>
    %c0_12 = arith.constant 0 : index
    %c0_13 = arith.constant 0 : index
    %31 = vector.load %arg7[%c0_12, %c0_13] : memref<8x128xf32, #tpu.memory_space<vmem>>, vector<8x128xf32>
    tpu.vector_store %arg7[%c0_12, %c0_13], %27 {strides = array<i32>} : memref<8x128xf32, #tpu.memory_space<vmem>>, vector<8x128xf32>,
    %c0_14 = arith.constant 0 : index
    %c0_15 = arith.constant 0 : index
    %32 = vector.load %arg6[%c0_14, %c0_15] : memref<8x128xf32, #tpu.memory_space<vmem>>, vector<8x128xf32>
    tpu.vector_store %arg6[%c0_14, %c0_15], %30 {strides = array<i32>} : memref<8x128xf32, #tpu.memory_space<vmem>>, vector<8x128xf32>,
    %33 = arith.addi %5, %c0_i32_4 : i32
    %c7_i32 = arith.constant 7 : i32
    %34 = arith.cmpi eq, %33, %c7_i32 : i32
    %35 = arith.extui %34 : i1 to i32
    %c0_i32_16 = arith.constant 0 : i32
    %36 = arith.cmpi ne, %35, %c0_i32_16 : i32
    scf.if %36 {
      %c0_117 = arith.constant 0 : index
      %c0_118 = arith.constant 0 : index
      %254 = vector.load %arg5[%c0_117, %c0_118] : memref<8x128xf32, #tpu.memory_space<vmem>>, vector<8x128xf32>
      tpu.vector_store %arg5[%c0_117, %c0_118], %30 {strides = array<i32>} : memref<8x128xf32, #tpu.memory_space<vmem>>, vector<8x128xf32>,
    } else {
    }
    %c1_i32 = arith.constant 1 : i32
    %37 = arith.index_cast %c1_i32 : i32 to index
    %c0_17 = arith.constant 0 : index
    %c0_18 = arith.constant 0 : index
    %38 = vector.load %arg2[%37, %c0_17, %c0_18] : memref<8x8x512xf32, #tpu.memory_space<vmem>>, vector<1x8x512xf32>
    %39 = vector.shape_cast %38 : vector<1x8x512xf32> to vector<8x512xf32>
    %c0_19 = arith.constant 0 : index
    %c0_20 = arith.constant 0 : index
    %40 = vector.load %arg6[%c0_19, %c0_20] : memref<8x128xf32, #tpu.memory_space<vmem>>, vector<8x128xf32>
    %cst_21 = arith.constant dense<0.000000e+00> : vector<8x512xf32>
    %41 = tpu.matmul %40, %3, %cst_21 {dimension_numbers = #tpu.dot_dimension_numbers<[1], [0], [0], [1], [0, 0, 1, 1], [], []>} : vector<8x128xf32>, vector<128x512xf32>, vector<8x512xf32> -> vector<8x512xf32>
    %42 = arith.addf %41, %39 : vector<8x512xf32>
    %43 = vector.broadcast %4 : vector<1x512xf32> to vector<8x512xf32>
    %44 = arith.addf %42, %43 : vector<8x512xf32>
    %45 = vector.extract_strided_slice %44 {offsets = [0, 0], sizes = [8, 384], strides = [1, 1]} : vector<8x512xf32> to vector<8x384xf32>
    %46 = arith.negf %45 : vector<8x384xf32>
    %47 = math.exp %46 : vector<8x384xf32>
    %cst_22 = arith.constant 1.000000e+00 : f32
    %48 = vector.broadcast %cst_22 : f32 to vector<8x384xf32>
    %49 = arith.addf %48, %47 : vector<8x384xf32>
    %50 = arith.divf %48, %49 : vector<8x384xf32>
    %51 = vector.extract_strided_slice %44 {offsets = [0, 384], sizes = [8, 128], strides = [1, 1]} : vector<8x512xf32> to vector<8x128xf32>
    %52 = math.tanh %51 : vector<8x128xf32>
    %53 = vector.extract_strided_slice %50 {offsets = [0, 128], sizes = [8, 128], strides = [1, 1]} : vector<8x384xf32> to vector<8x128xf32>
    %c0_23 = arith.constant 0 : index
    %c0_24 = arith.constant 0 : index
    %54 = vector.load %arg7[%c0_23, %c0_24] : memref<8x128xf32, #tpu.memory_space<vmem>>, vector<8x128xf32>
    %55 = arith.mulf %53, %54 : vector<8x128xf32>
    %56 = vector.extract_strided_slice %50 {offsets = [0, 0], sizes = [8, 128], strides = [1, 1]} : vector<8x384xf32> to vector<8x128xf32>
    %57 = arith.mulf %56, %52 : vector<8x128xf32>
    %58 = arith.addf %55, %57 : vector<8x128xf32>
    %59 = vector.extract_strided_slice %50 {offsets = [0, 256], sizes = [8, 128], strides = [1, 1]} : vector<8x384xf32> to vector<8x128xf32>
    %60 = math.tanh %58 : vector<8x128xf32>
    %61 = arith.mulf %59, %60 : vector<8x128xf32>
    %c0_25 = arith.constant 0 : index
    %c0_26 = arith.constant 0 : index
    %62 = vector.load %arg7[%c0_25, %c0_26] : memref<8x128xf32, #tpu.memory_space<vmem>>, vector<8x128xf32>
    tpu.vector_store %arg7[%c0_25, %c0_26], %58 {strides = array<i32>} : memref<8x128xf32, #tpu.memory_space<vmem>>, vector<8x128xf32>,
    %c0_27 = arith.constant 0 : index
    %c0_28 = arith.constant 0 : index
    %63 = vector.load %arg6[%c0_27, %c0_28] : memref<8x128xf32, #tpu.memory_space<vmem>>, vector<8x128xf32>
    tpu.vector_store %arg6[%c0_27, %c0_28], %61 {strides = array<i32>} : memref<8x128xf32, #tpu.memory_space<vmem>>, vector<8x128xf32>,
    %64 = arith.addi %5, %c1_i32 : i32
    %c7_i32_29 = arith.constant 7 : i32
    %65 = arith.cmpi eq, %64, %c7_i32_29 : i32
    %66 = arith.extui %65 : i1 to i32
    %c0_i32_30 = arith.constant 0 : i32
    %67 = arith.cmpi ne, %66, %c0_i32_30 : i32
    scf.if %67 {
      %c0_117 = arith.constant 0 : index
      %c0_118 = arith.constant 0 : index
      %254 = vector.load %arg5[%c0_117, %c0_118] : memref<8x128xf32, #tpu.memory_space<vmem>>, vector<8x128xf32>
      tpu.vector_store %arg5[%c0_117, %c0_118], %61 {strides = array<i32>} : memref<8x128xf32, #tpu.memory_space<vmem>>, vector<8x128xf32>,
    } else {
    }
    %c2_i32 = arith.constant 2 : i32
    %68 = arith.index_cast %c2_i32 : i32 to index
    %c0_31 = arith.constant 0 : index
    %c0_32 = arith.constant 0 : index
    %69 = vector.load %arg2[%68, %c0_31, %c0_32] : memref<8x8x512xf32, #tpu.memory_space<vmem>>, vector<1x8x512xf32>
    %70 = vector.shape_cast %69 : vector<1x8x512xf32> to vector<8x512xf32>
    %c0_33 = arith.constant 0 : index
    %c0_34 = arith.constant 0 : index
    %71 = vector.load %arg6[%c0_33, %c0_34] : memref<8x128xf32, #tpu.memory_space<vmem>>, vector<8x128xf32>
    %cst_35 = arith.constant dense<0.000000e+00> : vector<8x512xf32>
    %72 = tpu.matmul %71, %3, %cst_35 {dimension_numbers = #tpu.dot_dimension_numbers<[1], [0], [0], [1], [0, 0, 1, 1], [], []>} : vector<8x128xf32>, vector<128x512xf32>, vector<8x512xf32> -> vector<8x512xf32>
    %73 = arith.addf %72, %70 : vector<8x512xf32>
    %74 = vector.broadcast %4 : vector<1x512xf32> to vector<8x512xf32>
    %75 = arith.addf %73, %74 : vector<8x512xf32>
    %76 = vector.extract_strided_slice %75 {offsets = [0, 0], sizes = [8, 384], strides = [1, 1]} : vector<8x512xf32> to vector<8x384xf32>
    %77 = arith.negf %76 : vector<8x384xf32>
    %78 = math.exp %77 : vector<8x384xf32>
    %cst_36 = arith.constant 1.000000e+00 : f32
    %79 = vector.broadcast %cst_36 : f32 to vector<8x384xf32>
    %80 = arith.addf %79, %78 : vector<8x384xf32>
    %81 = arith.divf %79, %80 : vector<8x384xf32>
    %82 = vector.extract_strided_slice %75 {offsets = [0, 384], sizes = [8, 128], strides = [1, 1]} : vector<8x512xf32> to vector<8x128xf32>
    %83 = math.tanh %82 : vector<8x128xf32>
    %84 = vector.extract_strided_slice %81 {offsets = [0, 128], sizes = [8, 128], strides = [1, 1]} : vector<8x384xf32> to vector<8x128xf32>
    %c0_37 = arith.constant 0 : index
    %c0_38 = arith.constant 0 : index
    %85 = vector.load %arg7[%c0_37, %c0_38] : memref<8x128xf32, #tpu.memory_space<vmem>>, vector<8x128xf32>
    %86 = arith.mulf %84, %85 : vector<8x128xf32>
    %87 = vector.extract_strided_slice %81 {offsets = [0, 0], sizes = [8, 128], strides = [1, 1]} : vector<8x384xf32> to vector<8x128xf32>
    %88 = arith.mulf %87, %83 : vector<8x128xf32>
    %89 = arith.addf %86, %88 : vector<8x128xf32>
    %90 = vector.extract_strided_slice %81 {offsets = [0, 256], sizes = [8, 128], strides = [1, 1]} : vector<8x384xf32> to vector<8x128xf32>
    %91 = math.tanh %89 : vector<8x128xf32>
    %92 = arith.mulf %90, %91 : vector<8x128xf32>
    %c0_39 = arith.constant 0 : index
    %c0_40 = arith.constant 0 : index
    %93 = vector.load %arg7[%c0_39, %c0_40] : memref<8x128xf32, #tpu.memory_space<vmem>>, vector<8x128xf32>
    tpu.vector_store %arg7[%c0_39, %c0_40], %89 {strides = array<i32>} : memref<8x128xf32, #tpu.memory_space<vmem>>, vector<8x128xf32>,
    %c0_41 = arith.constant 0 : index
    %c0_42 = arith.constant 0 : index
    %94 = vector.load %arg6[%c0_41, %c0_42] : memref<8x128xf32, #tpu.memory_space<vmem>>, vector<8x128xf32>
    tpu.vector_store %arg6[%c0_41, %c0_42], %92 {strides = array<i32>} : memref<8x128xf32, #tpu.memory_space<vmem>>, vector<8x128xf32>,
    %95 = arith.addi %5, %c2_i32 : i32
    %c7_i32_43 = arith.constant 7 : i32
    %96 = arith.cmpi eq, %95, %c7_i32_43 : i32
    %97 = arith.extui %96 : i1 to i32
    %c0_i32_44 = arith.constant 0 : i32
    %98 = arith.cmpi ne, %97, %c0_i32_44 : i32
    scf.if %98 {
      %c0_117 = arith.constant 0 : index
      %c0_118 = arith.constant 0 : index
      %254 = vector.load %arg5[%c0_117, %c0_118] : memref<8x128xf32, #tpu.memory_space<vmem>>, vector<8x128xf32>
      tpu.vector_store %arg5[%c0_117, %c0_118], %92 {strides = array<i32>} : memref<8x128xf32, #tpu.memory_space<vmem>>, vector<8x128xf32>,
    } else {
    }
    %c3_i32 = arith.constant 3 : i32
    %99 = arith.index_cast %c3_i32 : i32 to index
    %c0_45 = arith.constant 0 : index
    %c0_46 = arith.constant 0 : index
    %100 = vector.load %arg2[%99, %c0_45, %c0_46] : memref<8x8x512xf32, #tpu.memory_space<vmem>>, vector<1x8x512xf32>
    %101 = vector.shape_cast %100 : vector<1x8x512xf32> to vector<8x512xf32>
    %c0_47 = arith.constant 0 : index
    %c0_48 = arith.constant 0 : index
    %102 = vector.load %arg6[%c0_47, %c0_48] : memref<8x128xf32, #tpu.memory_space<vmem>>, vector<8x128xf32>
    %cst_49 = arith.constant dense<0.000000e+00> : vector<8x512xf32>
    %103 = tpu.matmul %102, %3, %cst_49 {dimension_numbers = #tpu.dot_dimension_numbers<[1], [0], [0], [1], [0, 0, 1, 1], [], []>} : vector<8x128xf32>, vector<128x512xf32>, vector<8x512xf32> -> vector<8x512xf32>
    %104 = arith.addf %103, %101 : vector<8x512xf32>
    %105 = vector.broadcast %4 : vector<1x512xf32> to vector<8x512xf32>
    %106 = arith.addf %104, %105 : vector<8x512xf32>
    %107 = vector.extract_strided_slice %106 {offsets = [0, 0], sizes = [8, 384], strides = [1, 1]} : vector<8x512xf32> to vector<8x384xf32>
    %108 = arith.negf %107 : vector<8x384xf32>
    %109 = math.exp %108 : vector<8x384xf32>
    %cst_50 = arith.constant 1.000000e+00 : f32
    %110 = vector.broadcast %cst_50 : f32 to vector<8x384xf32>
    %111 = arith.addf %110, %109 : vector<8x384xf32>
    %112 = arith.divf %110, %111 : vector<8x384xf32>
    %113 = vector.extract_strided_slice %106 {offsets = [0, 384], sizes = [8, 128], strides = [1, 1]} : vector<8x512xf32> to vector<8x128xf32>
    %114 = math.tanh %113 : vector<8x128xf32>
    %115 = vector.extract_strided_slice %112 {offsets = [0, 128], sizes = [8, 128], strides = [1, 1]} : vector<8x384xf32> to vector<8x128xf32>
    %c0_51 = arith.constant 0 : index
    %c0_52 = arith.constant 0 : index
    %116 = vector.load %arg7[%c0_51, %c0_52] : memref<8x128xf32, #tpu.memory_space<vmem>>, vector<8x128xf32>
    %117 = arith.mulf %115, %116 : vector<8x128xf32>
    %118 = vector.extract_strided_slice %112 {offsets = [0, 0], sizes = [8, 128], strides = [1, 1]} : vector<8x384xf32> to vector<8x128xf32>
    %119 = arith.mulf %118, %114 : vector<8x128xf32>
    %120 = arith.addf %117, %119 : vector<8x128xf32>
    %121 = vector.extract_strided_slice %112 {offsets = [0, 256], sizes = [8, 128], strides = [1, 1]} : vector<8x384xf32> to vector<8x128xf32>
    %122 = math.tanh %120 : vector<8x128xf32>
    %123 = arith.mulf %121, %122 : vector<8x128xf32>
    %c0_53 = arith.constant 0 : index
    %c0_54 = arith.constant 0 : index
    %124 = vector.load %arg7[%c0_53, %c0_54] : memref<8x128xf32, #tpu.memory_space<vmem>>, vector<8x128xf32>
    tpu.vector_store %arg7[%c0_53, %c0_54], %120 {strides = array<i32>} : memref<8x128xf32, #tpu.memory_space<vmem>>, vector<8x128xf32>,
    %c0_55 = arith.constant 0 : index
    %c0_56 = arith.constant 0 : index
    %125 = vector.load %arg6[%c0_55, %c0_56] : memref<8x128xf32, #tpu.memory_space<vmem>>, vector<8x128xf32>
    tpu.vector_store %arg6[%c0_55, %c0_56], %123 {strides = array<i32>} : memref<8x128xf32, #tpu.memory_space<vmem>>, vector<8x128xf32>,
    %126 = arith.addi %5, %c3_i32 : i32
    %c7_i32_57 = arith.constant 7 : i32
    %127 = arith.cmpi eq, %126, %c7_i32_57 : i32
    %128 = arith.extui %127 : i1 to i32
    %c0_i32_58 = arith.constant 0 : i32
    %129 = arith.cmpi ne, %128, %c0_i32_58 : i32
    scf.if %129 {
      %c0_117 = arith.constant 0 : index
      %c0_118 = arith.constant 0 : index
      %254 = vector.load %arg5[%c0_117, %c0_118] : memref<8x128xf32, #tpu.memory_space<vmem>>, vector<8x128xf32>
      tpu.vector_store %arg5[%c0_117, %c0_118], %123 {strides = array<i32>} : memref<8x128xf32, #tpu.memory_space<vmem>>, vector<8x128xf32>,
    } else {
    }
    %c4_i32 = arith.constant 4 : i32
    %130 = arith.index_cast %c4_i32 : i32 to index
    %c0_59 = arith.constant 0 : index
    %c0_60 = arith.constant 0 : index
    %131 = vector.load %arg2[%130, %c0_59, %c0_60] : memref<8x8x512xf32, #tpu.memory_space<vmem>>, vector<1x8x512xf32>
    %132 = vector.shape_cast %131 : vector<1x8x512xf32> to vector<8x512xf32>
    %c0_61 = arith.constant 0 : index
    %c0_62 = arith.constant 0 : index
    %133 = vector.load %arg6[%c0_61, %c0_62] : memref<8x128xf32, #tpu.memory_space<vmem>>, vector<8x128xf32>
    %cst_63 = arith.constant dense<0.000000e+00> : vector<8x512xf32>
    %134 = tpu.matmul %133, %3, %cst_63 {dimension_numbers = #tpu.dot_dimension_numbers<[1], [0], [0], [1], [0, 0, 1, 1], [], []>} : vector<8x128xf32>, vector<128x512xf32>, vector<8x512xf32> -> vector<8x512xf32>
    %135 = arith.addf %134, %132 : vector<8x512xf32>
    %136 = vector.broadcast %4 : vector<1x512xf32> to vector<8x512xf32>
    %137 = arith.addf %135, %136 : vector<8x512xf32>
    %138 = vector.extract_strided_slice %137 {offsets = [0, 0], sizes = [8, 384], strides = [1, 1]} : vector<8x512xf32> to vector<8x384xf32>
    %139 = arith.negf %138 : vector<8x384xf32>
    %140 = math.exp %139 : vector<8x384xf32>
    %cst_64 = arith.constant 1.000000e+00 : f32
    %141 = vector.broadcast %cst_64 : f32 to vector<8x384xf32>
    %142 = arith.addf %141, %140 : vector<8x384xf32>
    %143 = arith.divf %141, %142 : vector<8x384xf32>
    %144 = vector.extract_strided_slice %137 {offsets = [0, 384], sizes = [8, 128], strides = [1, 1]} : vector<8x512xf32> to vector<8x128xf32>
    %145 = math.tanh %144 : vector<8x128xf32>
    %146 = vector.extract_strided_slice %143 {offsets = [0, 128], sizes = [8, 128], strides = [1, 1]} : vector<8x384xf32> to vector<8x128xf32>
    %c0_65 = arith.constant 0 : index
    %c0_66 = arith.constant 0 : index
    %147 = vector.load %arg7[%c0_65, %c0_66] : memref<8x128xf32, #tpu.memory_space<vmem>>, vector<8x128xf32>
    %148 = arith.mulf %146, %147 : vector<8x128xf32>
    %149 = vector.extract_strided_slice %143 {offsets = [0, 0], sizes = [8, 128], strides = [1, 1]} : vector<8x384xf32> to vector<8x128xf32>
    %150 = arith.mulf %149, %145 : vector<8x128xf32>
    %151 = arith.addf %148, %150 : vector<8x128xf32>
    %152 = vector.extract_strided_slice %143 {offsets = [0, 256], sizes = [8, 128], strides = [1, 1]} : vector<8x384xf32> to vector<8x128xf32>
    %153 = math.tanh %151 : vector<8x128xf32>
    %154 = arith.mulf %152, %153 : vector<8x128xf32>
    %c0_67 = arith.constant 0 : index
    %c0_68 = arith.constant 0 : index
    %155 = vector.load %arg7[%c0_67, %c0_68] : memref<8x128xf32, #tpu.memory_space<vmem>>, vector<8x128xf32>
    tpu.vector_store %arg7[%c0_67, %c0_68], %151 {strides = array<i32>} : memref<8x128xf32, #tpu.memory_space<vmem>>, vector<8x128xf32>,
    %c0_69 = arith.constant 0 : index
    %c0_70 = arith.constant 0 : index
    %156 = vector.load %arg6[%c0_69, %c0_70] : memref<8x128xf32, #tpu.memory_space<vmem>>, vector<8x128xf32>
    tpu.vector_store %arg6[%c0_69, %c0_70], %154 {strides = array<i32>} : memref<8x128xf32, #tpu.memory_space<vmem>>, vector<8x128xf32>,
    %157 = arith.addi %5, %c4_i32 : i32
    %c7_i32_71 = arith.constant 7 : i32
    %158 = arith.cmpi eq, %157, %c7_i32_71 : i32
    %159 = arith.extui %158 : i1 to i32
    %c0_i32_72 = arith.constant 0 : i32
    %160 = arith.cmpi ne, %159, %c0_i32_72 : i32
    scf.if %160 {
      %c0_117 = arith.constant 0 : index
      %c0_118 = arith.constant 0 : index
      %254 = vector.load %arg5[%c0_117, %c0_118] : memref<8x128xf32, #tpu.memory_space<vmem>>, vector<8x128xf32>
      tpu.vector_store %arg5[%c0_117, %c0_118], %154 {strides = array<i32>} : memref<8x128xf32, #tpu.memory_space<vmem>>, vector<8x128xf32>,
    } else {
    }
    %c5_i32 = arith.constant 5 : i32
    %161 = arith.index_cast %c5_i32 : i32 to index
    %c0_73 = arith.constant 0 : index
    %c0_74 = arith.constant 0 : index
    %162 = vector.load %arg2[%161, %c0_73, %c0_74] : memref<8x8x512xf32, #tpu.memory_space<vmem>>, vector<1x8x512xf32>
    %163 = vector.shape_cast %162 : vector<1x8x512xf32> to vector<8x512xf32>
    %c0_75 = arith.constant 0 : index
    %c0_76 = arith.constant 0 : index
    %164 = vector.load %arg6[%c0_75, %c0_76] : memref<8x128xf32, #tpu.memory_space<vmem>>, vector<8x128xf32>
    %cst_77 = arith.constant dense<0.000000e+00> : vector<8x512xf32>
    %165 = tpu.matmul %164, %3, %cst_77 {dimension_numbers = #tpu.dot_dimension_numbers<[1], [0], [0], [1], [0, 0, 1, 1], [], []>} : vector<8x128xf32>, vector<128x512xf32>, vector<8x512xf32> -> vector<8x512xf32>
    %166 = arith.addf %165, %163 : vector<8x512xf32>
    %167 = vector.broadcast %4 : vector<1x512xf32> to vector<8x512xf32>
    %168 = arith.addf %166, %167 : vector<8x512xf32>
    %169 = vector.extract_strided_slice %168 {offsets = [0, 0], sizes = [8, 384], strides = [1, 1]} : vector<8x512xf32> to vector<8x384xf32>
    %170 = arith.negf %169 : vector<8x384xf32>
    %171 = math.exp %170 : vector<8x384xf32>
    %cst_78 = arith.constant 1.000000e+00 : f32
    %172 = vector.broadcast %cst_78 : f32 to vector<8x384xf32>
    %173 = arith.addf %172, %171 : vector<8x384xf32>
    %174 = arith.divf %172, %173 : vector<8x384xf32>
    %175 = vector.extract_strided_slice %168 {offsets = [0, 384], sizes = [8, 128], strides = [1, 1]} : vector<8x512xf32> to vector<8x128xf32>
    %176 = math.tanh %175 : vector<8x128xf32>
    %177 = vector.extract_strided_slice %174 {offsets = [0, 128], sizes = [8, 128], strides = [1, 1]} : vector<8x384xf32> to vector<8x128xf32>
    %c0_79 = arith.constant 0 : index
    %c0_80 = arith.constant 0 : index
    %178 = vector.load %arg7[%c0_79, %c0_80] : memref<8x128xf32, #tpu.memory_space<vmem>>, vector<8x128xf32>
    %179 = arith.mulf %177, %178 : vector<8x128xf32>
    %180 = vector.extract_strided_slice %174 {offsets = [0, 0], sizes = [8, 128], strides = [1, 1]} : vector<8x384xf32> to vector<8x128xf32>
    %181 = arith.mulf %180, %176 : vector<8x128xf32>
    %182 = arith.addf %179, %181 : vector<8x128xf32>
    %183 = vector.extract_strided_slice %174 {offsets = [0, 256], sizes = [8, 128], strides = [1, 1]} : vector<8x384xf32> to vector<8x128xf32>
    %184 = math.tanh %182 : vector<8x128xf32>
    %185 = arith.mulf %183, %184 : vector<8x128xf32>
    %c0_81 = arith.constant 0 : index
    %c0_82 = arith.constant 0 : index
    %186 = vector.load %arg7[%c0_81, %c0_82] : memref<8x128xf32, #tpu.memory_space<vmem>>, vector<8x128xf32>
    tpu.vector_store %arg7[%c0_81, %c0_82], %182 {strides = array<i32>} : memref<8x128xf32, #tpu.memory_space<vmem>>, vector<8x128xf32>,
    %c0_83 = arith.constant 0 : index
    %c0_84 = arith.constant 0 : index
    %187 = vector.load %arg6[%c0_83, %c0_84] : memref<8x128xf32, #tpu.memory_space<vmem>>, vector<8x128xf32>
    tpu.vector_store %arg6[%c0_83, %c0_84], %185 {strides = array<i32>} : memref<8x128xf32, #tpu.memory_space<vmem>>, vector<8x128xf32>,
    %188 = arith.addi %5, %c5_i32 : i32
    %c7_i32_85 = arith.constant 7 : i32
    %189 = arith.cmpi eq, %188, %c7_i32_85 : i32
    %190 = arith.extui %189 : i1 to i32
    %c0_i32_86 = arith.constant 0 : i32
    %191 = arith.cmpi ne, %190, %c0_i32_86 : i32
    scf.if %191 {
      %c0_117 = arith.constant 0 : index
      %c0_118 = arith.constant 0 : index
      %254 = vector.load %arg5[%c0_117, %c0_118] : memref<8x128xf32, #tpu.memory_space<vmem>>, vector<8x128xf32>
      tpu.vector_store %arg5[%c0_117, %c0_118], %185 {strides = array<i32>} : memref<8x128xf32, #tpu.memory_space<vmem>>, vector<8x128xf32>,
    } else {
    }
    %c6_i32 = arith.constant 6 : i32
    %192 = arith.index_cast %c6_i32 : i32 to index
    %c0_87 = arith.constant 0 : index
    %c0_88 = arith.constant 0 : index
    %193 = vector.load %arg2[%192, %c0_87, %c0_88] : memref<8x8x512xf32, #tpu.memory_space<vmem>>, vector<1x8x512xf32>
    %194 = vector.shape_cast %193 : vector<1x8x512xf32> to vector<8x512xf32>
    %c0_89 = arith.constant 0 : index
    %c0_90 = arith.constant 0 : index
    %195 = vector.load %arg6[%c0_89, %c0_90] : memref<8x128xf32, #tpu.memory_space<vmem>>, vector<8x128xf32>
    %cst_91 = arith.constant dense<0.000000e+00> : vector<8x512xf32>
    %196 = tpu.matmul %195, %3, %cst_91 {dimension_numbers = #tpu.dot_dimension_numbers<[1], [0], [0], [1], [0, 0, 1, 1], [], []>} : vector<8x128xf32>, vector<128x512xf32>, vector<8x512xf32> -> vector<8x512xf32>
    %197 = arith.addf %196, %194 : vector<8x512xf32>
    %198 = vector.broadcast %4 : vector<1x512xf32> to vector<8x512xf32>
    %199 = arith.addf %197, %198 : vector<8x512xf32>
    %200 = vector.extract_strided_slice %199 {offsets = [0, 0], sizes = [8, 384], strides = [1, 1]} : vector<8x512xf32> to vector<8x384xf32>
    %201 = arith.negf %200 : vector<8x384xf32>
    %202 = math.exp %201 : vector<8x384xf32>
    %cst_92 = arith.constant 1.000000e+00 : f32
    %203 = vector.broadcast %cst_92 : f32 to vector<8x384xf32>
    %204 = arith.addf %203, %202 : vector<8x384xf32>
    %205 = arith.divf %203, %204 : vector<8x384xf32>
    %206 = vector.extract_strided_slice %199 {offsets = [0, 384], sizes = [8, 128], strides = [1, 1]} : vector<8x512xf32> to vector<8x128xf32>
    %207 = math.tanh %206 : vector<8x128xf32>
    %208 = vector.extract_strided_slice %205 {offsets = [0, 128], sizes = [8, 128], strides = [1, 1]} : vector<8x384xf32> to vector<8x128xf32>
    %c0_93 = arith.constant 0 : index
    %c0_94 = arith.constant 0 : index
    %209 = vector.load %arg7[%c0_93, %c0_94] : memref<8x128xf32, #tpu.memory_space<vmem>>, vector<8x128xf32>
    %210 = arith.mulf %208, %209 : vector<8x128xf32>
    %211 = vector.extract_strided_slice %205 {offsets = [0, 0], sizes = [8, 128], strides = [1, 1]} : vector<8x384xf32> to vector<8x128xf32>
    %212 = arith.mulf %211, %207 : vector<8x128xf32>
    %213 = arith.addf %210, %212 : vector<8x128xf32>
    %214 = vector.extract_strided_slice %205 {offsets = [0, 256], sizes = [8, 128], strides = [1, 1]} : vector<8x384xf32> to vector<8x128xf32>
    %215 = math.tanh %213 : vector<8x128xf32>
    %216 = arith.mulf %214, %215 : vector<8x128xf32>
    %c0_95 = arith.constant 0 : index
    %c0_96 = arith.constant 0 : index
    %217 = vector.load %arg7[%c0_95, %c0_96] : memref<8x128xf32, #tpu.memory_space<vmem>>, vector<8x128xf32>
    tpu.vector_store %arg7[%c0_95, %c0_96], %213 {strides = array<i32>} : memref<8x128xf32, #tpu.memory_space<vmem>>, vector<8x128xf32>,
    %c0_97 = arith.constant 0 : index
    %c0_98 = arith.constant 0 : index
    %218 = vector.load %arg6[%c0_97, %c0_98] : memref<8x128xf32, #tpu.memory_space<vmem>>, vector<8x128xf32>
    tpu.vector_store %arg6[%c0_97, %c0_98], %216 {strides = array<i32>} : memref<8x128xf32, #tpu.memory_space<vmem>>, vector<8x128xf32>,
    %219 = arith.addi %5, %c6_i32 : i32
    %c7_i32_99 = arith.constant 7 : i32
    %220 = arith.cmpi eq, %219, %c7_i32_99 : i32
    %221 = arith.extui %220 : i1 to i32
    %c0_i32_100 = arith.constant 0 : i32
    %222 = arith.cmpi ne, %221, %c0_i32_100 : i32
    scf.if %222 {
      %c0_117 = arith.constant 0 : index
      %c0_118 = arith.constant 0 : index
      %254 = vector.load %arg5[%c0_117, %c0_118] : memref<8x128xf32, #tpu.memory_space<vmem>>, vector<8x128xf32>
      tpu.vector_store %arg5[%c0_117, %c0_118], %216 {strides = array<i32>} : memref<8x128xf32, #tpu.memory_space<vmem>>, vector<8x128xf32>,
    } else {
    }
    %c7_i32_101 = arith.constant 7 : i32
    %223 = arith.index_cast %c7_i32_101 : i32 to index
    %c0_102 = arith.constant 0 : index
    %c0_103 = arith.constant 0 : index
    %224 = vector.load %arg2[%223, %c0_102, %c0_103] : memref<8x8x512xf32, #tpu.memory_space<vmem>>, vector<1x8x512xf32>
    %225 = vector.shape_cast %224 : vector<1x8x512xf32> to vector<8x512xf32>
    %c0_104 = arith.constant 0 : index
    %c0_105 = arith.constant 0 : index
    %226 = vector.load %arg6[%c0_104, %c0_105] : memref<8x128xf32, #tpu.memory_space<vmem>>, vector<8x128xf32>
    %cst_106 = arith.constant dense<0.000000e+00> : vector<8x512xf32>
    %227 = tpu.matmul %226, %3, %cst_106 {dimension_numbers = #tpu.dot_dimension_numbers<[1], [0], [0], [1], [0, 0, 1, 1], [], []>} : vector<8x128xf32>, vector<128x512xf32>, vector<8x512xf32> -> vector<8x512xf32>
    %228 = arith.addf %227, %225 : vector<8x512xf32>
    %229 = vector.broadcast %4 : vector<1x512xf32> to vector<8x512xf32>
    %230 = arith.addf %228, %229 : vector<8x512xf32>
    %231 = vector.extract_strided_slice %230 {offsets = [0, 0], sizes = [8, 384], strides = [1, 1]} : vector<8x512xf32> to vector<8x384xf32>
    %232 = arith.negf %231 : vector<8x384xf32>
    %233 = math.exp %232 : vector<8x384xf32>
    %cst_107 = arith.constant 1.000000e+00 : f32
    %234 = vector.broadcast %cst_107 : f32 to vector<8x384xf32>
    %235 = arith.addf %234, %233 : vector<8x384xf32>
    %236 = arith.divf %234, %235 : vector<8x384xf32>
    %237 = vector.extract_strided_slice %230 {offsets = [0, 384], sizes = [8, 128], strides = [1, 1]} : vector<8x512xf32> to vector<8x128xf32>
    %238 = math.tanh %237 : vector<8x128xf32>
    %239 = vector.extract_strided_slice %236 {offsets = [0, 128], sizes = [8, 128], strides = [1, 1]} : vector<8x384xf32> to vector<8x128xf32>
    %c0_108 = arith.constant 0 : index
    %c0_109 = arith.constant 0 : index
    %240 = vector.load %arg7[%c0_108, %c0_109] : memref<8x128xf32, #tpu.memory_space<vmem>>, vector<8x128xf32>
    %241 = arith.mulf %239, %240 : vector<8x128xf32>
    %242 = vector.extract_strided_slice %236 {offsets = [0, 0], sizes = [8, 128], strides = [1, 1]} : vector<8x384xf32> to vector<8x128xf32>
    %243 = arith.mulf %242, %238 : vector<8x128xf32>
    %244 = arith.addf %241, %243 : vector<8x128xf32>
    %245 = vector.extract_strided_slice %236 {offsets = [0, 256], sizes = [8, 128], strides = [1, 1]} : vector<8x384xf32> to vector<8x128xf32>
    %246 = math.tanh %244 : vector<8x128xf32>
    %247 = arith.mulf %245, %246 : vector<8x128xf32>
    %c0_110 = arith.constant 0 : index
    %c0_111 = arith.constant 0 : index
    %248 = vector.load %arg7[%c0_110, %c0_111] : memref<8x128xf32, #tpu.memory_space<vmem>>, vector<8x128xf32>
    tpu.vector_store %arg7[%c0_110, %c0_111], %244 {strides = array<i32>} : memref<8x128xf32, #tpu.memory_space<vmem>>, vector<8x128xf32>,
    %c0_112 = arith.constant 0 : index
    %c0_113 = arith.constant 0 : index
    %249 = vector.load %arg6[%c0_112, %c0_113] : memref<8x128xf32, #tpu.memory_space<vmem>>, vector<8x128xf32>
    tpu.vector_store %arg6[%c0_112, %c0_113], %247 {strides = array<i32>} : memref<8x128xf32, #tpu.memory_space<vmem>>, vector<8x128xf32>,
    %250 = arith.addi %5, %c7_i32_101 : i32
    %c7_i32_114 = arith.constant 7 : i32
    %251 = arith.cmpi eq, %250, %c7_i32_114 : i32
    %252 = arith.extui %251 : i1 to i32
    %c0_i32_115 = arith.constant 0 : i32
    %253 = arith.cmpi ne, %252, %c0_i32_115 : i32
    scf.if %253 {
      %c0_117 = arith.constant 0 : index
      %c0_118 = arith.constant 0 : index
      %254 = vector.load %arg5[%c0_117, %c0_118] : memref<8x128xf32, #tpu.memory_space<vmem>>, vector<8x128xf32>
      tpu.vector_store %arg5[%c0_117, %c0_118], %247 {strides = array<i32>} : memref<8x128xf32, #tpu.memory_space<vmem>>, vector<8x128xf32>,
    } else {
    }
    %c8_i32_116 = arith.constant 8 : i32
    return
  }
  func.func @transform_0(%arg0: i32, %arg1: i32) -> (i32, i32, i32) {
    %c0_i32 = arith.constant 0 : i32
    %c0_i32_0 = arith.constant 0 : i32
    return %arg1, %arg0, %c0_i32 : i32, i32, i32
  }
  func.func @transform_1(%arg0: i32, %arg1: i32) -> (i32, i32) {
    %c0_i32 = arith.constant 0 : i32
    %c0_i32_0 = arith.constant 0 : i32
    %c0_i32_1 = arith.constant 0 : i32
    return %c0_i32, %c0_i32_0 : i32, i32
  }
  func.func @transform_2(%arg0: i32, %arg1: i32) -> (i32, i32) {
    %c0_i32 = arith.constant 0 : i32
    %c0_i32_0 = arith.constant 0 : i32
    %c0_i32_1 = arith.constant 0 : i32
    return %c0_i32, %c0_i32_0 : i32, i32
  }
  func.func @transform_3(%arg0: i32, %arg1: i32) -> (i32, i32) {
    %c0_i32 = arith.constant 0 : i32
    %c0_i32_0 = arith.constant 0 : i32
    return %arg0, %c0_i32 : i32, i32
  }
}

module attributes {stable_mosaic.version = 11 : i64} {
  func.func @fc_head_kernel(%arg0: memref<8x128xf32, #tpu.memory_space<vmem>>, %arg1: memref<128x128xf32, #tpu.memory_space<vmem>>, %arg2: memref<1x128xf32, #tpu.memory_space<vmem>>, %arg3: memref<128x128xf32, #tpu.memory_space<vmem>>, %arg4: memref<1x128xf32, #tpu.memory_space<vmem>>, %arg5: memref<8x128xf32, #tpu.memory_space<vmem>>) attributes {dimension_semantics = [], scalar_prefetch = 0 : i64, scratch_operands = 0 : i64, tpu.core_type = #tpu.core_type<tc>} {
    %c0 = arith.constant 0 : index
    %c0_0 = arith.constant 0 : index
    %0 = vector.load %arg0[%c0, %c0_0] : memref<8x128xf32, #tpu.memory_space<vmem>>, vector<8x128xf32>
    %c0_1 = arith.constant 0 : index
    %c0_2 = arith.constant 0 : index
    %1 = vector.load %arg1[%c0_1, %c0_2] : memref<128x128xf32, #tpu.memory_space<vmem>>, vector<128x128xf32>
    %cst = arith.constant dense<0.000000e+00> : vector<8x128xf32>
    %2 = tpu.matmul %0, %1, %cst {dimension_numbers = #tpu.dot_dimension_numbers<[1], [0], [0], [1], [0, 0, 1, 1], [], []>} : vector<8x128xf32>, vector<128x128xf32>, vector<8x128xf32> -> vector<8x128xf32>
    %c0_3 = arith.constant 0 : index
    %c0_4 = arith.constant 0 : index
    %3 = vector.load %arg2[%c0_3, %c0_4] : memref<1x128xf32, #tpu.memory_space<vmem>>, vector<1x128xf32>
    %4 = vector.broadcast %3 : vector<1x128xf32> to vector<8x128xf32>
    %5 = arith.addf %2, %4 : vector<8x128xf32>
    %c0_5 = arith.constant 0 : index
    %c0_6 = arith.constant 0 : index
    %6 = vector.load %arg3[%c0_5, %c0_6] : memref<128x128xf32, #tpu.memory_space<vmem>>, vector<128x128xf32>
    %cst_7 = arith.constant dense<0.000000e+00> : vector<8x128xf32>
    %7 = tpu.matmul %5, %6, %cst_7 {dimension_numbers = #tpu.dot_dimension_numbers<[1], [0], [0], [1], [0, 0, 1, 1], [], []>} : vector<8x128xf32>, vector<128x128xf32>, vector<8x128xf32> -> vector<8x128xf32>
    %c0_8 = arith.constant 0 : index
    %c0_9 = arith.constant 0 : index
    %8 = vector.load %arg4[%c0_8, %c0_9] : memref<1x128xf32, #tpu.memory_space<vmem>>, vector<1x128xf32>
    %9 = vector.broadcast %8 : vector<1x128xf32> to vector<8x128xf32>
    %10 = arith.addf %7, %9 : vector<8x128xf32>
    %c0_10 = arith.constant 0 : index
    %c0_11 = arith.constant 0 : index
    %11 = vector.load %arg5[%c0_10, %c0_11] : memref<8x128xf32, #tpu.memory_space<vmem>>, vector<8x128xf32>
    tpu.vector_store %arg5[%c0_10, %c0_11], %10 {strides = array<i32>} : memref<8x128xf32, #tpu.memory_space<vmem>>, vector<8x128xf32>,
    return
  }
}

</mosaic_0001>

<llo_original>
// kernel: lstm_forecast.7
$region0: #{lstm_forecast.7}
  #allocation0 [shape = 'u32[]', space=smem, size = 0x4, offset = 0x4, fixed_abs, tag = 'smem constant byte address 0x4 - core index']
  #allocation1 [shape = 'u32[144,128]{1,0:T(1,128)}', space=vmem, size = 0x12000, scoped, tag = 'internal scratch']
  %s0 = inlined_call_operand.vmem [shape: f32[8,128], index: 0, kind: input, shape index: {}]
  %s1 = inlined_call_operand.vmem [shape: f32[128,128], index: 1, kind: input, shape index: {}]
  %s2 = inlined_call_operand.vmem [shape: f32[1,128], index: 2, kind: input, shape index: {}]
  %s3 = inlined_call_operand.vmem [shape: f32[128,128], index: 3, kind: input, shape index: {}]
  %s4 = inlined_call_operand.vmem [shape: f32[1,128], index: 4, kind: input, shape index: {}]
  %s5 = inlined_call_operand.vmem [shape: f32[8,128], index: 5, kind: output, shape index: {}]
  %s6 = sld [smem:[#allocation0]]
  $region30: #{lstm_forecast.7} parent=0
    _
  %s8 = ssub.s32 1, %s6
  %s9 = scalar_select 0, %s8, %s6
  // Predicated region
  $region2: #{lstm_forecast.7} parent=0 // pred_check
    _
  $region3: #{lstm_forecast.7} parent=0 // pred_check_branch
    %11 = sbr.rel (0) target = $region5
  $region4: #{lstm_forecast.7} parent=0 // pred_region
    _
  $region5: #{lstm_forecast.7} parent=0 // pred_fallthru
    _
  // Predicated region
  $region6: #{lstm_forecast.7} parent=0 // pred_check
    _
  $region7: #{lstm_forecast.7} parent=0 // pred_check_branch
    %13 = sbr.rel (0) target = $region9
  $region8: #{lstm_forecast.7} parent=0 // pred_region
    _
  $region9: #{lstm_forecast.7} parent=0 // pred_fallthru
    _
  // Predicated region
  $region10: #{lstm_forecast.7} parent=0 // pred_check
    _
  $region11: #{lstm_forecast.7} parent=0 // pred_check_branch
    %15 = sbr.rel (0) target = $region13
  $region12: #{lstm_forecast.7} parent=0 // pred_region
    _
  $region13: #{lstm_forecast.7} parent=0 // pred_fallthru
    _
  // Predicated region
  $region14: #{lstm_forecast.7} parent=0 // pred_check
    _
  $region15: #{lstm_forecast.7} parent=0 // pred_check_branch
    %17 = sbr.rel (0) target = $region17
  $region16: #{lstm_forecast.7} parent=0 // pred_region
    _
  $region17: #{lstm_forecast.7} parent=0 // pred_fallthru
    _
  // Predicated region
  $region18: #{lstm_forecast.7} parent=0 // pred_check
    _
  $region19: #{lstm_forecast.7} parent=0 // pred_check_branch
    %19 = sbr.rel (0) target = $region21
  $region20: #{lstm_forecast.7} parent=0 // pred_region
    _
  $region21: #{lstm_forecast.7} parent=0 // pred_fallthru
    _
  %v20 = vld [vmem:[%s0] sm:$0xff]
  %v21 = vld [vmem:[%s1] sm:$0xff]
  %v22 = vld [vmem:[%s1 + $0x8] sm:$0xff]
  %v23 = vld [vmem:[%s1 + $0x10] sm:$0xff]
  %v24 = vld [vmem:[%s1 + $0x18] sm:$0xff]
  %v25 = vld [vmem:[%s1 + $0x20] sm:$0xff]
  %v26 = vld [vmem:[%s1 + $0x28] sm:$0xff]
  %v27 = vld [vmem:[%s1 + $0x30] sm:$0xff]
  %v28 = vld [vmem:[%s1 + $0x38] sm:$0xff]
  %v29 = vld [vmem:[%s1 + $0x40] sm:$0xff]
  %v30 = vld [vmem:[%s1 + $0x48] sm:$0xff]
  %v31 = vld [vmem:[%s1 + $0x50] sm:$0xff]
  %v32 = vld [vmem:[%s1 + $0x58] sm:$0xff]
  %v33 = vld [vmem:[%s1 + $0x60] sm:$0xff]
  %v34 = vld [vmem:[%s1 + $0x68] sm:$0xff]
  %v35 = vld [vmem:[%s1 + $0x70] sm:$0xff]
  %v36 = vld [vmem:[%s1 + $0x78] sm:$0xff]
  %v37 = vld [vmem:[%s2] sm:$0x1]
  %v39 = vlaneseq
  %v40 = vshrl.u32 %v39, 7
  %v41 = vsub.s32 0, %v40
  %v42 = vrot.slane %v37, %v41
  %44 = vmatprep.subr.mxu0 0.0
  %45 = vmatpush1.msra.mxu0 %v21
  %46 = vmatprep.subr.mxu0 0.0
  %47 = vmatpush1.msra.mxu0 %v22
  %48 = vmatprep.subr.mxu0 0.0
  %49 = vmatpush1.msra.mxu0 %v23
  %50 = vmatprep.subr.mxu0 0.0
  %51 = vmatpush1.msra.mxu0 %v24
  %52 = vmatprep.subr.mxu0 0.0
  %53 = vmatpush1.msra.mxu0 %v25
  %54 = vmatprep.subr.mxu0 0.0
  %55 = vmatpush1.msra.mxu0 %v26
  %56 = vmatprep.subr.mxu0 0.0
  %57 = vmatpush1.msra.mxu0 %v27
  %58 = vmatprep.subr.mxu0 0.0
  %59 = vmatpush1.msra.mxu0 %v28
  %60 = vmatprep.subr.mxu0 0.0
  %61 = vmatpush1.msra.mxu0 %v29
  %62 = vmatprep.subr.mxu0 0.0
  %63 = vmatpush1.msra.mxu0 %v30
  %64 = vmatprep.subr.mxu0 0.0
  %65 = vmatpush1.msra.mxu0 %v31
  %66 = vmatprep.subr.mxu0 0.0
  %67 = vmatpush1.msra.mxu0 %v32
  %68 = vmatprep.subr.mxu0 0.0
  %69 = vmatpush1.msra.mxu0 %v33
  %70 = vmatprep.subr.mxu0 0.0
  %71 = vmatpush1.msra.mxu0 %v34
  %72 = vmatprep.subr.mxu0 0.0
  %73 = vmatpush1.msra.mxu0 %v35
  %74 = vmatprep.subr.mxu0 0.0
  %75 = vmatpush1.msra.mxu0 %v36
  %76 = vmatprep.subr.mxu0 0.0
  %77 = vmatpush1.msra.mxu0 0.0
  %78 = vmatprep.subr.mxu0 0.0
  %79 = vmatpush1.msra.mxu0 0.0
  %80 = vmatprep.subr.mxu0 0.0
  %81 = vmatpush1.msra.mxu0 0.0
  %82 = vmatprep.subr.mxu0 0.0
  %83 = vmatpush1.msra.mxu0 0.0
  %84 = vmatprep.subr.mxu0 0.0
  %85 = vmatpush1.msra.mxu0 0.0
  %86 = vmatprep.subr.mxu0 0.0
  %87 = vmatpush1.msra.mxu0 0.0
  %88 = vmatprep.subr.mxu0 0.0
  %89 = vmatpush1.msra.mxu0 0.0
  %90 = vmatprep.subr.mxu0 0.0
  %91 = vmatpush1.msra.mxu0 0.0
  %92 = vmatprep.subr.mxu0 0.0
  %93 = vmatpush1.msra.mxu0 0.0
  %94 = vmatprep.subr.mxu0 0.0
  %95 = vmatpush1.msra.mxu0 0.0
  %96 = vmatprep.subr.mxu0 0.0
  %97 = vmatpush1.msra.mxu0 0.0
  %98 = vmatprep.subr.mxu0 0.0
  %99 = vmatpush1.msra.mxu0 0.0
  %100 = vmatprep.subr.mxu0 0.0
  %101 = vmatpush1.msra.mxu0 0.0
  %102 = vmatprep.subr.mxu0 0.0
  %103 = vmatpush1.msra.mxu0 0.0
  %104 = vmatprep.subr.mxu0 0.0
  %105 = vmatpush1.msra.mxu0 0.0
  %106 = vmatprep.subr.mxu0 0.0
  %107 = vmatpush1.msra.mxu0 0.0
  %108 = vmatprep.mubr.f32.mxu0 0.0
  %109 = vmatmul.mubr.f32.gmra.mrb[0].mxu0 %v20
  %v110 = vpop.f32.mrb[0].mxu0
  %v111 = vadd.f32 %v42, %v110
  %v112 = vpop.f32.mrb[0].mxu0
  %113 = vdwg.mxu0
  %v114 = vld [vmem:[%s3] sm:$0xff]
  %v115 = vld [vmem:[%s3 + $0x8] sm:$0xff]
  %v116 = vld [vmem:[%s3 + $0x10] sm:$0xff]
  %v117 = vld [vmem:[%s3 + $0x18] sm:$0xff]
  %v118 = vld [vmem:[%s3 + $0x20] sm:$0xff]
  %v119 = vld [vmem:[%s3 + $0x28] sm:$0xff]
  %v120 = vld [vmem:[%s3 + $0x30] sm:$0xff]
  %v121 = vld [vmem:[%s3 + $0x38] sm:$0xff]
  %v122 = vld [vmem:[%s3 + $0x40] sm:$0xff]
  %v123 = vld [vmem:[%s3 + $0x48] sm:$0xff]
  %v124 = vld [vmem:[%s3 + $0x50] sm:$0xff]
  %v125 = vld [vmem:[%s3 + $0x58] sm:$0xff]
  %v126 = vld [vmem:[%s3 + $0x60] sm:$0xff]
  %v127 = vld [vmem:[%s3 + $0x68] sm:$0xff]
  %v128 = vld [vmem:[%s3 + $0x70] sm:$0xff]
  %v129 = vld [vmem:[%s3 + $0x78] sm:$0xff]
  %v130 = vld [vmem:[%s4] sm:$0x1]
  %v132 = vlaneseq
  %v133 = vshrl.u32 %v132, 7
  %v134 = vsub.s32 0, %v133
  %v135 = vrot.slane %v130, %v134
  %137 = vmatprep.subr.mxu0 0.0
  %138 = vmatpush1.msra.mxu0 %v114
  %139 = vmatprep.subr.mxu0 0.0
  %140 = vmatpush1.msra.mxu0 %v115
  %141 = vmatprep.subr.mxu0 0.0
  %142 = vmatpush1.msra.mxu0 %v116
  %143 = vmatprep.subr.mxu0 0.0
  %144 = vmatpush1.msra.mxu0 %v117
  %145 = vmatprep.subr.mxu0 0.0
  %146 = vmatpush1.msra.mxu0 %v118
  %147 = vmatprep.subr.mxu0 0.0
  %148 = vmatpush1.msra.mxu0 %v119
  %149 = vmatprep.subr.mxu0 0.0
  %150 = vmatpush1.msra.mxu0 %v120
  %151 = vmatprep.subr.mxu0 0.0
  %152 = vmatpush1.msra.mxu0 %v121
  %153 = vmatprep.subr.mxu0 0.0
  %154 = vmatpush1.msra.mxu0 %v122
  %155 = vmatprep.subr.mxu0 0.0
  %156 = vmatpush1.msra.mxu0 %v123
  %157 = vmatprep.subr.mxu0 0.0
  %158 = vmatpush1.msra.mxu0 %v124
  %159 = vmatprep.subr.mxu0 0.0
  %160 = vmatpush1.msra.mxu0 %v125
  %161 = vmatprep.subr.mxu0 0.0
  %162 = vmatpush1.msra.mxu0 %v126
  %163 = vmatprep.subr.mxu0 0.0
  %164 = vmatpush1.msra.mxu0 %v127
  %165 = vmatprep.subr.mxu0 0.0
  %166 = vmatpush1.msra.mxu0 %v128
  %167 = vmatprep.subr.mxu0 0.0
  %168 = vmatpush1.msra.mxu0 %v129
  %169 = vmatprep.subr.mxu0 0.0
  %170 = vmatpush1.msra.mxu0 0.0
  %171 = vmatprep.subr.mxu0 0.0
  %172 = vmatpush1.msra.mxu0 0.0
  %173 = vmatprep.subr.mxu0 0.0
  %174 = vmatpush1.msra.mxu0 0.0
  %175 = vmatprep.subr.mxu0 0.0
  %176 = vmatpush1.msra.mxu0 0.0
  %177 = vmatprep.subr.mxu0 0.0
  %178 = vmatpush1.msra.mxu0 0.0
  %179 = vmatprep.subr.mxu0 0.0
  %180 = vmatpush1.msra.mxu0 0.0
  %181 = vmatprep.subr.mxu0 0.0
  %182 = vmatpush1.msra.mxu0 0.0
  %183 = vmatprep.subr.mxu0 0.0
  %184 = vmatpush1.msra.mxu0 0.0
  %185 = vmatprep.subr.mxu0 0.0
  %186 = vmatpush1.msra.mxu0 0.0
  %187 = vmatprep.subr.mxu0 0.0
  %188 = vmatpush1.msra.mxu0 0.0
  %189 = vmatprep.subr.mxu0 0.0
  %190 = vmatpush1.msra.mxu0 0.0
  %191 = vmatprep.subr.mxu0 0.0
  %192 = vmatpush1.msra.mxu0 0.0
  %193 = vmatprep.subr.mxu0 0.0
  %194 = vmatpush1.msra.mxu0 0.0
  %195 = vmatprep.subr.mxu0 0.0
  %196 = vmatpush1.msra.mxu0 0.0
  %197 = vmatprep.subr.mxu0 0.0
  %198 = vmatpush1.msra.mxu0 0.0
  %199 = vmatprep.subr.mxu0 0.0
  %200 = vmatpush1.msra.mxu0 0.0
  %201 = vmatprep.mubr.f32.mxu0 0.0
  %202 = vmatmul.mubr.f32.gmra.mrb[0].mxu0 %v111
  %v203 = vpop.f32.mrb[0].mxu0
  %v204 = vadd.f32 %v135, %v203
  %v205 = vpop.f32.mrb[0].mxu0
  %206 = vdwg.mxu0
  %207 = vst [vmem:[%s5] sm:$0xff] %v204
  // Predicated region
  $region22: #{lstm_forecast.7} parent=0 // pred_check
    _
  $region23: #{lstm_forecast.7} parent=0 // pred_check_branch
    %209 = sbr.rel (0) target = $region25
  $region24: #{lstm_forecast.7} parent=0 // pred_region
    _
  $region25: #{lstm_forecast.7} parent=0 // pred_fallthru
    _
  // Predicated region
  $region26: #{lstm_forecast.7} parent=0 // pred_check
    _
  $region27: #{lstm_forecast.7} parent=0 // pred_check_branch
    %211 = sbr.rel (0) target = $region29
  $region28: #{lstm_forecast.7} parent=0 // pred_region
    _
  $region29: #{lstm_forecast.7} parent=0 // pred_fallthru
    _

// kernel: lstm_forecast.4
$region0: #{lstm_forecast.4}
  #allocation0 [shape = 'u32[]', space=smem, size = 0x4, offset = 0x4, fixed_abs, tag = 'smem constant byte address 0x4 - core index']
  #allocation1 [shape = 'u32[144,128]{1,0:T(1,128)}', space=vmem, size = 0x12000, scoped, tag = 'internal scratch']
  #allocation2 [shape = 'f32[8,128]{1,0:T(8,128)}', space=vmem, size = 0x1000, scoped, tag = 'scratch operand']
  #allocation3 [shape = 'f32[8,128]{1,0:T(8,128)}', space=vmem, size = 0x1000, scoped, tag = 'scratch operand']
  %s0 = inlined_call_operand.vmem [shape: f32[8,8,512], index: 0, kind: input, shape index: {}]
  %s1 = inlined_call_operand.hbm [shape: f32[128,512], index: 1, kind: input, shape index: {}]
  %s2 = inlined_call_operand.vmem [shape: f32[1,512], index: 2, kind: input, shape index: {}]
  %s3 = inlined_call_operand.vmem [shape: f32[8,8,128], index: 3, kind: output, shape index: {}]
  %s4 = sld [smem:[#allocation0]]
  $region30: #{lstm_forecast.4} parent=0
    _
  %s6 = ssub.s32 1, %s4
  %s7 = scalar_select 0, %s6, %s4
  $region1: #{lstm_forecast.4} parent=0
    #allocation4 [shape = 'u8[262144]{0}', space=vmem, size = 0x40000, scoped, tag = 'input window, operand 1, single buffered']
    #allocation5 [shape = 's32[1]{0}', space=sflag, size = 0x4, scoped, tag = 'scoped memory for lstm_forecast.4']
    %8 = vsyncpa [#allocation5], 0
    // Predicated region
    $region2: #{lstm_forecast.4} parent=1 // pred_check
      _
    $region3: #{lstm_forecast.4} parent=1 // pred_check_branch
      %10 = sbr.rel (0) target = $region5
    $region4: #{lstm_forecast.4} parent=1 // pred_region
      _
    $region5: #{lstm_forecast.4} parent=1 // pred_fallthru
      _
    // Predicated region
    $region6: #{lstm_forecast.4} parent=1 // pred_check
      _
    $region7: #{lstm_forecast.4} parent=1 // pred_check_branch
      %12 = sbr.rel (0) target = $region9
    $region8: #{lstm_forecast.4} parent=1 // pred_region
      %s14 = ssub.s32 8192, 8192
      %15 = vsyncadd [#allocation5], %s14
      %s16 = sshll.u32 [#allocation4], 4
      %s17 = int_to_ptr.vmem [resolvable:$true] %s16
      %22 = dma.hbm_to_vmem [thread:$0]  %s1, 8192, %s17, [#allocation5], 512, 512, 32
    $region9: #{lstm_forecast.4} parent=1 // pred_fallthru
      _
    // Predicated region
    $region10: #{lstm_forecast.4} parent=1 // pred_check
      _
    $region11: #{lstm_forecast.4} parent=1 // pred_check_branch
      %24 = sbr.rel (0) target = $region13
    $region12: #{lstm_forecast.4} parent=1 // pred_region
      _
    $region13: #{lstm_forecast.4} parent=1 // pred_fallthru
      _
    // Predicated region
    $region14: #{lstm_forecast.4} parent=1 // pred_check
      _
    $region15: #{lstm_forecast.4} parent=1 // pred_check_branch
      %26 = sbr.rel (0) target = $region17
    $region16: #{lstm_forecast.4} parent=1 // pred_region
      %27 = dma.done [#allocation5], 8192
    $region17: #{lstm_forecast.4} parent=1 // pred_fallthru
      _
    %p28 = scmp.eq.s32.totalorder 0, 0
    // Predicated region
    $region18: #{lstm_forecast.4} parent=1 // pred_check
      %p29 = pneg %p28
    $region19: #{lstm_forecast.4} parent=1 // pred_check_branch
      %31 = sbr.rel (%p29) target = $region21
    $region20: #{lstm_forecast.4} parent=1 // pred_region
      %32 = vst [vmem:[#allocation2] sm:$0xff] 0.0
      %33 = vst [vmem:[#allocation3] sm:$0xff] 0.0
    $region21: #{lstm_forecast.4} parent=1 // pred_fallthru
      _
    %v34 = vld [vmem:[#allocation4] sm:$0xff]
    %v35 = vld [vmem:[#allocation4 + $0x8] sm:$0xff]
    %v36 = vld [vmem:[#allocation4 + $0x10] sm:$0xff]
    %v37 = vld [vmem:[#allocation4 + $0x18] sm:$0xff]
    %v38 = vld [vmem:[#allocation4 + $0x20] sm:$0xff]
    %v39 = vld [vmem:[#allocation4 + $0x28] sm:$0xff]
    %v40 = vld [vmem:[#allocation4 + $0x30] sm:$0xff]
    %v41 = vld [vmem:[#allocation4 + $0x38] sm:$0xff]
    %v42 = vld [vmem:[#allocation4 + $0x40] sm:$0xff]
    %v43 = vld [vmem:[#allocation4 + $0x48] sm:$0xff]
    %v44 = vld [vmem:[#allocation4 + $0x50] sm:$0xff]
    %v45 = vld [vmem:[#allocation4 + $0x58] sm:$0xff]
    %v46 = vld [vmem:[#allocation4 + $0x60] sm:$0xff]
    %v47 = vld [vmem:[#allocation4 + $0x68] sm:$0xff]
    %v48 = vld [vmem:[#allocation4 + $0x70] sm:$0xff]
    %v49 = vld [vmem:[#allocation4 + $0x78] sm:$0xff]
    %v50 = vld [vmem:[#allocation4 + $0x80] sm:$0xff]
    %v51 = vld [vmem:[#allocation4 + $0x88] sm:$0xff]
    %v52 = vld [vmem:[#allocation4 + $0x90] sm:$0xff]
    %v53 = vld [vmem:[#allocation4 + $0x98] sm:$0xff]
    %v54 = vld [vmem:[#allocation4 + $0xa0] sm:$0xff]
    %v55 = vld [vmem:[#allocation4 + $0xa8] sm:$0xff]
    %v56 = vld [vmem:[#allocation4 + $0xb0] sm:$0xff]
    %v57 = vld [vmem:[#allocation4 + $0xb8] sm:$0xff]
    %v58 = vld [vmem:[#allocation4 + $0xc0] sm:$0xff]
    %v59 = vld [vmem:[#allocation4 + $0xc8] sm:$0xff]
    %v60 = vld [vmem:[#allocation4 + $0xd0] sm:$0xff]
    %v61 = vld [vmem:[#allocation4 + $0xd8] sm:$0xff]
    %v62 = vld [vmem:[#allocation4 + $0xe0] sm:$0xff]
    %v63 = vld [vmem:[#allocation4 + $0xe8] sm:$0xff]
    %v64 = vld [vmem:[#allocation4 + $0xf0] sm:$0xff]
    %v65 = vld [vmem:[#allocation4 + $0xf8] sm:$0xff]
    %v66 = vld [vmem:[#allocation4 + $0x100] sm:$0xff]
    %v67 = vld [vmem:[#allocation4 + $0x108] sm:$0xff]
    %v68 = vld [vmem:[#allocation4 + $0x110] sm:$0xff]
    %v69 = vld [vmem:[#allocation4 + $0x118] sm:$0xff]
    %v70 = vld [vmem:[#allocation4 + $0x120] sm:$0xff]
    %v71 = vld [vmem:[#allocation4 + $0x128] sm:$0xff]
    %v72 = vld [vmem:[#allocation4 + $0x130] sm:$0xff]
    %v73 = vld [vmem:[#allocation4 + $0x138] sm:$0xff]
    %v74 = vld [vmem:[#allocation4 + $0x140] sm:$0xff]
    %v75 = vld [vmem:[#allocation4 + $0x148] sm:$0xff]
    %v76 = vld [vmem:[#allocation4 + $0x150] sm:$0xff]
    %v77 = vld [vmem:[#allocation4 + $0x158] sm:$0xff]
    %v78 = vld [vmem:[#allocation4 + $0x160] sm:$0xff]
    %v79 = vld [vmem:[#allocation4 + $0x168] sm:$0xff]
    %v80 = vld [vmem:[#allocation4 + $0x170] sm:$0xff]
    %v81 = vld [vmem:[#allocation4 + $0x178] sm:$0xff]
    %v82 = vld [vmem:[#allocation4 + $0x180] sm:$0xff]
    %v83 = vld [vmem:[#allocation4 + $0x188] sm:$0xff]
    %v84 = vld [vmem:[#allocation4 + $0x190] sm:$0xff]
    %v85 = vld [vmem:[#allocation4 + $0x198] sm:$0xff]
    %v86 = vld [vmem:[#allocation4 + $0x1a0] sm:$0xff]
    %v87 = vld [vmem:[#allocation4 + $0x1a8] sm:$0xff]
    %v88 = vld [vmem:[#allocation4 + $0x1b0] sm:$0xff]
    %v89 = vld [vmem:[#allocation4 + $0x1b8] sm:$0xff]
    %v90 = vld [vmem:[#allocation4 + $0x1c0] sm:$0xff]
    %v91 = vld [vmem:[#allocation4 + $0x1c8] sm:$0xff]
    %v92 = vld [vmem:[#allocation4 + $0x1d0] sm:$0xff]
    %v93 = vld [vmem:[#allocation4 + $0x1d8] sm:$0xff]
    %v94 = vld [vmem:[#allocation4 + $0x1e0] sm:$0xff]
    %v95 = vld [vmem:[#allocation4 + $0x1e8] sm:$0xff]
    %v96 = vld [vmem:[#allocation4 + $0x1f0] sm:$0xff]
    %v97 = vld [vmem:[#allocation4 + $0x1f8] sm:$0xff]
    %v98 = vld [vmem:[%s2] sm:$0xf]
    %v99 = vld [vmem:[%s0] sm:$0xff]
    %v100 = vld [vmem:[%s0 + $0x8] sm:$0xff]
    %v101 = vld [vmem:[%s0 + $0x10] sm:$0xff]
    %v102 = vld [vmem:[%s0 + $0x18] sm:$0xff]
    %v103 = vld [vmem:[#allocation2] sm:$0xff]
    %104 = vmatprep.subr.mxu0 %v35
    %105 = vmatpush1.msra.mxu0 %v34
    %106 = vmatprep.subr.mxu0 %v39
    %107 = vmatpush1.msra.mxu0 %v38
    %108 = vmatprep.subr.mxu0 %v43
    %109 = vmatpush1.msra.mxu0 %v42
    %110 = vmatprep.subr.mxu0 %v47
    %111 = vmatpush1.msra.mxu0 %v46
    %112 = vmatprep.subr.mxu0 %v51
    %113 = vmatpush1.msra.mxu0 %v50
    %114 = vmatprep.subr.mxu0 %v55
    %115 = vmatpush1.msra.mxu0 %v54
    %116 = vmatprep.subr.mxu0 %v59
    %117 = vmatpush1.msra.mxu0 %v58
    %118 = vmatprep.subr.mxu0 %v63
    %119 = vmatpush1.msra.mxu0 %v62
    %120 = vmatprep.subr.mxu0 %v67
    %121 = vmatpush1.msra.mxu0 %v66
    %122 = vmatprep.subr.mxu0 %v71
    %123 = vmatpush1.msra.mxu0 %v70
    %124 = vmatprep.subr.mxu0 %v75
    %125 = vmatpush1.msra.mxu0 %v74
    %126 = vmatprep.subr.mxu0 %v79
    %127 = vmatpush1.msra.mxu0 %v78
    %128 = vmatprep.subr.mxu0 %v83
    %129 = vmatpush1.msra.mxu0 %v82
    %130 = vmatprep.subr.mxu0 %v87
    %131 = vmatpush1.msra.mxu0 %v86
    %132 = vmatprep.subr.mxu0 %v91
    %133 = vmatpush1.msra.mxu0 %v90
    %134 = vmatprep.subr.mxu0 %v95
    %135 = vmatpush1.msra.mxu0 %v94
    %136 = vmatprep.subr.mxu0 0.0
    %137 = vmatpush1.msra.mxu0 0.0
    %138 = vmatprep.subr.mxu0 0.0
    %139 = vmatpush1.msra.mxu0 0.0
    %140 = vmatprep.subr.mxu0 0.0
    %141 = vmatpush1.msra.mxu0 0.0
    %142 = vmatprep.subr.mxu0 0.0
    %143 = vmatpush1.msra.mxu0 0.0
    %144 = vmatprep.subr.mxu0 0.0
    %145 = vmatpush1.msra.mxu0 0.0
    %146 = vmatprep.subr.mxu0 0.0
    %147 = vmatpush1.msra.mxu0 0.0
    %148 = vmatprep.subr.mxu0 0.0
    %149 = vmatpush1.msra.mxu0 0.0
    %150 = vmatprep.subr.mxu0 0.0
    %151 = vmatpush1.msra.mxu0 0.0
    %152 = vmatprep.subr.mxu0 0.0
    %153 = vmatpush1.msra.mxu0 0.0
    %154 = vmatprep.subr.mxu0 0.0
    %155 = vmatpush1.msra.mxu0 0.0
    %156 = vmatprep.subr.mxu0 0.0
    %157 = vmatpush1.msra.mxu0 0.0
    %158 = vmatprep.subr.mxu0 0.0
    %159 = vmatpush1.msra.mxu0 0.0
    %160 = vmatprep.subr.mxu0 0.0
    %161 = vmatpush1.msra.mxu0 0.0
    %162 = vmatprep.subr.mxu0 0.0
    %163 = vmatpush1.msra.mxu0 0.0
    %164 = vmatprep.subr.mxu0 0.0
    %165 = vmatpush1.msra.mxu0 0.0
    %166 = vmatprep.subr.mxu0 0.0
    %167 = vmatpush1.msra.mxu0 0.0
    %168 = vmatprep.mubr.f32.mxu0 0.0
    %169 = vmatmul.mubr.f32.gmra.mrb[0].mxu0 %v103
    %v170 = vpop.f32.mrb[0].mxu0
    %v171 = vadd.f32 %v99, %v170
    %v172 = vpop.f32.mrb[0].mxu0
    %v173 = vadd.f32 %v100, %v172
    %174 = vdwg.mxu0
    %175 = vmatprep.subr.mxu0 %v37
    %176 = vmatpush1.msra.mxu0 %v36
    %177 = vmatprep.subr.mxu0 %v41
    %178 = vmatpush1.msra.mxu0 %v40
    %179 = vmatprep.subr.mxu0 %v45
    %180 = vmatpush1.msra.mxu0 %v44
    %181 = vmatprep.subr.mxu0 %v49
    %182 = vmatpush1.msra.mxu0 %v48
    %183 = vmatprep.subr.mxu0 %v53
    %184 = vmatpush1.msra.mxu0 %v52
    %185 = vmatprep.subr.mxu0 %v57
    %186 = vmatpush1.msra.mxu0 %v56
    %187 = vmatprep.subr.mxu0 %v61
    %188 = vmatpush1.msra.mxu0 %v60
    %189 = vmatprep.subr.mxu0 %v65
    %190 = vmatpush1.msra.mxu0 %v64
    %191 = vmatprep.subr.mxu0 %v69
    %192 = vmatpush1.msra.mxu0 %v68
    %193 = vmatprep.subr.mxu0 %v73
    %194 = vmatpush1.msra.mxu0 %v72
    %195 = vmatprep.subr.mxu0 %v77
    %196 = vmatpush1.msra.mxu0 %v76
    %197 = vmatprep.subr.mxu0 %v81
    %198 = vmatpush1.msra.mxu0 %v80
    %199 = vmatprep.subr.mxu0 %v85
    %200 = vmatpush1.msra.mxu0 %v84
    %201 = vmatprep.subr.mxu0 %v89
    %202 = vmatpush1.msra.mxu0 %v88
    %203 = vmatprep.subr.mxu0 %v93
    %204 = vmatpush1.msra.mxu0 %v92
    %205 = vmatprep.subr.mxu0 %v97
    %206 = vmatpush1.msra.mxu0 %v96
    %207 = vmatprep.subr.mxu0 0.0
    %208 = vmatpush1.msra.mxu0 0.0
    %209 = vmatprep.subr.mxu0 0.0
    %210 = vmatpush1.msra.mxu0 0.0
    %211 = vmatprep.subr.mxu0 0.0
    %212 = vmatpush1.msra.mxu0 0.0
    %213 = vmatprep.subr.mxu0 0.0
    %214 = vmatpush1.msra.mxu0 0.0
    %215 = vmatprep.subr.mxu0 0.0
    %216 = vmatpush1.msra.mxu0 0.0
    %217 = vmatprep.subr.mxu0 0.0
    %218 = vmatpush1.msra.mxu0 0.0
    %219 = vmatprep.subr.mxu0 0.0
    %220 = vmatpush1.msra.mxu0 0.0
    %221 = vmatprep.subr.mxu0 0.0
    %222 = vmatpush1.msra.mxu0 0.0
    %223 = vmatprep.subr.mxu0 0.0
    %224 = vmatpush1.msra.mxu0 0.0
    %225 = vmatprep.subr.mxu0 0.0
    %226 = vmatpush1.msra.mxu0 0.0
    %227 = vmatprep.subr.mxu0 0.0
    %228 = vmatpush1.msra.mxu0 0.0
    %229 = vmatprep.subr.mxu0 0.0
    %230 = vmatpush1.msra.mxu0 0.0
    %231 = vmatprep.subr.mxu0 0.0
    %232 = vmatpush1.msra.mxu0 0.0
    %233 = vmatprep.subr.mxu0 0.0
    %234 = vmatpush1.msra.mxu0 0.0
    %235 = vmatprep.subr.mxu0 0.0
    %236 = vmatpush1.msra.mxu0 0.0
    %237 = vmatprep.subr.mxu0 0.0
    %238 = vmatpush1.msra.mxu0 0.0
    %239 = vmatprep.mubr.f32.mxu0 0.0
    %240 = vmatmul.mubr.f32.gmra.mrb[0].mxu0 %v103
    %v241 = vpop.f32.mrb[0].mxu0
    %v242 = vadd.f32 %v101, %v241
    %v243 = vpop.f32.mrb[0].mxu0
    %v244 = vadd.f32 %v102, %v243
    %245 = vdwg.mxu0
    %v247 = vlaneseq
    %v248 = vshrl.u32 %v247, 7
    %v249 = vsub.s32 0, %v248
    %v250 = vrot.slane %v98, %v249
    %v251 = vlaneseq
    %v252 = vshrl.u32 %v251, 7
    %v253 = vsub.s32 1, %v252
    %v254 = vrot.slane %v98, %v253
    %v255 = vlaneseq
    %v256 = vshrl.u32 %v255, 7
    %v257 = vsub.s32 2, %v256
    %v258 = vrot.slane %v98, %v257
    %v259 = vlaneseq
    %v260 = vshrl.u32 %v259, 7
    %v261 = vsub.s32 3, %v260
    %v262 = vrot.slane %v98, %v261
    %v267 = vadd.f32 %v171, %v250
    %v268 = vadd.f32 %v173, %v254
    %v269 = vadd.f32 %v242, %v258
    %v270 = vadd.f32 %v244, %v262
    %v271 = vxor.u32 %v267, 2147483648
    %v272 = vxor.u32 %v268, 2147483648
    %v273 = vxor.u32 %v269, 2147483648
    %v274 = vmul.f32 %v271, 1.442695
    %v275 = vpow.pop %v274
    %v276 = vmul.f32 %v272, 1.442695
    %v277 = vpow.pop %v276
    %v278 = vmul.f32 %v273, 1.442695
    %v279 = vpow.pop %v278
    %v280 = vadd.f32 %v275, 1.0
    %v281 = vadd.f32 %v277, 1.0
    %v282 = vadd.f32 %v279, 1.0
    %v283 = vrcp.pop %v280
    %v284 = vmul.f32 1.0, %v283
    %v285 = vrcp.pop %v281
    %v286 = vmul.f32 1.0, %v285
    %v287 = vrcp.pop %v282
    %v288 = vmul.f32 1.0, %v287
    %v289 = vtanh.pop %v270
    %v290 = vld [vmem:[#allocation3] sm:$0xff]
    %v291 = vmul.f32 %v286, %v290
    %v292 = vmul.f32 %v284, %v289
    %v293 = vadd.f32 %v291, %v292
    %v294 = vtanh.pop %v293
    %v295 = vmul.f32 %v288, %v294
    %296 = vst [vmem:[#allocation3] sm:$0xff] %v293
    %297 = vst [vmem:[#allocation2] sm:$0xff] %v295
    %298 = vst [vmem:[%s3] sm:$0xff] %v295
    %s299 = scalar_lea.vmem %s0, 32
    %v300 = vld [vmem:[%s299] sm:$0xff]
    %v301 = vld [vmem:[%s299 + $0x8] sm:$0xff]
    %v302 = vld [vmem:[%s299 + $0x10] sm:$0xff]
    %v303 = vld [vmem:[%s299 + $0x18] sm:$0xff]
    %v304 = vld [vmem:[#allocation2] sm:$0xff]
    %305 = vmatprep.subr.mxu0 %v35
    %306 = vmatpush1.msra.mxu0 %v34
    %307 = vmatprep.subr.mxu0 %v39
    %308 = vmatpush1.msra.mxu0 %v38
    %309 = vmatprep.subr.mxu0 %v43
    %310 = vmatpush1.msra.mxu0 %v42
    %311 = vmatprep.subr.mxu0 %v47
    %312 = vmatpush1.msra.mxu0 %v46
    %313 = vmatprep.subr.mxu0 %v51
    %314 = vmatpush1.msra.mxu0 %v50
    %315 = vmatprep.subr.mxu0 %v55
    %316 = vmatpush1.msra.mxu0 %v54
    %317 = vmatprep.subr.mxu0 %v59
    %318 = vmatpush1.msra.mxu0 %v58
    %319 = vmatprep.subr.mxu0 %v63
    %320 = vmatpush1.msra.mxu0 %v62
    %321 = vmatprep.subr.mxu0 %v67
    %322 = vmatpush1.msra.mxu0 %v66
    %323 = vmatprep.subr.mxu0 %v71
    %324 = vmatpush1.msra.mxu0 %v70
    %325 = vmatprep.subr.mxu0 %v75
    %326 = vmatpush1.msra.mxu0 %v74
    %327 = vmatprep.subr.mxu0 %v79
    %328 = vmatpush1.msra.mxu0 %v78
    %329 = vmatprep.subr.mxu0 %v83
    %330 = vmatpush1.msra.mxu0 %v82
    %331 = vmatprep.subr.mxu0 %v87
    %332 = vmatpush1.msra.mxu0 %v86
    %333 = vmatprep.subr.mxu0 %v91
    %334 = vmatpush1.msra.mxu0 %v90
    %335 = vmatprep.subr.mxu0 %v95
    %336 = vmatpush1.msra.mxu0 %v94
    %337 = vmatprep.subr.mxu0 0.0
    %338 = vmatpush1.msra.mxu0 0.0
    %339 = vmatprep.subr.mxu0 0.0
    %340 = vmatpush1.msra.mxu0 0.0
    %341 = vmatprep.subr.mxu0 0.0
    %342 = vmatpush1.msra.mxu0 0.0
    %343 = vmatprep.subr.mxu0 0.0
    %344 = vmatpush1.msra.mxu0 0.0
    %345 = vmatprep.subr.mxu0 0.0
    %346 = vmatpush1.msra.mxu0 0.0
    %347 = vmatprep.subr.mxu0 0.0
    %348 = vmatpush1.msra.mxu0 0.0
    %349 = vmatprep.subr.mxu0 0.0
    %350 = vmatpush1.msra.mxu0 0.0
    %351 = vmatprep.subr.mxu0 0.0
    %352 = vmatpush1.msra.mxu0 0.0
    %353 = vmatprep.subr.mxu0 0.0
    %354 = vmatpush1.msra.mxu0 0.0
    %355 = vmatprep.subr.mxu0 0.0
    %356 = vmatpush1.msra.mxu0 0.0
    %357 = vmatprep.subr.mxu0 0.0
    %358 = vmatpush1.msra.mxu0 0.0
    %359 = vmatprep.subr.mxu0 0.0
    %360 = vmatpush1.msra.mxu0 0.0
    %361 = vmatprep.subr.mxu0 0.0
    %362 = vmatpush1.msra.mxu0 0.0
    %363 = vmatprep.subr.mxu0 0.0
    %364 = vmatpush1.msra.mxu0 0.0
    %365 = vmatprep.subr.mxu0 0.0
    %366 = vmatpush1.msra.mxu0 0.0
    %367 = vmatprep.subr.mxu0 0.0
    %368 = vmatpush1.msra.mxu0 0.0
    %369 = vmatprep.mubr.f32.mxu0 0.0
    %370 = vmatmul.mubr.f32.gmra.mrb[0].mxu0 %v304
    %v371 = vpop.f32.mrb[0].mxu0
    %v372 = vadd.f32 %v300, %v371
    %v373 = vpop.f32.mrb[0].mxu0
    %v374 = vadd.f32 %v301, %v373
    %375 = vdwg.mxu0
    %376 = vmatprep.subr.mxu0 %v37
    %377 = vmatpush1.msra.mxu0 %v36
    %378 = vmatprep.subr.mxu0 %v41
    %379 = vmatpush1.msra.mxu0 %v40
    %380 = vmatprep.subr.mxu0 %v45
    %381 = vmatpush1.msra.mxu0 %v44
    %382 = vmatprep.subr.mxu0 %v49
    %383 = vmatpush1.msra.mxu0 %v48
    %384 = vmatprep.subr.mxu0 %v53
    %385 = vmatpush1.msra.mxu0 %v52
    %386 = vmatprep.subr.mxu0 %v57
    %387 = vmatpush1.msra.mxu0 %v56
    %388 = vmatprep.subr.mxu0 %v61
    %389 = vmatpush1.msra.mxu0 %v60
    %390 = vmatprep.subr.mxu0 %v65
    %391 = vmatpush1.msra.mxu0 %v64
    %392 = vmatprep.subr.mxu0 %v69
    %393 = vmatpush1.msra.mxu0 %v68
    %394 = vmatprep.subr.mxu0 %v73
    %395 = vmatpush1.msra.mxu0 %v72
    %396 = vmatprep.subr.mxu0 %v77
    %397 = vmatpush1.msra.mxu0 %v76
    %398 = vmatprep.subr.mxu0 %v81
    %399 = vmatpush1.msra.mxu0 %v80
    %400 = vmatprep.subr.mxu0 %v85
    %401 = vmatpush1.msra.mxu0 %v84
    %402 = vmatprep.subr.mxu0 %v89
    %403 = vmatpush1.msra.mxu0 %v88
    %404 = vmatprep.subr.mxu0 %v93
    %405 = vmatpush1.msra.mxu0 %v92
    %406 = vmatprep.subr.mxu0 %v97
    %407 = vmatpush1.msra.mxu0 %v96
    %408 = vmatprep.subr.mxu0 0.0
    %409 = vmatpush1.msra.mxu0 0.0
    %410 = vmatprep.subr.mxu0 0.0
    %411 = vmatpush1.msra.mxu0 0.0
    %412 = vmatprep.subr.mxu0 0.0
    %413 = vmatpush1.msra.mxu0 0.0
    %414 = vmatprep.subr.mxu0 0.0
    %415 = vmatpush1.msra.mxu0 0.0
    %416 = vmatprep.subr.mxu0 0.0
    %417 = vmatpush1.msra.mxu0 0.0
    %418 = vmatprep.subr.mxu0 0.0
    %419 = vmatpush1.msra.mxu0 0.0
    %420 = vmatprep.subr.mxu0 0.0
    %421 = vmatpush1.msra.mxu0 0.0
    %422 = vmatprep.subr.mxu0 0.0
    %423 = vmatpush1.msra.mxu0 0.0
    %424 = vmatprep.subr.mxu0 0.0
    %425 = vmatpush1.msra.mxu0 0.0
    %426 = vmatprep.subr.mxu0 0.0
    %427 = vmatpush1.msra.mxu0 0.0
    %428 = vmatprep.subr.mxu0 0.0
    %429 = vmatpush1.msra.mxu0 0.0
    %430 = vmatprep.subr.mxu0 0.0
    %431 = vmatpush1.msra.mxu0 0.0
    %432 = vmatprep.subr.mxu0 0.0
    %433 = vmatpush1.msra.mxu0 0.0
    %434 = vmatprep.subr.mxu0 0.0
    %435 = vmatpush1.msra.mxu0 0.0
    %436 = vmatprep.subr.mxu0 0.0
    %437 = vmatpush1.msra.mxu0 0.0
    %438 = vmatprep.subr.mxu0 0.0
    %439 = vmatpush1.msra.mxu0 0.0
    %440 = vmatprep.mubr.f32.mxu0 0.0
    %441 = vmatmul.mubr.f32.gmra.mrb[0].mxu0 %v304
    %v442 = vpop.f32.mrb[0].mxu0
    %v443 = vadd.f32 %v302, %v442
    %v444 = vpop.f32.mrb[0].mxu0
    %v445 = vadd.f32 %v303, %v444
    %446 = vdwg.mxu0
    %v447 = vadd.f32 %v372, %v250
    %v448 = vadd.f32 %v374, %v254
    %v449 = vadd.f32 %v443, %v258
    %v450 = vadd.f32 %v445, %v262
    %v451 = vxor.u32 %v447, 2147483648
    %v452 = vxor.u32 %v448, 2147483648
    %v453 = vxor.u32 %v449, 2147483648
    %v454 = vmul.f32 %v451, 1.442695
    %v455 = vpow.pop %v454
    %v456 = vmul.f32 %v452, 1.442695
    %v457 = vpow.pop %v456
    %v458 = vmul.f32 %v453, 1.442695
    %v459 = vpow.pop %v458
    %v460 = vadd.f32 %v455, 1.0
    %v461 = vadd.f32 %v457, 1.0
    %v462 = vadd.f32 %v459, 1.0
    %v463 = vrcp.pop %v460
    %v464 = vmul.f32 1.0, %v463
    %v465 = vrcp.pop %v461
    %v466 = vmul.f32 1.0, %v465
    %v467 = vrcp.pop %v462
    %v468 = vmul.f32 1.0, %v467
    %v469 = vtanh.pop %v450
    %v470 = vld [vmem:[#allocation3] sm:$0xff]
    %v471 = vmul.f32 %v466, %v470
    %v472 = vmul.f32 %v464, %v469
    %v473 = vadd.f32 %v471, %v472
    %v474 = vtanh.pop %v473
    %v475 = vmul.f32 %v468, %v474
    %476 = vst [vmem:[#allocation3] sm:$0xff] %v473
    %477 = vst [vmem:[#allocation2] sm:$0xff] %v475
    %s478 = scalar_lea.vmem %s3, 8
    %479 = vst [vmem:[%s478] sm:$0xff] %v475
    %s480 = scalar_lea.vmem %s0, 64
    %v481 = vld [vmem:[%s480] sm:$0xff]
    %v482 = vld [vmem:[%s480 + $0x8] sm:$0xff]
    %v483 = vld [vmem:[%s480 + $0x10] sm:$0xff]
    %v484 = vld [vmem:[%s480 + $0x18] sm:$0xff]
    %v485 = vld [vmem:[#allocation2] sm:$0xff]
    %486 = vmatprep.subr.mxu0 %v35
    %487 = vmatpush1.msra.mxu0 %v34
    %488 = vmatprep.subr.mxu0 %v39
    %489 = vmatpush1.msra.mxu0 %v38
    %490 = vmatprep.subr.mxu0 %v43
    %491 = vmatpush1.msra.mxu0 %v42
    %492 = vmatprep.subr.mxu0 %v47
    %493 = vmatpush1.msra.mxu0 %v46
    %494 = vmatprep.subr.mxu0 %v51
    %495 = vmatpush1.msra.mxu0 %v50
    %496 = vmatprep.subr.mxu0 %v55
    %497 = vmatpush1.msra.mxu0 %v54
    %498 = vmatprep.subr.mxu0 %v59
    %499 = vmatpush1.msra.mxu0 %v58
    %500 = vmatprep.subr.mxu0 %v63
    %501 = vmatpush1.msra.mxu0 %v62
    %502 = vmatprep.subr.mxu0 %v67
    %503 = vmatpush1.msra.mxu0 %v66
    %504 = vmatprep.subr.mxu0 %v71
    %505 = vmatpush1.msra.mxu0 %v70
    %506 = vmatprep.subr.mxu0 %v75
    %507 = vmatpush1.msra.mxu0 %v74
    %508 = vmatprep.subr.mxu0 %v79
    %509 = vmatpush1.msra.mxu0 %v78
    %510 = vmatprep.subr.mxu0 %v83
    %511 = vmatpush1.msra.mxu0 %v82
    %512 = vmatprep.subr.mxu0 %v87
    %513 = vmatpush1.msra.mxu0 %v86
    %514 = vmatprep.subr.mxu0 %v91
    %515 = vmatpush1.msra.mxu0 %v90
    %516 = vmatprep.subr.mxu0 %v95
    %517 = vmatpush1.msra.mxu0 %v94
    %518 = vmatprep.subr.mxu0 0.0
    %519 = vmatpush1.msra.mxu0 0.0
    %520 = vmatprep.subr.mxu0 0.0
    %521 = vmatpush1.msra.mxu0 0.0
    %522 = vmatprep.subr.mxu0 0.0
    %523 = vmatpush1.msra.mxu0 0.0
    %524 = vmatprep.subr.mxu0 0.0
    %525 = vmatpush1.msra.mxu0 0.0
    %526 = vmatprep.subr.mxu0 0.0
    %527 = vmatpush1.msra.mxu0 0.0
    %528 = vmatprep.subr.mxu0 0.0
    %529 = vmatpush1.msra.mxu0 0.0
    %530 = vmatprep.subr.mxu0 0.0
    %531 = vmatpush1.msra.mxu0 0.0
    %532 = vmatprep.subr.mxu0 0.0
    %533 = vmatpush1.msra.mxu0 0.0
    %534 = vmatprep.subr.mxu0 0.0
    %535 = vmatpush1.msra.mxu0 0.0
    %536 = vmatprep.subr.mxu0 0.0
    %537 = vmatpush1.msra.mxu0 0.0
    %538 = vmatprep.subr.mxu0 0.0
    %539 = vmatpush1.msra.mxu0 0.0
    %540 = vmatprep.subr.mxu0 0.0
    %541 = vmatpush1.msra.mxu0 0.0
    %542 = vmatprep.subr.mxu0 0.0
    %543 = vmatpush1.msra.mxu0 0.0
    %544 = vmatprep.subr.mxu0 0.0
    %545 = vmatpush1.msra.mxu0 0.0
    %546 = vmatprep.subr.mxu0 0.0
    %547 = vmatpush1.msra.mxu0 0.0
    %548 = vmatprep.subr.mxu0 0.0
    %549 = vmatpush1.msra.mxu0 0.0
    %550 = vmatprep.mubr.f32.mxu0 0.0
    %551 = vmatmul.mubr.f32.gmra.mrb[0].mxu0 %v485
    %v552 = vpop.f32.mrb[0].mxu0
    %v553 = vadd.f32 %v481, %v552
    %v554 = vpop.f32.mrb[0].mxu0
    %v555 = vadd.f32 %v482, %v554
    %556 = vdwg.mxu0
    %557 = vmatprep.subr.mxu0 %v37
    %558 = vmatpush1.msra.mxu0 %v36
    %559 = vmatprep.subr.mxu0 %v41
    %560 = vmatpush1.msra.mxu0 %v40
    %561 = vmatprep.subr.mxu0 %v45
    %562 = vmatpush1.msra.mxu0 %v44
    %563 = vmatprep.subr.mxu0 %v49
    %564 = vmatpush1.msra.mxu0 %v48
    %565 = vmatprep.subr.mxu0 %v53
    %566 = vmatpush1.msra.mxu0 %v52
    %567 = vmatprep.subr.mxu0 %v57
    %568 = vmatpush1.msra.mxu0 %v56
    %569 = vmatprep.subr.mxu0 %v61
    %570 = vmatpush1.msra.mxu0 %v60
    %571 = vmatprep.subr.mxu0 %v65
    %572 = vmatpush1.msra.mxu0 %v64
    %573 = vmatprep.subr.mxu0 %v69
    %574 = vmatpush1.msra.mxu0 %v68
    %575 = vmatprep.subr.mxu0 %v73
    %576 = vmatpush1.msra.mxu0 %v72
    %577 = vmatprep.subr.mxu0 %v77
    %578 = vmatpush1.msra.mxu0 %v76
    %579 = vmatprep.subr.mxu0 %v81
    %580 = vmatpush1.msra.mxu0 %v80
    %581 = vmatprep.subr.mxu0 %v85
    %582 = vmatpush1.msra.mxu0 %v84
    %583 = vmatprep.subr.mxu0 %v89
    %584 = vmatpush1.msra.mxu0 %v88
    %585 = vmatprep.subr.mxu0 %v93
    %586 = vmatpush1.msra.mxu0 %v92
    %587 = vmatprep.subr.mxu0 %v97
    %588 = vmatpush1.msra.mxu0 %v96
    %589 = vmatprep.subr.mxu0 0.0
    %590 = vmatpush1.msra.mxu0 0.0
    %591 = vmatprep.subr.mxu0 0.0
    %592 = vmatpush1.msra.mxu0 0.0
    %593 = vmatprep.subr.mxu0 0.0
    %594 = vmatpush1.msra.mxu0 0.0
    %595 = vmatprep.subr.mxu0 0.0
    %596 = vmatpush1.msra.mxu0 0.0
    %597 = vmatprep.subr.mxu0 0.0
    %598 = vmatpush1.msra.mxu0 0.0
    %599 = vmatprep.subr.mxu0 0.0
    %600 = vmatpush1.msra.mxu0 0.0
    %601 = vmatprep.subr.mxu0 0.0
    %602 = vmatpush1.msra.mxu0 0.0
    %603 = vmatprep.subr.mxu0 0.0
    %604 = vmatpush1.msra.mxu0 0.0
    %605 = vmatprep.subr.mxu0 0.0
    %606 = vmatpush1.msra.mxu0 0.0
    %607 = vmatprep.subr.mxu0 0.0
    %608 = vmatpush1.msra.mxu0 0.0
    %609 = vmatprep.subr.mxu0 0.0
    %610 = vmatpush1.msra.mxu0 0.0
    %611 = vmatprep.subr.mxu0 0.0
    %612 = vmatpush1.msra.mxu0 0.0
    %613 = vmatprep.subr.mxu0 0.0
    %614 = vmatpush1.msra.mxu0 0.0
    %615 = vmatprep.subr.mxu0 0.0
    %616 = vmatpush1.msra.mxu0 0.0
    %617 = vmatprep.subr.mxu0 0.0
    %618 = vmatpush1.msra.mxu0 0.0
    %619 = vmatprep.subr.mxu0 0.0
    %620 = vmatpush1.msra.mxu0 0.0
    %621 = vmatprep.mubr.f32.mxu0 0.0
    %622 = vmatmul.mubr.f32.gmra.mrb[0].mxu0 %v485
    %v623 = vpop.f32.mrb[0].mxu0
    %v624 = vadd.f32 %v483, %v623
    %v625 = vpop.f32.mrb[0].mxu0
    %v626 = vadd.f32 %v484, %v625
    %627 = vdwg.mxu0
    %v628 = vadd.f32 %v553, %v250
    %v629 = vadd.f32 %v555, %v254
    %v630 = vadd.f32 %v624, %v258
    %v631 = vadd.f32 %v626, %v262
    %v632 = vxor.u32 %v628, 2147483648
    %v633 = vxor.u32 %v629, 2147483648
    %v634 = vxor.u32 %v630, 2147483648
    %v635 = vmul.f32 %v632, 1.442695
    %v636 = vpow.pop %v635
    %v637 = vmul.f32 %v633, 1.442695
    %v638 = vpow.pop %v637
    %v639 = vmul.f32 %v634, 1.442695
    %v640 = vpow.pop %v639
    %v641 = vadd.f32 %v636, 1.0
    %v642 = vadd.f32 %v638, 1.0
    %v643 = vadd.f32 %v640, 1.0
    %v644 = vrcp.pop %v641
    %v645 = vmul.f32 1.0, %v644
    %v646 = vrcp.pop %v642
    %v647 = vmul.f32 1.0, %v646
    %v648 = vrcp.pop %v643
    %v649 = vmul.f32 1.0, %v648
    %v650 = vtanh.pop %v631
    %v651 = vld [vmem:[#allocation3] sm:$0xff]
    %v652 = vmul.f32 %v647, %v651
    %v653 = vmul.f32 %v645, %v650
    %v654 = vadd.f32 %v652, %v653
    %v655 = vtanh.pop %v654
    %v656 = vmul.f32 %v649, %v655
    %657 = vst [vmem:[#allocation3] sm:$0xff] %v654
    %658 = vst [vmem:[#allocation2] sm:$0xff] %v656
    %s659 = scalar_lea.vmem %s3, 16
    %660 = vst [vmem:[%s659] sm:$0xff] %v656
    %s661 = scalar_lea.vmem %s0, 96
    %v662 = vld [vmem:[%s661] sm:$0xff]
    %v663 = vld [vmem:[%s661 + $0x8] sm:$0xff]
    %v664 = vld [vmem:[%s661 + $0x10] sm:$0xff]
    %v665 = vld [vmem:[%s661 + $0x18] sm:$0xff]
    %v666 = vld [vmem:[#allocation2] sm:$0xff]
    %667 = vmatprep.subr.mxu0 %v35
    %668 = vmatpush1.msra.mxu0 %v34
    %669 = vmatprep.subr.mxu0 %v39
    %670 = vmatpush1.msra.mxu0 %v38
    %671 = vmatprep.subr.mxu0 %v43
    %672 = vmatpush1.msra.mxu0 %v42
    %673 = vmatprep.subr.mxu0 %v47
    %674 = vmatpush1.msra.mxu0 %v46
    %675 = vmatprep.subr.mxu0 %v51
    %676 = vmatpush1.msra.mxu0 %v50
    %677 = vmatprep.subr.mxu0 %v55
    %678 = vmatpush1.msra.mxu0 %v54
    %679 = vmatprep.subr.mxu0 %v59
    %680 = vmatpush1.msra.mxu0 %v58
    %681 = vmatprep.subr.mxu0 %v63
    %682 = vmatpush1.msra.mxu0 %v62
    %683 = vmatprep.subr.mxu0 %v67
    %684 = vmatpush1.msra.mxu0 %v66
    %685 = vmatprep.subr.mxu0 %v71
    %686 = vmatpush1.msra.mxu0 %v70
    %687 = vmatprep.subr.mxu0 %v75
    %688 = vmatpush1.msra.mxu0 %v74
    %689 = vmatprep.subr.mxu0 %v79
    %690 = vmatpush1.msra.mxu0 %v78
    %691 = vmatprep.subr.mxu0 %v83
    %692 = vmatpush1.msra.mxu0 %v82
    %693 = vmatprep.subr.mxu0 %v87
    %694 = vmatpush1.msra.mxu0 %v86
    %695 = vmatprep.subr.mxu0 %v91
    %696 = vmatpush1.msra.mxu0 %v90
    %697 = vmatprep.subr.mxu0 %v95
    %698 = vmatpush1.msra.mxu0 %v94
    %699 = vmatprep.subr.mxu0 0.0
    %700 = vmatpush1.msra.mxu0 0.0
    %701 = vmatprep.subr.mxu0 0.0
    %702 = vmatpush1.msra.mxu0 0.0
    %703 = vmatprep.subr.mxu0 0.0
    %704 = vmatpush1.msra.mxu0 0.0
    %705 = vmatprep.subr.mxu0 0.0
    %706 = vmatpush1.msra.mxu0 0.0
    %707 = vmatprep.subr.mxu0 0.0
    %708 = vmatpush1.msra.mxu0 0.0
    %709 = vmatprep.subr.mxu0 0.0
    %710 = vmatpush1.msra.mxu0 0.0
    %711 = vmatprep.subr.mxu0 0.0
    %712 = vmatpush1.msra.mxu0 0.0
    %713 = vmatprep.subr.mxu0 0.0
    %714 = vmatpush1.msra.mxu0 0.0
    %715 = vmatprep.subr.mxu0 0.0
    %716 = vmatpush1.msra.mxu0 0.0
    %717 = vmatprep.subr.mxu0 0.0
    %718 = vmatpush1.msra.mxu0 0.0
    %719 = vmatprep.subr.mxu0 0.0
    %720 = vmatpush1.msra.mxu0 0.0
    %721 = vmatprep.subr.mxu0 0.0
    %722 = vmatpush1.msra.mxu0 0.0
    %723 = vmatprep.subr.mxu0 0.0
    %724 = vmatpush1.msra.mxu0 0.0
    %725 = vmatprep.subr.mxu0 0.0
    %726 = vmatpush1.msra.mxu0 0.0
    %727 = vmatprep.subr.mxu0 0.0
    %728 = vmatpush1.msra.mxu0 0.0
    %729 = vmatprep.subr.mxu0 0.0
    %730 = vmatpush1.msra.mxu0 0.0
    %731 = vmatprep.mubr.f32.mxu0 0.0
    %732 = vmatmul.mubr.f32.gmra.mrb[0].mxu0 %v666
    %v733 = vpop.f32.mrb[0].mxu0
    %v734 = vadd.f32 %v662, %v733
    %v735 = vpop.f32.mrb[0].mxu0
    %v736 = vadd.f32 %v663, %v735
    %737 = vdwg.mxu0
    %738 = vmatprep.subr.mxu0 %v37
    %739 = vmatpush1.msra.mxu0 %v36
    %740 = vmatprep.subr.mxu0 %v41
    %741 = vmatpush1.msra.mxu0 %v40
    %742 = vmatprep.subr.mxu0 %v45
    %743 = vmatpush1.msra.mxu0 %v44
    %744 = vmatprep.subr.mxu0 %v49
    %745 = vmatpush1.msra.mxu0 %v48
    %746 = vmatprep.subr.mxu0 %v53
    %747 = vmatpush1.msra.mxu0 %v52
    %748 = vmatprep.subr.mxu0 %v57
    %749 = vmatpush1.msra.mxu0 %v56
    %750 = vmatprep.subr.mxu0 %v61
    %751 = vmatpush1.msra.mxu0 %v60
    %752 = vmatprep.subr.mxu0 %v65
    %753 = vmatpush1.msra.mxu0 %v64
    %754 = vmatprep.subr.mxu0 %v69
    %755 = vmatpush1.msra.mxu0 %v68
    %756 = vmatprep.subr.mxu0 %v73
    %757 = vmatpush1.msra.mxu0 %v72
    %758 = vmatprep.subr.mxu0 %v77
    %759 = vmatpush1.msra.mxu0 %v76
    %760 = vmatprep.subr.mxu0 %v81
    %761 = vmatpush1.msra.mxu0 %v80
    %762 = vmatprep.subr.mxu0 %v85
    %763 = vmatpush1.msra.mxu0 %v84
    %764 = vmatprep.subr.mxu0 %v89
    %765 = vmatpush1.msra.mxu0 %v88
    %766 = vmatprep.subr.mxu0 %v93
    %767 = vmatpush1.msra.mxu0 %v92
    %768 = vmatprep.subr.mxu0 %v97
    %769 = vmatpush1.msra.mxu0 %v96
    %770 = vmatprep.subr.mxu0 0.0
    %771 = vmatpush1.msra.mxu0 0.0
    %772 = vmatprep.subr.mxu0 0.0
    %773 = vmatpush1.msra.mxu0 0.0
    %774 = vmatprep.subr.mxu0 0.0
    %775 = vmatpush1.msra.mxu0 0.0
    %776 = vmatprep.subr.mxu0 0.0
    %777 = vmatpush1.msra.mxu0 0.0
    %778 = vmatprep.subr.mxu0 0.0
    %779 = vmatpush1.msra.mxu0 0.0
    %780 = vmatprep.subr.mxu0 0.0
    %781 = vmatpush1.msra.mxu0 0.0
    %782 = vmatprep.subr.mxu0 0.0
    %783 = vmatpush1.msra.mxu0 0.0
    %784 = vmatprep.subr.mxu0 0.0
    %785 = vmatpush1.msra.mxu0 0.0
    %786 = vmatprep.subr.mxu0 0.0
    %787 = vmatpush1.msra.mxu0 0.0
    %788 = vmatprep.subr.mxu0 0.0
    %789 = vmatpush1.msra.mxu0 0.0
    %790 = vmatprep.subr.mxu0 0.0
    %791 = vmatpush1.msra.mxu0 0.0
    %792 = vmatprep.subr.mxu0 0.0
    %793 = vmatpush1.msra.mxu0 0.0
    %794 = vmatprep.subr.mxu0 0.0
    %795 = vmatpush1.msra.mxu0 0.0
    %796 = vmatprep.subr.mxu0 0.0
    %797 = vmatpush1.msra.mxu0 0.0
    %798 = vmatprep.subr.mxu0 0.0
    %799 = vmatpush1.msra.mxu0 0.0
    %800 = vmatprep.subr.mxu0 0.0
    %801 = vmatpush1.msra.mxu0 0.0
    %802 = vmatprep.mubr.f32.mxu0 0.0
    %803 = vmatmul.mubr.f32.gmra.mrb[0].mxu0 %v666
    %v804 = vpop.f32.mrb[0].mxu0
    %v805 = vadd.f32 %v664, %v804
    %v806 = vpop.f32.mrb[0].mxu0
    %v807 = vadd.f32 %v665, %v806
    %808 = vdwg.mxu0
    %v809 = vadd.f32 %v734, %v250
    %v810 = vadd.f32 %v736, %v254
    %v811 = vadd.f32 %v805, %v258
    %v812 = vadd.f32 %v807, %v262
    %v813 = vxor.u32 %v809, 2147483648
    %v814 = vxor.u32 %v810, 2147483648
    %v815 = vxor.u32 %v811, 2147483648
    %v816 = vmul.f32 %v813, 1.442695
    %v817 = vpow.pop %v816
    %v818 = vmul.f32 %v814, 1.442695
    %v819 = vpow.pop %v818
    %v820 = vmul.f32 %v815, 1.442695
    %v821 = vpow.pop %v820
    %v822 = vadd.f32 %v817, 1.0
    %v823 = vadd.f32 %v819, 1.0
    %v824 = vadd.f32 %v821, 1.0
    %v825 = vrcp.pop %v822
    %v826 = vmul.f32 1.0, %v825
    %v827 = vrcp.pop %v823
    %v828 = vmul.f32 1.0, %v827
    %v829 = vrcp.pop %v824
    %v830 = vmul.f32 1.0, %v829
    %v831 = vtanh.pop %v812
    %v832 = vld [vmem:[#allocation3] sm:$0xff]
    %v833 = vmul.f32 %v828, %v832
    %v834 = vmul.f32 %v826, %v831
    %v835 = vadd.f32 %v833, %v834
    %v836 = vtanh.pop %v835
    %v837 = vmul.f32 %v830, %v836
    %838 = vst [vmem:[#allocation3] sm:$0xff] %v835
    %839 = vst [vmem:[#allocation2] sm:$0xff] %v837
    %s840 = scalar_lea.vmem %s3, 24
    %841 = vst [vmem:[%s840] sm:$0xff] %v837
    %s842 = scalar_lea.vmem %s0, 128
    %v843 = vld [vmem:[%s842] sm:$0xff]
    %v844 = vld [vmem:[%s842 + $0x8] sm:$0xff]
    %v845 = vld [vmem:[%s842 + $0x10] sm:$0xff]
    %v846 = vld [vmem:[%s842 + $0x18] sm:$0xff]
    %v847 = vld [vmem:[#allocation2] sm:$0xff]
    %848 = vmatprep.subr.mxu0 %v35
    %849 = vmatpush1.msra.mxu0 %v34
    %850 = vmatprep.subr.mxu0 %v39
    %851 = vmatpush1.msra.mxu0 %v38
    %852 = vmatprep.subr.mxu0 %v43
    %853 = vmatpush1.msra.mxu0 %v42
    %854 = vmatprep.subr.mxu0 %v47
    %855 = vmatpush1.msra.mxu0 %v46
    %856 = vmatprep.subr.mxu0 %v51
    %857 = vmatpush1.msra.mxu0 %v50
    %858 = vmatprep.subr.mxu0 %v55
    %859 = vmatpush1.msra.mxu0 %v54
    %860 = vmatprep.subr.mxu0 %v59
    %861 = vmatpush1.msra.mxu0 %v58
    %862 = vmatprep.subr.mxu0 %v63
    %863 = vmatpush1.msra.mxu0 %v62
    %864 = vmatprep.subr.mxu0 %v67
    %865 = vmatpush1.msra.mxu0 %v66
    %866 = vmatprep.subr.mxu0 %v71
    %867 = vmatpush1.msra.mxu0 %v70
    %868 = vmatprep.subr.mxu0 %v75
    %869 = vmatpush1.msra.mxu0 %v74
    %870 = vmatprep.subr.mxu0 %v79
    %871 = vmatpush1.msra.mxu0 %v78
    %872 = vmatprep.subr.mxu0 %v83
    %873 = vmatpush1.msra.mxu0 %v82
    %874 = vmatprep.subr.mxu0 %v87
    %875 = vmatpush1.msra.mxu0 %v86
    %876 = vmatprep.subr.mxu0 %v91
    %877 = vmatpush1.msra.mxu0 %v90
    %878 = vmatprep.subr.mxu0 %v95
    %879 = vmatpush1.msra.mxu0 %v94
    %880 = vmatprep.subr.mxu0 0.0
    %881 = vmatpush1.msra.mxu0 0.0
    %882 = vmatprep.subr.mxu0 0.0
    %883 = vmatpush1.msra.mxu0 0.0
    %884 = vmatprep.subr.mxu0 0.0
    %885 = vmatpush1.msra.mxu0 0.0
    %886 = vmatprep.subr.mxu0 0.0
    %887 = vmatpush1.msra.mxu0 0.0
    %888 = vmatprep.subr.mxu0 0.0
    %889 = vmatpush1.msra.mxu0 0.0
    %890 = vmatprep.subr.mxu0 0.0
    %891 = vmatpush1.msra.mxu0 0.0
    %892 = vmatprep.subr.mxu0 0.0
    %893 = vmatpush1.msra.mxu0 0.0
    %894 = vmatprep.subr.mxu0 0.0
    %895 = vmatpush1.msra.mxu0 0.0
    %896 = vmatprep.subr.mxu0 0.0
    %897 = vmatpush1.msra.mxu0 0.0
    %898 = vmatprep.subr.mxu0 0.0
    %899 = vmatpush1.msra.mxu0 0.0
    %900 = vmatprep.subr.mxu0 0.0
    %901 = vmatpush1.msra.mxu0 0.0
    %902 = vmatprep.subr.mxu0 0.0
    %903 = vmatpush1.msra.mxu0 0.0
    %904 = vmatprep.subr.mxu0 0.0
    %905 = vmatpush1.msra.mxu0 0.0
    %906 = vmatprep.subr.mxu0 0.0
    %907 = vmatpush1.msra.mxu0 0.0
    %908 = vmatprep.subr.mxu0 0.0
    %909 = vmatpush1.msra.mxu0 0.0
    %910 = vmatprep.subr.mxu0 0.0
    %911 = vmatpush1.msra.mxu0 0.0
    %912 = vmatprep.mubr.f32.mxu0 0.0
    %913 = vmatmul.mubr.f32.gmra.mrb[0].mxu0 %v847
    %v914 = vpop.f32.mrb[0].mxu0
    %v915 = vadd.f32 %v843, %v914
    %v916 = vpop.f32.mrb[0].mxu0
    %v917 = vadd.f32 %v844, %v916
    %918 = vdwg.mxu0
    %919 = vmatprep.subr.mxu0 %v37
    %920 = vmatpush1.msra.mxu0 %v36
    %921 = vmatprep.subr.mxu0 %v41
    %922 = vmatpush1.msra.mxu0 %v40
    %923 = vmatprep.subr.mxu0 %v45
    %924 = vmatpush1.msra.mxu0 %v44
    %925 = vmatprep.subr.mxu0 %v49
    %926 = vmatpush1.msra.mxu0 %v48
    %927 = vmatprep.subr.mxu0 %v53
    %928 = vmatpush1.msra.mxu0 %v52
    %929 = vmatprep.subr.mxu0 %v57
    %930 = vmatpush1.msra.mxu0 %v56
    %931 = vmatprep.subr.mxu0 %v61
    %932 = vmatpush1.msra.mxu0 %v60
    %933 = vmatprep.subr.mxu0 %v65
    %934 = vmatpush1.msra.mxu0 %v64
    %935 = vmatprep.subr.mxu0 %v69
    %936 = vmatpush1.msra.mxu0 %v68
    %937 = vmatprep.subr.mxu0 %v73
    %938 = vmatpush1.msra.mxu0 %v72
    %939 = vmatprep.subr.mxu0 %v77
    %940 = vmatpush1.msra.mxu0 %v76
    %941 = vmatprep.subr.mxu0 %v81
    %942 = vmatpush1.msra.mxu0 %v80
    %943 = vmatprep.subr.mxu0 %v85
    %944 = vmatpush1.msra.mxu0 %v84
    %945 = vmatprep.subr.mxu0 %v89
    %946 = vmatpush1.msra.mxu0 %v88
    %947 = vmatprep.subr.mxu0 %v93
    %948 = vmatpush1.msra.mxu0 %v92
    %949 = vmatprep.subr.mxu0 %v97
    %950 = vmatpush1.msra.mxu0 %v96
    %951 = vmatprep.subr.mxu0 0.0
    %952 = vmatpush1.msra.mxu0 0.0
    %953 = vmatprep.subr.mxu0 0.0
    %954 = vmatpush1.msra.mxu0 0.0
    %955 = vmatprep.subr.mxu0 0.0
    %956 = vmatpush1.msra.mxu0 0.0
    %957 = vmatprep.subr.mxu0 0.0
    %958 = vmatpush1.msra.mxu0 0.0
    %959 = vmatprep.subr.mxu0 0.0
    %960 = vmatpush1.msra.mxu0 0.0
    %961 = vmatprep.subr.mxu0 0.0
    %962 = vmatpush1.msra.mxu0 0.0
    %963 = vmatprep.subr.mxu0 0.0
    %964 = vmatpush1.msra.mxu0 0.0
    %965 = vmatprep.subr.mxu0 0.0
    %966 = vmatpush1.msra.mxu0 0.0
    %967 = vmatprep.subr.mxu0 0.0
    %968 = vmatpush1.msra.mxu0 0.0
    %969 = vmatprep.subr.mxu0 0.0
    %970 = vmatpush1.msra.mxu0 0.0
    %971 = vmatprep.subr.mxu0 0.0
    %972 = vmatpush1.msra.mxu0 0.0
    %973 = vmatprep.subr.mxu0 0.0
    %974 = vmatpush1.msra.mxu0 0.0
    %975 = vmatprep.subr.mxu0 0.0
    %976 = vmatpush1.msra.mxu0 0.0
    %977 = vmatprep.subr.mxu0 0.0
    %978 = vmatpush1.msra.mxu0 0.0
    %979 = vmatprep.subr.mxu0 0.0
    %980 = vmatpush1.msra.mxu0 0.0
    %981 = vmatprep.subr.mxu0 0.0
    %982 = vmatpush1.msra.mxu0 0.0
    %983 = vmatprep.mubr.f32.mxu0 0.0
    %984 = vmatmul.mubr.f32.gmra.mrb[0].mxu0 %v847
    %v985 = vpop.f32.mrb[0].mxu0
    %v986 = vadd.f32 %v845, %v985
    %v987 = vpop.f32.mrb[0].mxu0
    %v988 = vadd.f32 %v846, %v987
    %989 = vdwg.mxu0
    %v990 = vadd.f32 %v915, %v250
    %v991 = vadd.f32 %v917, %v254
    %v992 = vadd.f32 %v986, %v258
    %v993 = vadd.f32 %v988, %v262
    %v994 = vxor.u32 %v990, 2147483648
    %v995 = vxor.u32 %v991, 2147483648
    %v996 = vxor.u32 %v992, 2147483648
    %v997 = vmul.f32 %v994, 1.442695
    %v998 = vpow.pop %v997
    %v999 = vmul.f32 %v995, 1.442695
    %v1000 = vpow.pop %v999
    %v1001 = vmul.f32 %v996, 1.442695
    %v1002 = vpow.pop %v1001
    %v1003 = vadd.f32 %v998, 1.0
    %v1004 = vadd.f32 %v1000, 1.0
    %v1005 = vadd.f32 %v1002, 1.0
    %v1006 = vrcp.pop %v1003
    %v1007 = vmul.f32 1.0, %v1006
    %v1008 = vrcp.pop %v1004
    %v1009 = vmul.f32 1.0, %v1008
    %v1010 = vrcp.pop %v1005
    %v1011 = vmul.f32 1.0, %v1010
    %v1012 = vtanh.pop %v993
    %v1013 = vld [vmem:[#allocation3] sm:$0xff]
    %v1014 = vmul.f32 %v1009, %v1013
    %v1015 = vmul.f32 %v1007, %v1012
    %v1016 = vadd.f32 %v1014, %v1015
    %v1017 = vtanh.pop %v1016
    %v1018 = vmul.f32 %v1011, %v1017
    %1019 = vst [vmem:[#allocation3] sm:$0xff] %v1016
    %1020 = vst [vmem:[#allocation2] sm:$0xff] %v1018
    %s1021 = scalar_lea.vmem %s3, 32
    %1022 = vst [vmem:[%s1021] sm:$0xff] %v1018
    %s1023 = scalar_lea.vmem %s0, 160
    %v1024 = vld [vmem:[%s1023] sm:$0xff]
    %v1025 = vld [vmem:[%s1023 + $0x8] sm:$0xff]
    %v1026 = vld [vmem:[%s1023 + $0x10] sm:$0xff]
    %v1027 = vld [vmem:[%s1023 + $0x18] sm:$0xff]
    %v1028 = vld [vmem:[#allocation2] sm:$0xff]
    %1029 = vmatprep.subr.mxu0 %v35
    %1030 = vmatpush1.msra.mxu0 %v34
    %1031 = vmatprep.subr.mxu0 %v39
    %1032 = vmatpush1.msra.mxu0 %v38
    %1033 = vmatprep.subr.mxu0 %v43
    %1034 = vmatpush1.msra.mxu0 %v42
    %1035 = vmatprep.subr.mxu0 %v47
    %1036 = vmatpush1.msra.mxu0 %v46
    %1037 = vmatprep.subr.mxu0 %v51
    %1038 = vmatpush1.msra.mxu0 %v50
    %1039 = vmatprep.subr.mxu0 %v55
    %1040 = vmatpush1.msra.mxu0 %v54
    %1041 = vmatprep.subr.mxu0 %v59
    %1042 = vmatpush1.msra.mxu0 %v58
    %1043 = vmatprep.subr.mxu0 %v63
    %1044 = vmatpush1.msra.mxu0 %v62
    %1045 = vmatprep.subr.mxu0 %v67
    %1046 = vmatpush1.msra.mxu0 %v66
    %1047 = vmatprep.subr.mxu0 %v71
    %1048 = vmatpush1.msra.mxu0 %v70
    %1049 = vmatprep.subr.mxu0 %v75
    %1050 = vmatpush1.msra.mxu0 %v74
    %1051 = vmatprep.subr.mxu0 %v79
    %1052 = vmatpush1.msra.mxu0 %v78
    %1053 = vmatprep.subr.mxu0 %v83
    %1054 = vmatpush1.msra.mxu0 %v82
    %1055 = vmatprep.subr.mxu0 %v87
    %1056 = vmatpush1.msra.mxu0 %v86
    %1057 = vmatprep.subr.mxu0 %v91
    %1058 = vmatpush1.msra.mxu0 %v90
    %1059 = vmatprep.subr.mxu0 %v95
    %1060 = vmatpush1.msra.mxu0 %v94
    %1061 = vmatprep.subr.mxu0 0.0
    %1062 = vmatpush1.msra.mxu0 0.0
    %1063 = vmatprep.subr.mxu0 0.0
    %1064 = vmatpush1.msra.mxu0 0.0
    %1065 = vmatprep.subr.mxu0 0.0
    %1066 = vmatpush1.msra.mxu0 0.0
    %1067 = vmatprep.subr.mxu0 0.0
    %1068 = vmatpush1.msra.mxu0 0.0
    %1069 = vmatprep.subr.mxu0 0.0
    %1070 = vmatpush1.msra.mxu0 0.0
    %1071 = vmatprep.subr.mxu0 0.0
    %1072 = vmatpush1.msra.mxu0 0.0
    %1073 = vmatprep.subr.mxu0 0.0
    %1074 = vmatpush1.msra.mxu0 0.0
    %1075 = vmatprep.subr.mxu0 0.0
    %1076 = vmatpush1.msra.mxu0 0.0
    %1077 = vmatprep.subr.mxu0 0.0
    %1078 = vmatpush1.msra.mxu0 0.0
    %1079 = vmatprep.subr.mxu0 0.0
    %1080 = vmatpush1.msra.mxu0 0.0
    %1081 = vmatprep.subr.mxu0 0.0
    %1082 = vmatpush1.msra.mxu0 0.0
    %1083 = vmatprep.subr.mxu0 0.0
    %1084 = vmatpush1.msra.mxu0 0.0
    %1085 = vmatprep.subr.mxu0 0.0
    %1086 = vmatpush1.msra.mxu0 0.0
    %1087 = vmatprep.subr.mxu0 0.0
    %1088 = vmatpush1.msra.mxu0 0.0
    %1089 = vmatprep.subr.mxu0 0.0
    %1090 = vmatpush1.msra.mxu0 0.0
    %1091 = vmatprep.subr.mxu0 0.0
    %1092 = vmatpush1.msra.mxu0 0.0
    %1093 = vmatprep.mubr.f32.mxu0 0.0
    %1094 = vmatmul.mubr.f32.gmra.mrb[0].mxu0 %v1028
    %v1095 = vpop.f32.mrb[0].mxu0
    %v1096 = vadd.f32 %v1024, %v1095
    %v1097 = vpop.f32.mrb[0].mxu0
    %v1098 = vadd.f32 %v1025, %v1097
    %1099 = vdwg.mxu0
    %1100 = vmatprep.subr.mxu0 %v37
    %1101 = vmatpush1.msra.mxu0 %v36
    %1102 = vmatprep.subr.mxu0 %v41
    %1103 = vmatpush1.msra.mxu0 %v40
    %1104 = vmatprep.subr.mxu0 %v45
    %1105 = vmatpush1.msra.mxu0 %v44
    %1106 = vmatprep.subr.mxu0 %v49
    %1107 = vmatpush1.msra.mxu0 %v48
    %1108 = vmatprep.subr.mxu0 %v53
    %1109 = vmatpush1.msra.mxu0 %v52
    %1110 = vmatprep.subr.mxu0 %v57
    %1111 = vmatpush1.msra.mxu0 %v56
    %1112 = vmatprep.subr.mxu0 %v61
    %1113 = vmatpush1.msra.mxu0 %v60
    %1114 = vmatprep.subr.mxu0 %v65
    %1115 = vmatpush1.msra.mxu0 %v64
    %1116 = vmatprep.subr.mxu0 %v69
    %1117 = vmatpush1.msra.mxu0 %v68
    %1118 = vmatprep.subr.mxu0 %v73
    %1119 = vmatpush1.msra.mxu0 %v72
    %1120 = vmatprep.subr.mxu0 %v77
    %1121 = vmatpush1.msra.mxu0 %v76
    %1122 = vmatprep.subr.mxu0 %v81
    %1123 = vmatpush1.msra.mxu0 %v80
    %1124 = vmatprep.subr.mxu0 %v85
    %1125 = vmatpush1.msra.mxu0 %v84
    %1126 = vmatprep.subr.mxu0 %v89
    %1127 = vmatpush1.msra.mxu0 %v88
    %1128 = vmatprep.subr.mxu0 %v93
    %1129 = vmatpush1.msra.mxu0 %v92
    %1130 = vmatprep.subr.mxu0 %v97
    %1131 = vmatpush1.msra.mxu0 %v96
    %1132 = vmatprep.subr.mxu0 0.0
    %1133 = vmatpush1.msra.mxu0 0.0
    %1134 = vmatprep.subr.mxu0 0.0
    %1135 = vmatpush1.msra.mxu0 0.0
    %1136 = vmatprep.subr.mxu0 0.0
    %1137 = vmatpush1.msra.mxu0 0.0
    %1138 = vmatprep.subr.mxu0 0.0
    %1139 = vmatpush1.msra.mxu0 0.0
    %1140 = vmatprep.subr.mxu0 0.0
    %1141 = vmatpush1.msra.mxu0 0.0
    %1142 = vmatprep.subr.mxu0 0.0
    %1143 = vmatpush1.msra.mxu0 0.0
    %1144 = vmatprep.subr.mxu0 0.0
    %1145 = vmatpush1.msra.mxu0 0.0
    %1146 = vmatprep.subr.mxu0 0.0
    %1147 = vmatpush1.msra.mxu0 0.0
    %1148 = vmatprep.subr.mxu0 0.0
    %1149 = vmatpush1.msra.mxu0 0.0
    %1150 = vmatprep.subr.mxu0 0.0
    %1151 = vmatpush1.msra.mxu0 0.0
    %1152 = vmatprep.subr.mxu0 0.0
    %1153 = vmatpush1.msra.mxu0 0.0
    %1154 = vmatprep.subr.mxu0 0.0
    %1155 = vmatpush1.msra.mxu0 0.0
    %1156 = vmatprep.subr.mxu0 0.0
    %1157 = vmatpush1.msra.mxu0 0.0
    %1158 = vmatprep.subr.mxu0 0.0
    %1159 = vmatpush1.msra.mxu0 0.0
    %1160 = vmatprep.subr.mxu0 0.0
    %1161 = vmatpush1.msra.mxu0 0.0
    %1162 = vmatprep.subr.mxu0 0.0
    %1163 = vmatpush1.msra.mxu0 0.0
    %1164 = vmatprep.mubr.f32.mxu0 0.0
    %1165 = vmatmul.mubr.f32.gmra.mrb[0].mxu0 %v1028
    %v1166 = vpop.f32.mrb[0].mxu0
    %v1167 = vadd.f32 %v1026, %v1166
    %v1168 = vpop.f32.mrb[0].mxu0
    %v1169 = vadd.f32 %v1027, %v1168
    %1170 = vdwg.mxu0
    %v1171 = vadd.f32 %v1096, %v250
    %v1172 = vadd.f32 %v1098, %v254
    %v1173 = vadd.f32 %v1167, %v258
    %v1174 = vadd.f32 %v1169, %v262
    %v1175 = vxor.u32 %v1171, 2147483648
    %v1176 = vxor.u32 %v1172, 2147483648
    %v1177 = vxor.u32 %v1173, 2147483648
    %v1178 = vmul.f32 %v1175, 1.442695
    %v1179 = vpow.pop %v1178
    %v1180 = vmul.f32 %v1176, 1.442695
    %v1181 = vpow.pop %v1180
    %v1182 = vmul.f32 %v1177, 1.442695
    %v1183 = vpow.pop %v1182
    %v1184 = vadd.f32 %v1179, 1.0
    %v1185 = vadd.f32 %v1181, 1.0
    %v1186 = vadd.f32 %v1183, 1.0
    %v1187 = vrcp.pop %v1184
    %v1188 = vmul.f32 1.0, %v1187
    %v1189 = vrcp.pop %v1185
    %v1190 = vmul.f32 1.0, %v1189
    %v1191 = vrcp.pop %v1186
    %v1192 = vmul.f32 1.0, %v1191
    %v1193 = vtanh.pop %v1174
    %v1194 = vld [vmem:[#allocation3] sm:$0xff]
    %v1195 = vmul.f32 %v1190, %v1194
    %v1196 = vmul.f32 %v1188, %v1193
    %v1197 = vadd.f32 %v1195, %v1196
    %v1198 = vtanh.pop %v1197
    %v1199 = vmul.f32 %v1192, %v1198
    %1200 = vst [vmem:[#allocation3] sm:$0xff] %v1197
    %1201 = vst [vmem:[#allocation2] sm:$0xff] %v1199
    %s1202 = scalar_lea.vmem %s3, 40
    %1203 = vst [vmem:[%s1202] sm:$0xff] %v1199
    %s1204 = scalar_lea.vmem %s0, 192
    %v1205 = vld [vmem:[%s1204] sm:$0xff]
    %v1206 = vld [vmem:[%s1204 + $0x8] sm:$0xff]
    %v1207 = vld [vmem:[%s1204 + $0x10] sm:$0xff]
    %v1208 = vld [vmem:[%s1204 + $0x18] sm:$0xff]
    %v1209 = vld [vmem:[#allocation2] sm:$0xff]
    %1210 = vmatprep.subr.mxu0 %v35
    %1211 = vmatpush1.msra.mxu0 %v34
    %1212 = vmatprep.subr.mxu0 %v39
    %1213 = vmatpush1.msra.mxu0 %v38
    %1214 = vmatprep.subr.mxu0 %v43
    %1215 = vmatpush1.msra.mxu0 %v42
    %1216 = vmatprep.subr.mxu0 %v47
    %1217 = vmatpush1.msra.mxu0 %v46
    %1218 = vmatprep.subr.mxu0 %v51
    %1219 = vmatpush1.msra.mxu0 %v50
    %1220 = vmatprep.subr.mxu0 %v55
    %1221 = vmatpush1.msra.mxu0 %v54
    %1222 = vmatprep.subr.mxu0 %v59
    %1223 = vmatpush1.msra.mxu0 %v58
    %1224 = vmatprep.subr.mxu0 %v63
    %1225 = vmatpush1.msra.mxu0 %v62
    %1226 = vmatprep.subr.mxu0 %v67
    %1227 = vmatpush1.msra.mxu0 %v66
    %1228 = vmatprep.subr.mxu0 %v71
    %1229 = vmatpush1.msra.mxu0 %v70
    %1230 = vmatprep.subr.mxu0 %v75
    %1231 = vmatpush1.msra.mxu0 %v74
    %1232 = vmatprep.subr.mxu0 %v79
    %1233 = vmatpush1.msra.mxu0 %v78
    %1234 = vmatprep.subr.mxu0 %v83
    %1235 = vmatpush1.msra.mxu0 %v82
    %1236 = vmatprep.subr.mxu0 %v87
    %1237 = vmatpush1.msra.mxu0 %v86
    %1238 = vmatprep.subr.mxu0 %v91
    %1239 = vmatpush1.msra.mxu0 %v90
    %1240 = vmatprep.subr.mxu0 %v95
    %1241 = vmatpush1.msra.mxu0 %v94
    %1242 = vmatprep.subr.mxu0 0.0
    %1243 = vmatpush1.msra.mxu0 0.0
    %1244 = vmatprep.subr.mxu0 0.0
    %1245 = vmatpush1.msra.mxu0 0.0
    %1246 = vmatprep.subr.mxu0 0.0
    %1247 = vmatpush1.msra.mxu0 0.0
    %1248 = vmatprep.subr.mxu0 0.0
    %1249 = vmatpush1.msra.mxu0 0.0
    %1250 = vmatprep.subr.mxu0 0.0
    %1251 = vmatpush1.msra.mxu0 0.0
    %1252 = vmatprep.subr.mxu0 0.0
    %1253 = vmatpush1.msra.mxu0 0.0
    %1254 = vmatprep.subr.mxu0 0.0
    %1255 = vmatpush1.msra.mxu0 0.0
    %1256 = vmatprep.subr.mxu0 0.0
    %1257 = vmatpush1.msra.mxu0 0.0
    %1258 = vmatprep.subr.mxu0 0.0
    %1259 = vmatpush1.msra.mxu0 0.0
    %1260 = vmatprep.subr.mxu0 0.0
    %1261 = vmatpush1.msra.mxu0 0.0
    %1262 = vmatprep.subr.mxu0 0.0
    %1263 = vmatpush1.msra.mxu0 0.0
    %1264 = vmatprep.subr.mxu0 0.0
    %1265 = vmatpush1.msra.mxu0 0.0
    %1266 = vmatprep.subr.mxu0 0.0
    %1267 = vmatpush1.msra.mxu0 0.0
    %1268 = vmatprep.subr.mxu0 0.0
    %1269 = vmatpush1.msra.mxu0 0.0
    %1270 = vmatprep.subr.mxu0 0.0
    %1271 = vmatpush1.msra.mxu0 0.0
    %1272 = vmatprep.subr.mxu0 0.0
    %1273 = vmatpush1.msra.mxu0 0.0
    %1274 = vmatprep.mubr.f32.mxu0 0.0
    %1275 = vmatmul.mubr.f32.gmra.mrb[0].mxu0 %v1209
    %v1276 = vpop.f32.mrb[0].mxu0
    %v1277 = vadd.f32 %v1205, %v1276
    %v1278 = vpop.f32.mrb[0].mxu0
    %v1279 = vadd.f32 %v1206, %v1278
    %1280 = vdwg.mxu0
    %1281 = vmatprep.subr.mxu0 %v37
    %1282 = vmatpush1.msra.mxu0 %v36
    %1283 = vmatprep.subr.mxu0 %v41
    %1284 = vmatpush1.msra.mxu0 %v40
    %1285 = vmatprep.subr.mxu0 %v45
    %1286 = vmatpush1.msra.mxu0 %v44
    %1287 = vmatprep.subr.mxu0 %v49
    %1288 = vmatpush1.msra.mxu0 %v48
    %1289 = vmatprep.subr.mxu0 %v53
    %1290 = vmatpush1.msra.mxu0 %v52
    %1291 = vmatprep.subr.mxu0 %v57
    %1292 = vmatpush1.msra.mxu0 %v56
    %1293 = vmatprep.subr.mxu0 %v61
    %1294 = vmatpush1.msra.mxu0 %v60
    %1295 = vmatprep.subr.mxu0 %v65
    %1296 = vmatpush1.msra.mxu0 %v64
    %1297 = vmatprep.subr.mxu0 %v69
    %1298 = vmatpush1.msra.mxu0 %v68
    %1299 = vmatprep.subr.mxu0 %v73
    %1300 = vmatpush1.msra.mxu0 %v72
    %1301 = vmatprep.subr.mxu0 %v77
    %1302 = vmatpush1.msra.mxu0 %v76
    %1303 = vmatprep.subr.mxu0 %v81
    %1304 = vmatpush1.msra.mxu0 %v80
    %1305 = vmatprep.subr.mxu0 %v85
    %1306 = vmatpush1.msra.mxu0 %v84
    %1307 = vmatprep.subr.mxu0 %v89
    %1308 = vmatpush1.msra.mxu0 %v88
    %1309 = vmatprep.subr.mxu0 %v93
    %1310 = vmatpush1.msra.mxu0 %v92
    %1311 = vmatprep.subr.mxu0 %v97
    %1312 = vmatpush1.msra.mxu0 %v96
    %1313 = vmatprep.subr.mxu0 0.0
    %1314 = vmatpush1.msra.mxu0 0.0
    %1315 = vmatprep.subr.mxu0 0.0
    %1316 = vmatpush1.msra.mxu0 0.0
    %1317 = vmatprep.subr.mxu0 0.0
    %1318 = vmatpush1.msra.mxu0 0.0
    %1319 = vmatprep.subr.mxu0 0.0
    %1320 = vmatpush1.msra.mxu0 0.0
    %1321 = vmatprep.subr.mxu0 0.0
    %1322 = vmatpush1.msra.mxu0 0.0
    %1323 = vmatprep.subr.mxu0 0.0
    %1324 = vmatpush1.msra.mxu0 0.0
    %1325 = vmatprep.subr.mxu0 0.0
    %1326 = vmatpush1.msra.mxu0 0.0
    %1327 = vmatprep.subr.mxu0 0.0
    %1328 = vmatpush1.msra.mxu0 0.0
    %1329 = vmatprep.subr.mxu0 0.0
    %1330 = vmatpush1.msra.mxu0 0.0
    %1331 = vmatprep.subr.mxu0 0.0
    %1332 = vmatpush1.msra.mxu0 0.0
    %1333 = vmatprep.subr.mxu0 0.0
    %1334 = vmatpush1.msra.mxu0 0.0
    %1335 = vmatprep.subr.mxu0 0.0
    %1336 = vmatpush1.msra.mxu0 0.0
    %1337 = vmatprep.subr.mxu0 0.0
    %1338 = vmatpush1.msra.mxu0 0.0
    %1339 = vmatprep.subr.mxu0 0.0
    %1340 = vmatpush1.msra.mxu0 0.0
    %1341 = vmatprep.subr.mxu0 0.0
    %1342 = vmatpush1.msra.mxu0 0.0
    %1343 = vmatprep.subr.mxu0 0.0
    %1344 = vmatpush1.msra.mxu0 0.0
    %1345 = vmatprep.mubr.f32.mxu0 0.0
    %1346 = vmatmul.mubr.f32.gmra.mrb[0].mxu0 %v1209
    %v1347 = vpop.f32.mrb[0].mxu0
    %v1348 = vadd.f32 %v1207, %v1347
    %v1349 = vpop.f32.mrb[0].mxu0
    %v1350 = vadd.f32 %v1208, %v1349
    %1351 = vdwg.mxu0
    %v1352 = vadd.f32 %v1277, %v250
    %v1353 = vadd.f32 %v1279, %v254
    %v1354 = vadd.f32 %v1348, %v258
    %v1355 = vadd.f32 %v1350, %v262
    %v1356 = vxor.u32 %v1352, 2147483648
    %v1357 = vxor.u32 %v1353, 2147483648
    %v1358 = vxor.u32 %v1354, 2147483648
    %v1359 = vmul.f32 %v1356, 1.442695
    %v1360 = vpow.pop %v1359
    %v1361 = vmul.f32 %v1357, 1.442695
    %v1362 = vpow.pop %v1361
    %v1363 = vmul.f32 %v1358, 1.442695
    %v1364 = vpow.pop %v1363
    %v1365 = vadd.f32 %v1360, 1.0
    %v1366 = vadd.f32 %v1362, 1.0
    %v1367 = vadd.f32 %v1364, 1.0
    %v1368 = vrcp.pop %v1365
    %v1369 = vmul.f32 1.0, %v1368
    %v1370 = vrcp.pop %v1366
    %v1371 = vmul.f32 1.0, %v1370
    %v1372 = vrcp.pop %v1367
    %v1373 = vmul.f32 1.0, %v1372
    %v1374 = vtanh.pop %v1355
    %v1375 = vld [vmem:[#allocation3] sm:$0xff]
    %v1376 = vmul.f32 %v1371, %v1375
    %v1377 = vmul.f32 %v1369, %v1374
    %v1378 = vadd.f32 %v1376, %v1377
    %v1379 = vtanh.pop %v1378
    %v1380 = vmul.f32 %v1373, %v1379
    %1381 = vst [vmem:[#allocation3] sm:$0xff] %v1378
    %1382 = vst [vmem:[#allocation2] sm:$0xff] %v1380
    %s1383 = scalar_lea.vmem %s3, 48
    %1384 = vst [vmem:[%s1383] sm:$0xff] %v1380
    %s1385 = scalar_lea.vmem %s0, 224
    %v1386 = vld [vmem:[%s1385] sm:$0xff]
    %v1387 = vld [vmem:[%s1385 + $0x8] sm:$0xff]
    %v1388 = vld [vmem:[%s1385 + $0x10] sm:$0xff]
    %v1389 = vld [vmem:[%s1385 + $0x18] sm:$0xff]
    %v1390 = vld [vmem:[#allocation2] sm:$0xff]
    %1391 = vmatprep.subr.mxu0 %v35
    %1392 = vmatpush1.msra.mxu0 %v34
    %1393 = vmatprep.subr.mxu0 %v39
    %1394 = vmatpush1.msra.mxu0 %v38
    %1395 = vmatprep.subr.mxu0 %v43
    %1396 = vmatpush1.msra.mxu0 %v42
    %1397 = vmatprep.subr.mxu0 %v47
    %1398 = vmatpush1.msra.mxu0 %v46
    %1399 = vmatprep.subr.mxu0 %v51
    %1400 = vmatpush1.msra.mxu0 %v50
    %1401 = vmatprep.subr.mxu0 %v55
    %1402 = vmatpush1.msra.mxu0 %v54
    %1403 = vmatprep.subr.mxu0 %v59
    %1404 = vmatpush1.msra.mxu0 %v58
    %1405 = vmatprep.subr.mxu0 %v63
    %1406 = vmatpush1.msra.mxu0 %v62
    %1407 = vmatprep.subr.mxu0 %v67
    %1408 = vmatpush1.msra.mxu0 %v66
    %1409 = vmatprep.subr.mxu0 %v71
    %1410 = vmatpush1.msra.mxu0 %v70
    %1411 = vmatprep.subr.mxu0 %v75
    %1412 = vmatpush1.msra.mxu0 %v74
    %1413 = vmatprep.subr.mxu0 %v79
    %1414 = vmatpush1.msra.mxu0 %v78
    %1415 = vmatprep.subr.mxu0 %v83
    %1416 = vmatpush1.msra.mxu0 %v82
    %1417 = vmatprep.subr.mxu0 %v87
    %1418 = vmatpush1.msra.mxu0 %v86
    %1419 = vmatprep.subr.mxu0 %v91
    %1420 = vmatpush1.msra.mxu0 %v90
    %1421 = vmatprep.subr.mxu0 %v95
    %1422 = vmatpush1.msra.mxu0 %v94
    %1423 = vmatprep.subr.mxu0 0.0
    %1424 = vmatpush1.msra.mxu0 0.0
    %1425 = vmatprep.subr.mxu0 0.0
    %1426 = vmatpush1.msra.mxu0 0.0
    %1427 = vmatprep.subr.mxu0 0.0
    %1428 = vmatpush1.msra.mxu0 0.0
    %1429 = vmatprep.subr.mxu0 0.0
    %1430 = vmatpush1.msra.mxu0 0.0
    %1431 = vmatprep.subr.mxu0 0.0
    %1432 = vmatpush1.msra.mxu0 0.0
    %1433 = vmatprep.subr.mxu0 0.0
    %1434 = vmatpush1.msra.mxu0 0.0
    %1435 = vmatprep.subr.mxu0 0.0
    %1436 = vmatpush1.msra.mxu0 0.0
    %1437 = vmatprep.subr.mxu0 0.0
    %1438 = vmatpush1.msra.mxu0 0.0
    %1439 = vmatprep.subr.mxu0 0.0
    %1440 = vmatpush1.msra.mxu0 0.0
    %1441 = vmatprep.subr.mxu0 0.0
    %1442 = vmatpush1.msra.mxu0 0.0
    %1443 = vmatprep.subr.mxu0 0.0
    %1444 = vmatpush1.msra.mxu0 0.0
    %1445 = vmatprep.subr.mxu0 0.0
    %1446 = vmatpush1.msra.mxu0 0.0
    %1447 = vmatprep.subr.mxu0 0.0
    %1448 = vmatpush1.msra.mxu0 0.0
    %1449 = vmatprep.subr.mxu0 0.0
    %1450 = vmatpush1.msra.mxu0 0.0
    %1451 = vmatprep.subr.mxu0 0.0
    %1452 = vmatpush1.msra.mxu0 0.0
    %1453 = vmatprep.subr.mxu0 0.0
    %1454 = vmatpush1.msra.mxu0 0.0
    %1455 = vmatprep.mubr.f32.mxu0 0.0
    %1456 = vmatmul.mubr.f32.gmra.mrb[0].mxu0 %v1390
    %v1457 = vpop.f32.mrb[0].mxu0
    %v1458 = vadd.f32 %v1386, %v1457
    %v1459 = vpop.f32.mrb[0].mxu0
    %v1460 = vadd.f32 %v1387, %v1459
    %1461 = vdwg.mxu0
    %1462 = vmatprep.subr.mxu0 %v37
    %1463 = vmatpush1.msra.mxu0 %v36
    %1464 = vmatprep.subr.mxu0 %v41
    %1465 = vmatpush1.msra.mxu0 %v40
    %1466 = vmatprep.subr.mxu0 %v45
    %1467 = vmatpush1.msra.mxu0 %v44
    %1468 = vmatprep.subr.mxu0 %v49
    %1469 = vmatpush1.msra.mxu0 %v48
    %1470 = vmatprep.subr.mxu0 %v53
    %1471 = vmatpush1.msra.mxu0 %v52
    %1472 = vmatprep.subr.mxu0 %v57
    %1473 = vmatpush1.msra.mxu0 %v56
    %1474 = vmatprep.subr.mxu0 %v61
    %1475 = vmatpush1.msra.mxu0 %v60
    %1476 = vmatprep.subr.mxu0 %v65
    %1477 = vmatpush1.msra.mxu0 %v64
    %1478 = vmatprep.subr.mxu0 %v69
    %1479 = vmatpush1.msra.mxu0 %v68
    %1480 = vmatprep.subr.mxu0 %v73
    %1481 = vmatpush1.msra.mxu0 %v72
    %1482 = vmatprep.subr.mxu0 %v77
    %1483 = vmatpush1.msra.mxu0 %v76
    %1484 = vmatprep.subr.mxu0 %v81
    %1485 = vmatpush1.msra.mxu0 %v80
    %1486 = vmatprep.subr.mxu0 %v85
    %1487 = vmatpush1.msra.mxu0 %v84
    %1488 = vmatprep.subr.mxu0 %v89
    %1489 = vmatpush1.msra.mxu0 %v88
    %1490 = vmatprep.subr.mxu0 %v93
    %1491 = vmatpush1.msra.mxu0 %v92
    %1492 = vmatprep.subr.mxu0 %v97
    %1493 = vmatpush1.msra.mxu0 %v96
    %1494 = vmatprep.subr.mxu0 0.0
    %1495 = vmatpush1.msra.mxu0 0.0
    %1496 = vmatprep.subr.mxu0 0.0
    %1497 = vmatpush1.msra.mxu0 0.0
    %1498 = vmatprep.subr.mxu0 0.0
    %1499 = vmatpush1.msra.mxu0 0.0
    %1500 = vmatprep.subr.mxu0 0.0
    %1501 = vmatpush1.msra.mxu0 0.0
    %1502 = vmatprep.subr.mxu0 0.0
    %1503 = vmatpush1.msra.mxu0 0.0
    %1504 = vmatprep.subr.mxu0 0.0
    %1505 = vmatpush1.msra.mxu0 0.0
    %1506 = vmatprep.subr.mxu0 0.0
    %1507 = vmatpush1.msra.mxu0 0.0
    %1508 = vmatprep.subr.mxu0 0.0
    %1509 = vmatpush1.msra.mxu0 0.0
    %1510 = vmatprep.subr.mxu0 0.0
    %1511 = vmatpush1.msra.mxu0 0.0
    %1512 = vmatprep.subr.mxu0 0.0
    %1513 = vmatpush1.msra.mxu0 0.0
    %1514 = vmatprep.subr.mxu0 0.0
    %1515 = vmatpush1.msra.mxu0 0.0
    %1516 = vmatprep.subr.mxu0 0.0
    %1517 = vmatpush1.msra.mxu0 0.0
    %1518 = vmatprep.subr.mxu0 0.0
    %1519 = vmatpush1.msra.mxu0 0.0
    %1520 = vmatprep.subr.mxu0 0.0
    %1521 = vmatpush1.msra.mxu0 0.0
    %1522 = vmatprep.subr.mxu0 0.0
    %1523 = vmatpush1.msra.mxu0 0.0
    %1524 = vmatprep.subr.mxu0 0.0
    %1525 = vmatpush1.msra.mxu0 0.0
    %1526 = vmatprep.mubr.f32.mxu0 0.0
    %1527 = vmatmul.mubr.f32.gmra.mrb[0].mxu0 %v1390
    %v1528 = vpop.f32.mrb[0].mxu0
    %v1529 = vadd.f32 %v1388, %v1528
    %v1530 = vpop.f32.mrb[0].mxu0
    %v1531 = vadd.f32 %v1389, %v1530
    %1532 = vdwg.mxu0
    %v1533 = vadd.f32 %v1458, %v250
    %v1534 = vadd.f32 %v1460, %v254
    %v1535 = vadd.f32 %v1529, %v258
    %v1536 = vadd.f32 %v1531, %v262
    %v1537 = vxor.u32 %v1533, 2147483648
    %v1538 = vxor.u32 %v1534, 2147483648
    %v1539 = vxor.u32 %v1535, 2147483648
    %v1540 = vmul.f32 %v1537, 1.442695
    %v1541 = vpow.pop %v1540
    %v1542 = vmul.f32 %v1538, 1.442695
    %v1543 = vpow.pop %v1542
    %v1544 = vmul.f32 %v1539, 1.442695
    %v1545 = vpow.pop %v1544
    %v1546 = vadd.f32 %v1541, 1.0
    %v1547 = vadd.f32 %v1543, 1.0
    %v1548 = vadd.f32 %v1545, 1.0
    %v1549 = vrcp.pop %v1546
    %v1550 = vmul.f32 1.0, %v1549
    %v1551 = vrcp.pop %v1547
    %v1552 = vmul.f32 1.0, %v1551
    %v1553 = vrcp.pop %v1548
    %v1554 = vmul.f32 1.0, %v1553
    %v1555 = vtanh.pop %v1536
    %v1556 = vld [vmem:[#allocation3] sm:$0xff]
    %v1557 = vmul.f32 %v1552, %v1556
    %v1558 = vmul.f32 %v1550, %v1555
    %v1559 = vadd.f32 %v1557, %v1558
    %v1560 = vtanh.pop %v1559
    %v1561 = vmul.f32 %v1554, %v1560
    %1562 = vst [vmem:[#allocation3] sm:$0xff] %v1559
    %1563 = vst [vmem:[#allocation2] sm:$0xff] %v1561
    %s1564 = scalar_lea.vmem %s3, 56
    %1565 = vst [vmem:[%s1564] sm:$0xff] %v1561
    // Predicated region
    $region22: #{lstm_forecast.4} parent=1 // pred_check
      _
    $region23: #{lstm_forecast.4} parent=1 // pred_check_branch
      %1567 = sbr.rel (0) target = $region25
    $region24: #{lstm_forecast.4} parent=1 // pred_region
      _
    $region25: #{lstm_forecast.4} parent=1 // pred_fallthru
      _
    // Predicated region
    $region26: #{lstm_forecast.4} parent=1 // pred_check
      _
    $region27: #{lstm_forecast.4} parent=1 // pred_check_branch
      %1569 = sbr.rel (0) target = $region29
    $region28: #{lstm_forecast.4} parent=1 // pred_region
      _
    $region29: #{lstm_forecast.4} parent=1 // pred_fallthru
      _
    %1570 = vsyncpa [#allocation5], 1

// kernel: lstm_forecast.5
$region0: #{lstm_forecast.5}
  #allocation0 [shape = 'u32[]', space=smem, size = 0x4, offset = 0x4, fixed_abs, tag = 'smem constant byte address 0x4 - core index']
  #allocation1 [shape = 'u32[144,128]{1,0:T(1,128)}', space=vmem, size = 0x12000, scoped, tag = 'internal scratch']
  #allocation2 [shape = 'f32[8,128]{1,0:T(8,128)}', space=vmem, size = 0x1000, scoped, tag = 'scratch operand']
  #allocation3 [shape = 'f32[8,128]{1,0:T(8,128)}', space=vmem, size = 0x1000, scoped, tag = 'scratch operand']
  %s0 = inlined_call_operand.vmem [shape: f32[8,8,512], index: 0, kind: input, shape index: {}]
  %s1 = inlined_call_operand.vmem [shape: f32[128,512], index: 1, kind: input, shape index: {}]
  %s2 = inlined_call_operand.vmem [shape: f32[1,512], index: 2, kind: input, shape index: {}]
  %s3 = inlined_call_operand.vmem [shape: f32[8,8,128], index: 3, kind: output, shape index: {}]
  %s4 = sld [smem:[#allocation0]]
  $region26: #{lstm_forecast.5} parent=0
    _
  %s6 = ssub.s32 1, %s4
  %s7 = scalar_select 0, %s6, %s4
  // Predicated region
  $region2: #{lstm_forecast.5} parent=0 // pred_check
    _
  $region3: #{lstm_forecast.5} parent=0 // pred_check_branch
    %9 = sbr.rel (0) target = $region5
  $region4: #{lstm_forecast.5} parent=0 // pred_region
    _
  $region5: #{lstm_forecast.5} parent=0 // pred_fallthru
    _
  // Predicated region
  $region6: #{lstm_forecast.5} parent=0 // pred_check
    _
  $region7: #{lstm_forecast.5} parent=0 // pred_check_branch
    %11 = sbr.rel (0) target = $region9
  $region8: #{lstm_forecast.5} parent=0 // pred_region
    _
  $region9: #{lstm_forecast.5} parent=0 // pred_fallthru
    _
  // Predicated region
  $region10: #{lstm_forecast.5} parent=0 // pred_check
    _
  $region11: #{lstm_forecast.5} parent=0 // pred_check_branch
    %13 = sbr.rel (0) target = $region13
  $region12: #{lstm_forecast.5} parent=0 // pred_region
    _
  $region13: #{lstm_forecast.5} parent=0 // pred_fallthru
    _
  %p14 = scmp.eq.s32.totalorder 0, 0
  // Predicated region
  $region14: #{lstm_forecast.5} parent=0 // pred_check
    %p15 = pneg %p14
  $region15: #{lstm_forecast.5} parent=0 // pred_check_branch
    %17 = sbr.rel (%p15) target = $region17
  $region16: #{lstm_forecast.5} parent=0 // pred_region
    %18 = vst [vmem:[#allocation2] sm:$0xff] 0.0
    %19 = vst [vmem:[#allocation3] sm:$0xff] 0.0
  $region17: #{lstm_forecast.5} parent=0 // pred_fallthru
    _
  %v20 = vld [vmem:[%s1] sm:$0xff]
  %v21 = vld [vmem:[%s1 + $0x8] sm:$0xff]
  %v22 = vld [vmem:[%s1 + $0x10] sm:$0xff]
  %v23 = vld [vmem:[%s1 + $0x18] sm:$0xff]
  %v24 = vld [vmem:[%s1 + $0x20] sm:$0xff]
  %v25 = vld [vmem:[%s1 + $0x28] sm:$0xff]
  %v26 = vld [vmem:[%s1 + $0x30] sm:$0xff]
  %v27 = vld [vmem:[%s1 + $0x38] sm:$0xff]
  %v28 = vld [vmem:[%s1 + $0x40] sm:$0xff]
  %v29 = vld [vmem:[%s1 + $0x48] sm:$0xff]
  %v30 = vld [vmem:[%s1 + $0x50] sm:$0xff]
  %v31 = vld [vmem:[%s1 + $0x58] sm:$0xff]
  %v32 = vld [vmem:[%s1 + $0x60] sm:$0xff]
  %v33 = vld [vmem:[%s1 + $0x68] sm:$0xff]
  %v34 = vld [vmem:[%s1 + $0x70] sm:$0xff]
  %v35 = vld [vmem:[%s1 + $0x78] sm:$0xff]
  %v36 = vld [vmem:[%s1 + $0x80] sm:$0xff]
  %v37 = vld [vmem:[%s1 + $0x88] sm:$0xff]
  %v38 = vld [vmem:[%s1 + $0x90] sm:$0xff]
  %v39 = vld [vmem:[%s1 + $0x98] sm:$0xff]
  %v40 = vld [vmem:[%s1 + $0xa0] sm:$0xff]
  %v41 = vld [vmem:[%s1 + $0xa8] sm:$0xff]
  %v42 = vld [vmem:[%s1 + $0xb0] sm:$0xff]
  %v43 = vld [vmem:[%s1 + $0xb8] sm:$0xff]
  %v44 = vld [vmem:[%s1 + $0xc0] sm:$0xff]
  %v45 = vld [vmem:[%s1 + $0xc8] sm:$0xff]
  %v46 = vld [vmem:[%s1 + $0xd0] sm:$0xff]
  %v47 = vld [vmem:[%s1 + $0xd8] sm:$0xff]
  %v48 = vld [vmem:[%s1 + $0xe0] sm:$0xff]
  %v49 = vld [vmem:[%s1 + $0xe8] sm:$0xff]
  %v50 = vld [vmem:[%s1 + $0xf0] sm:$0xff]
  %v51 = vld [vmem:[%s1 + $0xf8] sm:$0xff]
  %v52 = vld [vmem:[%s1 + $0x100] sm:$0xff]
  %v53 = vld [vmem:[%s1 + $0x108] sm:$0xff]
  %v54 = vld [vmem:[%s1 + $0x110] sm:$0xff]
  %v55 = vld [vmem:[%s1 + $0x118] sm:$0xff]
  %v56 = vld [vmem:[%s1 + $0x120] sm:$0xff]
  %v57 = vld [vmem:[%s1 + $0x128] sm:$0xff]
  %v58 = vld [vmem:[%s1 + $0x130] sm:$0xff]
  %v59 = vld [vmem:[%s1 + $0x138] sm:$0xff]
  %v60 = vld [vmem:[%s1 + $0x140] sm:$0xff]
  %v61 = vld [vmem:[%s1 + $0x148] sm:$0xff]
  %v62 = vld [vmem:[%s1 + $0x150] sm:$0xff]
  %v63 = vld [vmem:[%s1 + $0x158] sm:$0xff]
  %v64 = vld [vmem:[%s1 + $0x160] sm:$0xff]
  %v65 = vld [vmem:[%s1 + $0x168] sm:$0xff]
  %v66 = vld [vmem:[%s1 + $0x170] sm:$0xff]
  %v67 = vld [vmem:[%s1 + $0x178] sm:$0xff]
  %v68 = vld [vmem:[%s1 + $0x180] sm:$0xff]
  %v69 = vld [vmem:[%s1 + $0x188] sm:$0xff]
  %v70 = vld [vmem:[%s1 + $0x190] sm:$0xff]
  %v71 = vld [vmem:[%s1 + $0x198] sm:$0xff]
  %v72 = vld [vmem:[%s1 + $0x1a0] sm:$0xff]
  %v73 = vld [vmem:[%s1 + $0x1a8] sm:$0xff]
  %v74 = vld [vmem:[%s1 + $0x1b0] sm:$0xff]
  %v75 = vld [vmem:[%s1 + $0x1b8] sm:$0xff]
  %v76 = vld [vmem:[%s1 + $0x1c0] sm:$0xff]
  %v77 = vld [vmem:[%s1 + $0x1c8] sm:$0xff]
  %v78 = vld [vmem:[%s1 + $0x1d0] sm:$0xff]
  %v79 = vld [vmem:[%s1 + $0x1d8] sm:$0xff]
  %v80 = vld [vmem:[%s1 + $0x1e0] sm:$0xff]
  %v81 = vld [vmem:[%s1 + $0x1e8] sm:$0xff]
  %v82 = vld [vmem:[%s1 + $0x1f0] sm:$0xff]
  %v83 = vld [vmem:[%s1 + $0x1f8] sm:$0xff]
  %v84 = vld [vmem:[%s2] sm:$0xf]
  %v85 = vld [vmem:[%s0] sm:$0xff]
  %v86 = vld [vmem:[%s0 + $0x8] sm:$0xff]
  %v87 = vld [vmem:[%s0 + $0x10] sm:$0xff]
  %v88 = vld [vmem:[%s0 + $0x18] sm:$0xff]
  %v89 = vld [vmem:[#allocation2] sm:$0xff]
  %90 = vmatprep.subr.mxu0 %v21
  %91 = vmatpush1.msra.mxu0 %v20
  %92 = vmatprep.subr.mxu0 %v25
  %93 = vmatpush1.msra.mxu0 %v24
  %94 = vmatprep.subr.mxu0 %v29
  %95 = vmatpush1.msra.mxu0 %v28
  %96 = vmatprep.subr.mxu0 %v33
  %97 = vmatpush1.msra.mxu0 %v32
  %98 = vmatprep.subr.mxu0 %v37
  %99 = vmatpush1.msra.mxu0 %v36
  %100 = vmatprep.subr.mxu0 %v41
  %101 = vmatpush1.msra.mxu0 %v40
  %102 = vmatprep.subr.mxu0 %v45
  %103 = vmatpush1.msra.mxu0 %v44
  %104 = vmatprep.subr.mxu0 %v49
  %105 = vmatpush1.msra.mxu0 %v48
  %106 = vmatprep.subr.mxu0 %v53
  %107 = vmatpush1.msra.mxu0 %v52
  %108 = vmatprep.subr.mxu0 %v57
  %109 = vmatpush1.msra.mxu0 %v56
  %110 = vmatprep.subr.mxu0 %v61
  %111 = vmatpush1.msra.mxu0 %v60
  %112 = vmatprep.subr.mxu0 %v65
  %113 = vmatpush1.msra.mxu0 %v64
  %114 = vmatprep.subr.mxu0 %v69
  %115 = vmatpush1.msra.mxu0 %v68
  %116 = vmatprep.subr.mxu0 %v73
  %117 = vmatpush1.msra.mxu0 %v72
  %118 = vmatprep.subr.mxu0 %v77
  %119 = vmatpush1.msra.mxu0 %v76
  %120 = vmatprep.subr.mxu0 %v81
  %121 = vmatpush1.msra.mxu0 %v80
  %122 = vmatprep.subr.mxu0 0.0
  %123 = vmatpush1.msra.mxu0 0.0
  %124 = vmatprep.subr.mxu0 0.0
  %125 = vmatpush1.msra.mxu0 0.0
  %126 = vmatprep.subr.mxu0 0.0
  %127 = vmatpush1.msra.mxu0 0.0
  %128 = vmatprep.subr.mxu0 0.0
  %129 = vmatpush1.msra.mxu0 0.0
  %130 = vmatprep.subr.mxu0 0.0
  %131 = vmatpush1.msra.mxu0 0.0
  %132 = vmatprep.subr.mxu0 0.0
  %133 = vmatpush1.msra.mxu0 0.0
  %134 = vmatprep.subr.mxu0 0.0
  %135 = vmatpush1.msra.mxu0 0.0
  %136 = vmatprep.subr.mxu0 0.0
  %137 = vmatpush1.msra.mxu0 0.0
  %138 = vmatprep.subr.mxu0 0.0
  %139 = vmatpush1.msra.mxu0 0.0
  %140 = vmatprep.subr.mxu0 0.0
  %141 = vmatpush1.msra.mxu0 0.0
  %142 = vmatprep.subr.mxu0 0.0
  %143 = vmatpush1.msra.mxu0 0.0
  %144 = vmatprep.subr.mxu0 0.0
  %145 = vmatpush1.msra.mxu0 0.0
  %146 = vmatprep.subr.mxu0 0.0
  %147 = vmatpush1.msra.mxu0 0.0
  %148 = vmatprep.subr.mxu0 0.0
  %149 = vmatpush1.msra.mxu0 0.0
  %150 = vmatprep.subr.mxu0 0.0
  %151 = vmatpush1.msra.mxu0 0.0
  %152 = vmatprep.subr.mxu0 0.0
  %153 = vmatpush1.msra.mxu0 0.0
  %154 = vmatprep.mubr.f32.mxu0 0.0
  %155 = vmatmul.mubr.f32.gmra.mrb[0].mxu0 %v89
  %v156 = vpop.f32.mrb[0].mxu0
  %v157 = vadd.f32 %v85, %v156
  %v158 = vpop.f32.mrb[0].mxu0
  %v159 = vadd.f32 %v86, %v158
  %160 = vdwg.mxu0
  %161 = vmatprep.subr.mxu0 %v23
  %162 = vmatpush1.msra.mxu0 %v22
  %163 = vmatprep.subr.mxu0 %v27
  %164 = vmatpush1.msra.mxu0 %v26
  %165 = vmatprep.subr.mxu0 %v31
  %166 = vmatpush1.msra.mxu0 %v30
  %167 = vmatprep.subr.mxu0 %v35
  %168 = vmatpush1.msra.mxu0 %v34
  %169 = vmatprep.subr.mxu0 %v39
  %170 = vmatpush1.msra.mxu0 %v38
  %171 = vmatprep.subr.mxu0 %v43
  %172 = vmatpush1.msra.mxu0 %v42
  %173 = vmatprep.subr.mxu0 %v47
  %174 = vmatpush1.msra.mxu0 %v46
  %175 = vmatprep.subr.mxu0 %v51
  %176 = vmatpush1.msra.mxu0 %v50
  %177 = vmatprep.subr.mxu0 %v55
  %178 = vmatpush1.msra.mxu0 %v54
  %179 = vmatprep.subr.mxu0 %v59
  %180 = vmatpush1.msra.mxu0 %v58
  %181 = vmatprep.subr.mxu0 %v63
  %182 = vmatpush1.msra.mxu0 %v62
  %183 = vmatprep.subr.mxu0 %v67
  %184 = vmatpush1.msra.mxu0 %v66
  %185 = vmatprep.subr.mxu0 %v71
  %186 = vmatpush1.msra.mxu0 %v70
  %187 = vmatprep.subr.mxu0 %v75
  %188 = vmatpush1.msra.mxu0 %v74
  %189 = vmatprep.subr.mxu0 %v79
  %190 = vmatpush1.msra.mxu0 %v78
  %191 = vmatprep.subr.mxu0 %v83
  %192 = vmatpush1.msra.mxu0 %v82
  %193 = vmatprep.subr.mxu0 0.0
  %194 = vmatpush1.msra.mxu0 0.0
  %195 = vmatprep.subr.mxu0 0.0
  %196 = vmatpush1.msra.mxu0 0.0
  %197 = vmatprep.subr.mxu0 0.0
  %198 = vmatpush1.msra.mxu0 0.0
  %199 = vmatprep.subr.mxu0 0.0
  %200 = vmatpush1.msra.mxu0 0.0
  %201 = vmatprep.subr.mxu0 0.0
  %202 = vmatpush1.msra.mxu0 0.0
  %203 = vmatprep.subr.mxu0 0.0
  %204 = vmatpush1.msra.mxu0 0.0
  %205 = vmatprep.subr.mxu0 0.0
  %206 = vmatpush1.msra.mxu0 0.0
  %207 = vmatprep.subr.mxu0 0.0
  %208 = vmatpush1.msra.mxu0 0.0
  %209 = vmatprep.subr.mxu0 0.0
  %210 = vmatpush1.msra.mxu0 0.0
  %211 = vmatprep.subr.mxu0 0.0
  %212 = vmatpush1.msra.mxu0 0.0
  %213 = vmatprep.subr.mxu0 0.0
  %214 = vmatpush1.msra.mxu0 0.0
  %215 = vmatprep.subr.mxu0 0.0
  %216 = vmatpush1.msra.mxu0 0.0
  %217 = vmatprep.subr.mxu0 0.0
  %218 = vmatpush1.msra.mxu0 0.0
  %219 = vmatprep.subr.mxu0 0.0
  %220 = vmatpush1.msra.mxu0 0.0
  %221 = vmatprep.subr.mxu0 0.0
  %222 = vmatpush1.msra.mxu0 0.0
  %223 = vmatprep.subr.mxu0 0.0
  %224 = vmatpush1.msra.mxu0 0.0
  %225 = vmatprep.mubr.f32.mxu0 0.0
  %226 = vmatmul.mubr.f32.gmra.mrb[0].mxu0 %v89
  %v227 = vpop.f32.mrb[0].mxu0
  %v228 = vadd.f32 %v87, %v227
  %v229 = vpop.f32.mrb[0].mxu0
  %v230 = vadd.f32 %v88, %v229
  %231 = vdwg.mxu0
  %v233 = vlaneseq
  %v234 = vshrl.u32 %v233, 7
  %v235 = vsub.s32 0, %v234
  %v236 = vrot.slane %v84, %v235
  %v237 = vlaneseq
  %v238 = vshrl.u32 %v237, 7
  %v239 = vsub.s32 1, %v238
  %v240 = vrot.slane %v84, %v239
  %v241 = vlaneseq
  %v242 = vshrl.u32 %v241, 7
  %v243 = vsub.s32 2, %v242
  %v244 = vrot.slane %v84, %v243
  %v245 = vlaneseq
  %v246 = vshrl.u32 %v245, 7
  %v247 = vsub.s32 3, %v246
  %v248 = vrot.slane %v84, %v247
  %v253 = vadd.f32 %v157, %v236
  %v254 = vadd.f32 %v159, %v240
  %v255 = vadd.f32 %v228, %v244
  %v256 = vadd.f32 %v230, %v248
  %v257 = vxor.u32 %v253, 2147483648
  %v258 = vxor.u32 %v254, 2147483648
  %v259 = vxor.u32 %v255, 2147483648
  %v260 = vmul.f32 %v257, 1.442695
  %v261 = vpow.pop %v260
  %v262 = vmul.f32 %v258, 1.442695
  %v263 = vpow.pop %v262
  %v264 = vmul.f32 %v259, 1.442695
  %v265 = vpow.pop %v264
  %v266 = vadd.f32 %v261, 1.0
  %v267 = vadd.f32 %v263, 1.0
  %v268 = vadd.f32 %v265, 1.0
  %v269 = vrcp.pop %v266
  %v270 = vmul.f32 1.0, %v269
  %v271 = vrcp.pop %v267
  %v272 = vmul.f32 1.0, %v271
  %v273 = vrcp.pop %v268
  %v274 = vmul.f32 1.0, %v273
  %v275 = vtanh.pop %v256
  %v276 = vld [vmem:[#allocation3] sm:$0xff]
  %v277 = vmul.f32 %v272, %v276
  %v278 = vmul.f32 %v270, %v275
  %v279 = vadd.f32 %v277, %v278
  %v280 = vtanh.pop %v279
  %v281 = vmul.f32 %v274, %v280
  %282 = vst [vmem:[#allocation3] sm:$0xff] %v279
  %283 = vst [vmem:[#allocation2] sm:$0xff] %v281
  %284 = vst [vmem:[%s3] sm:$0xff] %v281
  %s285 = scalar_lea.vmem %s0, 32
  %v286 = vld [vmem:[%s285] sm:$0xff]
  %v287 = vld [vmem:[%s285 + $0x8] sm:$0xff]
  %v288 = vld [vmem:[%s285 + $0x10] sm:$0xff]
  %v289 = vld [vmem:[%s285 + $0x18] sm:$0xff]
  %v290 = vld [vmem:[#allocation2] sm:$0xff]
  %291 = vmatprep.subr.mxu0 %v21
  %292 = vmatpush1.msra.mxu0 %v20
  %293 = vmatprep.subr.mxu0 %v25
  %294 = vmatpush1.msra.mxu0 %v24
  %295 = vmatprep.subr.mxu0 %v29
  %296 = vmatpush1.msra.mxu0 %v28
  %297 = vmatprep.subr.mxu0 %v33
  %298 = vmatpush1.msra.mxu0 %v32
  %299 = vmatprep.subr.mxu0 %v37
  %300 = vmatpush1.msra.mxu0 %v36
  %301 = vmatprep.subr.mxu0 %v41
  %302 = vmatpush1.msra.mxu0 %v40
  %303 = vmatprep.subr.mxu0 %v45
  %304 = vmatpush1.msra.mxu0 %v44
  %305 = vmatprep.subr.mxu0 %v49
  %306 = vmatpush1.msra.mxu0 %v48
  %307 = vmatprep.subr.mxu0 %v53
  %308 = vmatpush1.msra.mxu0 %v52
  %309 = vmatprep.subr.mxu0 %v57
  %310 = vmatpush1.msra.mxu0 %v56
  %311 = vmatprep.subr.mxu0 %v61
  %312 = vmatpush1.msra.mxu0 %v60
  %313 = vmatprep.subr.mxu0 %v65
  %314 = vmatpush1.msra.mxu0 %v64
  %315 = vmatprep.subr.mxu0 %v69
  %316 = vmatpush1.msra.mxu0 %v68
  %317 = vmatprep.subr.mxu0 %v73
  %318 = vmatpush1.msra.mxu0 %v72
  %319 = vmatprep.subr.mxu0 %v77
  %320 = vmatpush1.msra.mxu0 %v76
  %321 = vmatprep.subr.mxu0 %v81
  %322 = vmatpush1.msra.mxu0 %v80
  %323 = vmatprep.subr.mxu0 0.0
  %324 = vmatpush1.msra.mxu0 0.0
  %325 = vmatprep.subr.mxu0 0.0
  %326 = vmatpush1.msra.mxu0 0.0
  %327 = vmatprep.subr.mxu0 0.0
  %328 = vmatpush1.msra.mxu0 0.0
  %329 = vmatprep.subr.mxu0 0.0
  %330 = vmatpush1.msra.mxu0 0.0
  %331 = vmatprep.subr.mxu0 0.0
  %332 = vmatpush1.msra.mxu0 0.0
  %333 = vmatprep.subr.mxu0 0.0
  %334 = vmatpush1.msra.mxu0 0.0
  %335 = vmatprep.subr.mxu0 0.0
  %336 = vmatpush1.msra.mxu0 0.0
  %337 = vmatprep.subr.mxu0 0.0
  %338 = vmatpush1.msra.mxu0 0.0
  %339 = vmatprep.subr.mxu0 0.0
  %340 = vmatpush1.msra.mxu0 0.0
  %341 = vmatprep.subr.mxu0 0.0
  %342 = vmatpush1.msra.mxu0 0.0
  %343 = vmatprep.subr.mxu0 0.0
  %344 = vmatpush1.msra.mxu0 0.0
  %345 = vmatprep.subr.mxu0 0.0
  %346 = vmatpush1.msra.mxu0 0.0
  %347 = vmatprep.subr.mxu0 0.0
  %348 = vmatpush1.msra.mxu0 0.0
  %349 = vmatprep.subr.mxu0 0.0
  %350 = vmatpush1.msra.mxu0 0.0
  %351 = vmatprep.subr.mxu0 0.0
  %352 = vmatpush1.msra.mxu0 0.0
  %353 = vmatprep.subr.mxu0 0.0
  %354 = vmatpush1.msra.mxu0 0.0
  %355 = vmatprep.mubr.f32.mxu0 0.0
  %356 = vmatmul.mubr.f32.gmra.mrb[0].mxu0 %v290
  %v357 = vpop.f32.mrb[0].mxu0
  %v358 = vadd.f32 %v286, %v357
  %v359 = vpop.f32.mrb[0].mxu0
  %v360 = vadd.f32 %v287, %v359
  %361 = vdwg.mxu0
  %362 = vmatprep.subr.mxu0 %v23
  %363 = vmatpush1.msra.mxu0 %v22
  %364 = vmatprep.subr.mxu0 %v27
  %365 = vmatpush1.msra.mxu0 %v26
  %366 = vmatprep.subr.mxu0 %v31
  %367 = vmatpush1.msra.mxu0 %v30
  %368 = vmatprep.subr.mxu0 %v35
  %369 = vmatpush1.msra.mxu0 %v34
  %370 = vmatprep.subr.mxu0 %v39
  %371 = vmatpush1.msra.mxu0 %v38
  %372 = vmatprep.subr.mxu0 %v43
  %373 = vmatpush1.msra.mxu0 %v42
  %374 = vmatprep.subr.mxu0 %v47
  %375 = vmatpush1.msra.mxu0 %v46
  %376 = vmatprep.subr.mxu0 %v51
  %377 = vmatpush1.msra.mxu0 %v50
  %378 = vmatprep.subr.mxu0 %v55
  %379 = vmatpush1.msra.mxu0 %v54
  %380 = vmatprep.subr.mxu0 %v59
  %381 = vmatpush1.msra.mxu0 %v58
  %382 = vmatprep.subr.mxu0 %v63
  %383 = vmatpush1.msra.mxu0 %v62
  %384 = vmatprep.subr.mxu0 %v67
  %385 = vmatpush1.msra.mxu0 %v66
  %386 = vmatprep.subr.mxu0 %v71
  %387 = vmatpush1.msra.mxu0 %v70
  %388 = vmatprep.subr.mxu0 %v75
  %389 = vmatpush1.msra.mxu0 %v74
  %390 = vmatprep.subr.mxu0 %v79
  %391 = vmatpush1.msra.mxu0 %v78
  %392 = vmatprep.subr.mxu0 %v83
  %393 = vmatpush1.msra.mxu0 %v82
  %394 = vmatprep.subr.mxu0 0.0
  %395 = vmatpush1.msra.mxu0 0.0
  %396 = vmatprep.subr.mxu0 0.0
  %397 = vmatpush1.msra.mxu0 0.0
  %398 = vmatprep.subr.mxu0 0.0
  %399 = vmatpush1.msra.mxu0 0.0
  %400 = vmatprep.subr.mxu0 0.0
  %401 = vmatpush1.msra.mxu0 0.0
  %402 = vmatprep.subr.mxu0 0.0
  %403 = vmatpush1.msra.mxu0 0.0
  %404 = vmatprep.subr.mxu0 0.0
  %405 = vmatpush1.msra.mxu0 0.0
  %406 = vmatprep.subr.mxu0 0.0
  %407 = vmatpush1.msra.mxu0 0.0
  %408 = vmatprep.subr.mxu0 0.0
  %409 = vmatpush1.msra.mxu0 0.0
  %410 = vmatprep.subr.mxu0 0.0
  %411 = vmatpush1.msra.mxu0 0.0
  %412 = vmatprep.subr.mxu0 0.0
  %413 = vmatpush1.msra.mxu0 0.0
  %414 = vmatprep.subr.mxu0 0.0
  %415 = vmatpush1.msra.mxu0 0.0
  %416 = vmatprep.subr.mxu0 0.0
  %417 = vmatpush1.msra.mxu0 0.0
  %418 = vmatprep.subr.mxu0 0.0
  %419 = vmatpush1.msra.mxu0 0.0
  %420 = vmatprep.subr.mxu0 0.0
  %421 = vmatpush1.msra.mxu0 0.0
  %422 = vmatprep.subr.mxu0 0.0
  %423 = vmatpush1.msra.mxu0 0.0
  %424 = vmatprep.subr.mxu0 0.0
  %425 = vmatpush1.msra.mxu0 0.0
  %426 = vmatprep.mubr.f32.mxu0 0.0
  %427 = vmatmul.mubr.f32.gmra.mrb[0].mxu0 %v290
  %v428 = vpop.f32.mrb[0].mxu0
  %v429 = vadd.f32 %v288, %v428
  %v430 = vpop.f32.mrb[0].mxu0
  %v431 = vadd.f32 %v289, %v430
  %432 = vdwg.mxu0
  %v433 = vadd.f32 %v358, %v236
  %v434 = vadd.f32 %v360, %v240
  %v435 = vadd.f32 %v429, %v244
  %v436 = vadd.f32 %v431, %v248
  %v437 = vxor.u32 %v433, 2147483648
  %v438 = vxor.u32 %v434, 2147483648
  %v439 = vxor.u32 %v435, 2147483648
  %v440 = vmul.f32 %v437, 1.442695
  %v441 = vpow.pop %v440
  %v442 = vmul.f32 %v438, 1.442695
  %v443 = vpow.pop %v442
  %v444 = vmul.f32 %v439, 1.442695
  %v445 = vpow.pop %v444
  %v446 = vadd.f32 %v441, 1.0
  %v447 = vadd.f32 %v443, 1.0
  %v448 = vadd.f32 %v445, 1.0
  %v449 = vrcp.pop %v446
  %v450 = vmul.f32 1.0, %v449
  %v451 = vrcp.pop %v447
  %v452 = vmul.f32 1.0, %v451
  %v453 = vrcp.pop %v448
  %v454 = vmul.f32 1.0, %v453
  %v455 = vtanh.pop %v436
  %v456 = vld [vmem:[#allocation3] sm:$0xff]
  %v457 = vmul.f32 %v452, %v456
  %v458 = vmul.f32 %v450, %v455
  %v459 = vadd.f32 %v457, %v458
  %v460 = vtanh.pop %v459
  %v461 = vmul.f32 %v454, %v460
  %462 = vst [vmem:[#allocation3] sm:$0xff] %v459
  %463 = vst [vmem:[#allocation2] sm:$0xff] %v461
  %s464 = scalar_lea.vmem %s3, 8
  %465 = vst [vmem:[%s464] sm:$0xff] %v461
  %s466 = scalar_lea.vmem %s0, 64
  %v467 = vld [vmem:[%s466] sm:$0xff]
  %v468 = vld [vmem:[%s466 + $0x8] sm:$0xff]
  %v469 = vld [vmem:[%s466 + $0x10] sm:$0xff]
  %v470 = vld [vmem:[%s466 + $0x18] sm:$0xff]
  %v471 = vld [vmem:[#allocation2] sm:$0xff]
  %472 = vmatprep.subr.mxu0 %v21
  %473 = vmatpush1.msra.mxu0 %v20
  %474 = vmatprep.subr.mxu0 %v25
  %475 = vmatpush1.msra.mxu0 %v24
  %476 = vmatprep.subr.mxu0 %v29
  %477 = vmatpush1.msra.mxu0 %v28
  %478 = vmatprep.subr.mxu0 %v33
  %479 = vmatpush1.msra.mxu0 %v32
  %480 = vmatprep.subr.mxu0 %v37
  %481 = vmatpush1.msra.mxu0 %v36
  %482 = vmatprep.subr.mxu0 %v41
  %483 = vmatpush1.msra.mxu0 %v40
  %484 = vmatprep.subr.mxu0 %v45
  %485 = vmatpush1.msra.mxu0 %v44
  %486 = vmatprep.subr.mxu0 %v49
  %487 = vmatpush1.msra.mxu0 %v48
  %488 = vmatprep.subr.mxu0 %v53
  %489 = vmatpush1.msra.mxu0 %v52
  %490 = vmatprep.subr.mxu0 %v57
  %491 = vmatpush1.msra.mxu0 %v56
  %492 = vmatprep.subr.mxu0 %v61
  %493 = vmatpush1.msra.mxu0 %v60
  %494 = vmatprep.subr.mxu0 %v65
  %495 = vmatpush1.msra.mxu0 %v64
  %496 = vmatprep.subr.mxu0 %v69
  %497 = vmatpush1.msra.mxu0 %v68
  %498 = vmatprep.subr.mxu0 %v73
  %499 = vmatpush1.msra.mxu0 %v72
  %500 = vmatprep.subr.mxu0 %v77
  %501 = vmatpush1.msra.mxu0 %v76
  %502 = vmatprep.subr.mxu0 %v81
  %503 = vmatpush1.msra.mxu0 %v80
  %504 = vmatprep.subr.mxu0 0.0
  %505 = vmatpush1.msra.mxu0 0.0
  %506 = vmatprep.subr.mxu0 0.0
  %507 = vmatpush1.msra.mxu0 0.0
  %508 = vmatprep.subr.mxu0 0.0
  %509 = vmatpush1.msra.mxu0 0.0
  %510 = vmatprep.subr.mxu0 0.0
  %511 = vmatpush1.msra.mxu0 0.0
  %512 = vmatprep.subr.mxu0 0.0
  %513 = vmatpush1.msra.mxu0 0.0
  %514 = vmatprep.subr.mxu0 0.0
  %515 = vmatpush1.msra.mxu0 0.0
  %516 = vmatprep.subr.mxu0 0.0
  %517 = vmatpush1.msra.mxu0 0.0
  %518 = vmatprep.subr.mxu0 0.0
  %519 = vmatpush1.msra.mxu0 0.0
  %520 = vmatprep.subr.mxu0 0.0
  %521 = vmatpush1.msra.mxu0 0.0
  %522 = vmatprep.subr.mxu0 0.0
  %523 = vmatpush1.msra.mxu0 0.0
  %524 = vmatprep.subr.mxu0 0.0
  %525 = vmatpush1.msra.mxu0 0.0
  %526 = vmatprep.subr.mxu0 0.0
  %527 = vmatpush1.msra.mxu0 0.0
  %528 = vmatprep.subr.mxu0 0.0
  %529 = vmatpush1.msra.mxu0 0.0
  %530 = vmatprep.subr.mxu0 0.0
  %531 = vmatpush1.msra.mxu0 0.0
  %532 = vmatprep.subr.mxu0 0.0
  %533 = vmatpush1.msra.mxu0 0.0
  %534 = vmatprep.subr.mxu0 0.0
  %535 = vmatpush1.msra.mxu0 0.0
  %536 = vmatprep.mubr.f32.mxu0 0.0
  %537 = vmatmul.mubr.f32.gmra.mrb[0].mxu0 %v471
  %v538 = vpop.f32.mrb[0].mxu0
  %v539 = vadd.f32 %v467, %v538
  %v540 = vpop.f32.mrb[0].mxu0
  %v541 = vadd.f32 %v468, %v540
  %542 = vdwg.mxu0
  %543 = vmatprep.subr.mxu0 %v23
  %544 = vmatpush1.msra.mxu0 %v22
  %545 = vmatprep.subr.mxu0 %v27
  %546 = vmatpush1.msra.mxu0 %v26
  %547 = vmatprep.subr.mxu0 %v31
  %548 = vmatpush1.msra.mxu0 %v30
  %549 = vmatprep.subr.mxu0 %v35
  %550 = vmatpush1.msra.mxu0 %v34
  %551 = vmatprep.subr.mxu0 %v39
  %552 = vmatpush1.msra.mxu0 %v38
  %553 = vmatprep.subr.mxu0 %v43
  %554 = vmatpush1.msra.mxu0 %v42
  %555 = vmatprep.subr.mxu0 %v47
  %556 = vmatpush1.msra.mxu0 %v46
  %557 = vmatprep.subr.mxu0 %v51
  %558 = vmatpush1.msra.mxu0 %v50
  %559 = vmatprep.subr.mxu0 %v55
  %560 = vmatpush1.msra.mxu0 %v54
  %561 = vmatprep.subr.mxu0 %v59
  %562 = vmatpush1.msra.mxu0 %v58
  %563 = vmatprep.subr.mxu0 %v63
  %564 = vmatpush1.msra.mxu0 %v62
  %565 = vmatprep.subr.mxu0 %v67
  %566 = vmatpush1.msra.mxu0 %v66
  %567 = vmatprep.subr.mxu0 %v71
  %568 = vmatpush1.msra.mxu0 %v70
  %569 = vmatprep.subr.mxu0 %v75
  %570 = vmatpush1.msra.mxu0 %v74
  %571 = vmatprep.subr.mxu0 %v79
  %572 = vmatpush1.msra.mxu0 %v78
  %573 = vmatprep.subr.mxu0 %v83
  %574 = vmatpush1.msra.mxu0 %v82
  %575 = vmatprep.subr.mxu0 0.0
  %576 = vmatpush1.msra.mxu0 0.0
  %577 = vmatprep.subr.mxu0 0.0
  %578 = vmatpush1.msra.mxu0 0.0
  %579 = vmatprep.subr.mxu0 0.0
  %580 = vmatpush1.msra.mxu0 0.0
  %581 = vmatprep.subr.mxu0 0.0
  %582 = vmatpush1.msra.mxu0 0.0
  %583 = vmatprep.subr.mxu0 0.0
  %584 = vmatpush1.msra.mxu0 0.0
  %585 = vmatprep.subr.mxu0 0.0
  %586 = vmatpush1.msra.mxu0 0.0
  %587 = vmatprep.subr.mxu0 0.0
  %588 = vmatpush1.msra.mxu0 0.0
  %589 = vmatprep.subr.mxu0 0.0
  %590 = vmatpush1.msra.mxu0 0.0
  %591 = vmatprep.subr.mxu0 0.0
  %592 = vmatpush1.msra.mxu0 0.0
  %593 = vmatprep.subr.mxu0 0.0
  %594 = vmatpush1.msra.mxu0 0.0
  %595 = vmatprep.subr.mxu0 0.0
  %596 = vmatpush1.msra.mxu0 0.0
  %597 = vmatprep.subr.mxu0 0.0
  %598 = vmatpush1.msra.mxu0 0.0
  %599 = vmatprep.subr.mxu0 0.0
  %600 = vmatpush1.msra.mxu0 0.0
  %601 = vmatprep.subr.mxu0 0.0
  %602 = vmatpush1.msra.mxu0 0.0
  %603 = vmatprep.subr.mxu0 0.0
  %604 = vmatpush1.msra.mxu0 0.0
  %605 = vmatprep.subr.mxu0 0.0
  %606 = vmatpush1.msra.mxu0 0.0
  %607 = vmatprep.mubr.f32.mxu0 0.0
  %608 = vmatmul.mubr.f32.gmra.mrb[0].mxu0 %v471
  %v609 = vpop.f32.mrb[0].mxu0
  %v610 = vadd.f32 %v469, %v609
  %v611 = vpop.f32.mrb[0].mxu0
  %v612 = vadd.f32 %v470, %v611
  %613 = vdwg.mxu0
  %v614 = vadd.f32 %v539, %v236
  %v615 = vadd.f32 %v541, %v240
  %v616 = vadd.f32 %v610, %v244
  %v617 = vadd.f32 %v612, %v248
  %v618 = vxor.u32 %v614, 2147483648
  %v619 = vxor.u32 %v615, 2147483648
  %v620 = vxor.u32 %v616, 2147483648
  %v621 = vmul.f32 %v618, 1.442695
  %v622 = vpow.pop %v621
  %v623 = vmul.f32 %v619, 1.442695
  %v624 = vpow.pop %v623
  %v625 = vmul.f32 %v620, 1.442695
  %v626 = vpow.pop %v625
  %v627 = vadd.f32 %v622, 1.0
  %v628 = vadd.f32 %v624, 1.0
  %v629 = vadd.f32 %v626, 1.0
  %v630 = vrcp.pop %v627
  %v631 = vmul.f32 1.0, %v630
  %v632 = vrcp.pop %v628
  %v633 = vmul.f32 1.0, %v632
  %v634 = vrcp.pop %v629
  %v635 = vmul.f32 1.0, %v634
  %v636 = vtanh.pop %v617
  %v637 = vld [vmem:[#allocation3] sm:$0xff]
  %v638 = vmul.f32 %v633, %v637
  %v639 = vmul.f32 %v631, %v636
  %v640 = vadd.f32 %v638, %v639
  %v641 = vtanh.pop %v640
  %v642 = vmul.f32 %v635, %v641
  %643 = vst [vmem:[#allocation3] sm:$0xff] %v640
  %644 = vst [vmem:[#allocation2] sm:$0xff] %v642
  %s645 = scalar_lea.vmem %s3, 16
  %646 = vst [vmem:[%s645] sm:$0xff] %v642
  %s647 = scalar_lea.vmem %s0, 96
  %v648 = vld [vmem:[%s647] sm:$0xff]
  %v649 = vld [vmem:[%s647 + $0x8] sm:$0xff]
  %v650 = vld [vmem:[%s647 + $0x10] sm:$0xff]
  %v651 = vld [vmem:[%s647 + $0x18] sm:$0xff]
  %v652 = vld [vmem:[#allocation2] sm:$0xff]
  %653 = vmatprep.subr.mxu0 %v21
  %654 = vmatpush1.msra.mxu0 %v20
  %655 = vmatprep.subr.mxu0 %v25
  %656 = vmatpush1.msra.mxu0 %v24
  %657 = vmatprep.subr.mxu0 %v29
  %658 = vmatpush1.msra.mxu0 %v28
  %659 = vmatprep.subr.mxu0 %v33
  %660 = vmatpush1.msra.mxu0 %v32
  %661 = vmatprep.subr.mxu0 %v37
  %662 = vmatpush1.msra.mxu0 %v36
  %663 = vmatprep.subr.mxu0 %v41
  %664 = vmatpush1.msra.mxu0 %v40
  %665 = vmatprep.subr.mxu0 %v45
  %666 = vmatpush1.msra.mxu0 %v44
  %667 = vmatprep.subr.mxu0 %v49
  %668 = vmatpush1.msra.mxu0 %v48
  %669 = vmatprep.subr.mxu0 %v53
  %670 = vmatpush1.msra.mxu0 %v52
  %671 = vmatprep.subr.mxu0 %v57
  %672 = vmatpush1.msra.mxu0 %v56
  %673 = vmatprep.subr.mxu0 %v61
  %674 = vmatpush1.msra.mxu0 %v60
  %675 = vmatprep.subr.mxu0 %v65
  %676 = vmatpush1.msra.mxu0 %v64
  %677 = vmatprep.subr.mxu0 %v69
  %678 = vmatpush1.msra.mxu0 %v68
  %679 = vmatprep.subr.mxu0 %v73
  %680 = vmatpush1.msra.mxu0 %v72
  %681 = vmatprep.subr.mxu0 %v77
  %682 = vmatpush1.msra.mxu0 %v76
  %683 = vmatprep.subr.mxu0 %v81
  %684 = vmatpush1.msra.mxu0 %v80
  %685 = vmatprep.subr.mxu0 0.0
  %686 = vmatpush1.msra.mxu0 0.0
  %687 = vmatprep.subr.mxu0 0.0
  %688 = vmatpush1.msra.mxu0 0.0
  %689 = vmatprep.subr.mxu0 0.0
  %690 = vmatpush1.msra.mxu0 0.0
  %691 = vmatprep.subr.mxu0 0.0
  %692 = vmatpush1.msra.mxu0 0.0
  %693 = vmatprep.subr.mxu0 0.0
  %694 = vmatpush1.msra.mxu0 0.0
  %695 = vmatprep.subr.mxu0 0.0
  %696 = vmatpush1.msra.mxu0 0.0
  %697 = vmatprep.subr.mxu0 0.0
  %698 = vmatpush1.msra.mxu0 0.0
  %699 = vmatprep.subr.mxu0 0.0
  %700 = vmatpush1.msra.mxu0 0.0
  %701 = vmatprep.subr.mxu0 0.0
  %702 = vmatpush1.msra.mxu0 0.0
  %703 = vmatprep.subr.mxu0 0.0
  %704 = vmatpush1.msra.mxu0 0.0
  %705 = vmatprep.subr.mxu0 0.0
  %706 = vmatpush1.msra.mxu0 0.0
  %707 = vmatprep.subr.mxu0 0.0
  %708 = vmatpush1.msra.mxu0 0.0
  %709 = vmatprep.subr.mxu0 0.0
  %710 = vmatpush1.msra.mxu0 0.0
  %711 = vmatprep.subr.mxu0 0.0
  %712 = vmatpush1.msra.mxu0 0.0
  %713 = vmatprep.subr.mxu0 0.0
  %714 = vmatpush1.msra.mxu0 0.0
  %715 = vmatprep.subr.mxu0 0.0
  %716 = vmatpush1.msra.mxu0 0.0
  %717 = vmatprep.mubr.f32.mxu0 0.0
  %718 = vmatmul.mubr.f32.gmra.mrb[0].mxu0 %v652
  %v719 = vpop.f32.mrb[0].mxu0
  %v720 = vadd.f32 %v648, %v719
  %v721 = vpop.f32.mrb[0].mxu0
  %v722 = vadd.f32 %v649, %v721
  %723 = vdwg.mxu0
  %724 = vmatprep.subr.mxu0 %v23
  %725 = vmatpush1.msra.mxu0 %v22
  %726 = vmatprep.subr.mxu0 %v27
  %727 = vmatpush1.msra.mxu0 %v26
  %728 = vmatprep.subr.mxu0 %v31
  %729 = vmatpush1.msra.mxu0 %v30
  %730 = vmatprep.subr.mxu0 %v35
  %731 = vmatpush1.msra.mxu0 %v34
  %732 = vmatprep.subr.mxu0 %v39
  %733 = vmatpush1.msra.mxu0 %v38
  %734 = vmatprep.subr.mxu0 %v43
  %735 = vmatpush1.msra.mxu0 %v42
  %736 = vmatprep.subr.mxu0 %v47
  %737 = vmatpush1.msra.mxu0 %v46
  %738 = vmatprep.subr.mxu0 %v51
  %739 = vmatpush1.msra.mxu0 %v50
  %740 = vmatprep.subr.mxu0 %v55
  %741 = vmatpush1.msra.mxu0 %v54
  %742 = vmatprep.subr.mxu0 %v59
  %743 = vmatpush1.msra.mxu0 %v58
  %744 = vmatprep.subr.mxu0 %v63
  %745 = vmatpush1.msra.mxu0 %v62
  %746 = vmatprep.subr.mxu0 %v67
  %747 = vmatpush1.msra.mxu0 %v66
  %748 = vmatprep.subr.mxu0 %v71
  %749 = vmatpush1.msra.mxu0 %v70
  %750 = vmatprep.subr.mxu0 %v75
  %751 = vmatpush1.msra.mxu0 %v74
  %752 = vmatprep.subr.mxu0 %v79
  %753 = vmatpush1.msra.mxu0 %v78
  %754 = vmatprep.subr.mxu0 %v83
  %755 = vmatpush1.msra.mxu0 %v82
  %756 = vmatprep.subr.mxu0 0.0
  %757 = vmatpush1.msra.mxu0 0.0
  %758 = vmatprep.subr.mxu0 0.0
  %759 = vmatpush1.msra.mxu0 0.0
  %760 = vmatprep.subr.mxu0 0.0
  %761 = vmatpush1.msra.mxu0 0.0
  %762 = vmatprep.subr.mxu0 0.0
  %763 = vmatpush1.msra.mxu0 0.0
  %764 = vmatprep.subr.mxu0 0.0
  %765 = vmatpush1.msra.mxu0 0.0
  %766 = vmatprep.subr.mxu0 0.0
  %767 = vmatpush1.msra.mxu0 0.0
  %768 = vmatprep.subr.mxu0 0.0
  %769 = vmatpush1.msra.mxu0 0.0
  %770 = vmatprep.subr.mxu0 0.0
  %771 = vmatpush1.msra.mxu0 0.0
  %772 = vmatprep.subr.mxu0 0.0
  %773 = vmatpush1.msra.mxu0 0.0
  %774 = vmatprep.subr.mxu0 0.0
  %775 = vmatpush1.msra.mxu0 0.0
  %776 = vmatprep.subr.mxu0 0.0
  %777 = vmatpush1.msra.mxu0 0.0
  %778 = vmatprep.subr.mxu0 0.0
  %779 = vmatpush1.msra.mxu0 0.0
  %780 = vmatprep.subr.mxu0 0.0
  %781 = vmatpush1.msra.mxu0 0.0
  %782 = vmatprep.subr.mxu0 0.0
  %783 = vmatpush1.msra.mxu0 0.0
  %784 = vmatprep.subr.mxu0 0.0
  %785 = vmatpush1.msra.mxu0 0.0
  %786 = vmatprep.subr.mxu0 0.0
  %787 = vmatpush1.msra.mxu0 0.0
  %788 = vmatprep.mubr.f32.mxu0 0.0
  %789 = vmatmul.mubr.f32.gmra.mrb[0].mxu0 %v652
  %v790 = vpop.f32.mrb[0].mxu0
  %v791 = vadd.f32 %v650, %v790
  %v792 = vpop.f32.mrb[0].mxu0
  %v793 = vadd.f32 %v651, %v792
  %794 = vdwg.mxu0
  %v795 = vadd.f32 %v720, %v236
  %v796 = vadd.f32 %v722, %v240
  %v797 = vadd.f32 %v791, %v244
  %v798 = vadd.f32 %v793, %v248
  %v799 = vxor.u32 %v795, 2147483648
  %v800 = vxor.u32 %v796, 2147483648
  %v801 = vxor.u32 %v797, 2147483648
  %v802 = vmul.f32 %v799, 1.442695
  %v803 = vpow.pop %v802
  %v804 = vmul.f32 %v800, 1.442695
  %v805 = vpow.pop %v804
  %v806 = vmul.f32 %v801, 1.442695
  %v807 = vpow.pop %v806
  %v808 = vadd.f32 %v803, 1.0
  %v809 = vadd.f32 %v805, 1.0
  %v810 = vadd.f32 %v807, 1.0
  %v811 = vrcp.pop %v808
  %v812 = vmul.f32 1.0, %v811
  %v813 = vrcp.pop %v809
  %v814 = vmul.f32 1.0, %v813
  %v815 = vrcp.pop %v810
  %v816 = vmul.f32 1.0, %v815
  %v817 = vtanh.pop %v798
  %v818 = vld [vmem:[#allocation3] sm:$0xff]
  %v819 = vmul.f32 %v814, %v818
  %v820 = vmul.f32 %v812, %v817
  %v821 = vadd.f32 %v819, %v820
  %v822 = vtanh.pop %v821
  %v823 = vmul.f32 %v816, %v822
  %824 = vst [vmem:[#allocation3] sm:$0xff] %v821
  %825 = vst [vmem:[#allocation2] sm:$0xff] %v823
  %s826 = scalar_lea.vmem %s3, 24
  %827 = vst [vmem:[%s826] sm:$0xff] %v823
  %s828 = scalar_lea.vmem %s0, 128
  %v829 = vld [vmem:[%s828] sm:$0xff]
  %v830 = vld [vmem:[%s828 + $0x8] sm:$0xff]
  %v831 = vld [vmem:[%s828 + $0x10] sm:$0xff]
  %v832 = vld [vmem:[%s828 + $0x18] sm:$0xff]
  %v833 = vld [vmem:[#allocation2] sm:$0xff]
  %834 = vmatprep.subr.mxu0 %v21
  %835 = vmatpush1.msra.mxu0 %v20
  %836 = vmatprep.subr.mxu0 %v25
  %837 = vmatpush1.msra.mxu0 %v24
  %838 = vmatprep.subr.mxu0 %v29
  %839 = vmatpush1.msra.mxu0 %v28
  %840 = vmatprep.subr.mxu0 %v33
  %841 = vmatpush1.msra.mxu0 %v32
  %842 = vmatprep.subr.mxu0 %v37
  %843 = vmatpush1.msra.mxu0 %v36
  %844 = vmatprep.subr.mxu0 %v41
  %845 = vmatpush1.msra.mxu0 %v40
  %846 = vmatprep.subr.mxu0 %v45
  %847 = vmatpush1.msra.mxu0 %v44
  %848 = vmatprep.subr.mxu0 %v49
  %849 = vmatpush1.msra.mxu0 %v48
  %850 = vmatprep.subr.mxu0 %v53
  %851 = vmatpush1.msra.mxu0 %v52
  %852 = vmatprep.subr.mxu0 %v57
  %853 = vmatpush1.msra.mxu0 %v56
  %854 = vmatprep.subr.mxu0 %v61
  %855 = vmatpush1.msra.mxu0 %v60
  %856 = vmatprep.subr.mxu0 %v65
  %857 = vmatpush1.msra.mxu0 %v64
  %858 = vmatprep.subr.mxu0 %v69
  %859 = vmatpush1.msra.mxu0 %v68
  %860 = vmatprep.subr.mxu0 %v73
  %861 = vmatpush1.msra.mxu0 %v72
  %862 = vmatprep.subr.mxu0 %v77
  %863 = vmatpush1.msra.mxu0 %v76
  %864 = vmatprep.subr.mxu0 %v81
  %865 = vmatpush1.msra.mxu0 %v80
  %866 = vmatprep.subr.mxu0 0.0
  %867 = vmatpush1.msra.mxu0 0.0
  %868 = vmatprep.subr.mxu0 0.0
  %869 = vmatpush1.msra.mxu0 0.0
  %870 = vmatprep.subr.mxu0 0.0
  %871 = vmatpush1.msra.mxu0 0.0
  %872 = vmatprep.subr.mxu0 0.0
  %873 = vmatpush1.msra.mxu0 0.0
  %874 = vmatprep.subr.mxu0 0.0
  %875 = vmatpush1.msra.mxu0 0.0
  %876 = vmatprep.subr.mxu0 0.0
  %877 = vmatpush1.msra.mxu0 0.0
  %878 = vmatprep.subr.mxu0 0.0
  %879 = vmatpush1.msra.mxu0 0.0
  %880 = vmatprep.subr.mxu0 0.0
  %881 = vmatpush1.msra.mxu0 0.0
  %882 = vmatprep.subr.mxu0 0.0
  %883 = vmatpush1.msra.mxu0 0.0
  %884 = vmatprep.subr.mxu0 0.0
  %885 = vmatpush1.msra.mxu0 0.0
  %886 = vmatprep.subr.mxu0 0.0
  %887 = vmatpush1.msra.mxu0 0.0
  %888 = vmatprep.subr.mxu0 0.0
  %889 = vmatpush1.msra.mxu0 0.0
  %890 = vmatprep.subr.mxu0 0.0
  %891 = vmatpush1.msra.mxu0 0.0
  %892 = vmatprep.subr.mxu0 0.0
  %893 = vmatpush1.msra.mxu0 0.0
  %894 = vmatprep.subr.mxu0 0.0
  %895 = vmatpush1.msra.mxu0 0.0
  %896 = vmatprep.subr.mxu0 0.0
  %897 = vmatpush1.msra.mxu0 0.0
  %898 = vmatprep.mubr.f32.mxu0 0.0
  %899 = vmatmul.mubr.f32.gmra.mrb[0].mxu0 %v833
  %v900 = vpop.f32.mrb[0].mxu0
  %v901 = vadd.f32 %v829, %v900
  %v902 = vpop.f32.mrb[0].mxu0
  %v903 = vadd.f32 %v830, %v902
  %904 = vdwg.mxu0
  %905 = vmatprep.subr.mxu0 %v23
  %906 = vmatpush1.msra.mxu0 %v22
  %907 = vmatprep.subr.mxu0 %v27
  %908 = vmatpush1.msra.mxu0 %v26
  %909 = vmatprep.subr.mxu0 %v31
  %910 = vmatpush1.msra.mxu0 %v30
  %911 = vmatprep.subr.mxu0 %v35
  %912 = vmatpush1.msra.mxu0 %v34
  %913 = vmatprep.subr.mxu0 %v39
  %914 = vmatpush1.msra.mxu0 %v38
  %915 = vmatprep.subr.mxu0 %v43
  %916 = vmatpush1.msra.mxu0 %v42
  %917 = vmatprep.subr.mxu0 %v47
  %918 = vmatpush1.msra.mxu0 %v46
  %919 = vmatprep.subr.mxu0 %v51
  %920 = vmatpush1.msra.mxu0 %v50
  %921 = vmatprep.subr.mxu0 %v55
  %922 = vmatpush1.msra.mxu0 %v54
  %923 = vmatprep.subr.mxu0 %v59
  %924 = vmatpush1.msra.mxu0 %v58
  %925 = vmatprep.subr.mxu0 %v63
  %926 = vmatpush1.msra.mxu0 %v62
  %927 = vmatprep.subr.mxu0 %v67
  %928 = vmatpush1.msra.mxu0 %v66
  %929 = vmatprep.subr.mxu0 %v71
  %930 = vmatpush1.msra.mxu0 %v70
  %931 = vmatprep.subr.mxu0 %v75
  %932 = vmatpush1.msra.mxu0 %v74
  %933 = vmatprep.subr.mxu0 %v79
  %934 = vmatpush1.msra.mxu0 %v78
  %935 = vmatprep.subr.mxu0 %v83
  %936 = vmatpush1.msra.mxu0 %v82
  %937 = vmatprep.subr.mxu0 0.0
  %938 = vmatpush1.msra.mxu0 0.0
  %939 = vmatprep.subr.mxu0 0.0
  %940 = vmatpush1.msra.mxu0 0.0
  %941 = vmatprep.subr.mxu0 0.0
  %942 = vmatpush1.msra.mxu0 0.0
  %943 = vmatprep.subr.mxu0 0.0
  %944 = vmatpush1.msra.mxu0 0.0
  %945 = vmatprep.subr.mxu0 0.0
  %946 = vmatpush1.msra.mxu0 0.0
  %947 = vmatprep.subr.mxu0 0.0
  %948 = vmatpush1.msra.mxu0 0.0
  %949 = vmatprep.subr.mxu0 0.0
  %950 = vmatpush1.msra.mxu0 0.0
  %951 = vmatprep.subr.mxu0 0.0
  %952 = vmatpush1.msra.mxu0 0.0
  %953 = vmatprep.subr.mxu0 0.0
  %954 = vmatpush1.msra.mxu0 0.0
  %955 = vmatprep.subr.mxu0 0.0
  %956 = vmatpush1.msra.mxu0 0.0
  %957 = vmatprep.subr.mxu0 0.0
  %958 = vmatpush1.msra.mxu0 0.0
  %959 = vmatprep.subr.mxu0 0.0
  %960 = vmatpush1.msra.mxu0 0.0
  %961 = vmatprep.subr.mxu0 0.0
  %962 = vmatpush1.msra.mxu0 0.0
  %963 = vmatprep.subr.mxu0 0.0
  %964 = vmatpush1.msra.mxu0 0.0
  %965 = vmatprep.subr.mxu0 0.0
  %966 = vmatpush1.msra.mxu0 0.0
  %967 = vmatprep.subr.mxu0 0.0
  %968 = vmatpush1.msra.mxu0 0.0
  %969 = vmatprep.mubr.f32.mxu0 0.0
  %970 = vmatmul.mubr.f32.gmra.mrb[0].mxu0 %v833
  %v971 = vpop.f32.mrb[0].mxu0
  %v972 = vadd.f32 %v831, %v971
  %v973 = vpop.f32.mrb[0].mxu0
  %v974 = vadd.f32 %v832, %v973
  %975 = vdwg.mxu0
  %v976 = vadd.f32 %v901, %v236
  %v977 = vadd.f32 %v903, %v240
  %v978 = vadd.f32 %v972, %v244
  %v979 = vadd.f32 %v974, %v248
  %v980 = vxor.u32 %v976, 2147483648
  %v981 = vxor.u32 %v977, 2147483648
  %v982 = vxor.u32 %v978, 2147483648
  %v983 = vmul.f32 %v980, 1.442695
  %v984 = vpow.pop %v983
  %v985 = vmul.f32 %v981, 1.442695
  %v986 = vpow.pop %v985
  %v987 = vmul.f32 %v982, 1.442695
  %v988 = vpow.pop %v987
  %v989 = vadd.f32 %v984, 1.0
  %v990 = vadd.f32 %v986, 1.0
  %v991 = vadd.f32 %v988, 1.0
  %v992 = vrcp.pop %v989
  %v993 = vmul.f32 1.0, %v992
  %v994 = vrcp.pop %v990
  %v995 = vmul.f32 1.0, %v994
  %v996 = vrcp.pop %v991
  %v997 = vmul.f32 1.0, %v996
  %v998 = vtanh.pop %v979
  %v999 = vld [vmem:[#allocation3] sm:$0xff]
  %v1000 = vmul.f32 %v995, %v999
  %v1001 = vmul.f32 %v993, %v998
  %v1002 = vadd.f32 %v1000, %v1001
  %v1003 = vtanh.pop %v1002
  %v1004 = vmul.f32 %v997, %v1003
  %1005 = vst [vmem:[#allocation3] sm:$0xff] %v1002
  %1006 = vst [vmem:[#allocation2] sm:$0xff] %v1004
  %s1007 = scalar_lea.vmem %s3, 32
  %1008 = vst [vmem:[%s1007] sm:$0xff] %v1004
  %s1009 = scalar_lea.vmem %s0, 160
  %v1010 = vld [vmem:[%s1009] sm:$0xff]
  %v1011 = vld [vmem:[%s1009 + $0x8] sm:$0xff]
  %v1012 = vld [vmem:[%s1009 + $0x10] sm:$0xff]
  %v1013 = vld [vmem:[%s1009 + $0x18] sm:$0xff]
  %v1014 = vld [vmem:[#allocation2] sm:$0xff]
  %1015 = vmatprep.subr.mxu0 %v21
  %1016 = vmatpush1.msra.mxu0 %v20
  %1017 = vmatprep.subr.mxu0 %v25
  %1018 = vmatpush1.msra.mxu0 %v24
  %1019 = vmatprep.subr.mxu0 %v29
  %1020 = vmatpush1.msra.mxu0 %v28
  %1021 = vmatprep.subr.mxu0 %v33
  %1022 = vmatpush1.msra.mxu0 %v32
  %1023 = vmatprep.subr.mxu0 %v37
  %1024 = vmatpush1.msra.mxu0 %v36
  %1025 = vmatprep.subr.mxu0 %v41
  %1026 = vmatpush1.msra.mxu0 %v40
  %1027 = vmatprep.subr.mxu0 %v45
  %1028 = vmatpush1.msra.mxu0 %v44
  %1029 = vmatprep.subr.mxu0 %v49
  %1030 = vmatpush1.msra.mxu0 %v48
  %1031 = vmatprep.subr.mxu0 %v53
  %1032 = vmatpush1.msra.mxu0 %v52
  %1033 = vmatprep.subr.mxu0 %v57
  %1034 = vmatpush1.msra.mxu0 %v56
  %1035 = vmatprep.subr.mxu0 %v61
  %1036 = vmatpush1.msra.mxu0 %v60
  %1037 = vmatprep.subr.mxu0 %v65
  %1038 = vmatpush1.msra.mxu0 %v64
  %1039 = vmatprep.subr.mxu0 %v69
  %1040 = vmatpush1.msra.mxu0 %v68
  %1041 = vmatprep.subr.mxu0 %v73
  %1042 = vmatpush1.msra.mxu0 %v72
  %1043 = vmatprep.subr.mxu0 %v77
  %1044 = vmatpush1.msra.mxu0 %v76
  %1045 = vmatprep.subr.mxu0 %v81
  %1046 = vmatpush1.msra.mxu0 %v80
  %1047 = vmatprep.subr.mxu0 0.0
  %1048 = vmatpush1.msra.mxu0 0.0
  %1049 = vmatprep.subr.mxu0 0.0
  %1050 = vmatpush1.msra.mxu0 0.0
  %1051 = vmatprep.subr.mxu0 0.0
  %1052 = vmatpush1.msra.mxu0 0.0
  %1053 = vmatprep.subr.mxu0 0.0
  %1054 = vmatpush1.msra.mxu0 0.0
  %1055 = vmatprep.subr.mxu0 0.0
  %1056 = vmatpush1.msra.mxu0 0.0
  %1057 = vmatprep.subr.mxu0 0.0
  %1058 = vmatpush1.msra.mxu0 0.0
  %1059 = vmatprep.subr.mxu0 0.0
  %1060 = vmatpush1.msra.mxu0 0.0
  %1061 = vmatprep.subr.mxu0 0.0
  %1062 = vmatpush1.msra.mxu0 0.0
  %1063 = vmatprep.subr.mxu0 0.0
  %1064 = vmatpush1.msra.mxu0 0.0
  %1065 = vmatprep.subr.mxu0 0.0
  %1066 = vmatpush1.msra.mxu0 0.0
  %1067 = vmatprep.subr.mxu0 0.0
  %1068 = vmatpush1.msra.mxu0 0.0
  %1069 = vmatprep.subr.mxu0 0.0
  %1070 = vmatpush1.msra.mxu0 0.0
  %1071 = vmatprep.subr.mxu0 0.0
  %1072 = vmatpush1.msra.mxu0 0.0
  %1073 = vmatprep.subr.mxu0 0.0
  %1074 = vmatpush1.msra.mxu0 0.0
  %1075 = vmatprep.subr.mxu0 0.0
  %1076 = vmatpush1.msra.mxu0 0.0
  %1077 = vmatprep.subr.mxu0 0.0
  %1078 = vmatpush1.msra.mxu0 0.0
  %1079 = vmatprep.mubr.f32.mxu0 0.0
  %1080 = vmatmul.mubr.f32.gmra.mrb[0].mxu0 %v1014
  %v1081 = vpop.f32.mrb[0].mxu0
  %v1082 = vadd.f32 %v1010, %v1081
  %v1083 = vpop.f32.mrb[0].mxu0
  %v1084 = vadd.f32 %v1011, %v1083
  %1085 = vdwg.mxu0
  %1086 = vmatprep.subr.mxu0 %v23
  %1087 = vmatpush1.msra.mxu0 %v22
  %1088 = vmatprep.subr.mxu0 %v27
  %1089 = vmatpush1.msra.mxu0 %v26
  %1090 = vmatprep.subr.mxu0 %v31
  %1091 = vmatpush1.msra.mxu0 %v30
  %1092 = vmatprep.subr.mxu0 %v35
  %1093 = vmatpush1.msra.mxu0 %v34
  %1094 = vmatprep.subr.mxu0 %v39
  %1095 = vmatpush1.msra.mxu0 %v38
  %1096 = vmatprep.subr.mxu0 %v43
  %1097 = vmatpush1.msra.mxu0 %v42
  %1098 = vmatprep.subr.mxu0 %v47
  %1099 = vmatpush1.msra.mxu0 %v46
  %1100 = vmatprep.subr.mxu0 %v51
  %1101 = vmatpush1.msra.mxu0 %v50
  %1102 = vmatprep.subr.mxu0 %v55
  %1103 = vmatpush1.msra.mxu0 %v54
  %1104 = vmatprep.subr.mxu0 %v59
  %1105 = vmatpush1.msra.mxu0 %v58
  %1106 = vmatprep.subr.mxu0 %v63
  %1107 = vmatpush1.msra.mxu0 %v62
  %1108 = vmatprep.subr.mxu0 %v67
  %1109 = vmatpush1.msra.mxu0 %v66
  %1110 = vmatprep.subr.mxu0 %v71
  %1111 = vmatpush1.msra.mxu0 %v70
  %1112 = vmatprep.subr.mxu0 %v75
  %1113 = vmatpush1.msra.mxu0 %v74
  %1114 = vmatprep.subr.mxu0 %v79
  %1115 = vmatpush1.msra.mxu0 %v78
  %1116 = vmatprep.subr.mxu0 %v83
  %1117 = vmatpush1.msra.mxu0 %v82
  %1118 = vmatprep.subr.mxu0 0.0
  %1119 = vmatpush1.msra.mxu0 0.0
  %1120 = vmatprep.subr.mxu0 0.0
  %1121 = vmatpush1.msra.mxu0 0.0
  %1122 = vmatprep.subr.mxu0 0.0
  %1123 = vmatpush1.msra.mxu0 0.0
  %1124 = vmatprep.subr.mxu0 0.0
  %1125 = vmatpush1.msra.mxu0 0.0
  %1126 = vmatprep.subr.mxu0 0.0
  %1127 = vmatpush1.msra.mxu0 0.0
  %1128 = vmatprep.subr.mxu0 0.0
  %1129 = vmatpush1.msra.mxu0 0.0
  %1130 = vmatprep.subr.mxu0 0.0
  %1131 = vmatpush1.msra.mxu0 0.0
  %1132 = vmatprep.subr.mxu0 0.0
  %1133 = vmatpush1.msra.mxu0 0.0
  %1134 = vmatprep.subr.mxu0 0.0
  %1135 = vmatpush1.msra.mxu0 0.0
  %1136 = vmatprep.subr.mxu0 0.0
  %1137 = vmatpush1.msra.mxu0 0.0
  %1138 = vmatprep.subr.mxu0 0.0
  %1139 = vmatpush1.msra.mxu0 0.0
  %1140 = vmatprep.subr.mxu0 0.0
  %1141 = vmatpush1.msra.mxu0 0.0
  %1142 = vmatprep.subr.mxu0 0.0
  %1143 = vmatpush1.msra.mxu0 0.0
  %1144 = vmatprep.subr.mxu0 0.0
  %1145 = vmatpush1.msra.mxu0 0.0
  %1146 = vmatprep.subr.mxu0 0.0
  %1147 = vmatpush1.msra.mxu0 0.0
  %1148 = vmatprep.subr.mxu0 0.0
  %1149 = vmatpush1.msra.mxu0 0.0
  %1150 = vmatprep.mubr.f32.mxu0 0.0
  %1151 = vmatmul.mubr.f32.gmra.mrb[0].mxu0 %v1014
  %v1152 = vpop.f32.mrb[0].mxu0
  %v1153 = vadd.f32 %v1012, %v1152
  %v1154 = vpop.f32.mrb[0].mxu0
  %v1155 = vadd.f32 %v1013, %v1154
  %1156 = vdwg.mxu0
  %v1157 = vadd.f32 %v1082, %v236
  %v1158 = vadd.f32 %v1084, %v240
  %v1159 = vadd.f32 %v1153, %v244
  %v1160 = vadd.f32 %v1155, %v248
  %v1161 = vxor.u32 %v1157, 2147483648
  %v1162 = vxor.u32 %v1158, 2147483648
  %v1163 = vxor.u32 %v1159, 2147483648
  %v1164 = vmul.f32 %v1161, 1.442695
  %v1165 = vpow.pop %v1164
  %v1166 = vmul.f32 %v1162, 1.442695
  %v1167 = vpow.pop %v1166
  %v1168 = vmul.f32 %v1163, 1.442695
  %v1169 = vpow.pop %v1168
  %v1170 = vadd.f32 %v1165, 1.0
  %v1171 = vadd.f32 %v1167, 1.0
  %v1172 = vadd.f32 %v1169, 1.0
  %v1173 = vrcp.pop %v1170
  %v1174 = vmul.f32 1.0, %v1173
  %v1175 = vrcp.pop %v1171
  %v1176 = vmul.f32 1.0, %v1175
  %v1177 = vrcp.pop %v1172
  %v1178 = vmul.f32 1.0, %v1177
  %v1179 = vtanh.pop %v1160
  %v1180 = vld [vmem:[#allocation3] sm:$0xff]
  %v1181 = vmul.f32 %v1176, %v1180
  %v1182 = vmul.f32 %v1174, %v1179
  %v1183 = vadd.f32 %v1181, %v1182
  %v1184 = vtanh.pop %v1183
  %v1185 = vmul.f32 %v1178, %v1184
  %1186 = vst [vmem:[#allocation3] sm:$0xff] %v1183
  %1187 = vst [vmem:[#allocation2] sm:$0xff] %v1185
  %s1188 = scalar_lea.vmem %s3, 40
  %1189 = vst [vmem:[%s1188] sm:$0xff] %v1185
  %s1190 = scalar_lea.vmem %s0, 192
  %v1191 = vld [vmem:[%s1190] sm:$0xff]
  %v1192 = vld [vmem:[%s1190 + $0x8] sm:$0xff]
  %v1193 = vld [vmem:[%s1190 + $0x10] sm:$0xff]
  %v1194 = vld [vmem:[%s1190 + $0x18] sm:$0xff]
  %v1195 = vld [vmem:[#allocation2] sm:$0xff]
  %1196 = vmatprep.subr.mxu0 %v21
  %1197 = vmatpush1.msra.mxu0 %v20
  %1198 = vmatprep.subr.mxu0 %v25
  %1199 = vmatpush1.msra.mxu0 %v24
  %1200 = vmatprep.subr.mxu0 %v29
  %1201 = vmatpush1.msra.mxu0 %v28
  %1202 = vmatprep.subr.mxu0 %v33
  %1203 = vmatpush1.msra.mxu0 %v32
  %1204 = vmatprep.subr.mxu0 %v37
  %1205 = vmatpush1.msra.mxu0 %v36
  %1206 = vmatprep.subr.mxu0 %v41
  %1207 = vmatpush1.msra.mxu0 %v40
  %1208 = vmatprep.subr.mxu0 %v45
  %1209 = vmatpush1.msra.mxu0 %v44
  %1210 = vmatprep.subr.mxu0 %v49
  %1211 = vmatpush1.msra.mxu0 %v48
  %1212 = vmatprep.subr.mxu0 %v53
  %1213 = vmatpush1.msra.mxu0 %v52
  %1214 = vmatprep.subr.mxu0 %v57
  %1215 = vmatpush1.msra.mxu0 %v56
  %1216 = vmatprep.subr.mxu0 %v61
  %1217 = vmatpush1.msra.mxu0 %v60
  %1218 = vmatprep.subr.mxu0 %v65
  %1219 = vmatpush1.msra.mxu0 %v64
  %1220 = vmatprep.subr.mxu0 %v69
  %1221 = vmatpush1.msra.mxu0 %v68
  %1222 = vmatprep.subr.mxu0 %v73
  %1223 = vmatpush1.msra.mxu0 %v72
  %1224 = vmatprep.subr.mxu0 %v77
  %1225 = vmatpush1.msra.mxu0 %v76
  %1226 = vmatprep.subr.mxu0 %v81
  %1227 = vmatpush1.msra.mxu0 %v80
  %1228 = vmatprep.subr.mxu0 0.0
  %1229 = vmatpush1.msra.mxu0 0.0
  %1230 = vmatprep.subr.mxu0 0.0
  %1231 = vmatpush1.msra.mxu0 0.0
  %1232 = vmatprep.subr.mxu0 0.0
  %1233 = vmatpush1.msra.mxu0 0.0
  %1234 = vmatprep.subr.mxu0 0.0
  %1235 = vmatpush1.msra.mxu0 0.0
  %1236 = vmatprep.subr.mxu0 0.0
  %1237 = vmatpush1.msra.mxu0 0.0
  %1238 = vmatprep.subr.mxu0 0.0
  %1239 = vmatpush1.msra.mxu0 0.0
  %1240 = vmatprep.subr.mxu0 0.0
  %1241 = vmatpush1.msra.mxu0 0.0
  %1242 = vmatprep.subr.mxu0 0.0
  %1243 = vmatpush1.msra.mxu0 0.0
  %1244 = vmatprep.subr.mxu0 0.0
  %1245 = vmatpush1.msra.mxu0 0.0
  %1246 = vmatprep.subr.mxu0 0.0
  %1247 = vmatpush1.msra.mxu0 0.0
  %1248 = vmatprep.subr.mxu0 0.0
  %1249 = vmatpush1.msra.mxu0 0.0
  %1250 = vmatprep.subr.mxu0 0.0
  %1251 = vmatpush1.msra.mxu0 0.0
  %1252 = vmatprep.subr.mxu0 0.0
  %1253 = vmatpush1.msra.mxu0 0.0
  %1254 = vmatprep.subr.mxu0 0.0
  %1255 = vmatpush1.msra.mxu0 0.0
  %1256 = vmatprep.subr.mxu0 0.0
  %1257 = vmatpush1.msra.mxu0 0.0
  %1258 = vmatprep.subr.mxu0 0.0
  %1259 = vmatpush1.msra.mxu0 0.0
  %1260 = vmatprep.mubr.f32.mxu0 0.0
  %1261 = vmatmul.mubr.f32.gmra.mrb[0].mxu0 %v1195
  %v1262 = vpop.f32.mrb[0].mxu0
  %v1263 = vadd.f32 %v1191, %v1262
  %v1264 = vpop.f32.mrb[0].mxu0
  %v1265 = vadd.f32 %v1192, %v1264
  %1266 = vdwg.mxu0
  %1267 = vmatprep.subr.mxu0 %v23
  %1268 = vmatpush1.msra.mxu0 %v22
  %1269 = vmatprep.subr.mxu0 %v27
  %1270 = vmatpush1.msra.mxu0 %v26
  %1271 = vmatprep.subr.mxu0 %v31
  %1272 = vmatpush1.msra.mxu0 %v30
  %1273 = vmatprep.subr.mxu0 %v35
  %1274 = vmatpush1.msra.mxu0 %v34
  %1275 = vmatprep.subr.mxu0 %v39
  %1276 = vmatpush1.msra.mxu0 %v38
  %1277 = vmatprep.subr.mxu0 %v43
  %1278 = vmatpush1.msra.mxu0 %v42
  %1279 = vmatprep.subr.mxu0 %v47
  %1280 = vmatpush1.msra.mxu0 %v46
  %1281 = vmatprep.subr.mxu0 %v51
  %1282 = vmatpush1.msra.mxu0 %v50
  %1283 = vmatprep.subr.mxu0 %v55
  %1284 = vmatpush1.msra.mxu0 %v54
  %1285 = vmatprep.subr.mxu0 %v59
  %1286 = vmatpush1.msra.mxu0 %v58
  %1287 = vmatprep.subr.mxu0 %v63
  %1288 = vmatpush1.msra.mxu0 %v62
  %1289 = vmatprep.subr.mxu0 %v67
  %1290 = vmatpush1.msra.mxu0 %v66
  %1291 = vmatprep.subr.mxu0 %v71
  %1292 = vmatpush1.msra.mxu0 %v70
  %1293 = vmatprep.subr.mxu0 %v75
  %1294 = vmatpush1.msra.mxu0 %v74
  %1295 = vmatprep.subr.mxu0 %v79
  %1296 = vmatpush1.msra.mxu0 %v78
  %1297 = vmatprep.subr.mxu0 %v83
  %1298 = vmatpush1.msra.mxu0 %v82
  %1299 = vmatprep.subr.mxu0 0.0
  %1300 = vmatpush1.msra.mxu0 0.0
  %1301 = vmatprep.subr.mxu0 0.0
  %1302 = vmatpush1.msra.mxu0 0.0
  %1303 = vmatprep.subr.mxu0 0.0
  %1304 = vmatpush1.msra.mxu0 0.0
  %1305 = vmatprep.subr.mxu0 0.0
  %1306 = vmatpush1.msra.mxu0 0.0
  %1307 = vmatprep.subr.mxu0 0.0
  %1308 = vmatpush1.msra.mxu0 0.0
  %1309 = vmatprep.subr.mxu0 0.0
  %1310 = vmatpush1.msra.mxu0 0.0
  %1311 = vmatprep.subr.mxu0 0.0
  %1312 = vmatpush1.msra.mxu0 0.0
  %1313 = vmatprep.subr.mxu0 0.0
  %1314 = vmatpush1.msra.mxu0 0.0
  %1315 = vmatprep.subr.mxu0 0.0
  %1316 = vmatpush1.msra.mxu0 0.0
  %1317 = vmatprep.subr.mxu0 0.0
  %1318 = vmatpush1.msra.mxu0 0.0
  %1319 = vmatprep.subr.mxu0 0.0
  %1320 = vmatpush1.msra.mxu0 0.0
  %1321 = vmatprep.subr.mxu0 0.0
  %1322 = vmatpush1.msra.mxu0 0.0
  %1323 = vmatprep.subr.mxu0 0.0
  %1324 = vmatpush1.msra.mxu0 0.0
  %1325 = vmatprep.subr.mxu0 0.0
  %1326 = vmatpush1.msra.mxu0 0.0
  %1327 = vmatprep.subr.mxu0 0.0
  %1328 = vmatpush1.msra.mxu0 0.0
  %1329 = vmatprep.subr.mxu0 0.0
  %1330 = vmatpush1.msra.mxu0 0.0
  %1331 = vmatprep.mubr.f32.mxu0 0.0
  %1332 = vmatmul.mubr.f32.gmra.mrb[0].mxu0 %v1195
  %v1333 = vpop.f32.mrb[0].mxu0
  %v1334 = vadd.f32 %v1193, %v1333
  %v1335 = vpop.f32.mrb[0].mxu0
  %v1336 = vadd.f32 %v1194, %v1335
  %1337 = vdwg.mxu0
  %v1338 = vadd.f32 %v1263, %v236
  %v1339 = vadd.f32 %v1265, %v240
  %v1340 = vadd.f32 %v1334, %v244
  %v1341 = vadd.f32 %v1336, %v248
  %v1342 = vxor.u32 %v1338, 2147483648
  %v1343 = vxor.u32 %v1339, 2147483648
  %v1344 = vxor.u32 %v1340, 2147483648
  %v1345 = vmul.f32 %v1342, 1.442695
  %v1346 = vpow.pop %v1345
  %v1347 = vmul.f32 %v1343, 1.442695
  %v1348 = vpow.pop %v1347
  %v1349 = vmul.f32 %v1344, 1.442695
  %v1350 = vpow.pop %v1349
  %v1351 = vadd.f32 %v1346, 1.0
  %v1352 = vadd.f32 %v1348, 1.0
  %v1353 = vadd.f32 %v1350, 1.0
  %v1354 = vrcp.pop %v1351
  %v1355 = vmul.f32 1.0, %v1354
  %v1356 = vrcp.pop %v1352
  %v1357 = vmul.f32 1.0, %v1356
  %v1358 = vrcp.pop %v1353
  %v1359 = vmul.f32 1.0, %v1358
  %v1360 = vtanh.pop %v1341
  %v1361 = vld [vmem:[#allocation3] sm:$0xff]
  %v1362 = vmul.f32 %v1357, %v1361
  %v1363 = vmul.f32 %v1355, %v1360
  %v1364 = vadd.f32 %v1362, %v1363
  %v1365 = vtanh.pop %v1364
  %v1366 = vmul.f32 %v1359, %v1365
  %1367 = vst [vmem:[#allocation3] sm:$0xff] %v1364
  %1368 = vst [vmem:[#allocation2] sm:$0xff] %v1366
  %s1369 = scalar_lea.vmem %s3, 48
  %1370 = vst [vmem:[%s1369] sm:$0xff] %v1366
  %s1371 = scalar_lea.vmem %s0, 224
  %v1372 = vld [vmem:[%s1371] sm:$0xff]
  %v1373 = vld [vmem:[%s1371 + $0x8] sm:$0xff]
  %v1374 = vld [vmem:[%s1371 + $0x10] sm:$0xff]
  %v1375 = vld [vmem:[%s1371 + $0x18] sm:$0xff]
  %v1376 = vld [vmem:[#allocation2] sm:$0xff]
  %1377 = vmatprep.subr.mxu0 %v21
  %1378 = vmatpush1.msra.mxu0 %v20
  %1379 = vmatprep.subr.mxu0 %v25
  %1380 = vmatpush1.msra.mxu0 %v24
  %1381 = vmatprep.subr.mxu0 %v29
  %1382 = vmatpush1.msra.mxu0 %v28
  %1383 = vmatprep.subr.mxu0 %v33
  %1384 = vmatpush1.msra.mxu0 %v32
  %1385 = vmatprep.subr.mxu0 %v37
  %1386 = vmatpush1.msra.mxu0 %v36
  %1387 = vmatprep.subr.mxu0 %v41
  %1388 = vmatpush1.msra.mxu0 %v40
  %1389 = vmatprep.subr.mxu0 %v45
  %1390 = vmatpush1.msra.mxu0 %v44
  %1391 = vmatprep.subr.mxu0 %v49
  %1392 = vmatpush1.msra.mxu0 %v48
  %1393 = vmatprep.subr.mxu0 %v53
  %1394 = vmatpush1.msra.mxu0 %v52
  %1395 = vmatprep.subr.mxu0 %v57
  %1396 = vmatpush1.msra.mxu0 %v56
  %1397 = vmatprep.subr.mxu0 %v61
  %1398 = vmatpush1.msra.mxu0 %v60
  %1399 = vmatprep.subr.mxu0 %v65
  %1400 = vmatpush1.msra.mxu0 %v64
  %1401 = vmatprep.subr.mxu0 %v69
  %1402 = vmatpush1.msra.mxu0 %v68
  %1403 = vmatprep.subr.mxu0 %v73
  %1404 = vmatpush1.msra.mxu0 %v72
  %1405 = vmatprep.subr.mxu0 %v77
  %1406 = vmatpush1.msra.mxu0 %v76
  %1407 = vmatprep.subr.mxu0 %v81
  %1408 = vmatpush1.msra.mxu0 %v80
  %1409 = vmatprep.subr.mxu0 0.0
  %1410 = vmatpush1.msra.mxu0 0.0
  %1411 = vmatprep.subr.mxu0 0.0
  %1412 = vmatpush1.msra.mxu0 0.0
  %1413 = vmatprep.subr.mxu0 0.0
  %1414 = vmatpush1.msra.mxu0 0.0
  %1415 = vmatprep.subr.mxu0 0.0
  %1416 = vmatpush1.msra.mxu0 0.0
  %1417 = vmatprep.subr.mxu0 0.0
  %1418 = vmatpush1.msra.mxu0 0.0
  %1419 = vmatprep.subr.mxu0 0.0
  %1420 = vmatpush1.msra.mxu0 0.0
  %1421 = vmatprep.subr.mxu0 0.0
  %1422 = vmatpush1.msra.mxu0 0.0
  %1423 = vmatprep.subr.mxu0 0.0
  %1424 = vmatpush1.msra.mxu0 0.0
  %1425 = vmatprep.subr.mxu0 0.0
  %1426 = vmatpush1.msra.mxu0 0.0
  %1427 = vmatprep.subr.mxu0 0.0
  %1428 = vmatpush1.msra.mxu0 0.0
  %1429 = vmatprep.subr.mxu0 0.0
  %1430 = vmatpush1.msra.mxu0 0.0
  %1431 = vmatprep.subr.mxu0 0.0
  %1432 = vmatpush1.msra.mxu0 0.0
  %1433 = vmatprep.subr.mxu0 0.0
  %1434 = vmatpush1.msra.mxu0 0.0
  %1435 = vmatprep.subr.mxu0 0.0
  %1436 = vmatpush1.msra.mxu0 0.0
  %1437 = vmatprep.subr.mxu0 0.0
  %1438 = vmatpush1.msra.mxu0 0.0
  %1439 = vmatprep.subr.mxu0 0.0
  %1440 = vmatpush1.msra.mxu0 0.0
  %1441 = vmatprep.mubr.f32.mxu0 0.0
  %1442 = vmatmul.mubr.f32.gmra.mrb[0].mxu0 %v1376
  %v1443 = vpop.f32.mrb[0].mxu0
  %v1444 = vadd.f32 %v1372, %v1443
  %v1445 = vpop.f32.mrb[0].mxu0
  %v1446 = vadd.f32 %v1373, %v1445
  %1447 = vdwg.mxu0
  %1448 = vmatprep.subr.mxu0 %v23
  %1449 = vmatpush1.msra.mxu0 %v22
  %1450 = vmatprep.subr.mxu0 %v27
  %1451 = vmatpush1.msra.mxu0 %v26
  %1452 = vmatprep.subr.mxu0 %v31
  %1453 = vmatpush1.msra.mxu0 %v30
  %1454 = vmatprep.subr.mxu0 %v35
  %1455 = vmatpush1.msra.mxu0 %v34
  %1456 = vmatprep.subr.mxu0 %v39
  %1457 = vmatpush1.msra.mxu0 %v38
  %1458 = vmatprep.subr.mxu0 %v43
  %1459 = vmatpush1.msra.mxu0 %v42
  %1460 = vmatprep.subr.mxu0 %v47
  %1461 = vmatpush1.msra.mxu0 %v46
  %1462 = vmatprep.subr.mxu0 %v51
  %1463 = vmatpush1.msra.mxu0 %v50
  %1464 = vmatprep.subr.mxu0 %v55
  %1465 = vmatpush1.msra.mxu0 %v54
  %1466 = vmatprep.subr.mxu0 %v59
  %1467 = vmatpush1.msra.mxu0 %v58
  %1468 = vmatprep.subr.mxu0 %v63
  %1469 = vmatpush1.msra.mxu0 %v62
  %1470 = vmatprep.subr.mxu0 %v67
  %1471 = vmatpush1.msra.mxu0 %v66
  %1472 = vmatprep.subr.mxu0 %v71
  %1473 = vmatpush1.msra.mxu0 %v70
  %1474 = vmatprep.subr.mxu0 %v75
  %1475 = vmatpush1.msra.mxu0 %v74
  %1476 = vmatprep.subr.mxu0 %v79
  %1477 = vmatpush1.msra.mxu0 %v78
  %1478 = vmatprep.subr.mxu0 %v83
  %1479 = vmatpush1.msra.mxu0 %v82
  %1480 = vmatprep.subr.mxu0 0.0
  %1481 = vmatpush1.msra.mxu0 0.0
  %1482 = vmatprep.subr.mxu0 0.0
  %1483 = vmatpush1.msra.mxu0 0.0
  %1484 = vmatprep.subr.mxu0 0.0
  %1485 = vmatpush1.msra.mxu0 0.0
  %1486 = vmatprep.subr.mxu0 0.0
  %1487 = vmatpush1.msra.mxu0 0.0
  %1488 = vmatprep.subr.mxu0 0.0
  %1489 = vmatpush1.msra.mxu0 0.0
  %1490 = vmatprep.subr.mxu0 0.0
  %1491 = vmatpush1.msra.mxu0 0.0
  %1492 = vmatprep.subr.mxu0 0.0
  %1493 = vmatpush1.msra.mxu0 0.0
  %1494 = vmatprep.subr.mxu0 0.0
  %1495 = vmatpush1.msra.mxu0 0.0
  %1496 = vmatprep.subr.mxu0 0.0
  %1497 = vmatpush1.msra.mxu0 0.0
  %1498 = vmatprep.subr.mxu0 0.0
  %1499 = vmatpush1.msra.mxu0 0.0
  %1500 = vmatprep.subr.mxu0 0.0
  %1501 = vmatpush1.msra.mxu0 0.0
  %1502 = vmatprep.subr.mxu0 0.0
  %1503 = vmatpush1.msra.mxu0 0.0
  %1504 = vmatprep.subr.mxu0 0.0
  %1505 = vmatpush1.msra.mxu0 0.0
  %1506 = vmatprep.subr.mxu0 0.0
  %1507 = vmatpush1.msra.mxu0 0.0
  %1508 = vmatprep.subr.mxu0 0.0
  %1509 = vmatpush1.msra.mxu0 0.0
  %1510 = vmatprep.subr.mxu0 0.0
  %1511 = vmatpush1.msra.mxu0 0.0
  %1512 = vmatprep.mubr.f32.mxu0 0.0
  %1513 = vmatmul.mubr.f32.gmra.mrb[0].mxu0 %v1376
  %v1514 = vpop.f32.mrb[0].mxu0
  %v1515 = vadd.f32 %v1374, %v1514
  %v1516 = vpop.f32.mrb[0].mxu0
  %v1517 = vadd.f32 %v1375, %v1516
  %1518 = vdwg.mxu0
  %v1519 = vadd.f32 %v1444, %v236
  %v1520 = vadd.f32 %v1446, %v240
  %v1521 = vadd.f32 %v1515, %v244
  %v1522 = vadd.f32 %v1517, %v248
  %v1523 = vxor.u32 %v1519, 2147483648
  %v1524 = vxor.u32 %v1520, 2147483648
  %v1525 = vxor.u32 %v1521, 2147483648
  %v1526 = vmul.f32 %v1523, 1.442695
  %v1527 = vpow.pop %v1526
  %v1528 = vmul.f32 %v1524, 1.442695
  %v1529 = vpow.pop %v1528
  %v1530 = vmul.f32 %v1525, 1.442695
  %v1531 = vpow.pop %v1530
  %v1532 = vadd.f32 %v1527, 1.0
  %v1533 = vadd.f32 %v1529, 1.0
  %v1534 = vadd.f32 %v1531, 1.0
  %v1535 = vrcp.pop %v1532
  %v1536 = vmul.f32 1.0, %v1535
  %v1537 = vrcp.pop %v1533
  %v1538 = vmul.f32 1.0, %v1537
  %v1539 = vrcp.pop %v1534
  %v1540 = vmul.f32 1.0, %v1539
  %v1541 = vtanh.pop %v1522
  %v1542 = vld [vmem:[#allocation3] sm:$0xff]
  %v1543 = vmul.f32 %v1538, %v1542
  %v1544 = vmul.f32 %v1536, %v1541
  %v1545 = vadd.f32 %v1543, %v1544
  %v1546 = vtanh.pop %v1545
  %v1547 = vmul.f32 %v1540, %v1546
  %1548 = vst [vmem:[#allocation3] sm:$0xff] %v1545
  %1549 = vst [vmem:[#allocation2] sm:$0xff] %v1547
  %s1550 = scalar_lea.vmem %s3, 56
  %1551 = vst [vmem:[%s1550] sm:$0xff] %v1547
  // Predicated region
  $region18: #{lstm_forecast.5} parent=0 // pred_check
    _
  $region19: #{lstm_forecast.5} parent=0 // pred_check_branch
    %1553 = sbr.rel (0) target = $region21
  $region20: #{lstm_forecast.5} parent=0 // pred_region
    _
  $region21: #{lstm_forecast.5} parent=0 // pred_fallthru
    _
  // Predicated region
  $region22: #{lstm_forecast.5} parent=0 // pred_check
    _
  $region23: #{lstm_forecast.5} parent=0 // pred_check_branch
    %1555 = sbr.rel (0) target = $region25
  $region24: #{lstm_forecast.5} parent=0 // pred_region
    _
  $region25: #{lstm_forecast.5} parent=0 // pred_fallthru
    _

// kernel: lstm_forecast.6
$region0: #{lstm_forecast.6}
  #allocation0 [shape = 'u32[]', space=smem, size = 0x4, offset = 0x4, fixed_abs, tag = 'smem constant byte address 0x4 - core index']
  #allocation1 [shape = 'u32[144,128]{1,0:T(1,128)}', space=vmem, size = 0x12000, scoped, tag = 'internal scratch']
  #allocation2 [shape = 'f32[8,128]{1,0:T(8,128)}', space=vmem, size = 0x1000, scoped, tag = 'scratch operand']
  #allocation3 [shape = 'f32[8,128]{1,0:T(8,128)}', space=vmem, size = 0x1000, scoped, tag = 'scratch operand']
  %s0 = inlined_call_operand.vmem [shape: f32[8,8,512], index: 0, kind: input, shape index: {}]
  %s1 = inlined_call_operand.vmem [shape: f32[128,512], index: 1, kind: input, shape index: {}]
  %s2 = inlined_call_operand.vmem [shape: f32[1,512], index: 2, kind: input, shape index: {}]
  %s3 = inlined_call_operand.vmem [shape: f32[8,128], index: 3, kind: output, shape index: {}]
  %s4 = sld [smem:[#allocation0]]
  $region58: #{lstm_forecast.6} parent=0
    _
  %s6 = ssub.s32 1, %s4
  %s7 = scalar_select 0, %s6, %s4
  // Predicated region
  $region2: #{lstm_forecast.6} parent=0 // pred_check
    _
  $region3: #{lstm_forecast.6} parent=0 // pred_check_branch
    %9 = sbr.rel (0) target = $region5
  $region4: #{lstm_forecast.6} parent=0 // pred_region
    _
  $region5: #{lstm_forecast.6} parent=0 // pred_fallthru
    _
  // Predicated region
  $region6: #{lstm_forecast.6} parent=0 // pred_check
    _
  $region7: #{lstm_forecast.6} parent=0 // pred_check_branch
    %11 = sbr.rel (0) target = $region9
  $region8: #{lstm_forecast.6} parent=0 // pred_region
    _
  $region9: #{lstm_forecast.6} parent=0 // pred_fallthru
    _
  // Predicated region
  $region10: #{lstm_forecast.6} parent=0 // pred_check
    _
  $region11: #{lstm_forecast.6} parent=0 // pred_check_branch
    %13 = sbr.rel (0) target = $region13
  $region12: #{lstm_forecast.6} parent=0 // pred_region
    _
  $region13: #{lstm_forecast.6} parent=0 // pred_fallthru
    _
  %p14 = scmp.eq.s32.totalorder 0, 0
  // Predicated region
  $region14: #{lstm_forecast.6} parent=0 // pred_check
    %p15 = pneg %p14
  $region15: #{lstm_forecast.6} parent=0 // pred_check_branch
    %17 = sbr.rel (%p15) target = $region17
  $region16: #{lstm_forecast.6} parent=0 // pred_region
    %18 = vst [vmem:[#allocation2] sm:$0xff] 0.0
    %19 = vst [vmem:[#allocation3] sm:$0xff] 0.0
  $region17: #{lstm_forecast.6} parent=0 // pred_fallthru
    _
  %v20 = vld [vmem:[%s1] sm:$0xff]
  %v21 = vld [vmem:[%s1 + $0x8] sm:$0xff]
  %v22 = vld [vmem:[%s1 + $0x10] sm:$0xff]
  %v23 = vld [vmem:[%s1 + $0x18] sm:$0xff]
  %v24 = vld [vmem:[%s1 + $0x20] sm:$0xff]
  %v25 = vld [vmem:[%s1 + $0x28] sm:$0xff]
  %v26 = vld [vmem:[%s1 + $0x30] sm:$0xff]
  %v27 = vld [vmem:[%s1 + $0x38] sm:$0xff]
  %v28 = vld [vmem:[%s1 + $0x40] sm:$0xff]
  %v29 = vld [vmem:[%s1 + $0x48] sm:$0xff]
  %v30 = vld [vmem:[%s1 + $0x50] sm:$0xff]
  %v31 = vld [vmem:[%s1 + $0x58] sm:$0xff]
  %v32 = vld [vmem:[%s1 + $0x60] sm:$0xff]
  %v33 = vld [vmem:[%s1 + $0x68] sm:$0xff]
  %v34 = vld [vmem:[%s1 + $0x70] sm:$0xff]
  %v35 = vld [vmem:[%s1 + $0x78] sm:$0xff]
  %v36 = vld [vmem:[%s1 + $0x80] sm:$0xff]
  %v37 = vld [vmem:[%s1 + $0x88] sm:$0xff]
  %v38 = vld [vmem:[%s1 + $0x90] sm:$0xff]
  %v39 = vld [vmem:[%s1 + $0x98] sm:$0xff]
  %v40 = vld [vmem:[%s1 + $0xa0] sm:$0xff]
  %v41 = vld [vmem:[%s1 + $0xa8] sm:$0xff]
  %v42 = vld [vmem:[%s1 + $0xb0] sm:$0xff]
  %v43 = vld [vmem:[%s1 + $0xb8] sm:$0xff]
  %v44 = vld [vmem:[%s1 + $0xc0] sm:$0xff]
  %v45 = vld [vmem:[%s1 + $0xc8] sm:$0xff]
  %v46 = vld [vmem:[%s1 + $0xd0] sm:$0xff]
  %v47 = vld [vmem:[%s1 + $0xd8] sm:$0xff]
  %v48 = vld [vmem:[%s1 + $0xe0] sm:$0xff]
  %v49 = vld [vmem:[%s1 + $0xe8] sm:$0xff]
  %v50 = vld [vmem:[%s1 + $0xf0] sm:$0xff]
  %v51 = vld [vmem:[%s1 + $0xf8] sm:$0xff]
  %v52 = vld [vmem:[%s1 + $0x100] sm:$0xff]
  %v53 = vld [vmem:[%s1 + $0x108] sm:$0xff]
  %v54 = vld [vmem:[%s1 + $0x110] sm:$0xff]
  %v55 = vld [vmem:[%s1 + $0x118] sm:$0xff]
  %v56 = vld [vmem:[%s1 + $0x120] sm:$0xff]
  %v57 = vld [vmem:[%s1 + $0x128] sm:$0xff]
  %v58 = vld [vmem:[%s1 + $0x130] sm:$0xff]
  %v59 = vld [vmem:[%s1 + $0x138] sm:$0xff]
  %v60 = vld [vmem:[%s1 + $0x140] sm:$0xff]
  %v61 = vld [vmem:[%s1 + $0x148] sm:$0xff]
  %v62 = vld [vmem:[%s1 + $0x150] sm:$0xff]
  %v63 = vld [vmem:[%s1 + $0x158] sm:$0xff]
  %v64 = vld [vmem:[%s1 + $0x160] sm:$0xff]
  %v65 = vld [vmem:[%s1 + $0x168] sm:$0xff]
  %v66 = vld [vmem:[%s1 + $0x170] sm:$0xff]
  %v67 = vld [vmem:[%s1 + $0x178] sm:$0xff]
  %v68 = vld [vmem:[%s1 + $0x180] sm:$0xff]
  %v69 = vld [vmem:[%s1 + $0x188] sm:$0xff]
  %v70 = vld [vmem:[%s1 + $0x190] sm:$0xff]
  %v71 = vld [vmem:[%s1 + $0x198] sm:$0xff]
  %v72 = vld [vmem:[%s1 + $0x1a0] sm:$0xff]
  %v73 = vld [vmem:[%s1 + $0x1a8] sm:$0xff]
  %v74 = vld [vmem:[%s1 + $0x1b0] sm:$0xff]
  %v75 = vld [vmem:[%s1 + $0x1b8] sm:$0xff]
  %v76 = vld [vmem:[%s1 + $0x1c0] sm:$0xff]
  %v77 = vld [vmem:[%s1 + $0x1c8] sm:$0xff]
  %v78 = vld [vmem:[%s1 + $0x1d0] sm:$0xff]
  %v79 = vld [vmem:[%s1 + $0x1d8] sm:$0xff]
  %v80 = vld [vmem:[%s1 + $0x1e0] sm:$0xff]
  %v81 = vld [vmem:[%s1 + $0x1e8] sm:$0xff]
  %v82 = vld [vmem:[%s1 + $0x1f0] sm:$0xff]
  %v83 = vld [vmem:[%s1 + $0x1f8] sm:$0xff]
  %v84 = vld [vmem:[%s2] sm:$0xf]
  %s85 = smul.u32 0, 8
  %v86 = vld [vmem:[%s0] sm:$0xff]
  %v87 = vld [vmem:[%s0 + $0x8] sm:$0xff]
  %v88 = vld [vmem:[%s0 + $0x10] sm:$0xff]
  %v89 = vld [vmem:[%s0 + $0x18] sm:$0xff]
  %v90 = vld [vmem:[#allocation2] sm:$0xff]
  %91 = vmatprep.subr.mxu0 %v21
  %92 = vmatpush1.msra.mxu0 %v20
  %93 = vmatprep.subr.mxu0 %v25
  %94 = vmatpush1.msra.mxu0 %v24
  %95 = vmatprep.subr.mxu0 %v29
  %96 = vmatpush1.msra.mxu0 %v28
  %97 = vmatprep.subr.mxu0 %v33
  %98 = vmatpush1.msra.mxu0 %v32
  %99 = vmatprep.subr.mxu0 %v37
  %100 = vmatpush1.msra.mxu0 %v36
  %101 = vmatprep.subr.mxu0 %v41
  %102 = vmatpush1.msra.mxu0 %v40
  %103 = vmatprep.subr.mxu0 %v45
  %104 = vmatpush1.msra.mxu0 %v44
  %105 = vmatprep.subr.mxu0 %v49
  %106 = vmatpush1.msra.mxu0 %v48
  %107 = vmatprep.subr.mxu0 %v53
  %108 = vmatpush1.msra.mxu0 %v52
  %109 = vmatprep.subr.mxu0 %v57
  %110 = vmatpush1.msra.mxu0 %v56
  %111 = vmatprep.subr.mxu0 %v61
  %112 = vmatpush1.msra.mxu0 %v60
  %113 = vmatprep.subr.mxu0 %v65
  %114 = vmatpush1.msra.mxu0 %v64
  %115 = vmatprep.subr.mxu0 %v69
  %116 = vmatpush1.msra.mxu0 %v68
  %117 = vmatprep.subr.mxu0 %v73
  %118 = vmatpush1.msra.mxu0 %v72
  %119 = vmatprep.subr.mxu0 %v77
  %120 = vmatpush1.msra.mxu0 %v76
  %121 = vmatprep.subr.mxu0 %v81
  %122 = vmatpush1.msra.mxu0 %v80
  %123 = vmatprep.subr.mxu0 0.0
  %124 = vmatpush1.msra.mxu0 0.0
  %125 = vmatprep.subr.mxu0 0.0
  %126 = vmatpush1.msra.mxu0 0.0
  %127 = vmatprep.subr.mxu0 0.0
  %128 = vmatpush1.msra.mxu0 0.0
  %129 = vmatprep.subr.mxu0 0.0
  %130 = vmatpush1.msra.mxu0 0.0
  %131 = vmatprep.subr.mxu0 0.0
  %132 = vmatpush1.msra.mxu0 0.0
  %133 = vmatprep.subr.mxu0 0.0
  %134 = vmatpush1.msra.mxu0 0.0
  %135 = vmatprep.subr.mxu0 0.0
  %136 = vmatpush1.msra.mxu0 0.0
  %137 = vmatprep.subr.mxu0 0.0
  %138 = vmatpush1.msra.mxu0 0.0
  %139 = vmatprep.subr.mxu0 0.0
  %140 = vmatpush1.msra.mxu0 0.0
  %141 = vmatprep.subr.mxu0 0.0
  %142 = vmatpush1.msra.mxu0 0.0
  %143 = vmatprep.subr.mxu0 0.0
  %144 = vmatpush1.msra.mxu0 0.0
  %145 = vmatprep.subr.mxu0 0.0
  %146 = vmatpush1.msra.mxu0 0.0
  %147 = vmatprep.subr.mxu0 0.0
  %148 = vmatpush1.msra.mxu0 0.0
  %149 = vmatprep.subr.mxu0 0.0
  %150 = vmatpush1.msra.mxu0 0.0
  %151 = vmatprep.subr.mxu0 0.0
  %152 = vmatpush1.msra.mxu0 0.0
  %153 = vmatprep.subr.mxu0 0.0
  %154 = vmatpush1.msra.mxu0 0.0
  %155 = vmatprep.mubr.f32.mxu0 0.0
  %156 = vmatmul.mubr.f32.gmra.mrb[0].mxu0 %v90
  %v157 = vpop.f32.mrb[0].mxu0
  %v158 = vadd.f32 %v86, %v157
  %v159 = vpop.f32.mrb[0].mxu0
  %v160 = vadd.f32 %v87, %v159
  %161 = vdwg.mxu0
  %162 = vmatprep.subr.mxu0 %v23
  %163 = vmatpush1.msra.mxu0 %v22
  %164 = vmatprep.subr.mxu0 %v27
  %165 = vmatpush1.msra.mxu0 %v26
  %166 = vmatprep.subr.mxu0 %v31
  %167 = vmatpush1.msra.mxu0 %v30
  %168 = vmatprep.subr.mxu0 %v35
  %169 = vmatpush1.msra.mxu0 %v34
  %170 = vmatprep.subr.mxu0 %v39
  %171 = vmatpush1.msra.mxu0 %v38
  %172 = vmatprep.subr.mxu0 %v43
  %173 = vmatpush1.msra.mxu0 %v42
  %174 = vmatprep.subr.mxu0 %v47
  %175 = vmatpush1.msra.mxu0 %v46
  %176 = vmatprep.subr.mxu0 %v51
  %177 = vmatpush1.msra.mxu0 %v50
  %178 = vmatprep.subr.mxu0 %v55
  %179 = vmatpush1.msra.mxu0 %v54
  %180 = vmatprep.subr.mxu0 %v59
  %181 = vmatpush1.msra.mxu0 %v58
  %182 = vmatprep.subr.mxu0 %v63
  %183 = vmatpush1.msra.mxu0 %v62
  %184 = vmatprep.subr.mxu0 %v67
  %185 = vmatpush1.msra.mxu0 %v66
  %186 = vmatprep.subr.mxu0 %v71
  %187 = vmatpush1.msra.mxu0 %v70
  %188 = vmatprep.subr.mxu0 %v75
  %189 = vmatpush1.msra.mxu0 %v74
  %190 = vmatprep.subr.mxu0 %v79
  %191 = vmatpush1.msra.mxu0 %v78
  %192 = vmatprep.subr.mxu0 %v83
  %193 = vmatpush1.msra.mxu0 %v82
  %194 = vmatprep.subr.mxu0 0.0
  %195 = vmatpush1.msra.mxu0 0.0
  %196 = vmatprep.subr.mxu0 0.0
  %197 = vmatpush1.msra.mxu0 0.0
  %198 = vmatprep.subr.mxu0 0.0
  %199 = vmatpush1.msra.mxu0 0.0
  %200 = vmatprep.subr.mxu0 0.0
  %201 = vmatpush1.msra.mxu0 0.0
  %202 = vmatprep.subr.mxu0 0.0
  %203 = vmatpush1.msra.mxu0 0.0
  %204 = vmatprep.subr.mxu0 0.0
  %205 = vmatpush1.msra.mxu0 0.0
  %206 = vmatprep.subr.mxu0 0.0
  %207 = vmatpush1.msra.mxu0 0.0
  %208 = vmatprep.subr.mxu0 0.0
  %209 = vmatpush1.msra.mxu0 0.0
  %210 = vmatprep.subr.mxu0 0.0
  %211 = vmatpush1.msra.mxu0 0.0
  %212 = vmatprep.subr.mxu0 0.0
  %213 = vmatpush1.msra.mxu0 0.0
  %214 = vmatprep.subr.mxu0 0.0
  %215 = vmatpush1.msra.mxu0 0.0
  %216 = vmatprep.subr.mxu0 0.0
  %217 = vmatpush1.msra.mxu0 0.0
  %218 = vmatprep.subr.mxu0 0.0
  %219 = vmatpush1.msra.mxu0 0.0
  %220 = vmatprep.subr.mxu0 0.0
  %221 = vmatpush1.msra.mxu0 0.0
  %222 = vmatprep.subr.mxu0 0.0
  %223 = vmatpush1.msra.mxu0 0.0
  %224 = vmatprep.subr.mxu0 0.0
  %225 = vmatpush1.msra.mxu0 0.0
  %226 = vmatprep.mubr.f32.mxu0 0.0
  %227 = vmatmul.mubr.f32.gmra.mrb[0].mxu0 %v90
  %v228 = vpop.f32.mrb[0].mxu0
  %v229 = vadd.f32 %v88, %v228
  %v230 = vpop.f32.mrb[0].mxu0
  %v231 = vadd.f32 %v89, %v230
  %232 = vdwg.mxu0
  %v234 = vlaneseq
  %v235 = vshrl.u32 %v234, 7
  %v236 = vsub.s32 0, %v235
  %v237 = vrot.slane %v84, %v236
  %v238 = vlaneseq
  %v239 = vshrl.u32 %v238, 7
  %v240 = vsub.s32 1, %v239
  %v241 = vrot.slane %v84, %v240
  %v242 = vlaneseq
  %v243 = vshrl.u32 %v242, 7
  %v244 = vsub.s32 2, %v243
  %v245 = vrot.slane %v84, %v244
  %v246 = vlaneseq
  %v247 = vshrl.u32 %v246, 7
  %v248 = vsub.s32 3, %v247
  %v249 = vrot.slane %v84, %v248
  %v254 = vadd.f32 %v158, %v237
  %v255 = vadd.f32 %v160, %v241
  %v256 = vadd.f32 %v229, %v245
  %v257 = vadd.f32 %v231, %v249
  %v258 = vxor.u32 %v254, 2147483648
  %v259 = vxor.u32 %v255, 2147483648
  %v260 = vxor.u32 %v256, 2147483648
  %v261 = vmul.f32 %v258, 1.442695
  %v262 = vpow.pop %v261
  %v263 = vmul.f32 %v259, 1.442695
  %v264 = vpow.pop %v263
  %v265 = vmul.f32 %v260, 1.442695
  %v266 = vpow.pop %v265
  %v267 = vadd.f32 %v262, 1.0
  %v268 = vadd.f32 %v264, 1.0
  %v269 = vadd.f32 %v266, 1.0
  %v270 = vrcp.pop %v267
  %v271 = vmul.f32 1.0, %v270
  %v272 = vrcp.pop %v268
  %v273 = vmul.f32 1.0, %v272
  %v274 = vrcp.pop %v269
  %v275 = vmul.f32 1.0, %v274
  %v276 = vtanh.pop %v257
  %v277 = vld [vmem:[#allocation3] sm:$0xff]
  %v278 = vmul.f32 %v273, %v277
  %v279 = vmul.f32 %v271, %v276
  %v280 = vadd.f32 %v278, %v279
  %v281 = vtanh.pop %v280
  %v282 = vmul.f32 %v275, %v281
  %283 = vst [vmem:[#allocation3] sm:$0xff] %v280
  %284 = vst [vmem:[#allocation2] sm:$0xff] %v282
  %p285 = scmp.eq.s32.totalorder %s85, 7
  // Predicated region
  $region18: #{lstm_forecast.6} parent=0 // pred_check
    %p286 = pneg %p285
  $region19: #{lstm_forecast.6} parent=0 // pred_check_branch
    %288 = sbr.rel (%p286) target = $region21
  $region20: #{lstm_forecast.6} parent=0 // pred_region
    %289 = vst [vmem:[%s3] sm:$0xff] %v282
  $region21: #{lstm_forecast.6} parent=0 // pred_fallthru
    _
  %s290 = scalar_lea.vmem %s0, 32
  %v291 = vld [vmem:[%s290] sm:$0xff]
  %v292 = vld [vmem:[%s290 + $0x8] sm:$0xff]
  %v293 = vld [vmem:[%s290 + $0x10] sm:$0xff]
  %v294 = vld [vmem:[%s290 + $0x18] sm:$0xff]
  %v295 = vld [vmem:[#allocation2] sm:$0xff]
  %296 = vmatprep.subr.mxu0 %v21
  %297 = vmatpush1.msra.mxu0 %v20
  %298 = vmatprep.subr.mxu0 %v25
  %299 = vmatpush1.msra.mxu0 %v24
  %300 = vmatprep.subr.mxu0 %v29
  %301 = vmatpush1.msra.mxu0 %v28
  %302 = vmatprep.subr.mxu0 %v33
  %303 = vmatpush1.msra.mxu0 %v32
  %304 = vmatprep.subr.mxu0 %v37
  %305 = vmatpush1.msra.mxu0 %v36
  %306 = vmatprep.subr.mxu0 %v41
  %307 = vmatpush1.msra.mxu0 %v40
  %308 = vmatprep.subr.mxu0 %v45
  %309 = vmatpush1.msra.mxu0 %v44
  %310 = vmatprep.subr.mxu0 %v49
  %311 = vmatpush1.msra.mxu0 %v48
  %312 = vmatprep.subr.mxu0 %v53
  %313 = vmatpush1.msra.mxu0 %v52
  %314 = vmatprep.subr.mxu0 %v57
  %315 = vmatpush1.msra.mxu0 %v56
  %316 = vmatprep.subr.mxu0 %v61
  %317 = vmatpush1.msra.mxu0 %v60
  %318 = vmatprep.subr.mxu0 %v65
  %319 = vmatpush1.msra.mxu0 %v64
  %320 = vmatprep.subr.mxu0 %v69
  %321 = vmatpush1.msra.mxu0 %v68
  %322 = vmatprep.subr.mxu0 %v73
  %323 = vmatpush1.msra.mxu0 %v72
  %324 = vmatprep.subr.mxu0 %v77
  %325 = vmatpush1.msra.mxu0 %v76
  %326 = vmatprep.subr.mxu0 %v81
  %327 = vmatpush1.msra.mxu0 %v80
  %328 = vmatprep.subr.mxu0 0.0
  %329 = vmatpush1.msra.mxu0 0.0
  %330 = vmatprep.subr.mxu0 0.0
  %331 = vmatpush1.msra.mxu0 0.0
  %332 = vmatprep.subr.mxu0 0.0
  %333 = vmatpush1.msra.mxu0 0.0
  %334 = vmatprep.subr.mxu0 0.0
  %335 = vmatpush1.msra.mxu0 0.0
  %336 = vmatprep.subr.mxu0 0.0
  %337 = vmatpush1.msra.mxu0 0.0
  %338 = vmatprep.subr.mxu0 0.0
  %339 = vmatpush1.msra.mxu0 0.0
  %340 = vmatprep.subr.mxu0 0.0
  %341 = vmatpush1.msra.mxu0 0.0
  %342 = vmatprep.subr.mxu0 0.0
  %343 = vmatpush1.msra.mxu0 0.0
  %344 = vmatprep.subr.mxu0 0.0
  %345 = vmatpush1.msra.mxu0 0.0
  %346 = vmatprep.subr.mxu0 0.0
  %347 = vmatpush1.msra.mxu0 0.0
  %348 = vmatprep.subr.mxu0 0.0
  %349 = vmatpush1.msra.mxu0 0.0
  %350 = vmatprep.subr.mxu0 0.0
  %351 = vmatpush1.msra.mxu0 0.0
  %352 = vmatprep.subr.mxu0 0.0
  %353 = vmatpush1.msra.mxu0 0.0
  %354 = vmatprep.subr.mxu0 0.0
  %355 = vmatpush1.msra.mxu0 0.0
  %356 = vmatprep.subr.mxu0 0.0
  %357 = vmatpush1.msra.mxu0 0.0
  %358 = vmatprep.subr.mxu0 0.0
  %359 = vmatpush1.msra.mxu0 0.0
  %360 = vmatprep.mubr.f32.mxu0 0.0
  %361 = vmatmul.mubr.f32.gmra.mrb[0].mxu0 %v295
  %v362 = vpop.f32.mrb[0].mxu0
  %v363 = vadd.f32 %v291, %v362
  %v364 = vpop.f32.mrb[0].mxu0
  %v365 = vadd.f32 %v292, %v364
  %366 = vdwg.mxu0
  %367 = vmatprep.subr.mxu0 %v23
  %368 = vmatpush1.msra.mxu0 %v22
  %369 = vmatprep.subr.mxu0 %v27
  %370 = vmatpush1.msra.mxu0 %v26
  %371 = vmatprep.subr.mxu0 %v31
  %372 = vmatpush1.msra.mxu0 %v30
  %373 = vmatprep.subr.mxu0 %v35
  %374 = vmatpush1.msra.mxu0 %v34
  %375 = vmatprep.subr.mxu0 %v39
  %376 = vmatpush1.msra.mxu0 %v38
  %377 = vmatprep.subr.mxu0 %v43
  %378 = vmatpush1.msra.mxu0 %v42
  %379 = vmatprep.subr.mxu0 %v47
  %380 = vmatpush1.msra.mxu0 %v46
  %381 = vmatprep.subr.mxu0 %v51
  %382 = vmatpush1.msra.mxu0 %v50
  %383 = vmatprep.subr.mxu0 %v55
  %384 = vmatpush1.msra.mxu0 %v54
  %385 = vmatprep.subr.mxu0 %v59
  %386 = vmatpush1.msra.mxu0 %v58
  %387 = vmatprep.subr.mxu0 %v63
  %388 = vmatpush1.msra.mxu0 %v62
  %389 = vmatprep.subr.mxu0 %v67
  %390 = vmatpush1.msra.mxu0 %v66
  %391 = vmatprep.subr.mxu0 %v71
  %392 = vmatpush1.msra.mxu0 %v70
  %393 = vmatprep.subr.mxu0 %v75
  %394 = vmatpush1.msra.mxu0 %v74
  %395 = vmatprep.subr.mxu0 %v79
  %396 = vmatpush1.msra.mxu0 %v78
  %397 = vmatprep.subr.mxu0 %v83
  %398 = vmatpush1.msra.mxu0 %v82
  %399 = vmatprep.subr.mxu0 0.0
  %400 = vmatpush1.msra.mxu0 0.0
  %401 = vmatprep.subr.mxu0 0.0
  %402 = vmatpush1.msra.mxu0 0.0
  %403 = vmatprep.subr.mxu0 0.0
  %404 = vmatpush1.msra.mxu0 0.0
  %405 = vmatprep.subr.mxu0 0.0
  %406 = vmatpush1.msra.mxu0 0.0
  %407 = vmatprep.subr.mxu0 0.0
  %408 = vmatpush1.msra.mxu0 0.0
  %409 = vmatprep.subr.mxu0 0.0
  %410 = vmatpush1.msra.mxu0 0.0
  %411 = vmatprep.subr.mxu0 0.0
  %412 = vmatpush1.msra.mxu0 0.0
  %413 = vmatprep.subr.mxu0 0.0
  %414 = vmatpush1.msra.mxu0 0.0
  %415 = vmatprep.subr.mxu0 0.0
  %416 = vmatpush1.msra.mxu0 0.0
  %417 = vmatprep.subr.mxu0 0.0
  %418 = vmatpush1.msra.mxu0 0.0
  %419 = vmatprep.subr.mxu0 0.0
  %420 = vmatpush1.msra.mxu0 0.0
  %421 = vmatprep.subr.mxu0 0.0
  %422 = vmatpush1.msra.mxu0 0.0
  %423 = vmatprep.subr.mxu0 0.0
  %424 = vmatpush1.msra.mxu0 0.0
  %425 = vmatprep.subr.mxu0 0.0
  %426 = vmatpush1.msra.mxu0 0.0
  %427 = vmatprep.subr.mxu0 0.0
  %428 = vmatpush1.msra.mxu0 0.0
  %429 = vmatprep.subr.mxu0 0.0
  %430 = vmatpush1.msra.mxu0 0.0
  %431 = vmatprep.mubr.f32.mxu0 0.0
  %432 = vmatmul.mubr.f32.gmra.mrb[0].mxu0 %v295
  %v433 = vpop.f32.mrb[0].mxu0
  %v434 = vadd.f32 %v293, %v433
  %v435 = vpop.f32.mrb[0].mxu0
  %v436 = vadd.f32 %v294, %v435
  %437 = vdwg.mxu0
  %v438 = vadd.f32 %v363, %v237
  %v439 = vadd.f32 %v365, %v241
  %v440 = vadd.f32 %v434, %v245
  %v441 = vadd.f32 %v436, %v249
  %v442 = vxor.u32 %v438, 2147483648
  %v443 = vxor.u32 %v439, 2147483648
  %v444 = vxor.u32 %v440, 2147483648
  %v445 = vmul.f32 %v442, 1.442695
  %v446 = vpow.pop %v445
  %v447 = vmul.f32 %v443, 1.442695
  %v448 = vpow.pop %v447
  %v449 = vmul.f32 %v444, 1.442695
  %v450 = vpow.pop %v449
  %v451 = vadd.f32 %v446, 1.0
  %v452 = vadd.f32 %v448, 1.0
  %v453 = vadd.f32 %v450, 1.0
  %v454 = vrcp.pop %v451
  %v455 = vmul.f32 1.0, %v454
  %v456 = vrcp.pop %v452
  %v457 = vmul.f32 1.0, %v456
  %v458 = vrcp.pop %v453
  %v459 = vmul.f32 1.0, %v458
  %v460 = vtanh.pop %v441
  %v461 = vld [vmem:[#allocation3] sm:$0xff]
  %v462 = vmul.f32 %v457, %v461
  %v463 = vmul.f32 %v455, %v460
  %v464 = vadd.f32 %v462, %v463
  %v465 = vtanh.pop %v464
  %v466 = vmul.f32 %v459, %v465
  %467 = vst [vmem:[#allocation3] sm:$0xff] %v464
  %468 = vst [vmem:[#allocation2] sm:$0xff] %v466
  %s469 = sadd.s32 %s85, 1
  %p470 = scmp.eq.s32.totalorder %s469, 7
  // Predicated region
  $region22: #{lstm_forecast.6} parent=0 // pred_check
    %p471 = pneg %p470
  $region23: #{lstm_forecast.6} parent=0 // pred_check_branch
    %473 = sbr.rel (%p471) target = $region25
  $region24: #{lstm_forecast.6} parent=0 // pred_region
    %474 = vst [vmem:[%s3] sm:$0xff] %v466
  $region25: #{lstm_forecast.6} parent=0 // pred_fallthru
    _
  %s475 = scalar_lea.vmem %s0, 64
  %v476 = vld [vmem:[%s475] sm:$0xff]
  %v477 = vld [vmem:[%s475 + $0x8] sm:$0xff]
  %v478 = vld [vmem:[%s475 + $0x10] sm:$0xff]
  %v479 = vld [vmem:[%s475 + $0x18] sm:$0xff]
  %v480 = vld [vmem:[#allocation2] sm:$0xff]
  %481 = vmatprep.subr.mxu0 %v21
  %482 = vmatpush1.msra.mxu0 %v20
  %483 = vmatprep.subr.mxu0 %v25
  %484 = vmatpush1.msra.mxu0 %v24
  %485 = vmatprep.subr.mxu0 %v29
  %486 = vmatpush1.msra.mxu0 %v28
  %487 = vmatprep.subr.mxu0 %v33
  %488 = vmatpush1.msra.mxu0 %v32
  %489 = vmatprep.subr.mxu0 %v37
  %490 = vmatpush1.msra.mxu0 %v36
  %491 = vmatprep.subr.mxu0 %v41
  %492 = vmatpush1.msra.mxu0 %v40
  %493 = vmatprep.subr.mxu0 %v45
  %494 = vmatpush1.msra.mxu0 %v44
  %495 = vmatprep.subr.mxu0 %v49
  %496 = vmatpush1.msra.mxu0 %v48
  %497 = vmatprep.subr.mxu0 %v53
  %498 = vmatpush1.msra.mxu0 %v52
  %499 = vmatprep.subr.mxu0 %v57
  %500 = vmatpush1.msra.mxu0 %v56
  %501 = vmatprep.subr.mxu0 %v61
  %502 = vmatpush1.msra.mxu0 %v60
  %503 = vmatprep.subr.mxu0 %v65
  %504 = vmatpush1.msra.mxu0 %v64
  %505 = vmatprep.subr.mxu0 %v69
  %506 = vmatpush1.msra.mxu0 %v68
  %507 = vmatprep.subr.mxu0 %v73
  %508 = vmatpush1.msra.mxu0 %v72
  %509 = vmatprep.subr.mxu0 %v77
  %510 = vmatpush1.msra.mxu0 %v76
  %511 = vmatprep.subr.mxu0 %v81
  %512 = vmatpush1.msra.mxu0 %v80
  %513 = vmatprep.subr.mxu0 0.0
  %514 = vmatpush1.msra.mxu0 0.0
  %515 = vmatprep.subr.mxu0 0.0
  %516 = vmatpush1.msra.mxu0 0.0
  %517 = vmatprep.subr.mxu0 0.0
  %518 = vmatpush1.msra.mxu0 0.0
  %519 = vmatprep.subr.mxu0 0.0
  %520 = vmatpush1.msra.mxu0 0.0
  %521 = vmatprep.subr.mxu0 0.0
  %522 = vmatpush1.msra.mxu0 0.0
  %523 = vmatprep.subr.mxu0 0.0
  %524 = vmatpush1.msra.mxu0 0.0
  %525 = vmatprep.subr.mxu0 0.0
  %526 = vmatpush1.msra.mxu0 0.0
  %527 = vmatprep.subr.mxu0 0.0
  %528 = vmatpush1.msra.mxu0 0.0
  %529 = vmatprep.subr.mxu0 0.0
  %530 = vmatpush1.msra.mxu0 0.0
  %531 = vmatprep.subr.mxu0 0.0
  %532 = vmatpush1.msra.mxu0 0.0
  %533 = vmatprep.subr.mxu0 0.0
  %534 = vmatpush1.msra.mxu0 0.0
  %535 = vmatprep.subr.mxu0 0.0
  %536 = vmatpush1.msra.mxu0 0.0
  %537 = vmatprep.subr.mxu0 0.0
  %538 = vmatpush1.msra.mxu0 0.0
  %539 = vmatprep.subr.mxu0 0.0
  %540 = vmatpush1.msra.mxu0 0.0
  %541 = vmatprep.subr.mxu0 0.0
  %542 = vmatpush1.msra.mxu0 0.0
  %543 = vmatprep.subr.mxu0 0.0
  %544 = vmatpush1.msra.mxu0 0.0
  %545 = vmatprep.mubr.f32.mxu0 0.0
  %546 = vmatmul.mubr.f32.gmra.mrb[0].mxu0 %v480
  %v547 = vpop.f32.mrb[0].mxu0
  %v548 = vadd.f32 %v476, %v547
  %v549 = vpop.f32.mrb[0].mxu0
  %v550 = vadd.f32 %v477, %v549
  %551 = vdwg.mxu0
  %552 = vmatprep.subr.mxu0 %v23
  %553 = vmatpush1.msra.mxu0 %v22
  %554 = vmatprep.subr.mxu0 %v27
  %555 = vmatpush1.msra.mxu0 %v26
  %556 = vmatprep.subr.mxu0 %v31
  %557 = vmatpush1.msra.mxu0 %v30
  %558 = vmatprep.subr.mxu0 %v35
  %559 = vmatpush1.msra.mxu0 %v34
  %560 = vmatprep.subr.mxu0 %v39
  %561 = vmatpush1.msra.mxu0 %v38
  %562 = vmatprep.subr.mxu0 %v43
  %563 = vmatpush1.msra.mxu0 %v42
  %564 = vmatprep.subr.mxu0 %v47
  %565 = vmatpush1.msra.mxu0 %v46
  %566 = vmatprep.subr.mxu0 %v51
  %567 = vmatpush1.msra.mxu0 %v50
  %568 = vmatprep.subr.mxu0 %v55
  %569 = vmatpush1.msra.mxu0 %v54
  %570 = vmatprep.subr.mxu0 %v59
  %571 = vmatpush1.msra.mxu0 %v58
  %572 = vmatprep.subr.mxu0 %v63
  %573 = vmatpush1.msra.mxu0 %v62
  %574 = vmatprep.subr.mxu0 %v67
  %575 = vmatpush1.msra.mxu0 %v66
  %576 = vmatprep.subr.mxu0 %v71
  %577 = vmatpush1.msra.mxu0 %v70
  %578 = vmatprep.subr.mxu0 %v75
  %579 = vmatpush1.msra.mxu0 %v74
  %580 = vmatprep.subr.mxu0 %v79
  %581 = vmatpush1.msra.mxu0 %v78
  %582 = vmatprep.subr.mxu0 %v83
  %583 = vmatpush1.msra.mxu0 %v82
  %584 = vmatprep.subr.mxu0 0.0
  %585 = vmatpush1.msra.mxu0 0.0
  %586 = vmatprep.subr.mxu0 0.0
  %587 = vmatpush1.msra.mxu0 0.0
  %588 = vmatprep.subr.mxu0 0.0
  %589 = vmatpush1.msra.mxu0 0.0
  %590 = vmatprep.subr.mxu0 0.0
  %591 = vmatpush1.msra.mxu0 0.0
  %592 = vmatprep.subr.mxu0 0.0
  %593 = vmatpush1.msra.mxu0 0.0
  %594 = vmatprep.subr.mxu0 0.0
  %595 = vmatpush1.msra.mxu0 0.0
  %596 = vmatprep.subr.mxu0 0.0
  %597 = vmatpush1.msra.mxu0 0.0
  %598 = vmatprep.subr.mxu0 0.0
  %599 = vmatpush1.msra.mxu0 0.0
  %600 = vmatprep.subr.mxu0 0.0
  %601 = vmatpush1.msra.mxu0 0.0
  %602 = vmatprep.subr.mxu0 0.0
  %603 = vmatpush1.msra.mxu0 0.0
  %604 = vmatprep.subr.mxu0 0.0
  %605 = vmatpush1.msra.mxu0 0.0
  %606 = vmatprep.subr.mxu0 0.0
  %607 = vmatpush1.msra.mxu0 0.0
  %608 = vmatprep.subr.mxu0 0.0
  %609 = vmatpush1.msra.mxu0 0.0
  %610 = vmatprep.subr.mxu0 0.0
  %611 = vmatpush1.msra.mxu0 0.0
  %612 = vmatprep.subr.mxu0 0.0
  %613 = vmatpush1.msra.mxu0 0.0
  %614 = vmatprep.subr.mxu0 0.0
  %615 = vmatpush1.msra.mxu0 0.0
  %616 = vmatprep.mubr.f32.mxu0 0.0
  %617 = vmatmul.mubr.f32.gmra.mrb[0].mxu0 %v480
  %v618 = vpop.f32.mrb[0].mxu0
  %v619 = vadd.f32 %v478, %v618
  %v620 = vpop.f32.mrb[0].mxu0
  %v621 = vadd.f32 %v479, %v620
  %622 = vdwg.mxu0
  %v623 = vadd.f32 %v548, %v237
  %v624 = vadd.f32 %v550, %v241
  %v625 = vadd.f32 %v619, %v245
  %v626 = vadd.f32 %v621, %v249
  %v627 = vxor.u32 %v623, 2147483648
  %v628 = vxor.u32 %v624, 2147483648
  %v629 = vxor.u32 %v625, 2147483648
  %v630 = vmul.f32 %v627, 1.442695
  %v631 = vpow.pop %v630
  %v632 = vmul.f32 %v628, 1.442695
  %v633 = vpow.pop %v632
  %v634 = vmul.f32 %v629, 1.442695
  %v635 = vpow.pop %v634
  %v636 = vadd.f32 %v631, 1.0
  %v637 = vadd.f32 %v633, 1.0
  %v638 = vadd.f32 %v635, 1.0
  %v639 = vrcp.pop %v636
  %v640 = vmul.f32 1.0, %v639
  %v641 = vrcp.pop %v637
  %v642 = vmul.f32 1.0, %v641
  %v643 = vrcp.pop %v638
  %v644 = vmul.f32 1.0, %v643
  %v645 = vtanh.pop %v626
  %v646 = vld [vmem:[#allocation3] sm:$0xff]
  %v647 = vmul.f32 %v642, %v646
  %v648 = vmul.f32 %v640, %v645
  %v649 = vadd.f32 %v647, %v648
  %v650 = vtanh.pop %v649
  %v651 = vmul.f32 %v644, %v650
  %652 = vst [vmem:[#allocation3] sm:$0xff] %v649
  %653 = vst [vmem:[#allocation2] sm:$0xff] %v651
  %s654 = sadd.s32 %s85, 2
  %p655 = scmp.eq.s32.totalorder %s654, 7
  // Predicated region
  $region26: #{lstm_forecast.6} parent=0 // pred_check
    %p656 = pneg %p655
  $region27: #{lstm_forecast.6} parent=0 // pred_check_branch
    %658 = sbr.rel (%p656) target = $region29
  $region28: #{lstm_forecast.6} parent=0 // pred_region
    %659 = vst [vmem:[%s3] sm:$0xff] %v651
  $region29: #{lstm_forecast.6} parent=0 // pred_fallthru
    _
  %s660 = scalar_lea.vmem %s0, 96
  %v661 = vld [vmem:[%s660] sm:$0xff]
  %v662 = vld [vmem:[%s660 + $0x8] sm:$0xff]
  %v663 = vld [vmem:[%s660 + $0x10] sm:$0xff]
  %v664 = vld [vmem:[%s660 + $0x18] sm:$0xff]
  %v665 = vld [vmem:[#allocation2] sm:$0xff]
  %666 = vmatprep.subr.mxu0 %v21
  %667 = vmatpush1.msra.mxu0 %v20
  %668 = vmatprep.subr.mxu0 %v25
  %669 = vmatpush1.msra.mxu0 %v24
  %670 = vmatprep.subr.mxu0 %v29
  %671 = vmatpush1.msra.mxu0 %v28
  %672 = vmatprep.subr.mxu0 %v33
  %673 = vmatpush1.msra.mxu0 %v32
  %674 = vmatprep.subr.mxu0 %v37
  %675 = vmatpush1.msra.mxu0 %v36
  %676 = vmatprep.subr.mxu0 %v41
  %677 = vmatpush1.msra.mxu0 %v40
  %678 = vmatprep.subr.mxu0 %v45
  %679 = vmatpush1.msra.mxu0 %v44
  %680 = vmatprep.subr.mxu0 %v49
  %681 = vmatpush1.msra.mxu0 %v48
  %682 = vmatprep.subr.mxu0 %v53
  %683 = vmatpush1.msra.mxu0 %v52
  %684 = vmatprep.subr.mxu0 %v57
  %685 = vmatpush1.msra.mxu0 %v56
  %686 = vmatprep.subr.mxu0 %v61
  %687 = vmatpush1.msra.mxu0 %v60
  %688 = vmatprep.subr.mxu0 %v65
  %689 = vmatpush1.msra.mxu0 %v64
  %690 = vmatprep.subr.mxu0 %v69
  %691 = vmatpush1.msra.mxu0 %v68
  %692 = vmatprep.subr.mxu0 %v73
  %693 = vmatpush1.msra.mxu0 %v72
  %694 = vmatprep.subr.mxu0 %v77
  %695 = vmatpush1.msra.mxu0 %v76
  %696 = vmatprep.subr.mxu0 %v81
  %697 = vmatpush1.msra.mxu0 %v80
  %698 = vmatprep.subr.mxu0 0.0
  %699 = vmatpush1.msra.mxu0 0.0
  %700 = vmatprep.subr.mxu0 0.0
  %701 = vmatpush1.msra.mxu0 0.0
  %702 = vmatprep.subr.mxu0 0.0
  %703 = vmatpush1.msra.mxu0 0.0
  %704 = vmatprep.subr.mxu0 0.0
  %705 = vmatpush1.msra.mxu0 0.0
  %706 = vmatprep.subr.mxu0 0.0
  %707 = vmatpush1.msra.mxu0 0.0
  %708 = vmatprep.subr.mxu0 0.0
  %709 = vmatpush1.msra.mxu0 0.0
  %710 = vmatprep.subr.mxu0 0.0
  %711 = vmatpush1.msra.mxu0 0.0
  %712 = vmatprep.subr.mxu0 0.0
  %713 = vmatpush1.msra.mxu0 0.0
  %714 = vmatprep.subr.mxu0 0.0
  %715 = vmatpush1.msra.mxu0 0.0
  %716 = vmatprep.subr.mxu0 0.0
  %717 = vmatpush1.msra.mxu0 0.0
  %718 = vmatprep.subr.mxu0 0.0
  %719 = vmatpush1.msra.mxu0 0.0
  %720 = vmatprep.subr.mxu0 0.0
  %721 = vmatpush1.msra.mxu0 0.0
  %722 = vmatprep.subr.mxu0 0.0
  %723 = vmatpush1.msra.mxu0 0.0
  %724 = vmatprep.subr.mxu0 0.0
  %725 = vmatpush1.msra.mxu0 0.0
  %726 = vmatprep.subr.mxu0 0.0
  %727 = vmatpush1.msra.mxu0 0.0
  %728 = vmatprep.subr.mxu0 0.0
  %729 = vmatpush1.msra.mxu0 0.0
  %730 = vmatprep.mubr.f32.mxu0 0.0
  %731 = vmatmul.mubr.f32.gmra.mrb[0].mxu0 %v665
  %v732 = vpop.f32.mrb[0].mxu0
  %v733 = vadd.f32 %v661, %v732
  %v734 = vpop.f32.mrb[0].mxu0
  %v735 = vadd.f32 %v662, %v734
  %736 = vdwg.mxu0
  %737 = vmatprep.subr.mxu0 %v23
  %738 = vmatpush1.msra.mxu0 %v22
  %739 = vmatprep.subr.mxu0 %v27
  %740 = vmatpush1.msra.mxu0 %v26
  %741 = vmatprep.subr.mxu0 %v31
  %742 = vmatpush1.msra.mxu0 %v30
  %743 = vmatprep.subr.mxu0 %v35
  %744 = vmatpush1.msra.mxu0 %v34
  %745 = vmatprep.subr.mxu0 %v39
  %746 = vmatpush1.msra.mxu0 %v38
  %747 = vmatprep.subr.mxu0 %v43
  %748 = vmatpush1.msra.mxu0 %v42
  %749 = vmatprep.subr.mxu0 %v47
  %750 = vmatpush1.msra.mxu0 %v46
  %751 = vmatprep.subr.mxu0 %v51
  %752 = vmatpush1.msra.mxu0 %v50
  %753 = vmatprep.subr.mxu0 %v55
  %754 = vmatpush1.msra.mxu0 %v54
  %755 = vmatprep.subr.mxu0 %v59
  %756 = vmatpush1.msra.mxu0 %v58
  %757 = vmatprep.subr.mxu0 %v63
  %758 = vmatpush1.msra.mxu0 %v62
  %759 = vmatprep.subr.mxu0 %v67
  %760 = vmatpush1.msra.mxu0 %v66
  %761 = vmatprep.subr.mxu0 %v71
  %762 = vmatpush1.msra.mxu0 %v70
  %763 = vmatprep.subr.mxu0 %v75
  %764 = vmatpush1.msra.mxu0 %v74
  %765 = vmatprep.subr.mxu0 %v79
  %766 = vmatpush1.msra.mxu0 %v78
  %767 = vmatprep.subr.mxu0 %v83
  %768 = vmatpush1.msra.mxu0 %v82
  %769 = vmatprep.subr.mxu0 0.0
  %770 = vmatpush1.msra.mxu0 0.0
  %771 = vmatprep.subr.mxu0 0.0
  %772 = vmatpush1.msra.mxu0 0.0
  %773 = vmatprep.subr.mxu0 0.0
  %774 = vmatpush1.msra.mxu0 0.0
  %775 = vmatprep.subr.mxu0 0.0
  %776 = vmatpush1.msra.mxu0 0.0
  %777 = vmatprep.subr.mxu0 0.0
  %778 = vmatpush1.msra.mxu0 0.0
  %779 = vmatprep.subr.mxu0 0.0
  %780 = vmatpush1.msra.mxu0 0.0
  %781 = vmatprep.subr.mxu0 0.0
  %782 = vmatpush1.msra.mxu0 0.0
  %783 = vmatprep.subr.mxu0 0.0
  %784 = vmatpush1.msra.mxu0 0.0
  %785 = vmatprep.subr.mxu0 0.0
  %786 = vmatpush1.msra.mxu0 0.0
  %787 = vmatprep.subr.mxu0 0.0
  %788 = vmatpush1.msra.mxu0 0.0
  %789 = vmatprep.subr.mxu0 0.0
  %790 = vmatpush1.msra.mxu0 0.0
  %791 = vmatprep.subr.mxu0 0.0
  %792 = vmatpush1.msra.mxu0 0.0
  %793 = vmatprep.subr.mxu0 0.0
  %794 = vmatpush1.msra.mxu0 0.0
  %795 = vmatprep.subr.mxu0 0.0
  %796 = vmatpush1.msra.mxu0 0.0
  %797 = vmatprep.subr.mxu0 0.0
  %798 = vmatpush1.msra.mxu0 0.0
  %799 = vmatprep.subr.mxu0 0.0
  %800 = vmatpush1.msra.mxu0 0.0
  %801 = vmatprep.mubr.f32.mxu0 0.0
  %802 = vmatmul.mubr.f32.gmra.mrb[0].mxu0 %v665
  %v803 = vpop.f32.mrb[0].mxu0
  %v804 = vadd.f32 %v663, %v803
  %v805 = vpop.f32.mrb[0].mxu0
  %v806 = vadd.f32 %v664, %v805
  %807 = vdwg.mxu0
  %v808 = vadd.f32 %v733, %v237
  %v809 = vadd.f32 %v735, %v241
  %v810 = vadd.f32 %v804, %v245
  %v811 = vadd.f32 %v806, %v249
  %v812 = vxor.u32 %v808, 2147483648
  %v813 = vxor.u32 %v809, 2147483648
  %v814 = vxor.u32 %v810, 2147483648
  %v815 = vmul.f32 %v812, 1.442695
  %v816 = vpow.pop %v815
  %v817 = vmul.f32 %v813, 1.442695
  %v818 = vpow.pop %v817
  %v819 = vmul.f32 %v814, 1.442695
  %v820 = vpow.pop %v819
  %v821 = vadd.f32 %v816, 1.0
  %v822 = vadd.f32 %v818, 1.0
  %v823 = vadd.f32 %v820, 1.0
  %v824 = vrcp.pop %v821
  %v825 = vmul.f32 1.0, %v824
  %v826 = vrcp.pop %v822
  %v827 = vmul.f32 1.0, %v826
  %v828 = vrcp.pop %v823
  %v829 = vmul.f32 1.0, %v828
  %v830 = vtanh.pop %v811
  %v831 = vld [vmem:[#allocation3] sm:$0xff]
  %v832 = vmul.f32 %v827, %v831
  %v833 = vmul.f32 %v825, %v830
  %v834 = vadd.f32 %v832, %v833
  %v835 = vtanh.pop %v834
  %v836 = vmul.f32 %v829, %v835
  %837 = vst [vmem:[#allocation3] sm:$0xff] %v834
  %838 = vst [vmem:[#allocation2] sm:$0xff] %v836
  %s839 = sadd.s32 %s85, 3
  %p840 = scmp.eq.s32.totalorder %s839, 7
  // Predicated region
  $region30: #{lstm_forecast.6} parent=0 // pred_check
    %p841 = pneg %p840
  $region31: #{lstm_forecast.6} parent=0 // pred_check_branch
    %843 = sbr.rel (%p841) target = $region33
  $region32: #{lstm_forecast.6} parent=0 // pred_region
    %844 = vst [vmem:[%s3] sm:$0xff] %v836
  $region33: #{lstm_forecast.6} parent=0 // pred_fallthru
    _
  %s845 = scalar_lea.vmem %s0, 128
  %v846 = vld [vmem:[%s845] sm:$0xff]
  %v847 = vld [vmem:[%s845 + $0x8] sm:$0xff]
  %v848 = vld [vmem:[%s845 + $0x10] sm:$0xff]
  %v849 = vld [vmem:[%s845 + $0x18] sm:$0xff]
  %v850 = vld [vmem:[#allocation2] sm:$0xff]
  %851 = vmatprep.subr.mxu0 %v21
  %852 = vmatpush1.msra.mxu0 %v20
  %853 = vmatprep.subr.mxu0 %v25
  %854 = vmatpush1.msra.mxu0 %v24
  %855 = vmatprep.subr.mxu0 %v29
  %856 = vmatpush1.msra.mxu0 %v28
  %857 = vmatprep.subr.mxu0 %v33
  %858 = vmatpush1.msra.mxu0 %v32
  %859 = vmatprep.subr.mxu0 %v37
  %860 = vmatpush1.msra.mxu0 %v36
  %861 = vmatprep.subr.mxu0 %v41
  %862 = vmatpush1.msra.mxu0 %v40
  %863 = vmatprep.subr.mxu0 %v45
  %864 = vmatpush1.msra.mxu0 %v44
  %865 = vmatprep.subr.mxu0 %v49
  %866 = vmatpush1.msra.mxu0 %v48
  %867 = vmatprep.subr.mxu0 %v53
  %868 = vmatpush1.msra.mxu0 %v52
  %869 = vmatprep.subr.mxu0 %v57
  %870 = vmatpush1.msra.mxu0 %v56
  %871 = vmatprep.subr.mxu0 %v61
  %872 = vmatpush1.msra.mxu0 %v60
  %873 = vmatprep.subr.mxu0 %v65
  %874 = vmatpush1.msra.mxu0 %v64
  %875 = vmatprep.subr.mxu0 %v69
  %876 = vmatpush1.msra.mxu0 %v68
  %877 = vmatprep.subr.mxu0 %v73
  %878 = vmatpush1.msra.mxu0 %v72
  %879 = vmatprep.subr.mxu0 %v77
  %880 = vmatpush1.msra.mxu0 %v76
  %881 = vmatprep.subr.mxu0 %v81
  %882 = vmatpush1.msra.mxu0 %v80
  %883 = vmatprep.subr.mxu0 0.0
  %884 = vmatpush1.msra.mxu0 0.0
  %885 = vmatprep.subr.mxu0 0.0
  %886 = vmatpush1.msra.mxu0 0.0
  %887 = vmatprep.subr.mxu0 0.0
  %888 = vmatpush1.msra.mxu0 0.0
  %889 = vmatprep.subr.mxu0 0.0
  %890 = vmatpush1.msra.mxu0 0.0
  %891 = vmatprep.subr.mxu0 0.0
  %892 = vmatpush1.msra.mxu0 0.0
  %893 = vmatprep.subr.mxu0 0.0
  %894 = vmatpush1.msra.mxu0 0.0
  %895 = vmatprep.subr.mxu0 0.0
  %896 = vmatpush1.msra.mxu0 0.0
  %897 = vmatprep.subr.mxu0 0.0
  %898 = vmatpush1.msra.mxu0 0.0
  %899 = vmatprep.subr.mxu0 0.0
  %900 = vmatpush1.msra.mxu0 0.0
  %901 = vmatprep.subr.mxu0 0.0
  %902 = vmatpush1.msra.mxu0 0.0
  %903 = vmatprep.subr.mxu0 0.0
  %904 = vmatpush1.msra.mxu0 0.0
  %905 = vmatprep.subr.mxu0 0.0
  %906 = vmatpush1.msra.mxu0 0.0
  %907 = vmatprep.subr.mxu0 0.0
  %908 = vmatpush1.msra.mxu0 0.0
  %909 = vmatprep.subr.mxu0 0.0
  %910 = vmatpush1.msra.mxu0 0.0
  %911 = vmatprep.subr.mxu0 0.0
  %912 = vmatpush1.msra.mxu0 0.0
  %913 = vmatprep.subr.mxu0 0.0
  %914 = vmatpush1.msra.mxu0 0.0
  %915 = vmatprep.mubr.f32.mxu0 0.0
  %916 = vmatmul.mubr.f32.gmra.mrb[0].mxu0 %v850
  %v917 = vpop.f32.mrb[0].mxu0
  %v918 = vadd.f32 %v846, %v917
  %v919 = vpop.f32.mrb[0].mxu0
  %v920 = vadd.f32 %v847, %v919
  %921 = vdwg.mxu0
  %922 = vmatprep.subr.mxu0 %v23
  %923 = vmatpush1.msra.mxu0 %v22
  %924 = vmatprep.subr.mxu0 %v27
  %925 = vmatpush1.msra.mxu0 %v26
  %926 = vmatprep.subr.mxu0 %v31
  %927 = vmatpush1.msra.mxu0 %v30
  %928 = vmatprep.subr.mxu0 %v35
  %929 = vmatpush1.msra.mxu0 %v34
  %930 = vmatprep.subr.mxu0 %v39
  %931 = vmatpush1.msra.mxu0 %v38
  %932 = vmatprep.subr.mxu0 %v43
  %933 = vmatpush1.msra.mxu0 %v42
  %934 = vmatprep.subr.mxu0 %v47
  %935 = vmatpush1.msra.mxu0 %v46
  %936 = vmatprep.subr.mxu0 %v51
  %937 = vmatpush1.msra.mxu0 %v50
  %938 = vmatprep.subr.mxu0 %v55
  %939 = vmatpush1.msra.mxu0 %v54
  %940 = vmatprep.subr.mxu0 %v59
  %941 = vmatpush1.msra.mxu0 %v58
  %942 = vmatprep.subr.mxu0 %v63
  %943 = vmatpush1.msra.mxu0 %v62
  %944 = vmatprep.subr.mxu0 %v67
  %945 = vmatpush1.msra.mxu0 %v66
  %946 = vmatprep.subr.mxu0 %v71
  %947 = vmatpush1.msra.mxu0 %v70
  %948 = vmatprep.subr.mxu0 %v75
  %949 = vmatpush1.msra.mxu0 %v74
  %950 = vmatprep.subr.mxu0 %v79
  %951 = vmatpush1.msra.mxu0 %v78
  %952 = vmatprep.subr.mxu0 %v83
  %953 = vmatpush1.msra.mxu0 %v82
  %954 = vmatprep.subr.mxu0 0.0
  %955 = vmatpush1.msra.mxu0 0.0
  %956 = vmatprep.subr.mxu0 0.0
  %957 = vmatpush1.msra.mxu0 0.0
  %958 = vmatprep.subr.mxu0 0.0
  %959 = vmatpush1.msra.mxu0 0.0
  %960 = vmatprep.subr.mxu0 0.0
  %961 = vmatpush1.msra.mxu0 0.0
  %962 = vmatprep.subr.mxu0 0.0
  %963 = vmatpush1.msra.mxu0 0.0
  %964 = vmatprep.subr.mxu0 0.0
  %965 = vmatpush1.msra.mxu0 0.0
  %966 = vmatprep.subr.mxu0 0.0
  %967 = vmatpush1.msra.mxu0 0.0
  %968 = vmatprep.subr.mxu0 0.0
  %969 = vmatpush1.msra.mxu0 0.0
  %970 = vmatprep.subr.mxu0 0.0
  %971 = vmatpush1.msra.mxu0 0.0
  %972 = vmatprep.subr.mxu0 0.0
  %973 = vmatpush1.msra.mxu0 0.0
  %974 = vmatprep.subr.mxu0 0.0
  %975 = vmatpush1.msra.mxu0 0.0
  %976 = vmatprep.subr.mxu0 0.0
  %977 = vmatpush1.msra.mxu0 0.0
  %978 = vmatprep.subr.mxu0 0.0
  %979 = vmatpush1.msra.mxu0 0.0
  %980 = vmatprep.subr.mxu0 0.0
  %981 = vmatpush1.msra.mxu0 0.0
  %982 = vmatprep.subr.mxu0 0.0
  %983 = vmatpush1.msra.mxu0 0.0
  %984 = vmatprep.subr.mxu0 0.0
  %985 = vmatpush1.msra.mxu0 0.0
  %986 = vmatprep.mubr.f32.mxu0 0.0
  %987 = vmatmul.mubr.f32.gmra.mrb[0].mxu0 %v850
  %v988 = vpop.f32.mrb[0].mxu0
  %v989 = vadd.f32 %v848, %v988
  %v990 = vpop.f32.mrb[0].mxu0
  %v991 = vadd.f32 %v849, %v990
  %992 = vdwg.mxu0
  %v993 = vadd.f32 %v918, %v237
  %v994 = vadd.f32 %v920, %v241
  %v995 = vadd.f32 %v989, %v245
  %v996 = vadd.f32 %v991, %v249
  %v997 = vxor.u32 %v993, 2147483648
  %v998 = vxor.u32 %v994, 2147483648
  %v999 = vxor.u32 %v995, 2147483648
  %v1000 = vmul.f32 %v997, 1.442695
  %v1001 = vpow.pop %v1000
  %v1002 = vmul.f32 %v998, 1.442695
  %v1003 = vpow.pop %v1002
  %v1004 = vmul.f32 %v999, 1.442695
  %v1005 = vpow.pop %v1004
  %v1006 = vadd.f32 %v1001, 1.0
  %v1007 = vadd.f32 %v1003, 1.0
  %v1008 = vadd.f32 %v1005, 1.0
  %v1009 = vrcp.pop %v1006
  %v1010 = vmul.f32 1.0, %v1009
  %v1011 = vrcp.pop %v1007
  %v1012 = vmul.f32 1.0, %v1011
  %v1013 = vrcp.pop %v1008
  %v1014 = vmul.f32 1.0, %v1013
  %v1015 = vtanh.pop %v996
  %v1016 = vld [vmem:[#allocation3] sm:$0xff]
  %v1017 = vmul.f32 %v1012, %v1016
  %v1018 = vmul.f32 %v1010, %v1015
  %v1019 = vadd.f32 %v1017, %v1018
  %v1020 = vtanh.pop %v1019
  %v1021 = vmul.f32 %v1014, %v1020
  %1022 = vst [vmem:[#allocation3] sm:$0xff] %v1019
  %1023 = vst [vmem:[#allocation2] sm:$0xff] %v1021
  %s1024 = sadd.s32 %s85, 4
  %p1025 = scmp.eq.s32.totalorder %s1024, 7
  // Predicated region
  $region34: #{lstm_forecast.6} parent=0 // pred_check
    %p1026 = pneg %p1025
  $region35: #{lstm_forecast.6} parent=0 // pred_check_branch
    %1028 = sbr.rel (%p1026) target = $region37
  $region36: #{lstm_forecast.6} parent=0 // pred_region
    %1029 = vst [vmem:[%s3] sm:$0xff] %v1021
  $region37: #{lstm_forecast.6} parent=0 // pred_fallthru
    _
  %s1030 = scalar_lea.vmem %s0, 160
  %v1031 = vld [vmem:[%s1030] sm:$0xff]
  %v1032 = vld [vmem:[%s1030 + $0x8] sm:$0xff]
  %v1033 = vld [vmem:[%s1030 + $0x10] sm:$0xff]
  %v1034 = vld [vmem:[%s1030 + $0x18] sm:$0xff]
  %v1035 = vld [vmem:[#allocation2] sm:$0xff]
  %1036 = vmatprep.subr.mxu0 %v21
  %1037 = vmatpush1.msra.mxu0 %v20
  %1038 = vmatprep.subr.mxu0 %v25
  %1039 = vmatpush1.msra.mxu0 %v24
  %1040 = vmatprep.subr.mxu0 %v29
  %1041 = vmatpush1.msra.mxu0 %v28
  %1042 = vmatprep.subr.mxu0 %v33
  %1043 = vmatpush1.msra.mxu0 %v32
  %1044 = vmatprep.subr.mxu0 %v37
  %1045 = vmatpush1.msra.mxu0 %v36
  %1046 = vmatprep.subr.mxu0 %v41
  %1047 = vmatpush1.msra.mxu0 %v40
  %1048 = vmatprep.subr.mxu0 %v45
  %1049 = vmatpush1.msra.mxu0 %v44
  %1050 = vmatprep.subr.mxu0 %v49
  %1051 = vmatpush1.msra.mxu0 %v48
  %1052 = vmatprep.subr.mxu0 %v53
  %1053 = vmatpush1.msra.mxu0 %v52
  %1054 = vmatprep.subr.mxu0 %v57
  %1055 = vmatpush1.msra.mxu0 %v56
  %1056 = vmatprep.subr.mxu0 %v61
  %1057 = vmatpush1.msra.mxu0 %v60
  %1058 = vmatprep.subr.mxu0 %v65
  %1059 = vmatpush1.msra.mxu0 %v64
  %1060 = vmatprep.subr.mxu0 %v69
  %1061 = vmatpush1.msra.mxu0 %v68
  %1062 = vmatprep.subr.mxu0 %v73
  %1063 = vmatpush1.msra.mxu0 %v72
  %1064 = vmatprep.subr.mxu0 %v77
  %1065 = vmatpush1.msra.mxu0 %v76
  %1066 = vmatprep.subr.mxu0 %v81
  %1067 = vmatpush1.msra.mxu0 %v80
  %1068 = vmatprep.subr.mxu0 0.0
  %1069 = vmatpush1.msra.mxu0 0.0
  %1070 = vmatprep.subr.mxu0 0.0
  %1071 = vmatpush1.msra.mxu0 0.0
  %1072 = vmatprep.subr.mxu0 0.0
  %1073 = vmatpush1.msra.mxu0 0.0
  %1074 = vmatprep.subr.mxu0 0.0
  %1075 = vmatpush1.msra.mxu0 0.0
  %1076 = vmatprep.subr.mxu0 0.0
  %1077 = vmatpush1.msra.mxu0 0.0
  %1078 = vmatprep.subr.mxu0 0.0
  %1079 = vmatpush1.msra.mxu0 0.0
  %1080 = vmatprep.subr.mxu0 0.0
  %1081 = vmatpush1.msra.mxu0 0.0
  %1082 = vmatprep.subr.mxu0 0.0
  %1083 = vmatpush1.msra.mxu0 0.0
  %1084 = vmatprep.subr.mxu0 0.0
  %1085 = vmatpush1.msra.mxu0 0.0
  %1086 = vmatprep.subr.mxu0 0.0
  %1087 = vmatpush1.msra.mxu0 0.0
  %1088 = vmatprep.subr.mxu0 0.0
  %1089 = vmatpush1.msra.mxu0 0.0
  %1090 = vmatprep.subr.mxu0 0.0
  %1091 = vmatpush1.msra.mxu0 0.0
  %1092 = vmatprep.subr.mxu0 0.0
  %1093 = vmatpush1.msra.mxu0 0.0
  %1094 = vmatprep.subr.mxu0 0.0
  %1095 = vmatpush1.msra.mxu0 0.0
  %1096 = vmatprep.subr.mxu0 0.0
  %1097 = vmatpush1.msra.mxu0 0.0
  %1098 = vmatprep.subr.mxu0 0.0
  %1099 = vmatpush1.msra.mxu0 0.0
  %1100 = vmatprep.mubr.f32.mxu0 0.0
  %1101 = vmatmul.mubr.f32.gmra.mrb[0].mxu0 %v1035
  %v1102 = vpop.f32.mrb[0].mxu0
  %v1103 = vadd.f32 %v1031, %v1102
  %v1104 = vpop.f32.mrb[0].mxu0
  %v1105 = vadd.f32 %v1032, %v1104
  %1106 = vdwg.mxu0
  %1107 = vmatprep.subr.mxu0 %v23
  %1108 = vmatpush1.msra.mxu0 %v22
  %1109 = vmatprep.subr.mxu0 %v27
  %1110 = vmatpush1.msra.mxu0 %v26
  %1111 = vmatprep.subr.mxu0 %v31
  %1112 = vmatpush1.msra.mxu0 %v30
  %1113 = vmatprep.subr.mxu0 %v35
  %1114 = vmatpush1.msra.mxu0 %v34
  %1115 = vmatprep.subr.mxu0 %v39
  %1116 = vmatpush1.msra.mxu0 %v38
  %1117 = vmatprep.subr.mxu0 %v43
  %1118 = vmatpush1.msra.mxu0 %v42
  %1119 = vmatprep.subr.mxu0 %v47
  %1120 = vmatpush1.msra.mxu0 %v46
  %1121 = vmatprep.subr.mxu0 %v51
  %1122 = vmatpush1.msra.mxu0 %v50
  %1123 = vmatprep.subr.mxu0 %v55
  %1124 = vmatpush1.msra.mxu0 %v54
  %1125 = vmatprep.subr.mxu0 %v59
  %1126 = vmatpush1.msra.mxu0 %v58
  %1127 = vmatprep.subr.mxu0 %v63
  %1128 = vmatpush1.msra.mxu0 %v62
  %1129 = vmatprep.subr.mxu0 %v67
  %1130 = vmatpush1.msra.mxu0 %v66
  %1131 = vmatprep.subr.mxu0 %v71
  %1132 = vmatpush1.msra.mxu0 %v70
  %1133 = vmatprep.subr.mxu0 %v75
  %1134 = vmatpush1.msra.mxu0 %v74
  %1135 = vmatprep.subr.mxu0 %v79
  %1136 = vmatpush1.msra.mxu0 %v78
  %1137 = vmatprep.subr.mxu0 %v83
  %1138 = vmatpush1.msra.mxu0 %v82
  %1139 = vmatprep.subr.mxu0 0.0
  %1140 = vmatpush1.msra.mxu0 0.0
  %1141 = vmatprep.subr.mxu0 0.0
  %1142 = vmatpush1.msra.mxu0 0.0
  %1143 = vmatprep.subr.mxu0 0.0
  %1144 = vmatpush1.msra.mxu0 0.0
  %1145 = vmatprep.subr.mxu0 0.0
  %1146 = vmatpush1.msra.mxu0 0.0
  %1147 = vmatprep.subr.mxu0 0.0
  %1148 = vmatpush1.msra.mxu0 0.0
  %1149 = vmatprep.subr.mxu0 0.0
  %1150 = vmatpush1.msra.mxu0 0.0
  %1151 = vmatprep.subr.mxu0 0.0
  %1152 = vmatpush1.msra.mxu0 0.0
  %1153 = vmatprep.subr.mxu0 0.0
  %1154 = vmatpush1.msra.mxu0 0.0
  %1155 = vmatprep.subr.mxu0 0.0
  %1156 = vmatpush1.msra.mxu0 0.0
  %1157 = vmatprep.subr.mxu0 0.0
  %1158 = vmatpush1.msra.mxu0 0.0
  %1159 = vmatprep.subr.mxu0 0.0
  %1160 = vmatpush1.msra.mxu0 0.0
  %1161 = vmatprep.subr.mxu0 0.0
  %1162 = vmatpush1.msra.mxu0 0.0
  %1163 = vmatprep.subr.mxu0 0.0
  %1164 = vmatpush1.msra.mxu0 0.0
  %1165 = vmatprep.subr.mxu0 0.0
  %1166 = vmatpush1.msra.mxu0 0.0
  %1167 = vmatprep.subr.mxu0 0.0
  %1168 = vmatpush1.msra.mxu0 0.0
  %1169 = vmatprep.subr.mxu0 0.0
  %1170 = vmatpush1.msra.mxu0 0.0
  %1171 = vmatprep.mubr.f32.mxu0 0.0
  %1172 = vmatmul.mubr.f32.gmra.mrb[0].mxu0 %v1035
  %v1173 = vpop.f32.mrb[0].mxu0
  %v1174 = vadd.f32 %v1033, %v1173
  %v1175 = vpop.f32.mrb[0].mxu0
  %v1176 = vadd.f32 %v1034, %v1175
  %1177 = vdwg.mxu0
  %v1178 = vadd.f32 %v1103, %v237
  %v1179 = vadd.f32 %v1105, %v241
  %v1180 = vadd.f32 %v1174, %v245
  %v1181 = vadd.f32 %v1176, %v249
  %v1182 = vxor.u32 %v1178, 2147483648
  %v1183 = vxor.u32 %v1179, 2147483648
  %v1184 = vxor.u32 %v1180, 2147483648
  %v1185 = vmul.f32 %v1182, 1.442695
  %v1186 = vpow.pop %v1185
  %v1187 = vmul.f32 %v1183, 1.442695
  %v1188 = vpow.pop %v1187
  %v1189 = vmul.f32 %v1184, 1.442695
  %v1190 = vpow.pop %v1189
  %v1191 = vadd.f32 %v1186, 1.0
  %v1192 = vadd.f32 %v1188, 1.0
  %v1193 = vadd.f32 %v1190, 1.0
  %v1194 = vrcp.pop %v1191
  %v1195 = vmul.f32 1.0, %v1194
  %v1196 = vrcp.pop %v1192
  %v1197 = vmul.f32 1.0, %v1196
  %v1198 = vrcp.pop %v1193
  %v1199 = vmul.f32 1.0, %v1198
  %v1200 = vtanh.pop %v1181
  %v1201 = vld [vmem:[#allocation3] sm:$0xff]
  %v1202 = vmul.f32 %v1197, %v1201
  %v1203 = vmul.f32 %v1195, %v1200
  %v1204 = vadd.f32 %v1202, %v1203
  %v1205 = vtanh.pop %v1204
  %v1206 = vmul.f32 %v1199, %v1205
  %1207 = vst [vmem:[#allocation3] sm:$0xff] %v1204
  %1208 = vst [vmem:[#allocation2] sm:$0xff] %v1206
  %s1209 = sadd.s32 %s85, 5
  %p1210 = scmp.eq.s32.totalorder %s1209, 7
  // Predicated region
  $region38: #{lstm_forecast.6} parent=0 // pred_check
    %p1211 = pneg %p1210
  $region39: #{lstm_forecast.6} parent=0 // pred_check_branch
    %1213 = sbr.rel (%p1211) target = $region41
  $region40: #{lstm_forecast.6} parent=0 // pred_region
    %1214 = vst [vmem:[%s3] sm:$0xff] %v1206
  $region41: #{lstm_forecast.6} parent=0 // pred_fallthru
    _
  %s1215 = scalar_lea.vmem %s0, 192
  %v1216 = vld [vmem:[%s1215] sm:$0xff]
  %v1217 = vld [vmem:[%s1215 + $0x8] sm:$0xff]
  %v1218 = vld [vmem:[%s1215 + $0x10] sm:$0xff]
  %v1219 = vld [vmem:[%s1215 + $0x18] sm:$0xff]
  %v1220 = vld [vmem:[#allocation2] sm:$0xff]
  %1221 = vmatprep.subr.mxu0 %v21
  %1222 = vmatpush1.msra.mxu0 %v20
  %1223 = vmatprep.subr.mxu0 %v25
  %1224 = vmatpush1.msra.mxu0 %v24
  %1225 = vmatprep.subr.mxu0 %v29
  %1226 = vmatpush1.msra.mxu0 %v28
  %1227 = vmatprep.subr.mxu0 %v33
  %1228 = vmatpush1.msra.mxu0 %v32
  %1229 = vmatprep.subr.mxu0 %v37
  %1230 = vmatpush1.msra.mxu0 %v36
  %1231 = vmatprep.subr.mxu0 %v41
  %1232 = vmatpush1.msra.mxu0 %v40
  %1233 = vmatprep.subr.mxu0 %v45
  %1234 = vmatpush1.msra.mxu0 %v44
  %1235 = vmatprep.subr.mxu0 %v49
  %1236 = vmatpush1.msra.mxu0 %v48
  %1237 = vmatprep.subr.mxu0 %v53
  %1238 = vmatpush1.msra.mxu0 %v52
  %1239 = vmatprep.subr.mxu0 %v57
  %1240 = vmatpush1.msra.mxu0 %v56
  %1241 = vmatprep.subr.mxu0 %v61
  %1242 = vmatpush1.msra.mxu0 %v60
  %1243 = vmatprep.subr.mxu0 %v65
  %1244 = vmatpush1.msra.mxu0 %v64
  %1245 = vmatprep.subr.mxu0 %v69
  %1246 = vmatpush1.msra.mxu0 %v68
  %1247 = vmatprep.subr.mxu0 %v73
  %1248 = vmatpush1.msra.mxu0 %v72
  %1249 = vmatprep.subr.mxu0 %v77
  %1250 = vmatpush1.msra.mxu0 %v76
  %1251 = vmatprep.subr.mxu0 %v81
  %1252 = vmatpush1.msra.mxu0 %v80
  %1253 = vmatprep.subr.mxu0 0.0
  %1254 = vmatpush1.msra.mxu0 0.0
  %1255 = vmatprep.subr.mxu0 0.0
  %1256 = vmatpush1.msra.mxu0 0.0
  %1257 = vmatprep.subr.mxu0 0.0
  %1258 = vmatpush1.msra.mxu0 0.0
  %1259 = vmatprep.subr.mxu0 0.0
  %1260 = vmatpush1.msra.mxu0 0.0
  %1261 = vmatprep.subr.mxu0 0.0
  %1262 = vmatpush1.msra.mxu0 0.0
  %1263 = vmatprep.subr.mxu0 0.0
  %1264 = vmatpush1.msra.mxu0 0.0
  %1265 = vmatprep.subr.mxu0 0.0
  %1266 = vmatpush1.msra.mxu0 0.0
  %1267 = vmatprep.subr.mxu0 0.0
  %1268 = vmatpush1.msra.mxu0 0.0
  %1269 = vmatprep.subr.mxu0 0.0
  %1270 = vmatpush1.msra.mxu0 0.0
  %1271 = vmatprep.subr.mxu0 0.0
  %1272 = vmatpush1.msra.mxu0 0.0
  %1273 = vmatprep.subr.mxu0 0.0
  %1274 = vmatpush1.msra.mxu0 0.0
  %1275 = vmatprep.subr.mxu0 0.0
  %1276 = vmatpush1.msra.mxu0 0.0
  %1277 = vmatprep.subr.mxu0 0.0
  %1278 = vmatpush1.msra.mxu0 0.0
  %1279 = vmatprep.subr.mxu0 0.0
  %1280 = vmatpush1.msra.mxu0 0.0
  %1281 = vmatprep.subr.mxu0 0.0
  %1282 = vmatpush1.msra.mxu0 0.0
  %1283 = vmatprep.subr.mxu0 0.0
  %1284 = vmatpush1.msra.mxu0 0.0
  %1285 = vmatprep.mubr.f32.mxu0 0.0
  %1286 = vmatmul.mubr.f32.gmra.mrb[0].mxu0 %v1220
  %v1287 = vpop.f32.mrb[0].mxu0
  %v1288 = vadd.f32 %v1216, %v1287
  %v1289 = vpop.f32.mrb[0].mxu0
  %v1290 = vadd.f32 %v1217, %v1289
  %1291 = vdwg.mxu0
  %1292 = vmatprep.subr.mxu0 %v23
  %1293 = vmatpush1.msra.mxu0 %v22
  %1294 = vmatprep.subr.mxu0 %v27
  %1295 = vmatpush1.msra.mxu0 %v26
  %1296 = vmatprep.subr.mxu0 %v31
  %1297 = vmatpush1.msra.mxu0 %v30
  %1298 = vmatprep.subr.mxu0 %v35
  %1299 = vmatpush1.msra.mxu0 %v34
  %1300 = vmatprep.subr.mxu0 %v39
  %1301 = vmatpush1.msra.mxu0 %v38
  %1302 = vmatprep.subr.mxu0 %v43
  %1303 = vmatpush1.msra.mxu0 %v42
  %1304 = vmatprep.subr.mxu0 %v47
  %1305 = vmatpush1.msra.mxu0 %v46
  %1306 = vmatprep.subr.mxu0 %v51
  %1307 = vmatpush1.msra.mxu0 %v50
  %1308 = vmatprep.subr.mxu0 %v55
  %1309 = vmatpush1.msra.mxu0 %v54
  %1310 = vmatprep.subr.mxu0 %v59
  %1311 = vmatpush1.msra.mxu0 %v58
  %1312 = vmatprep.subr.mxu0 %v63
  %1313 = vmatpush1.msra.mxu0 %v62
  %1314 = vmatprep.subr.mxu0 %v67
  %1315 = vmatpush1.msra.mxu0 %v66
  %1316 = vmatprep.subr.mxu0 %v71
  %1317 = vmatpush1.msra.mxu0 %v70
  %1318 = vmatprep.subr.mxu0 %v75
  %1319 = vmatpush1.msra.mxu0 %v74
  %1320 = vmatprep.subr.mxu0 %v79
  %1321 = vmatpush1.msra.mxu0 %v78
  %1322 = vmatprep.subr.mxu0 %v83
  %1323 = vmatpush1.msra.mxu0 %v82
  %1324 = vmatprep.subr.mxu0 0.0
  %1325 = vmatpush1.msra.mxu0 0.0
  %1326 = vmatprep.subr.mxu0 0.0
  %1327 = vmatpush1.msra.mxu0 0.0
  %1328 = vmatprep.subr.mxu0 0.0
  %1329 = vmatpush1.msra.mxu0 0.0
  %1330 = vmatprep.subr.mxu0 0.0
  %1331 = vmatpush1.msra.mxu0 0.0
  %1332 = vmatprep.subr.mxu0 0.0
  %1333 = vmatpush1.msra.mxu0 0.0
  %1334 = vmatprep.subr.mxu0 0.0
  %1335 = vmatpush1.msra.mxu0 0.0
  %1336 = vmatprep.subr.mxu0 0.0
  %1337 = vmatpush1.msra.mxu0 0.0
  %1338 = vmatprep.subr.mxu0 0.0
  %1339 = vmatpush1.msra.mxu0 0.0
  %1340 = vmatprep.subr.mxu0 0.0
  %1341 = vmatpush1.msra.mxu0 0.0
  %1342 = vmatprep.subr.mxu0 0.0
  %1343 = vmatpush1.msra.mxu0 0.0
  %1344 = vmatprep.subr.mxu0 0.0
  %1345 = vmatpush1.msra.mxu0 0.0
  %1346 = vmatprep.subr.mxu0 0.0
  %1347 = vmatpush1.msra.mxu0 0.0
  %1348 = vmatprep.subr.mxu0 0.0
  %1349 = vmatpush1.msra.mxu0 0.0
  %1350 = vmatprep.subr.mxu0 0.0
  %1351 = vmatpush1.msra.mxu0 0.0
  %1352 = vmatprep.subr.mxu0 0.0
  %1353 = vmatpush1.msra.mxu0 0.0
  %1354 = vmatprep.subr.mxu0 0.0
  %1355 = vmatpush1.msra.mxu0 0.0
  %1356 = vmatprep.mubr.f32.mxu0 0.0
  %1357 = vmatmul.mubr.f32.gmra.mrb[0].mxu0 %v1220
  %v1358 = vpop.f32.mrb[0].mxu0
  %v1359 = vadd.f32 %v1218, %v1358
  %v1360 = vpop.f32.mrb[0].mxu0
  %v1361 = vadd.f32 %v1219, %v1360
  %1362 = vdwg.mxu0
  %v1363 = vadd.f32 %v1288, %v237
  %v1364 = vadd.f32 %v1290, %v241
  %v1365 = vadd.f32 %v1359, %v245
  %v1366 = vadd.f32 %v1361, %v249
  %v1367 = vxor.u32 %v1363, 2147483648
  %v1368 = vxor.u32 %v1364, 2147483648
  %v1369 = vxor.u32 %v1365, 2147483648
  %v1370 = vmul.f32 %v1367, 1.442695
  %v1371 = vpow.pop %v1370
  %v1372 = vmul.f32 %v1368, 1.442695
  %v1373 = vpow.pop %v1372
  %v1374 = vmul.f32 %v1369, 1.442695
  %v1375 = vpow.pop %v1374
  %v1376 = vadd.f32 %v1371, 1.0
  %v1377 = vadd.f32 %v1373, 1.0
  %v1378 = vadd.f32 %v1375, 1.0
  %v1379 = vrcp.pop %v1376
  %v1380 = vmul.f32 1.0, %v1379
  %v1381 = vrcp.pop %v1377
  %v1382 = vmul.f32 1.0, %v1381
  %v1383 = vrcp.pop %v1378
  %v1384 = vmul.f32 1.0, %v1383
  %v1385 = vtanh.pop %v1366
  %v1386 = vld [vmem:[#allocation3] sm:$0xff]
  %v1387 = vmul.f32 %v1382, %v1386
  %v1388 = vmul.f32 %v1380, %v1385
  %v1389 = vadd.f32 %v1387, %v1388
  %v1390 = vtanh.pop %v1389
  %v1391 = vmul.f32 %v1384, %v1390
  %1392 = vst [vmem:[#allocation3] sm:$0xff] %v1389
  %1393 = vst [vmem:[#allocation2] sm:$0xff] %v1391
  %s1394 = sadd.s32 %s85, 6
  %p1395 = scmp.eq.s32.totalorder %s1394, 7
  // Predicated region
  $region42: #{lstm_forecast.6} parent=0 // pred_check
    %p1396 = pneg %p1395
  $region43: #{lstm_forecast.6} parent=0 // pred_check_branch
    %1398 = sbr.rel (%p1396) target = $region45
  $region44: #{lstm_forecast.6} parent=0 // pred_region
    %1399 = vst [vmem:[%s3] sm:$0xff] %v1391
  $region45: #{lstm_forecast.6} parent=0 // pred_fallthru
    _
  %s1400 = scalar_lea.vmem %s0, 224
  %v1401 = vld [vmem:[%s1400] sm:$0xff]
  %v1402 = vld [vmem:[%s1400 + $0x8] sm:$0xff]
  %v1403 = vld [vmem:[%s1400 + $0x10] sm:$0xff]
  %v1404 = vld [vmem:[%s1400 + $0x18] sm:$0xff]
  %v1405 = vld [vmem:[#allocation2] sm:$0xff]
  %1406 = vmatprep.subr.mxu0 %v21
  %1407 = vmatpush1.msra.mxu0 %v20
  %1408 = vmatprep.subr.mxu0 %v25
  %1409 = vmatpush1.msra.mxu0 %v24
  %1410 = vmatprep.subr.mxu0 %v29
  %1411 = vmatpush1.msra.mxu0 %v28
  %1412 = vmatprep.subr.mxu0 %v33
  %1413 = vmatpush1.msra.mxu0 %v32
  %1414 = vmatprep.subr.mxu0 %v37
  %1415 = vmatpush1.msra.mxu0 %v36
  %1416 = vmatprep.subr.mxu0 %v41
  %1417 = vmatpush1.msra.mxu0 %v40
  %1418 = vmatprep.subr.mxu0 %v45
  %1419 = vmatpush1.msra.mxu0 %v44
  %1420 = vmatprep.subr.mxu0 %v49
  %1421 = vmatpush1.msra.mxu0 %v48
  %1422 = vmatprep.subr.mxu0 %v53
  %1423 = vmatpush1.msra.mxu0 %v52
  %1424 = vmatprep.subr.mxu0 %v57
  %1425 = vmatpush1.msra.mxu0 %v56
  %1426 = vmatprep.subr.mxu0 %v61
  %1427 = vmatpush1.msra.mxu0 %v60
  %1428 = vmatprep.subr.mxu0 %v65
  %1429 = vmatpush1.msra.mxu0 %v64
  %1430 = vmatprep.subr.mxu0 %v69
  %1431 = vmatpush1.msra.mxu0 %v68
  %1432 = vmatprep.subr.mxu0 %v73
  %1433 = vmatpush1.msra.mxu0 %v72
  %1434 = vmatprep.subr.mxu0 %v77
  %1435 = vmatpush1.msra.mxu0 %v76
  %1436 = vmatprep.subr.mxu0 %v81
  %1437 = vmatpush1.msra.mxu0 %v80
  %1438 = vmatprep.subr.mxu0 0.0
  %1439 = vmatpush1.msra.mxu0 0.0
  %1440 = vmatprep.subr.mxu0 0.0
  %1441 = vmatpush1.msra.mxu0 0.0
  %1442 = vmatprep.subr.mxu0 0.0
  %1443 = vmatpush1.msra.mxu0 0.0
  %1444 = vmatprep.subr.mxu0 0.0
  %1445 = vmatpush1.msra.mxu0 0.0
  %1446 = vmatprep.subr.mxu0 0.0
  %1447 = vmatpush1.msra.mxu0 0.0
  %1448 = vmatprep.subr.mxu0 0.0
  %1449 = vmatpush1.msra.mxu0 0.0
  %1450 = vmatprep.subr.mxu0 0.0
  %1451 = vmatpush1.msra.mxu0 0.0
  %1452 = vmatprep.subr.mxu0 0.0
  %1453 = vmatpush1.msra.mxu0 0.0
  %1454 = vmatprep.subr.mxu0 0.0
  %1455 = vmatpush1.msra.mxu0 0.0
  %1456 = vmatprep.subr.mxu0 0.0
  %1457 = vmatpush1.msra.mxu0 0.0
  %1458 = vmatprep.subr.mxu0 0.0
  %1459 = vmatpush1.msra.mxu0 0.0
  %1460 = vmatprep.subr.mxu0 0.0
  %1461 = vmatpush1.msra.mxu0 0.0
  %1462 = vmatprep.subr.mxu0 0.0
  %1463 = vmatpush1.msra.mxu0 0.0
  %1464 = vmatprep.subr.mxu0 0.0
  %1465 = vmatpush1.msra.mxu0 0.0
  %1466 = vmatprep.subr.mxu0 0.0
  %1467 = vmatpush1.msra.mxu0 0.0
  %1468 = vmatprep.subr.mxu0 0.0
  %1469 = vmatpush1.msra.mxu0 0.0
  %1470 = vmatprep.mubr.f32.mxu0 0.0
  %1471 = vmatmul.mubr.f32.gmra.mrb[0].mxu0 %v1405
  %v1472 = vpop.f32.mrb[0].mxu0
  %v1473 = vadd.f32 %v1401, %v1472
  %v1474 = vpop.f32.mrb[0].mxu0
  %v1475 = vadd.f32 %v1402, %v1474
  %1476 = vdwg.mxu0
  %1477 = vmatprep.subr.mxu0 %v23
  %1478 = vmatpush1.msra.mxu0 %v22
  %1479 = vmatprep.subr.mxu0 %v27
  %1480 = vmatpush1.msra.mxu0 %v26
  %1481 = vmatprep.subr.mxu0 %v31
  %1482 = vmatpush1.msra.mxu0 %v30
  %1483 = vmatprep.subr.mxu0 %v35
  %1484 = vmatpush1.msra.mxu0 %v34
  %1485 = vmatprep.subr.mxu0 %v39
  %1486 = vmatpush1.msra.mxu0 %v38
  %1487 = vmatprep.subr.mxu0 %v43
  %1488 = vmatpush1.msra.mxu0 %v42
  %1489 = vmatprep.subr.mxu0 %v47
  %1490 = vmatpush1.msra.mxu0 %v46
  %1491 = vmatprep.subr.mxu0 %v51
  %1492 = vmatpush1.msra.mxu0 %v50
  %1493 = vmatprep.subr.mxu0 %v55
  %1494 = vmatpush1.msra.mxu0 %v54
  %1495 = vmatprep.subr.mxu0 %v59
  %1496 = vmatpush1.msra.mxu0 %v58
  %1497 = vmatprep.subr.mxu0 %v63
  %1498 = vmatpush1.msra.mxu0 %v62
  %1499 = vmatprep.subr.mxu0 %v67
  %1500 = vmatpush1.msra.mxu0 %v66
  %1501 = vmatprep.subr.mxu0 %v71
  %1502 = vmatpush1.msra.mxu0 %v70
  %1503 = vmatprep.subr.mxu0 %v75
  %1504 = vmatpush1.msra.mxu0 %v74
  %1505 = vmatprep.subr.mxu0 %v79
  %1506 = vmatpush1.msra.mxu0 %v78
  %1507 = vmatprep.subr.mxu0 %v83
  %1508 = vmatpush1.msra.mxu0 %v82
  %1509 = vmatprep.subr.mxu0 0.0
  %1510 = vmatpush1.msra.mxu0 0.0
  %1511 = vmatprep.subr.mxu0 0.0
  %1512 = vmatpush1.msra.mxu0 0.0
  %1513 = vmatprep.subr.mxu0 0.0
  %1514 = vmatpush1.msra.mxu0 0.0
  %1515 = vmatprep.subr.mxu0 0.0
  %1516 = vmatpush1.msra.mxu0 0.0
  %1517 = vmatprep.subr.mxu0 0.0
  %1518 = vmatpush1.msra.mxu0 0.0
  %1519 = vmatprep.subr.mxu0 0.0
  %1520 = vmatpush1.msra.mxu0 0.0
  %1521 = vmatprep.subr.mxu0 0.0
  %1522 = vmatpush1.msra.mxu0 0.0
  %1523 = vmatprep.subr.mxu0 0.0
  %1524 = vmatpush1.msra.mxu0 0.0
  %1525 = vmatprep.subr.mxu0 0.0
  %1526 = vmatpush1.msra.mxu0 0.0
  %1527 = vmatprep.subr.mxu0 0.0
  %1528 = vmatpush1.msra.mxu0 0.0
  %1529 = vmatprep.subr.mxu0 0.0
  %1530 = vmatpush1.msra.mxu0 0.0
  %1531 = vmatprep.subr.mxu0 0.0
  %1532 = vmatpush1.msra.mxu0 0.0
  %1533 = vmatprep.subr.mxu0 0.0
  %1534 = vmatpush1.msra.mxu0 0.0
  %1535 = vmatprep.subr.mxu0 0.0
  %1536 = vmatpush1.msra.mxu0 0.0
  %1537 = vmatprep.subr.mxu0 0.0
  %1538 = vmatpush1.msra.mxu0 0.0
  %1539 = vmatprep.subr.mxu0 0.0
  %1540 = vmatpush1.msra.mxu0 0.0
  %1541 = vmatprep.mubr.f32.mxu0 0.0
  %1542 = vmatmul.mubr.f32.gmra.mrb[0].mxu0 %v1405
  %v1543 = vpop.f32.mrb[0].mxu0
  %v1544 = vadd.f32 %v1403, %v1543
  %v1545 = vpop.f32.mrb[0].mxu0
  %v1546 = vadd.f32 %v1404, %v1545
  %1547 = vdwg.mxu0
  %v1548 = vadd.f32 %v1473, %v237
  %v1549 = vadd.f32 %v1475, %v241
  %v1550 = vadd.f32 %v1544, %v245
  %v1551 = vadd.f32 %v1546, %v249
  %v1552 = vxor.u32 %v1548, 2147483648
  %v1553 = vxor.u32 %v1549, 2147483648
  %v1554 = vxor.u32 %v1550, 2147483648
  %v1555 = vmul.f32 %v1552, 1.442695
  %v1556 = vpow.pop %v1555
  %v1557 = vmul.f32 %v1553, 1.442695
  %v1558 = vpow.pop %v1557
  %v1559 = vmul.f32 %v1554, 1.442695
  %v1560 = vpow.pop %v1559
  %v1561 = vadd.f32 %v1556, 1.0
  %v1562 = vadd.f32 %v1558, 1.0
  %v1563 = vadd.f32 %v1560, 1.0
  %v1564 = vrcp.pop %v1561
  %v1565 = vmul.f32 1.0, %v1564
  %v1566 = vrcp.pop %v1562
  %v1567 = vmul.f32 1.0, %v1566
  %v1568 = vrcp.pop %v1563
  %v1569 = vmul.f32 1.0, %v1568
  %v1570 = vtanh.pop %v1551
  %v1571 = vld [vmem:[#allocation3] sm:$0xff]
  %v1572 = vmul.f32 %v1567, %v1571
  %v1573 = vmul.f32 %v1565, %v1570
  %v1574 = vadd.f32 %v1572, %v1573
  %v1575 = vtanh.pop %v1574
  %v1576 = vmul.f32 %v1569, %v1575
  %1577 = vst [vmem:[#allocation3] sm:$0xff] %v1574
  %1578 = vst [vmem:[#allocation2] sm:$0xff] %v1576
  %s1579 = sadd.s32 %s85, 7
  %p1580 = scmp.eq.s32.totalorder %s1579, 7
  // Predicated region
  $region46: #{lstm_forecast.6} parent=0 // pred_check
    %p1581 = pneg %p1580
  $region47: #{lstm_forecast.6} parent=0 // pred_check_branch
    %1583 = sbr.rel (%p1581) target = $region49
  $region48: #{lstm_forecast.6} parent=0 // pred_region
    %1584 = vst [vmem:[%s3] sm:$0xff] %v1576
  $region49: #{lstm_forecast.6} parent=0 // pred_fallthru
    _
  // Predicated region
  $region50: #{lstm_forecast.6} parent=0 // pred_check
    _
  $region51: #{lstm_forecast.6} parent=0 // pred_check_branch
    %1586 = sbr.rel (0) target = $region53
  $region52: #{lstm_forecast.6} parent=0 // pred_region
    _
  $region53: #{lstm_forecast.6} parent=0 // pred_fallthru
    _
  // Predicated region
  $region54: #{lstm_forecast.6} parent=0 // pred_check
    _
  $region55: #{lstm_forecast.6} parent=0 // pred_check_branch
    %1588 = sbr.rel (0) target = $region57
  $region56: #{lstm_forecast.6} parent=0 // pred_region
    _
  $region57: #{lstm_forecast.6} parent=0 // pred_fallthru
    _

</llo_original>
